<compile_context>
chip_gen: v6e
topology: v6e:2x2x1
jax: 0.10.0
libtpu: 0.0.40
codegen_flags: <defaults>
</compile_context>

<pallas_src>
import math

import jax
import jax.numpy as jnp
from jax.experimental import pallas as pl
from jax.experimental.pallas import tpu as pltpu

# ----- hyperparameters mirroring CharacterModel.__init__ -----
VOCAB_SIZE = 96          # 95 printable lookup chars + '<pad>' (index 0)
EMBED_SIZE = 32
HIDDEN = 16              # birnn_hidden_size
GATES = 4 * HIDDEN       # i, f, g, o (PyTorch gate order), per direction
GATES2 = 2 * GATES       # interleaved fwd/bwd gate columns = 128 lanes
MAX_ROW_BLOCK = 128      # rows (tokens) per grid step


def _round_up(x, m):
    return (x + m - 1) // m * m


def _char_bilstm_kernel(ids_ref, ew1_ref, wih2_ref, whh_ref, b2_ref, out_ref,
                        proj_scr, l1_scr):
    """One row-block (RB tokens) of the 2-layer bidirectional LSTM.

    ids_ref  : [T*RB, 1] int32   char ids, time-major (row = t*RB + token)
    ew1_ref  : [V, 16H]          emb @ Wih_l1 (+bias), fwd proj in lanes 0:8H,
                                 bwd proj in lanes 8H:16H, gate-interleaved
    wih2_ref : [2H, 16H]         layer-2 input proj, same lane layout
    whh_ref  : [2, 2H, 8H]       block-diag hidden->gates (layer 1, layer 2)
    b2_ref   : [1, 16H]          layer-2 combined biases
    out_ref  : [RB, T*2H]        lane-dense output, PyTorch view(B,-1) order
    proj_scr : [T*RB, 16H]       hoisted input projections (reused by layer 2)
    l1_scr   : [T*RB, 2H]        layer-1 hidden states [h_fwd || h_bwd]
    """
    H = HIDDEN
    H2 = 2 * H
    G8 = 8 * H                                  # 128 lanes per direction slab
    TRB = ids_ref.shape[0]
    RB = out_ref.shape[0]
    T = TRB // RB

    def cell(gin, h, c, whh):
        # gin/gates lanes: [i_f i_b | f_f f_b | g_f g_b | o_f o_b], H each.
        gates = gin + jnp.dot(h, whh, preferred_element_type=jnp.float32)
        sg = jax.nn.sigmoid(gates)                         # one 128-lane EUP op
        g = jnp.tanh(gates[:, 4 * H:6 * H])                # [RB, 2H]
        c = sg[:, 2 * H:4 * H] * c + sg[:, 0:2 * H] * g    # [RB, 2H]
        h = sg[:, 6 * H:8 * H] * jnp.tanh(c)               # [RB, 2H] = [h_f||h_b]
        return h, c

    # ---- embedding lookup + layer-1 input projection (+bias): one matmul ----
    ids = ids_ref[...]                                               # [T*RB, 1]
    onehot = (ids == jax.lax.broadcasted_iota(
        jnp.int32, (TRB, VOCAB_SIZE), 1)).astype(jnp.float32)        # [T*RB, V]
    proj_scr[...] = jnp.dot(onehot, ew1_ref[...],
                            preferred_element_type=jnp.float32)      # [T*RB,16H]

    zeros2 = jnp.zeros((RB, H2), jnp.float32)

    # ---- layer 1: fused fwd/bwd recurrence, fully unrolled (T static) ----
    h, c = zeros2, zeros2
    for i in range(T):
        tf, tb = i, T - 1 - i
        gin = (proj_scr[tf * RB:(tf + 1) * RB, 0:G8]
               + proj_scr[tb * RB:(tb + 1) * RB, G8:2 * G8])
        h, c = cell(gin, h, c, whh_ref[0])
        if tf == tb:
            l1_scr[tf * RB:(tf + 1) * RB, :] = h
        else:
            l1_scr[tf * RB:(tf + 1) * RB, 0:H] = h[:, 0:H]
            l1_scr[tb * RB:(tb + 1) * RB, H:H2] = h[:, H:H2]

    # ---- layer-2 input projection, hoisted over all timesteps ----
    proj_scr[...] = (jnp.dot(l1_scr[...], wih2_ref[...],
                             preferred_element_type=jnp.float32)
                     + b2_ref[...])

    # ---- layer 2: fused fwd/bwd, write straight into lane-dense output ----
    h, c = zeros2, zeros2
    for i in range(T):
        tf, tb = i, T - 1 - i
        gin = (proj_scr[tf * RB:(tf + 1) * RB, 0:G8]
               + proj_scr[tb * RB:(tb + 1) * RB, G8:2 * G8])
        h, c = cell(gin, h, c, whh_ref[1])
        if tf == tb:
            out_ref[:, tf * H2:(tf + 1) * H2] = h
        else:
            out_ref[:, tf * H2:tf * H2 + H] = h[:, 0:H]
            out_ref[:, tb * H2 + H:(tb + 1) * H2] = h[:, H:H2]


def bilstm_pallas(ids_blk, ew1, wih2, whh, b2, *, RB, T):
    """ids_blk: [NBLK, T*RB, 1] int32 -> [NBLK, RB, T*2*HIDDEN] float32."""
    NBLK = ids_blk.shape[0]
    TRB = T * RB
    return pl.pallas_call(
        _char_bilstm_kernel,
        out_shape=jax.ShapeDtypeStruct((NBLK, RB, T * 2 * HIDDEN), jnp.float32),
        grid_spec=pltpu.PrefetchScalarGridSpec(
            num_scalar_prefetch=0,
            grid=(NBLK,),
            in_specs=[
                pl.BlockSpec((pl.Squeezed(), TRB, 1), lambda r: (r, 0, 0)),
                pl.BlockSpec((VOCAB_SIZE, 2 * GATES2), lambda r: (0, 0)),
                pl.BlockSpec((2 * HIDDEN, 2 * GATES2), lambda r: (0, 0)),
                pl.BlockSpec((2, 2 * HIDDEN, GATES2), lambda r: (0, 0, 0)),
                pl.BlockSpec((1, 2 * GATES2), lambda r: (0, 0)),
            ],
            out_specs=pl.BlockSpec((pl.Squeezed(), RB, T * 2 * HIDDEN),
                                   lambda r: (r, 0, 0)),
            scratch_shapes=[
                pltpu.VMEM((TRB, 2 * GATES2), jnp.float32),   # hoisted proj
                pltpu.VMEM((TRB, 2 * HIDDEN), jnp.float32),   # layer-1 hidden
            ]),
        compiler_params=pltpu.CompilerParams(
            dimension_semantics=("parallel",)),               # megacore on v7x
    )(ids_blk, ew1, wih2, whh, b2)


# ----------------------------------------------------------------------------
# Parameter init (mirrors nn.Embedding / nn.LSTM shapes) + kernel packing
# ----------------------------------------------------------------------------
def init_raw_params(key):
    keys = jax.random.split(key, 9)
    emb = jax.random.normal(keys[0], (VOCAB_SIZE, EMBED_SIZE), jnp.float32)
    emb = emb.at[0].set(0.0)                   # padding_idx=0
    k = 1.0 / math.sqrt(HIDDEN)
    u = lambda kk, shape: jax.random.uniform(kk, shape, jnp.float32, -k, k)
    return dict(
        emb=emb,
        wih1=u(keys[1], (2, EMBED_SIZE, GATES)),     # (dir, E, 4H), gates i,f,g,o
        whh1=u(keys[2], (2, HIDDEN, GATES)),         # (dir, H, 4H)
        b1=u(keys[3], (2, GATES)) + u(keys[4], (2, GATES)),   # b_ih + b_hh
        wih2=u(keys[5], (2, 2 * HIDDEN, GATES)),     # (dir, 2H, 4H)
        whh2=u(keys[6], (2, HIDDEN, GATES)),
        b2=u(keys[7], (2, GATES)) + u(keys[8], (2, GATES)),
    )


def _scatter_gates(w_fwd, w_bwd):
    """[in,4H],[in,4H] -> [in,8H] gate-interleaved: i_f,i_b,f_f,f_b,g_f,g_b,o_f,o_b."""
    n = w_fwd.shape[0]
    w0 = w_fwd.reshape(n, 4, HIDDEN)
    w1 = w_bwd.reshape(n, 4, HIDDEN)
    return jnp.concatenate([w0, w1], axis=2).reshape(n, 8 * HIDDEN)


def pack_params(raw):
    z_e = jnp.zeros((EMBED_SIZE, GATES), jnp.float32)
    z_h = jnp.zeros((HIDDEN, GATES), jnp.float32)
    z_2h = jnp.zeros((2 * HIDDEN, GATES), jnp.float32)
    z_b = jnp.zeros((1, GATES), jnp.float32)

    # Layer 1: fold embedding, input projection AND bias into one lookup table.
    ew_f = (raw["emb"] @ _scatter_gates(raw["wih1"][0], z_e)
            + _scatter_gates(raw["b1"][0][None], z_b))
    ew_b = (raw["emb"] @ _scatter_gates(z_e, raw["wih1"][1])
            + _scatter_gates(z_b, raw["b1"][1][None]))
    ew1 = jnp.concatenate([ew_f, ew_b], axis=1)                       # [V, 16H]

    wih2 = jnp.concatenate([_scatter_gates(raw["wih2"][0], z_2h),
                            _scatter_gates(z_2h, raw["wih2"][1])], axis=1)
    b2 = jnp.concatenate([_scatter_gates(raw["b2"][0][None], z_b),
                          _scatter_gates(z_b, raw["b2"][1][None])], axis=1)

    def block_diag(whh):                                              # [2H, 8H]
        return jnp.concatenate([_scatter_gates(whh[0], z_h),
                                _scatter_gates(z_h, whh[1])], axis=0)

    whh = jnp.stack([block_diag(raw["whh1"]), block_diag(raw["whh2"])])  # [2,2H,8H]
    return {"ew1": ew1, "wih2": wih2, "whh": whh, "b2": b2}


# ----------------------------------------------------------------------------
# Forward pass (eval mode)
# ----------------------------------------------------------------------------
def character_model_forward(ids, packed):
    """ids: int32 [N, B, T] -> float32 [N, B, T * 2 * HIDDEN].

    Dropout (p=0.1 on embeddings, p=0.15 between LSTM layers) is identity in
    eval mode.  # TODO(synk): training-mode dropout is not implemented.
    """
    N, B, T = ids.shape
    NB = N * B
    RB = min(_round_up(NB, 8), MAX_ROW_BLOCK)      # rows per grid step
    P = _round_up(NB, RB)
    NBLK = P // RB

    ids2 = ids.reshape(NB, T).astype(jnp.int32)
    if P != NB:                                    # pad with <pad> = 0 rows
        ids2 = jnp.pad(ids2, ((0, P - NB), (0, 0)))
    ids_tm = ids2.T                                # [T, P] time-major
    ids_blk = (ids_tm.reshape(T, NBLK, RB)
               .transpose(1, 0, 2)
               .reshape(NBLK, T * RB, 1))          # row = t*RB + token-in-block

    out = bilstm_pallas(ids_blk, packed["ew1"], packed["wih2"],
                        packed["whh"], packed["b2"], RB=RB, T=T)
    out = out.reshape(P, T * 2 * HIDDEN)[:NB]      # drop padded rows
    return out.reshape(N, B, T * 2 * HIDDEN)


# ----------------------------------------------------------------------------
# Pure-JAX reference (mirrors PyTorch nn.LSTM equations, eval mode)
# ----------------------------------------------------------------------------
def character_model_reference(ids, raw):
    N, B, T = ids.shape
    x = raw["emb"][ids.reshape(N * B, T)]                  # [NB, T, E]

    def run_layer(x_seq, wih, whh, b):
        H = HIDDEN
        outs = []
        for d in range(2):
            h = jnp.zeros((x_seq.shape[0], H), jnp.float32)
            c = jnp.zeros_like(h)
            hs = [None] * T
            ts = range(T) if d == 0 else range(T - 1, -1, -1)
            for t in ts:
                gates = x_seq[:, t] @ wih[d] + h @ whh[d] + b[d]
                i = jax.nn.sigmoid(gates[:, 0:H])
                f = jax.nn.sigmoid(gates[:, H:2 * H])
                g = jnp.tanh(gates[:, 2 * H:3 * H])
                o = jax.nn.sigmoid(gates[:, 3 * H:4 * H])
                c = f * c + i * g
                h = o * jnp.tanh(c)
                hs[t] = h
            outs.append(jnp.stack(hs, axis=1))             # [NB, T, H]
        return jnp.concatenate(outs, axis=2)               # [NB, T, 2H]

    l1 = run_layer(x, raw["wih1"], raw["whh1"], raw["b1"])
    l2 = run_layer(l1, raw["wih2"], raw["whh2"], raw["b2"])
    return l2.reshape(N, B, T * 2 * HIDDEN)


if __name__ == "__main__":
    key = jax.random.PRNGKey(0)
    pkey, dkey = jax.random.split(key)
    raw = init_raw_params(pkey)
    packed = pack_params(raw)

    # 2 outer batches, 8 tokens each, 15 chars per token (max_token_length=15).
    N, B, T = 2, 8, 15
    ids = jax.random.randint(dkey, (N, B, T), 0, VOCAB_SIZE, dtype=jnp.int32)

    fwd = jax.jit(character_model_forward)
    out = fwd(ids, packed)
    jax.block_until_ready(out)
    assert out.shape == (N, B, T * 2 * HIDDEN)

    ref = jax.jit(character_model_reference)(ids, raw)
    err = float(jnp.max(jnp.abs(out - ref)))
    assert err < 5e-2, f"max abs err vs reference: {err}"

    print("KERNEL_OK")
</pallas_src>

<mosaic_0001>
module attributes {stable_mosaic.version = 11 : i64} {
  func.func @_char_bilstm_kernel(%arg0: i32, %arg1: memref<1x240x1xi32, #tpu.memory_space<vmem>>, %arg2: memref<96x256xf32, #tpu.memory_space<vmem>>, %arg3: memref<32x256xf32, #tpu.memory_space<vmem>>, %arg4: memref<2x32x128xf32, #tpu.memory_space<vmem>>, %arg5: memref<1x256xf32, #tpu.memory_space<vmem>>, %arg6: memref<1x16x480xf32, #tpu.memory_space<vmem>>, %arg7: memref<240x256xf32, #tpu.memory_space<vmem>>, %arg8: memref<240x32xf32, #tpu.memory_space<vmem>>) attributes {dimension_semantics = [#tpu.dimension_semantics<parallel>], iteration_bounds = array<i64: 1>, scalar_prefetch = 0 : i64, scratch_operands = 2 : i64, tpu.core_type = #tpu.core_type<tc>, window_params = [{transform_indices = @transform_0, window_bounds = array<i64: 1, 240, 1>}, {pipeline_mode = #tpu.pipeline_mode<synchronous>, transform_indices = @transform_1, window_bounds = array<i64: 96, 256>}, {pipeline_mode = #tpu.pipeline_mode<synchronous>, transform_indices = @transform_2, window_bounds = array<i64: 32, 256>}, {pipeline_mode = #tpu.pipeline_mode<synchronous>, transform_indices = @transform_3, window_bounds = array<i64: 2, 32, 128>}, {pipeline_mode = #tpu.pipeline_mode<synchronous>, transform_indices = @transform_4, window_bounds = array<i64: 1, 256>}, {transform_indices = @transform_5, window_bounds = array<i64: 1, 16, 480>}]} {
    %c0 = arith.constant 0 : index
    %c0_0 = arith.constant 0 : index
    %c0_1 = arith.constant 0 : index
    %0 = vector.load %arg1[%c0, %c0_0, %c0_1] : memref<1x240x1xi32, #tpu.memory_space<vmem>>, vector<1x240x1xi32>
    %1 = vector.shape_cast %0 : vector<1x240x1xi32> to vector<240x1xi32>
    %2 = tpu.iota {dimensions = array<i32: 1>} : vector<240x96xi32>
    %3 = vector.broadcast %1 : vector<240x1xi32> to vector<240x96xi32>
    %4 = arith.cmpi eq, %3, %2 : vector<240x96xi32>
    %5 = arith.extui %4 : vector<240x96xi1> to vector<240x96xi32>
    %6 = arith.sitofp %5 : vector<240x96xi32> to vector<240x96xf32>
    %c0_2 = arith.constant 0 : index
    %c0_3 = arith.constant 0 : index
    %7 = vector.load %arg2[%c0_2, %c0_3] : memref<96x256xf32, #tpu.memory_space<vmem>>, vector<96x256xf32>
    %cst = arith.constant dense<0.000000e+00> : vector<240x256xf32>
    %8 = tpu.matmul %6, %7, %cst {dimension_numbers = #tpu.dot_dimension_numbers<[1], [0], [0], [1], [0, 0, 1, 1], [], []>} : vector<240x96xf32>, vector<96x256xf32>, vector<240x256xf32> -> vector<240x256xf32>
    %c0_4 = arith.constant 0 : index
    %c0_5 = arith.constant 0 : index
    %9 = vector.load %arg7[%c0_4, %c0_5] : memref<240x256xf32, #tpu.memory_space<vmem>>, vector<240x256xf32>
    tpu.vector_store %arg7[%c0_4, %c0_5], %8 {strides = array<i32>} : memref<240x256xf32, #tpu.memory_space<vmem>>, vector<240x256xf32>,
    %cst_6 = arith.constant 0.000000e+00 : f32
    %10 = vector.broadcast %cst_6 : f32 to vector<16x32xf32>
    %c0_7 = arith.constant 0 : index
    %c0_8 = arith.constant 0 : index
    %11 = vector.load %arg7[%c0_7, %c0_8] : memref<240x256xf32, #tpu.memory_space<vmem>>, vector<16x128xf32>
    %c224 = arith.constant 224 : index
    %c128 = arith.constant 128 : index
    %12 = vector.load %arg7[%c224, %c128] : memref<240x256xf32, #tpu.memory_space<vmem>>, vector<16x128xf32>
    %13 = arith.addf %11, %12 : vector<16x128xf32>
    %c0_9 = arith.constant 0 : index
    %c0_10 = arith.constant 0 : index
    %c0_11 = arith.constant 0 : index
    %14 = vector.load %arg4[%c0_9, %c0_10, %c0_11] : memref<2x32x128xf32, #tpu.memory_space<vmem>>, vector<1x32x128xf32>
    %15 = vector.shape_cast %14 : vector<1x32x128xf32> to vector<32x128xf32>
    %cst_12 = arith.constant dense<0.000000e+00> : vector<16x128xf32>
    %16 = tpu.matmul %10, %15, %cst_12 {dimension_numbers = #tpu.dot_dimension_numbers<[1], [0], [0], [1], [0, 0, 1, 1], [], []>} : vector<16x32xf32>, vector<32x128xf32>, vector<16x128xf32> -> vector<16x128xf32>
    %17 = arith.addf %13, %16 : vector<16x128xf32>
    %18 = arith.negf %17 : vector<16x128xf32>
    %19 = math.exp %18 : vector<16x128xf32>
    %cst_13 = arith.constant 1.000000e+00 : f32
    %20 = vector.broadcast %cst_13 : f32 to vector<16x128xf32>
    %21 = arith.addf %20, %19 : vector<16x128xf32>
    %22 = arith.divf %20, %21 : vector<16x128xf32>
    %23 = vector.extract_strided_slice %17 {offsets = [0, 64], sizes = [16, 32], strides = [1, 1]} : vector<16x128xf32> to vector<16x32xf32>
    %24 = math.tanh %23 : vector<16x32xf32>
    %25 = vector.extract_strided_slice %22 {offsets = [0, 32], sizes = [16, 32], strides = [1, 1]} : vector<16x128xf32> to vector<16x32xf32>
    %26 = arith.mulf %25, %10 : vector<16x32xf32>
    %27 = vector.extract_strided_slice %22 {offsets = [0, 0], sizes = [16, 32], strides = [1, 1]} : vector<16x128xf32> to vector<16x32xf32>
    %28 = arith.mulf %27, %24 : vector<16x32xf32>
    %29 = arith.addf %26, %28 : vector<16x32xf32>
    %30 = vector.extract_strided_slice %22 {offsets = [0, 96], sizes = [16, 32], strides = [1, 1]} : vector<16x128xf32> to vector<16x32xf32>
    %31 = math.tanh %29 : vector<16x32xf32>
    %32 = arith.mulf %30, %31 : vector<16x32xf32>
    %33 = vector.extract_strided_slice %32 {offsets = [0, 0], sizes = [16, 16], strides = [1, 1]} : vector<16x32xf32> to vector<16x16xf32>
    %c0_14 = arith.constant 0 : index
    %c0_15 = arith.constant 0 : index
    %34 = vector.load %arg8[%c0_14, %c0_15] : memref<240x32xf32, #tpu.memory_space<vmem>>, vector<16x16xf32>
    tpu.vector_store %arg8[%c0_14, %c0_15], %33 {strides = array<i32>} : memref<240x32xf32, #tpu.memory_space<vmem>>, vector<16x16xf32>,
    %35 = vector.extract_strided_slice %32 {offsets = [0, 16], sizes = [16, 16], strides = [1, 1]} : vector<16x32xf32> to vector<16x16xf32>
    %c224_16 = arith.constant 224 : index
    %c16 = arith.constant 16 : index
    %36 = vector.load %arg8[%c224_16, %c16] : memref<240x32xf32, #tpu.memory_space<vmem>>, vector<16x16xf32>
    tpu.vector_store %arg8[%c224_16, %c16], %35 {strides = array<i32>} : memref<240x32xf32, #tpu.memory_space<vmem>>, vector<16x16xf32>,
    %c16_17 = arith.constant 16 : index
    %c0_18 = arith.constant 0 : index
    %37 = vector.load %arg7[%c16_17, %c0_18] : memref<240x256xf32, #tpu.memory_space<vmem>>, vector<16x128xf32>
    %c208 = arith.constant 208 : index
    %c128_19 = arith.constant 128 : index
    %38 = vector.load %arg7[%c208, %c128_19] : memref<240x256xf32, #tpu.memory_space<vmem>>, vector<16x128xf32>
    %39 = arith.addf %37, %38 : vector<16x128xf32>
    %c0_20 = arith.constant 0 : index
    %c0_21 = arith.constant 0 : index
    %c0_22 = arith.constant 0 : index
    %40 = vector.load %arg4[%c0_20, %c0_21, %c0_22] : memref<2x32x128xf32, #tpu.memory_space<vmem>>, vector<1x32x128xf32>
    %41 = vector.shape_cast %40 : vector<1x32x128xf32> to vector<32x128xf32>
    %cst_23 = arith.constant dense<0.000000e+00> : vector<16x128xf32>
    %42 = tpu.matmul %32, %41, %cst_23 {dimension_numbers = #tpu.dot_dimension_numbers<[1], [0], [0], [1], [0, 0, 1, 1], [], []>} : vector<16x32xf32>, vector<32x128xf32>, vector<16x128xf32> -> vector<16x128xf32>
    %43 = arith.addf %39, %42 : vector<16x128xf32>
    %44 = arith.negf %43 : vector<16x128xf32>
    %45 = math.exp %44 : vector<16x128xf32>
    %cst_24 = arith.constant 1.000000e+00 : f32
    %46 = vector.broadcast %cst_24 : f32 to vector<16x128xf32>
    %47 = arith.addf %46, %45 : vector<16x128xf32>
    %48 = arith.divf %46, %47 : vector<16x128xf32>
    %49 = vector.extract_strided_slice %43 {offsets = [0, 64], sizes = [16, 32], strides = [1, 1]} : vector<16x128xf32> to vector<16x32xf32>
    %50 = math.tanh %49 : vector<16x32xf32>
    %51 = vector.extract_strided_slice %48 {offsets = [0, 32], sizes = [16, 32], strides = [1, 1]} : vector<16x128xf32> to vector<16x32xf32>
    %52 = arith.mulf %51, %29 : vector<16x32xf32>
    %53 = vector.extract_strided_slice %48 {offsets = [0, 0], sizes = [16, 32], strides = [1, 1]} : vector<16x128xf32> to vector<16x32xf32>
    %54 = arith.mulf %53, %50 : vector<16x32xf32>
    %55 = arith.addf %52, %54 : vector<16x32xf32>
    %56 = vector.extract_strided_slice %48 {offsets = [0, 96], sizes = [16, 32], strides = [1, 1]} : vector<16x128xf32> to vector<16x32xf32>
    %57 = math.tanh %55 : vector<16x32xf32>
    %58 = arith.mulf %56, %57 : vector<16x32xf32>
    %59 = vector.extract_strided_slice %58 {offsets = [0, 0], sizes = [16, 16], strides = [1, 1]} : vector<16x32xf32> to vector<16x16xf32>
    %c16_25 = arith.constant 16 : index
    %c0_26 = arith.constant 0 : index
    %60 = vector.load %arg8[%c16_25, %c0_26] : memref<240x32xf32, #tpu.memory_space<vmem>>, vector<16x16xf32>
    tpu.vector_store %arg8[%c16_25, %c0_26], %59 {strides = array<i32>} : memref<240x32xf32, #tpu.memory_space<vmem>>, vector<16x16xf32>,
    %61 = vector.extract_strided_slice %58 {offsets = [0, 16], sizes = [16, 16], strides = [1, 1]} : vector<16x32xf32> to vector<16x16xf32>
    %c208_27 = arith.constant 208 : index
    %c16_28 = arith.constant 16 : index
    %62 = vector.load %arg8[%c208_27, %c16_28] : memref<240x32xf32, #tpu.memory_space<vmem>>, vector<16x16xf32>
    tpu.vector_store %arg8[%c208_27, %c16_28], %61 {strides = array<i32>} : memref<240x32xf32, #tpu.memory_space<vmem>>, vector<16x16xf32>,
    %c32 = arith.constant 32 : index
    %c0_29 = arith.constant 0 : index
    %63 = vector.load %arg7[%c32, %c0_29] : memref<240x256xf32, #tpu.memory_space<vmem>>, vector<16x128xf32>
    %c192 = arith.constant 192 : index
    %c128_30 = arith.constant 128 : index
    %64 = vector.load %arg7[%c192, %c128_30] : memref<240x256xf32, #tpu.memory_space<vmem>>, vector<16x128xf32>
    %65 = arith.addf %63, %64 : vector<16x128xf32>
    %c0_31 = arith.constant 0 : index
    %c0_32 = arith.constant 0 : index
    %c0_33 = arith.constant 0 : index
    %66 = vector.load %arg4[%c0_31, %c0_32, %c0_33] : memref<2x32x128xf32, #tpu.memory_space<vmem>>, vector<1x32x128xf32>
    %67 = vector.shape_cast %66 : vector<1x32x128xf32> to vector<32x128xf32>
    %cst_34 = arith.constant dense<0.000000e+00> : vector<16x128xf32>
    %68 = tpu.matmul %58, %67, %cst_34 {dimension_numbers = #tpu.dot_dimension_numbers<[1], [0], [0], [1], [0, 0, 1, 1], [], []>} : vector<16x32xf32>, vector<32x128xf32>, vector<16x128xf32> -> vector<16x128xf32>
    %69 = arith.addf %65, %68 : vector<16x128xf32>
    %70 = arith.negf %69 : vector<16x128xf32>
    %71 = math.exp %70 : vector<16x128xf32>
    %cst_35 = arith.constant 1.000000e+00 : f32
    %72 = vector.broadcast %cst_35 : f32 to vector<16x128xf32>
    %73 = arith.addf %72, %71 : vector<16x128xf32>
    %74 = arith.divf %72, %73 : vector<16x128xf32>
    %75 = vector.extract_strided_slice %69 {offsets = [0, 64], sizes = [16, 32], strides = [1, 1]} : vector<16x128xf32> to vector<16x32xf32>
    %76 = math.tanh %75 : vector<16x32xf32>
    %77 = vector.extract_strided_slice %74 {offsets = [0, 32], sizes = [16, 32], strides = [1, 1]} : vector<16x128xf32> to vector<16x32xf32>
    %78 = arith.mulf %77, %55 : vector<16x32xf32>
    %79 = vector.extract_strided_slice %74 {offsets = [0, 0], sizes = [16, 32], strides = [1, 1]} : vector<16x128xf32> to vector<16x32xf32>
    %80 = arith.mulf %79, %76 : vector<16x32xf32>
    %81 = arith.addf %78, %80 : vector<16x32xf32>
    %82 = vector.extract_strided_slice %74 {offsets = [0, 96], sizes = [16, 32], strides = [1, 1]} : vector<16x128xf32> to vector<16x32xf32>
    %83 = math.tanh %81 : vector<16x32xf32>
    %84 = arith.mulf %82, %83 : vector<16x32xf32>
    %85 = vector.extract_strided_slice %84 {offsets = [0, 0], sizes = [16, 16], strides = [1, 1]} : vector<16x32xf32> to vector<16x16xf32>
    %c32_36 = arith.constant 32 : index
    %c0_37 = arith.constant 0 : index
    %86 = vector.load %arg8[%c32_36, %c0_37] : memref<240x32xf32, #tpu.memory_space<vmem>>, vector<16x16xf32>
    tpu.vector_store %arg8[%c32_36, %c0_37], %85 {strides = array<i32>} : memref<240x32xf32, #tpu.memory_space<vmem>>, vector<16x16xf32>,
    %87 = vector.extract_strided_slice %84 {offsets = [0, 16], sizes = [16, 16], strides = [1, 1]} : vector<16x32xf32> to vector<16x16xf32>
    %c192_38 = arith.constant 192 : index
    %c16_39 = arith.constant 16 : index
    %88 = vector.load %arg8[%c192_38, %c16_39] : memref<240x32xf32, #tpu.memory_space<vmem>>, vector<16x16xf32>
    tpu.vector_store %arg8[%c192_38, %c16_39], %87 {strides = array<i32>} : memref<240x32xf32, #tpu.memory_space<vmem>>, vector<16x16xf32>,
    %c48 = arith.constant 48 : index
    %c0_40 = arith.constant 0 : index
    %89 = vector.load %arg7[%c48, %c0_40] : memref<240x256xf32, #tpu.memory_space<vmem>>, vector<16x128xf32>
    %c176 = arith.constant 176 : index
    %c128_41 = arith.constant 128 : index
    %90 = vector.load %arg7[%c176, %c128_41] : memref<240x256xf32, #tpu.memory_space<vmem>>, vector<16x128xf32>
    %91 = arith.addf %89, %90 : vector<16x128xf32>
    %c0_42 = arith.constant 0 : index
    %c0_43 = arith.constant 0 : index
    %c0_44 = arith.constant 0 : index
    %92 = vector.load %arg4[%c0_42, %c0_43, %c0_44] : memref<2x32x128xf32, #tpu.memory_space<vmem>>, vector<1x32x128xf32>
    %93 = vector.shape_cast %92 : vector<1x32x128xf32> to vector<32x128xf32>
    %cst_45 = arith.constant dense<0.000000e+00> : vector<16x128xf32>
    %94 = tpu.matmul %84, %93, %cst_45 {dimension_numbers = #tpu.dot_dimension_numbers<[1], [0], [0], [1], [0, 0, 1, 1], [], []>} : vector<16x32xf32>, vector<32x128xf32>, vector<16x128xf32> -> vector<16x128xf32>
    %95 = arith.addf %91, %94 : vector<16x128xf32>
    %96 = arith.negf %95 : vector<16x128xf32>
    %97 = math.exp %96 : vector<16x128xf32>
    %cst_46 = arith.constant 1.000000e+00 : f32
    %98 = vector.broadcast %cst_46 : f32 to vector<16x128xf32>
    %99 = arith.addf %98, %97 : vector<16x128xf32>
    %100 = arith.divf %98, %99 : vector<16x128xf32>
    %101 = vector.extract_strided_slice %95 {offsets = [0, 64], sizes = [16, 32], strides = [1, 1]} : vector<16x128xf32> to vector<16x32xf32>
    %102 = math.tanh %101 : vector<16x32xf32>
    %103 = vector.extract_strided_slice %100 {offsets = [0, 32], sizes = [16, 32], strides = [1, 1]} : vector<16x128xf32> to vector<16x32xf32>
    %104 = arith.mulf %103, %81 : vector<16x32xf32>
    %105 = vector.extract_strided_slice %100 {offsets = [0, 0], sizes = [16, 32], strides = [1, 1]} : vector<16x128xf32> to vector<16x32xf32>
    %106 = arith.mulf %105, %102 : vector<16x32xf32>
    %107 = arith.addf %104, %106 : vector<16x32xf32>
    %108 = vector.extract_strided_slice %100 {offsets = [0, 96], sizes = [16, 32], strides = [1, 1]} : vector<16x128xf32> to vector<16x32xf32>
    %109 = math.tanh %107 : vector<16x32xf32>
    %110 = arith.mulf %108, %109 : vector<16x32xf32>
    %111 = vector.extract_strided_slice %110 {offsets = [0, 0], sizes = [16, 16], strides = [1, 1]} : vector<16x32xf32> to vector<16x16xf32>
    %c48_47 = arith.constant 48 : index
    %c0_48 = arith.constant 0 : index
    %112 = vector.load %arg8[%c48_47, %c0_48] : memref<240x32xf32, #tpu.memory_space<vmem>>, vector<16x16xf32>
    tpu.vector_store %arg8[%c48_47, %c0_48], %111 {strides = array<i32>} : memref<240x32xf32, #tpu.memory_space<vmem>>, vector<16x16xf32>,
    %113 = vector.extract_strided_slice %110 {offsets = [0, 16], sizes = [16, 16], strides = [1, 1]} : vector<16x32xf32> to vector<16x16xf32>
    %c176_49 = arith.constant 176 : index
    %c16_50 = arith.constant 16 : index
    %114 = vector.load %arg8[%c176_49, %c16_50] : memref<240x32xf32, #tpu.memory_space<vmem>>, vector<16x16xf32>
    tpu.vector_store %arg8[%c176_49, %c16_50], %113 {strides = array<i32>} : memref<240x32xf32, #tpu.memory_space<vmem>>, vector<16x16xf32>,
    %c64 = arith.constant 64 : index
    %c0_51 = arith.constant 0 : index
    %115 = vector.load %arg7[%c64, %c0_51] : memref<240x256xf32, #tpu.memory_space<vmem>>, vector<16x128xf32>
    %c160 = arith.constant 160 : index
    %c128_52 = arith.constant 128 : index
    %116 = vector.load %arg7[%c160, %c128_52] : memref<240x256xf32, #tpu.memory_space<vmem>>, vector<16x128xf32>
    %117 = arith.addf %115, %116 : vector<16x128xf32>
    %c0_53 = arith.constant 0 : index
    %c0_54 = arith.constant 0 : index
    %c0_55 = arith.constant 0 : index
    %118 = vector.load %arg4[%c0_53, %c0_54, %c0_55] : memref<2x32x128xf32, #tpu.memory_space<vmem>>, vector<1x32x128xf32>
    %119 = vector.shape_cast %118 : vector<1x32x128xf32> to vector<32x128xf32>
    %cst_56 = arith.constant dense<0.000000e+00> : vector<16x128xf32>
    %120 = tpu.matmul %110, %119, %cst_56 {dimension_numbers = #tpu.dot_dimension_numbers<[1], [0], [0], [1], [0, 0, 1, 1], [], []>} : vector<16x32xf32>, vector<32x128xf32>, vector<16x128xf32> -> vector<16x128xf32>
    %121 = arith.addf %117, %120 : vector<16x128xf32>
    %122 = arith.negf %121 : vector<16x128xf32>
    %123 = math.exp %122 : vector<16x128xf32>
    %cst_57 = arith.constant 1.000000e+00 : f32
    %124 = vector.broadcast %cst_57 : f32 to vector<16x128xf32>
    %125 = arith.addf %124, %123 : vector<16x128xf32>
    %126 = arith.divf %124, %125 : vector<16x128xf32>
    %127 = vector.extract_strided_slice %121 {offsets = [0, 64], sizes = [16, 32], strides = [1, 1]} : vector<16x128xf32> to vector<16x32xf32>
    %128 = math.tanh %127 : vector<16x32xf32>
    %129 = vector.extract_strided_slice %126 {offsets = [0, 32], sizes = [16, 32], strides = [1, 1]} : vector<16x128xf32> to vector<16x32xf32>
    %130 = arith.mulf %129, %107 : vector<16x32xf32>
    %131 = vector.extract_strided_slice %126 {offsets = [0, 0], sizes = [16, 32], strides = [1, 1]} : vector<16x128xf32> to vector<16x32xf32>
    %132 = arith.mulf %131, %128 : vector<16x32xf32>
    %133 = arith.addf %130, %132 : vector<16x32xf32>
    %134 = vector.extract_strided_slice %126 {offsets = [0, 96], sizes = [16, 32], strides = [1, 1]} : vector<16x128xf32> to vector<16x32xf32>
    %135 = math.tanh %133 : vector<16x32xf32>
    %136 = arith.mulf %134, %135 : vector<16x32xf32>
    %137 = vector.extract_strided_slice %136 {offsets = [0, 0], sizes = [16, 16], strides = [1, 1]} : vector<16x32xf32> to vector<16x16xf32>
    %c64_58 = arith.constant 64 : index
    %c0_59 = arith.constant 0 : index
    %138 = vector.load %arg8[%c64_58, %c0_59] : memref<240x32xf32, #tpu.memory_space<vmem>>, vector<16x16xf32>
    tpu.vector_store %arg8[%c64_58, %c0_59], %137 {strides = array<i32>} : memref<240x32xf32, #tpu.memory_space<vmem>>, vector<16x16xf32>,
    %139 = vector.extract_strided_slice %136 {offsets = [0, 16], sizes = [16, 16], strides = [1, 1]} : vector<16x32xf32> to vector<16x16xf32>
    %c160_60 = arith.constant 160 : index
    %c16_61 = arith.constant 16 : index
    %140 = vector.load %arg8[%c160_60, %c16_61] : memref<240x32xf32, #tpu.memory_space<vmem>>, vector<16x16xf32>
    tpu.vector_store %arg8[%c160_60, %c16_61], %139 {strides = array<i32>} : memref<240x32xf32, #tpu.memory_space<vmem>>, vector<16x16xf32>,
    %c80 = arith.constant 80 : index
    %c0_62 = arith.constant 0 : index
    %141 = vector.load %arg7[%c80, %c0_62] : memref<240x256xf32, #tpu.memory_space<vmem>>, vector<16x128xf32>
    %c144 = arith.constant 144 : index
    %c128_63 = arith.constant 128 : index
    %142 = vector.load %arg7[%c144, %c128_63] : memref<240x256xf32, #tpu.memory_space<vmem>>, vector<16x128xf32>
    %143 = arith.addf %141, %142 : vector<16x128xf32>
    %c0_64 = arith.constant 0 : index
    %c0_65 = arith.constant 0 : index
    %c0_66 = arith.constant 0 : index
    %144 = vector.load %arg4[%c0_64, %c0_65, %c0_66] : memref<2x32x128xf32, #tpu.memory_space<vmem>>, vector<1x32x128xf32>
    %145 = vector.shape_cast %144 : vector<1x32x128xf32> to vector<32x128xf32>
    %cst_67 = arith.constant dense<0.000000e+00> : vector<16x128xf32>
    %146 = tpu.matmul %136, %145, %cst_67 {dimension_numbers = #tpu.dot_dimension_numbers<[1], [0], [0], [1], [0, 0, 1, 1], [], []>} : vector<16x32xf32>, vector<32x128xf32>, vector<16x128xf32> -> vector<16x128xf32>
    %147 = arith.addf %143, %146 : vector<16x128xf32>
    %148 = arith.negf %147 : vector<16x128xf32>
    %149 = math.exp %148 : vector<16x128xf32>
    %cst_68 = arith.constant 1.000000e+00 : f32
    %150 = vector.broadcast %cst_68 : f32 to vector<16x128xf32>
    %151 = arith.addf %150, %149 : vector<16x128xf32>
    %152 = arith.divf %150, %151 : vector<16x128xf32>
    %153 = vector.extract_strided_slice %147 {offsets = [0, 64], sizes = [16, 32], strides = [1, 1]} : vector<16x128xf32> to vector<16x32xf32>
    %154 = math.tanh %153 : vector<16x32xf32>
    %155 = vector.extract_strided_slice %152 {offsets = [0, 32], sizes = [16, 32], strides = [1, 1]} : vector<16x128xf32> to vector<16x32xf32>
    %156 = arith.mulf %155, %133 : vector<16x32xf32>
    %157 = vector.extract_strided_slice %152 {offsets = [0, 0], sizes = [16, 32], strides = [1, 1]} : vector<16x128xf32> to vector<16x32xf32>
    %158 = arith.mulf %157, %154 : vector<16x32xf32>
    %159 = arith.addf %156, %158 : vector<16x32xf32>
    %160 = vector.extract_strided_slice %152 {offsets = [0, 96], sizes = [16, 32], strides = [1, 1]} : vector<16x128xf32> to vector<16x32xf32>
    %161 = math.tanh %159 : vector<16x32xf32>
    %162 = arith.mulf %160, %161 : vector<16x32xf32>
    %163 = vector.extract_strided_slice %162 {offsets = [0, 0], sizes = [16, 16], strides = [1, 1]} : vector<16x32xf32> to vector<16x16xf32>
    %c80_69 = arith.constant 80 : index
    %c0_70 = arith.constant 0 : index
    %164 = vector.load %arg8[%c80_69, %c0_70] : memref<240x32xf32, #tpu.memory_space<vmem>>, vector<16x16xf32>
    tpu.vector_store %arg8[%c80_69, %c0_70], %163 {strides = array<i32>} : memref<240x32xf32, #tpu.memory_space<vmem>>, vector<16x16xf32>,
    %165 = vector.extract_strided_slice %162 {offsets = [0, 16], sizes = [16, 16], strides = [1, 1]} : vector<16x32xf32> to vector<16x16xf32>
    %c144_71 = arith.constant 144 : index
    %c16_72 = arith.constant 16 : index
    %166 = vector.load %arg8[%c144_71, %c16_72] : memref<240x32xf32, #tpu.memory_space<vmem>>, vector<16x16xf32>
    tpu.vector_store %arg8[%c144_71, %c16_72], %165 {strides = array<i32>} : memref<240x32xf32, #tpu.memory_space<vmem>>, vector<16x16xf32>,
    %c96 = arith.constant 96 : index
    %c0_73 = arith.constant 0 : index
    %167 = vector.load %arg7[%c96, %c0_73] : memref<240x256xf32, #tpu.memory_space<vmem>>, vector<16x128xf32>
    %c128_74 = arith.constant 128 : index
    %c128_75 = arith.constant 128 : index
    %168 = vector.load %arg7[%c128_74, %c128_75] : memref<240x256xf32, #tpu.memory_space<vmem>>, vector<16x128xf32>
    %169 = arith.addf %167, %168 : vector<16x128xf32>
    %c0_76 = arith.constant 0 : index
    %c0_77 = arith.constant 0 : index
    %c0_78 = arith.constant 0 : index
    %170 = vector.load %arg4[%c0_76, %c0_77, %c0_78] : memref<2x32x128xf32, #tpu.memory_space<vmem>>, vector<1x32x128xf32>
    %171 = vector.shape_cast %170 : vector<1x32x128xf32> to vector<32x128xf32>
    %cst_79 = arith.constant dense<0.000000e+00> : vector<16x128xf32>
    %172 = tpu.matmul %162, %171, %cst_79 {dimension_numbers = #tpu.dot_dimension_numbers<[1], [0], [0], [1], [0, 0, 1, 1], [], []>} : vector<16x32xf32>, vector<32x128xf32>, vector<16x128xf32> -> vector<16x128xf32>
    %173 = arith.addf %169, %172 : vector<16x128xf32>
    %174 = arith.negf %173 : vector<16x128xf32>
    %175 = math.exp %174 : vector<16x128xf32>
    %cst_80 = arith.constant 1.000000e+00 : f32
    %176 = vector.broadcast %cst_80 : f32 to vector<16x128xf32>
    %177 = arith.addf %176, %175 : vector<16x128xf32>
    %178 = arith.divf %176, %177 : vector<16x128xf32>
    %179 = vector.extract_strided_slice %173 {offsets = [0, 64], sizes = [16, 32], strides = [1, 1]} : vector<16x128xf32> to vector<16x32xf32>
    %180 = math.tanh %179 : vector<16x32xf32>
    %181 = vector.extract_strided_slice %178 {offsets = [0, 32], sizes = [16, 32], strides = [1, 1]} : vector<16x128xf32> to vector<16x32xf32>
    %182 = arith.mulf %181, %159 : vector<16x32xf32>
    %183 = vector.extract_strided_slice %178 {offsets = [0, 0], sizes = [16, 32], strides = [1, 1]} : vector<16x128xf32> to vector<16x32xf32>
    %184 = arith.mulf %183, %180 : vector<16x32xf32>
    %185 = arith.addf %182, %184 : vector<16x32xf32>
    %186 = vector.extract_strided_slice %178 {offsets = [0, 96], sizes = [16, 32], strides = [1, 1]} : vector<16x128xf32> to vector<16x32xf32>
    %187 = math.tanh %185 : vector<16x32xf32>
    %188 = arith.mulf %186, %187 : vector<16x32xf32>
    %189 = vector.extract_strided_slice %188 {offsets = [0, 0], sizes = [16, 16], strides = [1, 1]} : vector<16x32xf32> to vector<16x16xf32>
    %c96_81 = arith.constant 96 : index
    %c0_82 = arith.constant 0 : index
    %190 = vector.load %arg8[%c96_81, %c0_82] : memref<240x32xf32, #tpu.memory_space<vmem>>, vector<16x16xf32>
    tpu.vector_store %arg8[%c96_81, %c0_82], %189 {strides = array<i32>} : memref<240x32xf32, #tpu.memory_space<vmem>>, vector<16x16xf32>,
    %191 = vector.extract_strided_slice %188 {offsets = [0, 16], sizes = [16, 16], strides = [1, 1]} : vector<16x32xf32> to vector<16x16xf32>
    %c128_83 = arith.constant 128 : index
    %c16_84 = arith.constant 16 : index
    %192 = vector.load %arg8[%c128_83, %c16_84] : memref<240x32xf32, #tpu.memory_space<vmem>>, vector<16x16xf32>
    tpu.vector_store %arg8[%c128_83, %c16_84], %191 {strides = array<i32>} : memref<240x32xf32, #tpu.memory_space<vmem>>, vector<16x16xf32>,
    %c112 = arith.constant 112 : index
    %c0_85 = arith.constant 0 : index
    %193 = vector.load %arg7[%c112, %c0_85] : memref<240x256xf32, #tpu.memory_space<vmem>>, vector<16x128xf32>
    %c112_86 = arith.constant 112 : index
    %c128_87 = arith.constant 128 : index
    %194 = vector.load %arg7[%c112_86, %c128_87] : memref<240x256xf32, #tpu.memory_space<vmem>>, vector<16x128xf32>
    %195 = arith.addf %193, %194 : vector<16x128xf32>
    %c0_88 = arith.constant 0 : index
    %c0_89 = arith.constant 0 : index
    %c0_90 = arith.constant 0 : index
    %196 = vector.load %arg4[%c0_88, %c0_89, %c0_90] : memref<2x32x128xf32, #tpu.memory_space<vmem>>, vector<1x32x128xf32>
    %197 = vector.shape_cast %196 : vector<1x32x128xf32> to vector<32x128xf32>
    %cst_91 = arith.constant dense<0.000000e+00> : vector<16x128xf32>
    %198 = tpu.matmul %188, %197, %cst_91 {dimension_numbers = #tpu.dot_dimension_numbers<[1], [0], [0], [1], [0, 0, 1, 1], [], []>} : vector<16x32xf32>, vector<32x128xf32>, vector<16x128xf32> -> vector<16x128xf32>
    %199 = arith.addf %195, %198 : vector<16x128xf32>
    %200 = arith.negf %199 : vector<16x128xf32>
    %201 = math.exp %200 : vector<16x128xf32>
    %cst_92 = arith.constant 1.000000e+00 : f32
    %202 = vector.broadcast %cst_92 : f32 to vector<16x128xf32>
    %203 = arith.addf %202, %201 : vector<16x128xf32>
    %204 = arith.divf %202, %203 : vector<16x128xf32>
    %205 = vector.extract_strided_slice %199 {offsets = [0, 64], sizes = [16, 32], strides = [1, 1]} : vector<16x128xf32> to vector<16x32xf32>
    %206 = math.tanh %205 : vector<16x32xf32>
    %207 = vector.extract_strided_slice %204 {offsets = [0, 32], sizes = [16, 32], strides = [1, 1]} : vector<16x128xf32> to vector<16x32xf32>
    %208 = arith.mulf %207, %185 : vector<16x32xf32>
    %209 = vector.extract_strided_slice %204 {offsets = [0, 0], sizes = [16, 32], strides = [1, 1]} : vector<16x128xf32> to vector<16x32xf32>
    %210 = arith.mulf %209, %206 : vector<16x32xf32>
    %211 = arith.addf %208, %210 : vector<16x32xf32>
    %212 = vector.extract_strided_slice %204 {offsets = [0, 96], sizes = [16, 32], strides = [1, 1]} : vector<16x128xf32> to vector<16x32xf32>
    %213 = math.tanh %211 : vector<16x32xf32>
    %214 = arith.mulf %212, %213 : vector<16x32xf32>
    %c112_93 = arith.constant 112 : index
    %c0_94 = arith.constant 0 : index
    %215 = vector.load %arg8[%c112_93, %c0_94] : memref<240x32xf32, #tpu.memory_space<vmem>>, vector<16x32xf32>
    tpu.vector_store %arg8[%c112_93, %c0_94], %214 {strides = array<i32>} : memref<240x32xf32, #tpu.memory_space<vmem>>, vector<16x32xf32>,
    %c128_95 = arith.constant 128 : index
    %c0_96 = arith.constant 0 : index
    %216 = vector.load %arg7[%c128_95, %c0_96] : memref<240x256xf32, #tpu.memory_space<vmem>>, vector<16x128xf32>
    %c96_97 = arith.constant 96 : index
    %c128_98 = arith.constant 128 : index
    %217 = vector.load %arg7[%c96_97, %c128_98] : memref<240x256xf32, #tpu.memory_space<vmem>>, vector<16x128xf32>
    %218 = arith.addf %216, %217 : vector<16x128xf32>
    %c0_99 = arith.constant 0 : index
    %c0_100 = arith.constant 0 : index
    %c0_101 = arith.constant 0 : index
    %219 = vector.load %arg4[%c0_99, %c0_100, %c0_101] : memref<2x32x128xf32, #tpu.memory_space<vmem>>, vector<1x32x128xf32>
    %220 = vector.shape_cast %219 : vector<1x32x128xf32> to vector<32x128xf32>
    %cst_102 = arith.constant dense<0.000000e+00> : vector<16x128xf32>
    %221 = tpu.matmul %214, %220, %cst_102 {dimension_numbers = #tpu.dot_dimension_numbers<[1], [0], [0], [1], [0, 0, 1, 1], [], []>} : vector<16x32xf32>, vector<32x128xf32>, vector<16x128xf32> -> vector<16x128xf32>
    %222 = arith.addf %218, %221 : vector<16x128xf32>
    %223 = arith.negf %222 : vector<16x128xf32>
    %224 = math.exp %223 : vector<16x128xf32>
    %cst_103 = arith.constant 1.000000e+00 : f32
    %225 = vector.broadcast %cst_103 : f32 to vector<16x128xf32>
    %226 = arith.addf %225, %224 : vector<16x128xf32>
    %227 = arith.divf %225, %226 : vector<16x128xf32>
    %228 = vector.extract_strided_slice %222 {offsets = [0, 64], sizes = [16, 32], strides = [1, 1]} : vector<16x128xf32> to vector<16x32xf32>
    %229 = math.tanh %228 : vector<16x32xf32>
    %230 = vector.extract_strided_slice %227 {offsets = [0, 32], sizes = [16, 32], strides = [1, 1]} : vector<16x128xf32> to vector<16x32xf32>
    %231 = arith.mulf %230, %211 : vector<16x32xf32>
    %232 = vector.extract_strided_slice %227 {offsets = [0, 0], sizes = [16, 32], strides = [1, 1]} : vector<16x128xf32> to vector<16x32xf32>
    %233 = arith.mulf %232, %229 : vector<16x32xf32>
    %234 = arith.addf %231, %233 : vector<16x32xf32>
    %235 = vector.extract_strided_slice %227 {offsets = [0, 96], sizes = [16, 32], strides = [1, 1]} : vector<16x128xf32> to vector<16x32xf32>
    %236 = math.tanh %234 : vector<16x32xf32>
    %237 = arith.mulf %235, %236 : vector<16x32xf32>
    %238 = vector.extract_strided_slice %237 {offsets = [0, 0], sizes = [16, 16], strides = [1, 1]} : vector<16x32xf32> to vector<16x16xf32>
    %c128_104 = arith.constant 128 : index
    %c0_105 = arith.constant 0 : index
    %239 = vector.load %arg8[%c128_104, %c0_105] : memref<240x32xf32, #tpu.memory_space<vmem>>, vector<16x16xf32>
    tpu.vector_store %arg8[%c128_104, %c0_105], %238 {strides = array<i32>} : memref<240x32xf32, #tpu.memory_space<vmem>>, vector<16x16xf32>,
    %240 = vector.extract_strided_slice %237 {offsets = [0, 16], sizes = [16, 16], strides = [1, 1]} : vector<16x32xf32> to vector<16x16xf32>
    %c96_106 = arith.constant 96 : index
    %c16_107 = arith.constant 16 : index
    %241 = vector.load %arg8[%c96_106, %c16_107] : memref<240x32xf32, #tpu.memory_space<vmem>>, vector<16x16xf32>
    tpu.vector_store %arg8[%c96_106, %c16_107], %240 {strides = array<i32>} : memref<240x32xf32, #tpu.memory_space<vmem>>, vector<16x16xf32>,
    %c144_108 = arith.constant 144 : index
    %c0_109 = arith.constant 0 : index
    %242 = vector.load %arg7[%c144_108, %c0_109] : memref<240x256xf32, #tpu.memory_space<vmem>>, vector<16x128xf32>
    %c80_110 = arith.constant 80 : index
    %c128_111 = arith.constant 128 : index
    %243 = vector.load %arg7[%c80_110, %c128_111] : memref<240x256xf32, #tpu.memory_space<vmem>>, vector<16x128xf32>
    %244 = arith.addf %242, %243 : vector<16x128xf32>
    %c0_112 = arith.constant 0 : index
    %c0_113 = arith.constant 0 : index
    %c0_114 = arith.constant 0 : index
    %245 = vector.load %arg4[%c0_112, %c0_113, %c0_114] : memref<2x32x128xf32, #tpu.memory_space<vmem>>, vector<1x32x128xf32>
    %246 = vector.shape_cast %245 : vector<1x32x128xf32> to vector<32x128xf32>
    %cst_115 = arith.constant dense<0.000000e+00> : vector<16x128xf32>
    %247 = tpu.matmul %237, %246, %cst_115 {dimension_numbers = #tpu.dot_dimension_numbers<[1], [0], [0], [1], [0, 0, 1, 1], [], []>} : vector<16x32xf32>, vector<32x128xf32>, vector<16x128xf32> -> vector<16x128xf32>
    %248 = arith.addf %244, %247 : vector<16x128xf32>
    %249 = arith.negf %248 : vector<16x128xf32>
    %250 = math.exp %249 : vector<16x128xf32>
    %cst_116 = arith.constant 1.000000e+00 : f32
    %251 = vector.broadcast %cst_116 : f32 to vector<16x128xf32>
    %252 = arith.addf %251, %250 : vector<16x128xf32>
    %253 = arith.divf %251, %252 : vector<16x128xf32>
    %254 = vector.extract_strided_slice %248 {offsets = [0, 64], sizes = [16, 32], strides = [1, 1]} : vector<16x128xf32> to vector<16x32xf32>
    %255 = math.tanh %254 : vector<16x32xf32>
    %256 = vector.extract_strided_slice %253 {offsets = [0, 32], sizes = [16, 32], strides = [1, 1]} : vector<16x128xf32> to vector<16x32xf32>
    %257 = arith.mulf %256, %234 : vector<16x32xf32>
    %258 = vector.extract_strided_slice %253 {offsets = [0, 0], sizes = [16, 32], strides = [1, 1]} : vector<16x128xf32> to vector<16x32xf32>
    %259 = arith.mulf %258, %255 : vector<16x32xf32>
    %260 = arith.addf %257, %259 : vector<16x32xf32>
    %261 = vector.extract_strided_slice %253 {offsets = [0, 96], sizes = [16, 32], strides = [1, 1]} : vector<16x128xf32> to vector<16x32xf32>
    %262 = math.tanh %260 : vector<16x32xf32>
    %263 = arith.mulf %261, %262 : vector<16x32xf32>
    %264 = vector.extract_strided_slice %263 {offsets = [0, 0], sizes = [16, 16], strides = [1, 1]} : vector<16x32xf32> to vector<16x16xf32>
    %c144_117 = arith.constant 144 : index
    %c0_118 = arith.constant 0 : index
    %265 = vector.load %arg8[%c144_117, %c0_118] : memref<240x32xf32, #tpu.memory_space<vmem>>, vector<16x16xf32>
    tpu.vector_store %arg8[%c144_117, %c0_118], %264 {strides = array<i32>} : memref<240x32xf32, #tpu.memory_space<vmem>>, vector<16x16xf32>,
    %266 = vector.extract_strided_slice %263 {offsets = [0, 16], sizes = [16, 16], strides = [1, 1]} : vector<16x32xf32> to vector<16x16xf32>
    %c80_119 = arith.constant 80 : index
    %c16_120 = arith.constant 16 : index
    %267 = vector.load %arg8[%c80_119, %c16_120] : memref<240x32xf32, #tpu.memory_space<vmem>>, vector<16x16xf32>
    tpu.vector_store %arg8[%c80_119, %c16_120], %266 {strides = array<i32>} : memref<240x32xf32, #tpu.memory_space<vmem>>, vector<16x16xf32>,
    %c160_121 = arith.constant 160 : index
    %c0_122 = arith.constant 0 : index
    %268 = vector.load %arg7[%c160_121, %c0_122] : memref<240x256xf32, #tpu.memory_space<vmem>>, vector<16x128xf32>
    %c64_123 = arith.constant 64 : index
    %c128_124 = arith.constant 128 : index
    %269 = vector.load %arg7[%c64_123, %c128_124] : memref<240x256xf32, #tpu.memory_space<vmem>>, vector<16x128xf32>
    %270 = arith.addf %268, %269 : vector<16x128xf32>
    %c0_125 = arith.constant 0 : index
    %c0_126 = arith.constant 0 : index
    %c0_127 = arith.constant 0 : index
    %271 = vector.load %arg4[%c0_125, %c0_126, %c0_127] : memref<2x32x128xf32, #tpu.memory_space<vmem>>, vector<1x32x128xf32>
    %272 = vector.shape_cast %271 : vector<1x32x128xf32> to vector<32x128xf32>
    %cst_128 = arith.constant dense<0.000000e+00> : vector<16x128xf32>
    %273 = tpu.matmul %263, %272, %cst_128 {dimension_numbers = #tpu.dot_dimension_numbers<[1], [0], [0], [1], [0, 0, 1, 1], [], []>} : vector<16x32xf32>, vector<32x128xf32>, vector<16x128xf32> -> vector<16x128xf32>
    %274 = arith.addf %270, %273 : vector<16x128xf32>
    %275 = arith.negf %274 : vector<16x128xf32>
    %276 = math.exp %275 : vector<16x128xf32>
    %cst_129 = arith.constant 1.000000e+00 : f32
    %277 = vector.broadcast %cst_129 : f32 to vector<16x128xf32>
    %278 = arith.addf %277, %276 : vector<16x128xf32>
    %279 = arith.divf %277, %278 : vector<16x128xf32>
    %280 = vector.extract_strided_slice %274 {offsets = [0, 64], sizes = [16, 32], strides = [1, 1]} : vector<16x128xf32> to vector<16x32xf32>
    %281 = math.tanh %280 : vector<16x32xf32>
    %282 = vector.extract_strided_slice %279 {offsets = [0, 32], sizes = [16, 32], strides = [1, 1]} : vector<16x128xf32> to vector<16x32xf32>
    %283 = arith.mulf %282, %260 : vector<16x32xf32>
    %284 = vector.extract_strided_slice %279 {offsets = [0, 0], sizes = [16, 32], strides = [1, 1]} : vector<16x128xf32> to vector<16x32xf32>
    %285 = arith.mulf %284, %281 : vector<16x32xf32>
    %286 = arith.addf %283, %285 : vector<16x32xf32>
    %287 = vector.extract_strided_slice %279 {offsets = [0, 96], sizes = [16, 32], strides = [1, 1]} : vector<16x128xf32> to vector<16x32xf32>
    %288 = math.tanh %286 : vector<16x32xf32>
    %289 = arith.mulf %287, %288 : vector<16x32xf32>
    %290 = vector.extract_strided_slice %289 {offsets = [0, 0], sizes = [16, 16], strides = [1, 1]} : vector<16x32xf32> to vector<16x16xf32>
    %c160_130 = arith.constant 160 : index
    %c0_131 = arith.constant 0 : index
    %291 = vector.load %arg8[%c160_130, %c0_131] : memref<240x32xf32, #tpu.memory_space<vmem>>, vector<16x16xf32>
    tpu.vector_store %arg8[%c160_130, %c0_131], %290 {strides = array<i32>} : memref<240x32xf32, #tpu.memory_space<vmem>>, vector<16x16xf32>,
    %292 = vector.extract_strided_slice %289 {offsets = [0, 16], sizes = [16, 16], strides = [1, 1]} : vector<16x32xf32> to vector<16x16xf32>
    %c64_132 = arith.constant 64 : index
    %c16_133 = arith.constant 16 : index
    %293 = vector.load %arg8[%c64_132, %c16_133] : memref<240x32xf32, #tpu.memory_space<vmem>>, vector<16x16xf32>
    tpu.vector_store %arg8[%c64_132, %c16_133], %292 {strides = array<i32>} : memref<240x32xf32, #tpu.memory_space<vmem>>, vector<16x16xf32>,
    %c176_134 = arith.constant 176 : index
    %c0_135 = arith.constant 0 : index
    %294 = vector.load %arg7[%c176_134, %c0_135] : memref<240x256xf32, #tpu.memory_space<vmem>>, vector<16x128xf32>
    %c48_136 = arith.constant 48 : index
    %c128_137 = arith.constant 128 : index
    %295 = vector.load %arg7[%c48_136, %c128_137] : memref<240x256xf32, #tpu.memory_space<vmem>>, vector<16x128xf32>
    %296 = arith.addf %294, %295 : vector<16x128xf32>
    %c0_138 = arith.constant 0 : index
    %c0_139 = arith.constant 0 : index
    %c0_140 = arith.constant 0 : index
    %297 = vector.load %arg4[%c0_138, %c0_139, %c0_140] : memref<2x32x128xf32, #tpu.memory_space<vmem>>, vector<1x32x128xf32>
    %298 = vector.shape_cast %297 : vector<1x32x128xf32> to vector<32x128xf32>
    %cst_141 = arith.constant dense<0.000000e+00> : vector<16x128xf32>
    %299 = tpu.matmul %289, %298, %cst_141 {dimension_numbers = #tpu.dot_dimension_numbers<[1], [0], [0], [1], [0, 0, 1, 1], [], []>} : vector<16x32xf32>, vector<32x128xf32>, vector<16x128xf32> -> vector<16x128xf32>
    %300 = arith.addf %296, %299 : vector<16x128xf32>
    %301 = arith.negf %300 : vector<16x128xf32>
    %302 = math.exp %301 : vector<16x128xf32>
    %cst_142 = arith.constant 1.000000e+00 : f32
    %303 = vector.broadcast %cst_142 : f32 to vector<16x128xf32>
    %304 = arith.addf %303, %302 : vector<16x128xf32>
    %305 = arith.divf %303, %304 : vector<16x128xf32>
    %306 = vector.extract_strided_slice %300 {offsets = [0, 64], sizes = [16, 32], strides = [1, 1]} : vector<16x128xf32> to vector<16x32xf32>
    %307 = math.tanh %306 : vector<16x32xf32>
    %308 = vector.extract_strided_slice %305 {offsets = [0, 32], sizes = [16, 32], strides = [1, 1]} : vector<16x128xf32> to vector<16x32xf32>
    %309 = arith.mulf %308, %286 : vector<16x32xf32>
    %310 = vector.extract_strided_slice %305 {offsets = [0, 0], sizes = [16, 32], strides = [1, 1]} : vector<16x128xf32> to vector<16x32xf32>
    %311 = arith.mulf %310, %307 : vector<16x32xf32>
    %312 = arith.addf %309, %311 : vector<16x32xf32>
    %313 = vector.extract_strided_slice %305 {offsets = [0, 96], sizes = [16, 32], strides = [1, 1]} : vector<16x128xf32> to vector<16x32xf32>
    %314 = math.tanh %312 : vector<16x32xf32>
    %315 = arith.mulf %313, %314 : vector<16x32xf32>
    %316 = vector.extract_strided_slice %315 {offsets = [0, 0], sizes = [16, 16], strides = [1, 1]} : vector<16x32xf32> to vector<16x16xf32>
    %c176_143 = arith.constant 176 : index
    %c0_144 = arith.constant 0 : index
    %317 = vector.load %arg8[%c176_143, %c0_144] : memref<240x32xf32, #tpu.memory_space<vmem>>, vector<16x16xf32>
    tpu.vector_store %arg8[%c176_143, %c0_144], %316 {strides = array<i32>} : memref<240x32xf32, #tpu.memory_space<vmem>>, vector<16x16xf32>,
    %318 = vector.extract_strided_slice %315 {offsets = [0, 16], sizes = [16, 16], strides = [1, 1]} : vector<16x32xf32> to vector<16x16xf32>
    %c48_145 = arith.constant 48 : index
    %c16_146 = arith.constant 16 : index
    %319 = vector.load %arg8[%c48_145, %c16_146] : memref<240x32xf32, #tpu.memory_space<vmem>>, vector<16x16xf32>
    tpu.vector_store %arg8[%c48_145, %c16_146], %318 {strides = array<i32>} : memref<240x32xf32, #tpu.memory_space<vmem>>, vector<16x16xf32>,
    %c192_147 = arith.constant 192 : index
    %c0_148 = arith.constant 0 : index
    %320 = vector.load %arg7[%c192_147, %c0_148] : memref<240x256xf32, #tpu.memory_space<vmem>>, vector<16x128xf32>
    %c32_149 = arith.constant 32 : index
    %c128_150 = arith.constant 128 : index
    %321 = vector.load %arg7[%c32_149, %c128_150] : memref<240x256xf32, #tpu.memory_space<vmem>>, vector<16x128xf32>
    %322 = arith.addf %320, %321 : vector<16x128xf32>
    %c0_151 = arith.constant 0 : index
    %c0_152 = arith.constant 0 : index
    %c0_153 = arith.constant 0 : index
    %323 = vector.load %arg4[%c0_151, %c0_152, %c0_153] : memref<2x32x128xf32, #tpu.memory_space<vmem>>, vector<1x32x128xf32>
    %324 = vector.shape_cast %323 : vector<1x32x128xf32> to vector<32x128xf32>
    %cst_154 = arith.constant dense<0.000000e+00> : vector<16x128xf32>
    %325 = tpu.matmul %315, %324, %cst_154 {dimension_numbers = #tpu.dot_dimension_numbers<[1], [0], [0], [1], [0, 0, 1, 1], [], []>} : vector<16x32xf32>, vector<32x128xf32>, vector<16x128xf32> -> vector<16x128xf32>
    %326 = arith.addf %322, %325 : vector<16x128xf32>
    %327 = arith.negf %326 : vector<16x128xf32>
    %328 = math.exp %327 : vector<16x128xf32>
    %cst_155 = arith.constant 1.000000e+00 : f32
    %329 = vector.broadcast %cst_155 : f32 to vector<16x128xf32>
    %330 = arith.addf %329, %328 : vector<16x128xf32>
    %331 = arith.divf %329, %330 : vector<16x128xf32>
    %332 = vector.extract_strided_slice %326 {offsets = [0, 64], sizes = [16, 32], strides = [1, 1]} : vector<16x128xf32> to vector<16x32xf32>
    %333 = math.tanh %332 : vector<16x32xf32>
    %334 = vector.extract_strided_slice %331 {offsets = [0, 32], sizes = [16, 32], strides = [1, 1]} : vector<16x128xf32> to vector<16x32xf32>
    %335 = arith.mulf %334, %312 : vector<16x32xf32>
    %336 = vector.extract_strided_slice %331 {offsets = [0, 0], sizes = [16, 32], strides = [1, 1]} : vector<16x128xf32> to vector<16x32xf32>
    %337 = arith.mulf %336, %333 : vector<16x32xf32>
    %338 = arith.addf %335, %337 : vector<16x32xf32>
    %339 = vector.extract_strided_slice %331 {offsets = [0, 96], sizes = [16, 32], strides = [1, 1]} : vector<16x128xf32> to vector<16x32xf32>
    %340 = math.tanh %338 : vector<16x32xf32>
    %341 = arith.mulf %339, %340 : vector<16x32xf32>
    %342 = vector.extract_strided_slice %341 {offsets = [0, 0], sizes = [16, 16], strides = [1, 1]} : vector<16x32xf32> to vector<16x16xf32>
    %c192_156 = arith.constant 192 : index
    %c0_157 = arith.constant 0 : index
    %343 = vector.load %arg8[%c192_156, %c0_157] : memref<240x32xf32, #tpu.memory_space<vmem>>, vector<16x16xf32>
    tpu.vector_store %arg8[%c192_156, %c0_157], %342 {strides = array<i32>} : memref<240x32xf32, #tpu.memory_space<vmem>>, vector<16x16xf32>,
    %344 = vector.extract_strided_slice %341 {offsets = [0, 16], sizes = [16, 16], strides = [1, 1]} : vector<16x32xf32> to vector<16x16xf32>
    %c32_158 = arith.constant 32 : index
    %c16_159 = arith.constant 16 : index
    %345 = vector.load %arg8[%c32_158, %c16_159] : memref<240x32xf32, #tpu.memory_space<vmem>>, vector<16x16xf32>
    tpu.vector_store %arg8[%c32_158, %c16_159], %344 {strides = array<i32>} : memref<240x32xf32, #tpu.memory_space<vmem>>, vector<16x16xf32>,
    %c208_160 = arith.constant 208 : index
    %c0_161 = arith.constant 0 : index
    %346 = vector.load %arg7[%c208_160, %c0_161] : memref<240x256xf32, #tpu.memory_space<vmem>>, vector<16x128xf32>
    %c16_162 = arith.constant 16 : index
    %c128_163 = arith.constant 128 : index
    %347 = vector.load %arg7[%c16_162, %c128_163] : memref<240x256xf32, #tpu.memory_space<vmem>>, vector<16x128xf32>
    %348 = arith.addf %346, %347 : vector<16x128xf32>
    %c0_164 = arith.constant 0 : index
    %c0_165 = arith.constant 0 : index
    %c0_166 = arith.constant 0 : index
    %349 = vector.load %arg4[%c0_164, %c0_165, %c0_166] : memref<2x32x128xf32, #tpu.memory_space<vmem>>, vector<1x32x128xf32>
    %350 = vector.shape_cast %349 : vector<1x32x128xf32> to vector<32x128xf32>
    %cst_167 = arith.constant dense<0.000000e+00> : vector<16x128xf32>
    %351 = tpu.matmul %341, %350, %cst_167 {dimension_numbers = #tpu.dot_dimension_numbers<[1], [0], [0], [1], [0, 0, 1, 1], [], []>} : vector<16x32xf32>, vector<32x128xf32>, vector<16x128xf32> -> vector<16x128xf32>
    %352 = arith.addf %348, %351 : vector<16x128xf32>
    %353 = arith.negf %352 : vector<16x128xf32>
    %354 = math.exp %353 : vector<16x128xf32>
    %cst_168 = arith.constant 1.000000e+00 : f32
    %355 = vector.broadcast %cst_168 : f32 to vector<16x128xf32>
    %356 = arith.addf %355, %354 : vector<16x128xf32>
    %357 = arith.divf %355, %356 : vector<16x128xf32>
    %358 = vector.extract_strided_slice %352 {offsets = [0, 64], sizes = [16, 32], strides = [1, 1]} : vector<16x128xf32> to vector<16x32xf32>
    %359 = math.tanh %358 : vector<16x32xf32>
    %360 = vector.extract_strided_slice %357 {offsets = [0, 32], sizes = [16, 32], strides = [1, 1]} : vector<16x128xf32> to vector<16x32xf32>
    %361 = arith.mulf %360, %338 : vector<16x32xf32>
    %362 = vector.extract_strided_slice %357 {offsets = [0, 0], sizes = [16, 32], strides = [1, 1]} : vector<16x128xf32> to vector<16x32xf32>
    %363 = arith.mulf %362, %359 : vector<16x32xf32>
    %364 = arith.addf %361, %363 : vector<16x32xf32>
    %365 = vector.extract_strided_slice %357 {offsets = [0, 96], sizes = [16, 32], strides = [1, 1]} : vector<16x128xf32> to vector<16x32xf32>
    %366 = math.tanh %364 : vector<16x32xf32>
    %367 = arith.mulf %365, %366 : vector<16x32xf32>
    %368 = vector.extract_strided_slice %367 {offsets = [0, 0], sizes = [16, 16], strides = [1, 1]} : vector<16x32xf32> to vector<16x16xf32>
    %c208_169 = arith.constant 208 : index
    %c0_170 = arith.constant 0 : index
    %369 = vector.load %arg8[%c208_169, %c0_170] : memref<240x32xf32, #tpu.memory_space<vmem>>, vector<16x16xf32>
    tpu.vector_store %arg8[%c208_169, %c0_170], %368 {strides = array<i32>} : memref<240x32xf32, #tpu.memory_space<vmem>>, vector<16x16xf32>,
    %370 = vector.extract_strided_slice %367 {offsets = [0, 16], sizes = [16, 16], strides = [1, 1]} : vector<16x32xf32> to vector<16x16xf32>
    %c16_171 = arith.constant 16 : index
    %c16_172 = arith.constant 16 : index
    %371 = vector.load %arg8[%c16_171, %c16_172] : memref<240x32xf32, #tpu.memory_space<vmem>>, vector<16x16xf32>
    tpu.vector_store %arg8[%c16_171, %c16_172], %370 {strides = array<i32>} : memref<240x32xf32, #tpu.memory_space<vmem>>, vector<16x16xf32>,
    %c224_173 = arith.constant 224 : index
    %c0_174 = arith.constant 0 : index
    %372 = vector.load %arg7[%c224_173, %c0_174] : memref<240x256xf32, #tpu.memory_space<vmem>>, vector<16x128xf32>
    %c0_175 = arith.constant 0 : index
    %c128_176 = arith.constant 128 : index
    %373 = vector.load %arg7[%c0_175, %c128_176] : memref<240x256xf32, #tpu.memory_space<vmem>>, vector<16x128xf32>
    %374 = arith.addf %372, %373 : vector<16x128xf32>
    %c0_177 = arith.constant 0 : index
    %c0_178 = arith.constant 0 : index
    %c0_179 = arith.constant 0 : index
    %375 = vector.load %arg4[%c0_177, %c0_178, %c0_179] : memref<2x32x128xf32, #tpu.memory_space<vmem>>, vector<1x32x128xf32>
    %376 = vector.shape_cast %375 : vector<1x32x128xf32> to vector<32x128xf32>
    %cst_180 = arith.constant dense<0.000000e+00> : vector<16x128xf32>
    %377 = tpu.matmul %367, %376, %cst_180 {dimension_numbers = #tpu.dot_dimension_numbers<[1], [0], [0], [1], [0, 0, 1, 1], [], []>} : vector<16x32xf32>, vector<32x128xf32>, vector<16x128xf32> -> vector<16x128xf32>
    %378 = arith.addf %374, %377 : vector<16x128xf32>
    %379 = arith.negf %378 : vector<16x128xf32>
    %380 = math.exp %379 : vector<16x128xf32>
    %cst_181 = arith.constant 1.000000e+00 : f32
    %381 = vector.broadcast %cst_181 : f32 to vector<16x128xf32>
    %382 = arith.addf %381, %380 : vector<16x128xf32>
    %383 = arith.divf %381, %382 : vector<16x128xf32>
    %384 = vector.extract_strided_slice %378 {offsets = [0, 64], sizes = [16, 32], strides = [1, 1]} : vector<16x128xf32> to vector<16x32xf32>
    %385 = math.tanh %384 : vector<16x32xf32>
    %386 = vector.extract_strided_slice %383 {offsets = [0, 32], sizes = [16, 32], strides = [1, 1]} : vector<16x128xf32> to vector<16x32xf32>
    %387 = arith.mulf %386, %364 : vector<16x32xf32>
    %388 = vector.extract_strided_slice %383 {offsets = [0, 0], sizes = [16, 32], strides = [1, 1]} : vector<16x128xf32> to vector<16x32xf32>
    %389 = arith.mulf %388, %385 : vector<16x32xf32>
    %390 = arith.addf %387, %389 : vector<16x32xf32>
    %391 = vector.extract_strided_slice %383 {offsets = [0, 96], sizes = [16, 32], strides = [1, 1]} : vector<16x128xf32> to vector<16x32xf32>
    %392 = math.tanh %390 : vector<16x32xf32>
    %393 = arith.mulf %391, %392 : vector<16x32xf32>
    %394 = vector.extract_strided_slice %393 {offsets = [0, 0], sizes = [16, 16], strides = [1, 1]} : vector<16x32xf32> to vector<16x16xf32>
    %c224_182 = arith.constant 224 : index
    %c0_183 = arith.constant 0 : index
    %395 = vector.load %arg8[%c224_182, %c0_183] : memref<240x32xf32, #tpu.memory_space<vmem>>, vector<16x16xf32>
    tpu.vector_store %arg8[%c224_182, %c0_183], %394 {strides = array<i32>} : memref<240x32xf32, #tpu.memory_space<vmem>>, vector<16x16xf32>,
    %396 = vector.extract_strided_slice %393 {offsets = [0, 16], sizes = [16, 16], strides = [1, 1]} : vector<16x32xf32> to vector<16x16xf32>
    %c0_184 = arith.constant 0 : index
    %c16_185 = arith.constant 16 : index
    %397 = vector.load %arg8[%c0_184, %c16_185] : memref<240x32xf32, #tpu.memory_space<vmem>>, vector<16x16xf32>
    tpu.vector_store %arg8[%c0_184, %c16_185], %396 {strides = array<i32>} : memref<240x32xf32, #tpu.memory_space<vmem>>, vector<16x16xf32>,
    %c0_186 = arith.constant 0 : index
    %c0_187 = arith.constant 0 : index
    %398 = vector.load %arg8[%c0_186, %c0_187] : memref<240x32xf32, #tpu.memory_space<vmem>>, vector<240x32xf32>
    %c0_188 = arith.constant 0 : index
    %c0_189 = arith.constant 0 : index
    %399 = vector.load %arg3[%c0_188, %c0_189] : memref<32x256xf32, #tpu.memory_space<vmem>>, vector<32x256xf32>
    %cst_190 = arith.constant dense<0.000000e+00> : vector<240x256xf32>
    %400 = tpu.matmul %398, %399, %cst_190 {dimension_numbers = #tpu.dot_dimension_numbers<[1], [0], [0], [1], [0, 0, 1, 1], [], []>} : vector<240x32xf32>, vector<32x256xf32>, vector<240x256xf32> -> vector<240x256xf32>
    %c0_191 = arith.constant 0 : index
    %c0_192 = arith.constant 0 : index
    %401 = vector.load %arg5[%c0_191, %c0_192] : memref<1x256xf32, #tpu.memory_space<vmem>>, vector<1x256xf32>
    %402 = vector.broadcast %401 : vector<1x256xf32> to vector<240x256xf32>
    %403 = arith.addf %400, %402 : vector<240x256xf32>
    %c0_193 = arith.constant 0 : index
    %c0_194 = arith.constant 0 : index
    %404 = vector.load %arg7[%c0_193, %c0_194] : memref<240x256xf32, #tpu.memory_space<vmem>>, vector<240x256xf32>
    tpu.vector_store %arg7[%c0_193, %c0_194], %403 {strides = array<i32>} : memref<240x256xf32, #tpu.memory_space<vmem>>, vector<240x256xf32>,
    %c0_195 = arith.constant 0 : index
    %c0_196 = arith.constant 0 : index
    %405 = vector.load %arg7[%c0_195, %c0_196] : memref<240x256xf32, #tpu.memory_space<vmem>>, vector<16x128xf32>
    %c224_197 = arith.constant 224 : index
    %c128_198 = arith.constant 128 : index
    %406 = vector.load %arg7[%c224_197, %c128_198] : memref<240x256xf32, #tpu.memory_space<vmem>>, vector<16x128xf32>
    %407 = arith.addf %405, %406 : vector<16x128xf32>
    %c1 = arith.constant 1 : index
    %c0_199 = arith.constant 0 : index
    %c0_200 = arith.constant 0 : index
    %408 = vector.load %arg4[%c1, %c0_199, %c0_200] : memref<2x32x128xf32, #tpu.memory_space<vmem>>, vector<1x32x128xf32>
    %409 = vector.shape_cast %408 : vector<1x32x128xf32> to vector<32x128xf32>
    %cst_201 = arith.constant dense<0.000000e+00> : vector<16x128xf32>
    %410 = tpu.matmul %10, %409, %cst_201 {dimension_numbers = #tpu.dot_dimension_numbers<[1], [0], [0], [1], [0, 0, 1, 1], [], []>} : vector<16x32xf32>, vector<32x128xf32>, vector<16x128xf32> -> vector<16x128xf32>
    %411 = arith.addf %407, %410 : vector<16x128xf32>
    %412 = arith.negf %411 : vector<16x128xf32>
    %413 = math.exp %412 : vector<16x128xf32>
    %cst_202 = arith.constant 1.000000e+00 : f32
    %414 = vector.broadcast %cst_202 : f32 to vector<16x128xf32>
    %415 = arith.addf %414, %413 : vector<16x128xf32>
    %416 = arith.divf %414, %415 : vector<16x128xf32>
    %417 = vector.extract_strided_slice %411 {offsets = [0, 64], sizes = [16, 32], strides = [1, 1]} : vector<16x128xf32> to vector<16x32xf32>
    %418 = math.tanh %417 : vector<16x32xf32>
    %419 = vector.extract_strided_slice %416 {offsets = [0, 32], sizes = [16, 32], strides = [1, 1]} : vector<16x128xf32> to vector<16x32xf32>
    %420 = arith.mulf %419, %10 : vector<16x32xf32>
    %421 = vector.extract_strided_slice %416 {offsets = [0, 0], sizes = [16, 32], strides = [1, 1]} : vector<16x128xf32> to vector<16x32xf32>
    %422 = arith.mulf %421, %418 : vector<16x32xf32>
    %423 = arith.addf %420, %422 : vector<16x32xf32>
    %424 = vector.extract_strided_slice %416 {offsets = [0, 96], sizes = [16, 32], strides = [1, 1]} : vector<16x128xf32> to vector<16x32xf32>
    %425 = math.tanh %423 : vector<16x32xf32>
    %426 = arith.mulf %424, %425 : vector<16x32xf32>
    %427 = vector.extract_strided_slice %426 {offsets = [0, 0], sizes = [16, 16], strides = [1, 1]} : vector<16x32xf32> to vector<16x16xf32>
    %c0_203 = arith.constant 0 : index
    %c0_204 = arith.constant 0 : index
    %c0_205 = arith.constant 0 : index
    %428 = vector.load %arg6[%c0_203, %c0_204, %c0_205] : memref<1x16x480xf32, #tpu.memory_space<vmem>>, vector<1x16x16xf32>
    %429 = vector.shape_cast %428 : vector<1x16x16xf32> to vector<16x16xf32>
    %430 = vector.shape_cast %427 : vector<16x16xf32> to vector<1x16x16xf32>
    tpu.vector_store %arg6[%c0_203, %c0_204, %c0_205], %430 {strides = array<i32>} : memref<1x16x480xf32, #tpu.memory_space<vmem>>, vector<1x16x16xf32>,
    %431 = vector.extract_strided_slice %426 {offsets = [0, 16], sizes = [16, 16], strides = [1, 1]} : vector<16x32xf32> to vector<16x16xf32>
    %c0_206 = arith.constant 0 : index
    %c0_207 = arith.constant 0 : index
    %c464 = arith.constant 464 : index
    %432 = vector.load %arg6[%c0_206, %c0_207, %c464] : memref<1x16x480xf32, #tpu.memory_space<vmem>>, vector<1x16x16xf32>
    %433 = vector.shape_cast %432 : vector<1x16x16xf32> to vector<16x16xf32>
    %434 = vector.shape_cast %431 : vector<16x16xf32> to vector<1x16x16xf32>
    tpu.vector_store %arg6[%c0_206, %c0_207, %c464], %434 {strides = array<i32>} : memref<1x16x480xf32, #tpu.memory_space<vmem>>, vector<1x16x16xf32>,
    %c16_208 = arith.constant 16 : index
    %c0_209 = arith.constant 0 : index
    %435 = vector.load %arg7[%c16_208, %c0_209] : memref<240x256xf32, #tpu.memory_space<vmem>>, vector<16x128xf32>
    %c208_210 = arith.constant 208 : index
    %c128_211 = arith.constant 128 : index
    %436 = vector.load %arg7[%c208_210, %c128_211] : memref<240x256xf32, #tpu.memory_space<vmem>>, vector<16x128xf32>
    %437 = arith.addf %435, %436 : vector<16x128xf32>
    %c1_212 = arith.constant 1 : index
    %c0_213 = arith.constant 0 : index
    %c0_214 = arith.constant 0 : index
    %438 = vector.load %arg4[%c1_212, %c0_213, %c0_214] : memref<2x32x128xf32, #tpu.memory_space<vmem>>, vector<1x32x128xf32>
    %439 = vector.shape_cast %438 : vector<1x32x128xf32> to vector<32x128xf32>
    %cst_215 = arith.constant dense<0.000000e+00> : vector<16x128xf32>
    %440 = tpu.matmul %426, %439, %cst_215 {dimension_numbers = #tpu.dot_dimension_numbers<[1], [0], [0], [1], [0, 0, 1, 1], [], []>} : vector<16x32xf32>, vector<32x128xf32>, vector<16x128xf32> -> vector<16x128xf32>
    %441 = arith.addf %437, %440 : vector<16x128xf32>
    %442 = arith.negf %441 : vector<16x128xf32>
    %443 = math.exp %442 : vector<16x128xf32>
    %cst_216 = arith.constant 1.000000e+00 : f32
    %444 = vector.broadcast %cst_216 : f32 to vector<16x128xf32>
    %445 = arith.addf %444, %443 : vector<16x128xf32>
    %446 = arith.divf %444, %445 : vector<16x128xf32>
    %447 = vector.extract_strided_slice %441 {offsets = [0, 64], sizes = [16, 32], strides = [1, 1]} : vector<16x128xf32> to vector<16x32xf32>
    %448 = math.tanh %447 : vector<16x32xf32>
    %449 = vector.extract_strided_slice %446 {offsets = [0, 32], sizes = [16, 32], strides = [1, 1]} : vector<16x128xf32> to vector<16x32xf32>
    %450 = arith.mulf %449, %423 : vector<16x32xf32>
    %451 = vector.extract_strided_slice %446 {offsets = [0, 0], sizes = [16, 32], strides = [1, 1]} : vector<16x128xf32> to vector<16x32xf32>
    %452 = arith.mulf %451, %448 : vector<16x32xf32>
    %453 = arith.addf %450, %452 : vector<16x32xf32>
    %454 = vector.extract_strided_slice %446 {offsets = [0, 96], sizes = [16, 32], strides = [1, 1]} : vector<16x128xf32> to vector<16x32xf32>
    %455 = math.tanh %453 : vector<16x32xf32>
    %456 = arith.mulf %454, %455 : vector<16x32xf32>
    %457 = vector.extract_strided_slice %456 {offsets = [0, 0], sizes = [16, 16], strides = [1, 1]} : vector<16x32xf32> to vector<16x16xf32>
    %c0_217 = arith.constant 0 : index
    %c0_218 = arith.constant 0 : index
    %c32_219 = arith.constant 32 : index
    %458 = vector.load %arg6[%c0_217, %c0_218, %c32_219] : memref<1x16x480xf32, #tpu.memory_space<vmem>>, vector<1x16x16xf32>
    %459 = vector.shape_cast %458 : vector<1x16x16xf32> to vector<16x16xf32>
    %460 = vector.shape_cast %457 : vector<16x16xf32> to vector<1x16x16xf32>
    tpu.vector_store %arg6[%c0_217, %c0_218, %c32_219], %460 {strides = array<i32>} : memref<1x16x480xf32, #tpu.memory_space<vmem>>, vector<1x16x16xf32>,
    %461 = vector.extract_strided_slice %456 {offsets = [0, 16], sizes = [16, 16], strides = [1, 1]} : vector<16x32xf32> to vector<16x16xf32>
    %c0_220 = arith.constant 0 : index
    %c0_221 = arith.constant 0 : index
    %c432 = arith.constant 432 : index
    %462 = vector.load %arg6[%c0_220, %c0_221, %c432] : memref<1x16x480xf32, #tpu.memory_space<vmem>>, vector<1x16x16xf32>
    %463 = vector.shape_cast %462 : vector<1x16x16xf32> to vector<16x16xf32>
    %464 = vector.shape_cast %461 : vector<16x16xf32> to vector<1x16x16xf32>
    tpu.vector_store %arg6[%c0_220, %c0_221, %c432], %464 {strides = array<i32>} : memref<1x16x480xf32, #tpu.memory_space<vmem>>, vector<1x16x16xf32>,
    %c32_222 = arith.constant 32 : index
    %c0_223 = arith.constant 0 : index
    %465 = vector.load %arg7[%c32_222, %c0_223] : memref<240x256xf32, #tpu.memory_space<vmem>>, vector<16x128xf32>
    %c192_224 = arith.constant 192 : index
    %c128_225 = arith.constant 128 : index
    %466 = vector.load %arg7[%c192_224, %c128_225] : memref<240x256xf32, #tpu.memory_space<vmem>>, vector<16x128xf32>
    %467 = arith.addf %465, %466 : vector<16x128xf32>
    %c1_226 = arith.constant 1 : index
    %c0_227 = arith.constant 0 : index
    %c0_228 = arith.constant 0 : index
    %468 = vector.load %arg4[%c1_226, %c0_227, %c0_228] : memref<2x32x128xf32, #tpu.memory_space<vmem>>, vector<1x32x128xf32>
    %469 = vector.shape_cast %468 : vector<1x32x128xf32> to vector<32x128xf32>
    %cst_229 = arith.constant dense<0.000000e+00> : vector<16x128xf32>
    %470 = tpu.matmul %456, %469, %cst_229 {dimension_numbers = #tpu.dot_dimension_numbers<[1], [0], [0], [1], [0, 0, 1, 1], [], []>} : vector<16x32xf32>, vector<32x128xf32>, vector<16x128xf32> -> vector<16x128xf32>
    %471 = arith.addf %467, %470 : vector<16x128xf32>
    %472 = arith.negf %471 : vector<16x128xf32>
    %473 = math.exp %472 : vector<16x128xf32>
    %cst_230 = arith.constant 1.000000e+00 : f32
    %474 = vector.broadcast %cst_230 : f32 to vector<16x128xf32>
    %475 = arith.addf %474, %473 : vector<16x128xf32>
    %476 = arith.divf %474, %475 : vector<16x128xf32>
    %477 = vector.extract_strided_slice %471 {offsets = [0, 64], sizes = [16, 32], strides = [1, 1]} : vector<16x128xf32> to vector<16x32xf32>
    %478 = math.tanh %477 : vector<16x32xf32>
    %479 = vector.extract_strided_slice %476 {offsets = [0, 32], sizes = [16, 32], strides = [1, 1]} : vector<16x128xf32> to vector<16x32xf32>
    %480 = arith.mulf %479, %453 : vector<16x32xf32>
    %481 = vector.extract_strided_slice %476 {offsets = [0, 0], sizes = [16, 32], strides = [1, 1]} : vector<16x128xf32> to vector<16x32xf32>
    %482 = arith.mulf %481, %478 : vector<16x32xf32>
    %483 = arith.addf %480, %482 : vector<16x32xf32>
    %484 = vector.extract_strided_slice %476 {offsets = [0, 96], sizes = [16, 32], strides = [1, 1]} : vector<16x128xf32> to vector<16x32xf32>
    %485 = math.tanh %483 : vector<16x32xf32>
    %486 = arith.mulf %484, %485 : vector<16x32xf32>
    %487 = vector.extract_strided_slice %486 {offsets = [0, 0], sizes = [16, 16], strides = [1, 1]} : vector<16x32xf32> to vector<16x16xf32>
    %c0_231 = arith.constant 0 : index
    %c0_232 = arith.constant 0 : index
    %c64_233 = arith.constant 64 : index
    %488 = vector.load %arg6[%c0_231, %c0_232, %c64_233] : memref<1x16x480xf32, #tpu.memory_space<vmem>>, vector<1x16x16xf32>
    %489 = vector.shape_cast %488 : vector<1x16x16xf32> to vector<16x16xf32>
    %490 = vector.shape_cast %487 : vector<16x16xf32> to vector<1x16x16xf32>
    tpu.vector_store %arg6[%c0_231, %c0_232, %c64_233], %490 {strides = array<i32>} : memref<1x16x480xf32, #tpu.memory_space<vmem>>, vector<1x16x16xf32>,
    %491 = vector.extract_strided_slice %486 {offsets = [0, 16], sizes = [16, 16], strides = [1, 1]} : vector<16x32xf32> to vector<16x16xf32>
    %c0_234 = arith.constant 0 : index
    %c0_235 = arith.constant 0 : index
    %c400 = arith.constant 400 : index
    %492 = vector.load %arg6[%c0_234, %c0_235, %c400] : memref<1x16x480xf32, #tpu.memory_space<vmem>>, vector<1x16x16xf32>
    %493 = vector.shape_cast %492 : vector<1x16x16xf32> to vector<16x16xf32>
    %494 = vector.shape_cast %491 : vector<16x16xf32> to vector<1x16x16xf32>
    tpu.vector_store %arg6[%c0_234, %c0_235, %c400], %494 {strides = array<i32>} : memref<1x16x480xf32, #tpu.memory_space<vmem>>, vector<1x16x16xf32>,
    %c48_236 = arith.constant 48 : index
    %c0_237 = arith.constant 0 : index
    %495 = vector.load %arg7[%c48_236, %c0_237] : memref<240x256xf32, #tpu.memory_space<vmem>>, vector<16x128xf32>
    %c176_238 = arith.constant 176 : index
    %c128_239 = arith.constant 128 : index
    %496 = vector.load %arg7[%c176_238, %c128_239] : memref<240x256xf32, #tpu.memory_space<vmem>>, vector<16x128xf32>
    %497 = arith.addf %495, %496 : vector<16x128xf32>
    %c1_240 = arith.constant 1 : index
    %c0_241 = arith.constant 0 : index
    %c0_242 = arith.constant 0 : index
    %498 = vector.load %arg4[%c1_240, %c0_241, %c0_242] : memref<2x32x128xf32, #tpu.memory_space<vmem>>, vector<1x32x128xf32>
    %499 = vector.shape_cast %498 : vector<1x32x128xf32> to vector<32x128xf32>
    %cst_243 = arith.constant dense<0.000000e+00> : vector<16x128xf32>
    %500 = tpu.matmul %486, %499, %cst_243 {dimension_numbers = #tpu.dot_dimension_numbers<[1], [0], [0], [1], [0, 0, 1, 1], [], []>} : vector<16x32xf32>, vector<32x128xf32>, vector<16x128xf32> -> vector<16x128xf32>
    %501 = arith.addf %497, %500 : vector<16x128xf32>
    %502 = arith.negf %501 : vector<16x128xf32>
    %503 = math.exp %502 : vector<16x128xf32>
    %cst_244 = arith.constant 1.000000e+00 : f32
    %504 = vector.broadcast %cst_244 : f32 to vector<16x128xf32>
    %505 = arith.addf %504, %503 : vector<16x128xf32>
    %506 = arith.divf %504, %505 : vector<16x128xf32>
    %507 = vector.extract_strided_slice %501 {offsets = [0, 64], sizes = [16, 32], strides = [1, 1]} : vector<16x128xf32> to vector<16x32xf32>
    %508 = math.tanh %507 : vector<16x32xf32>
    %509 = vector.extract_strided_slice %506 {offsets = [0, 32], sizes = [16, 32], strides = [1, 1]} : vector<16x128xf32> to vector<16x32xf32>
    %510 = arith.mulf %509, %483 : vector<16x32xf32>
    %511 = vector.extract_strided_slice %506 {offsets = [0, 0], sizes = [16, 32], strides = [1, 1]} : vector<16x128xf32> to vector<16x32xf32>
    %512 = arith.mulf %511, %508 : vector<16x32xf32>
    %513 = arith.addf %510, %512 : vector<16x32xf32>
    %514 = vector.extract_strided_slice %506 {offsets = [0, 96], sizes = [16, 32], strides = [1, 1]} : vector<16x128xf32> to vector<16x32xf32>
    %515 = math.tanh %513 : vector<16x32xf32>
    %516 = arith.mulf %514, %515 : vector<16x32xf32>
    %517 = vector.extract_strided_slice %516 {offsets = [0, 0], sizes = [16, 16], strides = [1, 1]} : vector<16x32xf32> to vector<16x16xf32>
    %c0_245 = arith.constant 0 : index
    %c0_246 = arith.constant 0 : index
    %c96_247 = arith.constant 96 : index
    %518 = vector.load %arg6[%c0_245, %c0_246, %c96_247] : memref<1x16x480xf32, #tpu.memory_space<vmem>>, vector<1x16x16xf32>
    %519 = vector.shape_cast %518 : vector<1x16x16xf32> to vector<16x16xf32>
    %520 = vector.shape_cast %517 : vector<16x16xf32> to vector<1x16x16xf32>
    tpu.vector_store %arg6[%c0_245, %c0_246, %c96_247], %520 {strides = array<i32>} : memref<1x16x480xf32, #tpu.memory_space<vmem>>, vector<1x16x16xf32>,
    %521 = vector.extract_strided_slice %516 {offsets = [0, 16], sizes = [16, 16], strides = [1, 1]} : vector<16x32xf32> to vector<16x16xf32>
    %c0_248 = arith.constant 0 : index
    %c0_249 = arith.constant 0 : index
    %c368 = arith.constant 368 : index
    %522 = vector.load %arg6[%c0_248, %c0_249, %c368] : memref<1x16x480xf32, #tpu.memory_space<vmem>>, vector<1x16x16xf32>
    %523 = vector.shape_cast %522 : vector<1x16x16xf32> to vector<16x16xf32>
    %524 = vector.shape_cast %521 : vector<16x16xf32> to vector<1x16x16xf32>
    tpu.vector_store %arg6[%c0_248, %c0_249, %c368], %524 {strides = array<i32>} : memref<1x16x480xf32, #tpu.memory_space<vmem>>, vector<1x16x16xf32>,
    %c64_250 = arith.constant 64 : index
    %c0_251 = arith.constant 0 : index
    %525 = vector.load %arg7[%c64_250, %c0_251] : memref<240x256xf32, #tpu.memory_space<vmem>>, vector<16x128xf32>
    %c160_252 = arith.constant 160 : index
    %c128_253 = arith.constant 128 : index
    %526 = vector.load %arg7[%c160_252, %c128_253] : memref<240x256xf32, #tpu.memory_space<vmem>>, vector<16x128xf32>
    %527 = arith.addf %525, %526 : vector<16x128xf32>
    %c1_254 = arith.constant 1 : index
    %c0_255 = arith.constant 0 : index
    %c0_256 = arith.constant 0 : index
    %528 = vector.load %arg4[%c1_254, %c0_255, %c0_256] : memref<2x32x128xf32, #tpu.memory_space<vmem>>, vector<1x32x128xf32>
    %529 = vector.shape_cast %528 : vector<1x32x128xf32> to vector<32x128xf32>
    %cst_257 = arith.constant dense<0.000000e+00> : vector<16x128xf32>
    %530 = tpu.matmul %516, %529, %cst_257 {dimension_numbers = #tpu.dot_dimension_numbers<[1], [0], [0], [1], [0, 0, 1, 1], [], []>} : vector<16x32xf32>, vector<32x128xf32>, vector<16x128xf32> -> vector<16x128xf32>
    %531 = arith.addf %527, %530 : vector<16x128xf32>
    %532 = arith.negf %531 : vector<16x128xf32>
    %533 = math.exp %532 : vector<16x128xf32>
    %cst_258 = arith.constant 1.000000e+00 : f32
    %534 = vector.broadcast %cst_258 : f32 to vector<16x128xf32>
    %535 = arith.addf %534, %533 : vector<16x128xf32>
    %536 = arith.divf %534, %535 : vector<16x128xf32>
    %537 = vector.extract_strided_slice %531 {offsets = [0, 64], sizes = [16, 32], strides = [1, 1]} : vector<16x128xf32> to vector<16x32xf32>
    %538 = math.tanh %537 : vector<16x32xf32>
    %539 = vector.extract_strided_slice %536 {offsets = [0, 32], sizes = [16, 32], strides = [1, 1]} : vector<16x128xf32> to vector<16x32xf32>
    %540 = arith.mulf %539, %513 : vector<16x32xf32>
    %541 = vector.extract_strided_slice %536 {offsets = [0, 0], sizes = [16, 32], strides = [1, 1]} : vector<16x128xf32> to vector<16x32xf32>
    %542 = arith.mulf %541, %538 : vector<16x32xf32>
    %543 = arith.addf %540, %542 : vector<16x32xf32>
    %544 = vector.extract_strided_slice %536 {offsets = [0, 96], sizes = [16, 32], strides = [1, 1]} : vector<16x128xf32> to vector<16x32xf32>
    %545 = math.tanh %543 : vector<16x32xf32>
    %546 = arith.mulf %544, %545 : vector<16x32xf32>
    %547 = vector.extract_strided_slice %546 {offsets = [0, 0], sizes = [16, 16], strides = [1, 1]} : vector<16x32xf32> to vector<16x16xf32>
    %c0_259 = arith.constant 0 : index
    %c0_260 = arith.constant 0 : index
    %c128_261 = arith.constant 128 : index
    %548 = vector.load %arg6[%c0_259, %c0_260, %c128_261] : memref<1x16x480xf32, #tpu.memory_space<vmem>>, vector<1x16x16xf32>
    %549 = vector.shape_cast %548 : vector<1x16x16xf32> to vector<16x16xf32>
    %550 = vector.shape_cast %547 : vector<16x16xf32> to vector<1x16x16xf32>
    tpu.vector_store %arg6[%c0_259, %c0_260, %c128_261], %550 {strides = array<i32>} : memref<1x16x480xf32, #tpu.memory_space<vmem>>, vector<1x16x16xf32>,
    %551 = vector.extract_strided_slice %546 {offsets = [0, 16], sizes = [16, 16], strides = [1, 1]} : vector<16x32xf32> to vector<16x16xf32>
    %c0_262 = arith.constant 0 : index
    %c0_263 = arith.constant 0 : index
    %c336 = arith.constant 336 : index
    %552 = vector.load %arg6[%c0_262, %c0_263, %c336] : memref<1x16x480xf32, #tpu.memory_space<vmem>>, vector<1x16x16xf32>
    %553 = vector.shape_cast %552 : vector<1x16x16xf32> to vector<16x16xf32>
    %554 = vector.shape_cast %551 : vector<16x16xf32> to vector<1x16x16xf32>
    tpu.vector_store %arg6[%c0_262, %c0_263, %c336], %554 {strides = array<i32>} : memref<1x16x480xf32, #tpu.memory_space<vmem>>, vector<1x16x16xf32>,
    %c80_264 = arith.constant 80 : index
    %c0_265 = arith.constant 0 : index
    %555 = vector.load %arg7[%c80_264, %c0_265] : memref<240x256xf32, #tpu.memory_space<vmem>>, vector<16x128xf32>
    %c144_266 = arith.constant 144 : index
    %c128_267 = arith.constant 128 : index
    %556 = vector.load %arg7[%c144_266, %c128_267] : memref<240x256xf32, #tpu.memory_space<vmem>>, vector<16x128xf32>
    %557 = arith.addf %555, %556 : vector<16x128xf32>
    %c1_268 = arith.constant 1 : index
    %c0_269 = arith.constant 0 : index
    %c0_270 = arith.constant 0 : index
    %558 = vector.load %arg4[%c1_268, %c0_269, %c0_270] : memref<2x32x128xf32, #tpu.memory_space<vmem>>, vector<1x32x128xf32>
    %559 = vector.shape_cast %558 : vector<1x32x128xf32> to vector<32x128xf32>
    %cst_271 = arith.constant dense<0.000000e+00> : vector<16x128xf32>
    %560 = tpu.matmul %546, %559, %cst_271 {dimension_numbers = #tpu.dot_dimension_numbers<[1], [0], [0], [1], [0, 0, 1, 1], [], []>} : vector<16x32xf32>, vector<32x128xf32>, vector<16x128xf32> -> vector<16x128xf32>
    %561 = arith.addf %557, %560 : vector<16x128xf32>
    %562 = arith.negf %561 : vector<16x128xf32>
    %563 = math.exp %562 : vector<16x128xf32>
    %cst_272 = arith.constant 1.000000e+00 : f32
    %564 = vector.broadcast %cst_272 : f32 to vector<16x128xf32>
    %565 = arith.addf %564, %563 : vector<16x128xf32>
    %566 = arith.divf %564, %565 : vector<16x128xf32>
    %567 = vector.extract_strided_slice %561 {offsets = [0, 64], sizes = [16, 32], strides = [1, 1]} : vector<16x128xf32> to vector<16x32xf32>
    %568 = math.tanh %567 : vector<16x32xf32>
    %569 = vector.extract_strided_slice %566 {offsets = [0, 32], sizes = [16, 32], strides = [1, 1]} : vector<16x128xf32> to vector<16x32xf32>
    %570 = arith.mulf %569, %543 : vector<16x32xf32>
    %571 = vector.extract_strided_slice %566 {offsets = [0, 0], sizes = [16, 32], strides = [1, 1]} : vector<16x128xf32> to vector<16x32xf32>
    %572 = arith.mulf %571, %568 : vector<16x32xf32>
    %573 = arith.addf %570, %572 : vector<16x32xf32>
    %574 = vector.extract_strided_slice %566 {offsets = [0, 96], sizes = [16, 32], strides = [1, 1]} : vector<16x128xf32> to vector<16x32xf32>
    %575 = math.tanh %573 : vector<16x32xf32>
    %576 = arith.mulf %574, %575 : vector<16x32xf32>
    %577 = vector.extract_strided_slice %576 {offsets = [0, 0], sizes = [16, 16], strides = [1, 1]} : vector<16x32xf32> to vector<16x16xf32>
    %c0_273 = arith.constant 0 : index
    %c0_274 = arith.constant 0 : index
    %c160_275 = arith.constant 160 : index
    %578 = vector.load %arg6[%c0_273, %c0_274, %c160_275] : memref<1x16x480xf32, #tpu.memory_space<vmem>>, vector<1x16x16xf32>
    %579 = vector.shape_cast %578 : vector<1x16x16xf32> to vector<16x16xf32>
    %580 = vector.shape_cast %577 : vector<16x16xf32> to vector<1x16x16xf32>
    tpu.vector_store %arg6[%c0_273, %c0_274, %c160_275], %580 {strides = array<i32>} : memref<1x16x480xf32, #tpu.memory_space<vmem>>, vector<1x16x16xf32>,
    %581 = vector.extract_strided_slice %576 {offsets = [0, 16], sizes = [16, 16], strides = [1, 1]} : vector<16x32xf32> to vector<16x16xf32>
    %c0_276 = arith.constant 0 : index
    %c0_277 = arith.constant 0 : index
    %c304 = arith.constant 304 : index
    %582 = vector.load %arg6[%c0_276, %c0_277, %c304] : memref<1x16x480xf32, #tpu.memory_space<vmem>>, vector<1x16x16xf32>
    %583 = vector.shape_cast %582 : vector<1x16x16xf32> to vector<16x16xf32>
    %584 = vector.shape_cast %581 : vector<16x16xf32> to vector<1x16x16xf32>
    tpu.vector_store %arg6[%c0_276, %c0_277, %c304], %584 {strides = array<i32>} : memref<1x16x480xf32, #tpu.memory_space<vmem>>, vector<1x16x16xf32>,
    %c96_278 = arith.constant 96 : index
    %c0_279 = arith.constant 0 : index
    %585 = vector.load %arg7[%c96_278, %c0_279] : memref<240x256xf32, #tpu.memory_space<vmem>>, vector<16x128xf32>
    %c128_280 = arith.constant 128 : index
    %c128_281 = arith.constant 128 : index
    %586 = vector.load %arg7[%c128_280, %c128_281] : memref<240x256xf32, #tpu.memory_space<vmem>>, vector<16x128xf32>
    %587 = arith.addf %585, %586 : vector<16x128xf32>
    %c1_282 = arith.constant 1 : index
    %c0_283 = arith.constant 0 : index
    %c0_284 = arith.constant 0 : index
    %588 = vector.load %arg4[%c1_282, %c0_283, %c0_284] : memref<2x32x128xf32, #tpu.memory_space<vmem>>, vector<1x32x128xf32>
    %589 = vector.shape_cast %588 : vector<1x32x128xf32> to vector<32x128xf32>
    %cst_285 = arith.constant dense<0.000000e+00> : vector<16x128xf32>
    %590 = tpu.matmul %576, %589, %cst_285 {dimension_numbers = #tpu.dot_dimension_numbers<[1], [0], [0], [1], [0, 0, 1, 1], [], []>} : vector<16x32xf32>, vector<32x128xf32>, vector<16x128xf32> -> vector<16x128xf32>
    %591 = arith.addf %587, %590 : vector<16x128xf32>
    %592 = arith.negf %591 : vector<16x128xf32>
    %593 = math.exp %592 : vector<16x128xf32>
    %cst_286 = arith.constant 1.000000e+00 : f32
    %594 = vector.broadcast %cst_286 : f32 to vector<16x128xf32>
    %595 = arith.addf %594, %593 : vector<16x128xf32>
    %596 = arith.divf %594, %595 : vector<16x128xf32>
    %597 = vector.extract_strided_slice %591 {offsets = [0, 64], sizes = [16, 32], strides = [1, 1]} : vector<16x128xf32> to vector<16x32xf32>
    %598 = math.tanh %597 : vector<16x32xf32>
    %599 = vector.extract_strided_slice %596 {offsets = [0, 32], sizes = [16, 32], strides = [1, 1]} : vector<16x128xf32> to vector<16x32xf32>
    %600 = arith.mulf %599, %573 : vector<16x32xf32>
    %601 = vector.extract_strided_slice %596 {offsets = [0, 0], sizes = [16, 32], strides = [1, 1]} : vector<16x128xf32> to vector<16x32xf32>
    %602 = arith.mulf %601, %598 : vector<16x32xf32>
    %603 = arith.addf %600, %602 : vector<16x32xf32>
    %604 = vector.extract_strided_slice %596 {offsets = [0, 96], sizes = [16, 32], strides = [1, 1]} : vector<16x128xf32> to vector<16x32xf32>
    %605 = math.tanh %603 : vector<16x32xf32>
    %606 = arith.mulf %604, %605 : vector<16x32xf32>
    %607 = vector.extract_strided_slice %606 {offsets = [0, 0], sizes = [16, 16], strides = [1, 1]} : vector<16x32xf32> to vector<16x16xf32>
    %c0_287 = arith.constant 0 : index
    %c0_288 = arith.constant 0 : index
    %c192_289 = arith.constant 192 : index
    %608 = vector.load %arg6[%c0_287, %c0_288, %c192_289] : memref<1x16x480xf32, #tpu.memory_space<vmem>>, vector<1x16x16xf32>
    %609 = vector.shape_cast %608 : vector<1x16x16xf32> to vector<16x16xf32>
    %610 = vector.shape_cast %607 : vector<16x16xf32> to vector<1x16x16xf32>
    tpu.vector_store %arg6[%c0_287, %c0_288, %c192_289], %610 {strides = array<i32>} : memref<1x16x480xf32, #tpu.memory_space<vmem>>, vector<1x16x16xf32>,
    %611 = vector.extract_strided_slice %606 {offsets = [0, 16], sizes = [16, 16], strides = [1, 1]} : vector<16x32xf32> to vector<16x16xf32>
    %c0_290 = arith.constant 0 : index
    %c0_291 = arith.constant 0 : index
    %c272 = arith.constant 272 : index
    %612 = vector.load %arg6[%c0_290, %c0_291, %c272] : memref<1x16x480xf32, #tpu.memory_space<vmem>>, vector<1x16x16xf32>
    %613 = vector.shape_cast %612 : vector<1x16x16xf32> to vector<16x16xf32>
    %614 = vector.shape_cast %611 : vector<16x16xf32> to vector<1x16x16xf32>
    tpu.vector_store %arg6[%c0_290, %c0_291, %c272], %614 {strides = array<i32>} : memref<1x16x480xf32, #tpu.memory_space<vmem>>, vector<1x16x16xf32>,
    %c112_292 = arith.constant 112 : index
    %c0_293 = arith.constant 0 : index
    %615 = vector.load %arg7[%c112_292, %c0_293] : memref<240x256xf32, #tpu.memory_space<vmem>>, vector<16x128xf32>
    %c112_294 = arith.constant 112 : index
    %c128_295 = arith.constant 128 : index
    %616 = vector.load %arg7[%c112_294, %c128_295] : memref<240x256xf32, #tpu.memory_space<vmem>>, vector<16x128xf32>
    %617 = arith.addf %615, %616 : vector<16x128xf32>
    %c1_296 = arith.constant 1 : index
    %c0_297 = arith.constant 0 : index
    %c0_298 = arith.constant 0 : index
    %618 = vector.load %arg4[%c1_296, %c0_297, %c0_298] : memref<2x32x128xf32, #tpu.memory_space<vmem>>, vector<1x32x128xf32>
    %619 = vector.shape_cast %618 : vector<1x32x128xf32> to vector<32x128xf32>
    %cst_299 = arith.constant dense<0.000000e+00> : vector<16x128xf32>
    %620 = tpu.matmul %606, %619, %cst_299 {dimension_numbers = #tpu.dot_dimension_numbers<[1], [0], [0], [1], [0, 0, 1, 1], [], []>} : vector<16x32xf32>, vector<32x128xf32>, vector<16x128xf32> -> vector<16x128xf32>
    %621 = arith.addf %617, %620 : vector<16x128xf32>
    %622 = arith.negf %621 : vector<16x128xf32>
    %623 = math.exp %622 : vector<16x128xf32>
    %cst_300 = arith.constant 1.000000e+00 : f32
    %624 = vector.broadcast %cst_300 : f32 to vector<16x128xf32>
    %625 = arith.addf %624, %623 : vector<16x128xf32>
    %626 = arith.divf %624, %625 : vector<16x128xf32>
    %627 = vector.extract_strided_slice %621 {offsets = [0, 64], sizes = [16, 32], strides = [1, 1]} : vector<16x128xf32> to vector<16x32xf32>
    %628 = math.tanh %627 : vector<16x32xf32>
    %629 = vector.extract_strided_slice %626 {offsets = [0, 32], sizes = [16, 32], strides = [1, 1]} : vector<16x128xf32> to vector<16x32xf32>
    %630 = arith.mulf %629, %603 : vector<16x32xf32>
    %631 = vector.extract_strided_slice %626 {offsets = [0, 0], sizes = [16, 32], strides = [1, 1]} : vector<16x128xf32> to vector<16x32xf32>
    %632 = arith.mulf %631, %628 : vector<16x32xf32>
    %633 = arith.addf %630, %632 : vector<16x32xf32>
    %634 = vector.extract_strided_slice %626 {offsets = [0, 96], sizes = [16, 32], strides = [1, 1]} : vector<16x128xf32> to vector<16x32xf32>
    %635 = math.tanh %633 : vector<16x32xf32>
    %636 = arith.mulf %634, %635 : vector<16x32xf32>
    %c0_301 = arith.constant 0 : index
    %c0_302 = arith.constant 0 : index
    %c224_303 = arith.constant 224 : index
    %637 = vector.load %arg6[%c0_301, %c0_302, %c224_303] : memref<1x16x480xf32, #tpu.memory_space<vmem>>, vector<1x16x32xf32>
    %638 = vector.shape_cast %637 : vector<1x16x32xf32> to vector<16x32xf32>
    %639 = vector.shape_cast %636 : vector<16x32xf32> to vector<1x16x32xf32>
    tpu.vector_store %arg6[%c0_301, %c0_302, %c224_303], %639 {strides = array<i32>} : memref<1x16x480xf32, #tpu.memory_space<vmem>>, vector<1x16x32xf32>,
    %c128_304 = arith.constant 128 : index
    %c0_305 = arith.constant 0 : index
    %640 = vector.load %arg7[%c128_304, %c0_305] : memref<240x256xf32, #tpu.memory_space<vmem>>, vector<16x128xf32>
    %c96_306 = arith.constant 96 : index
    %c128_307 = arith.constant 128 : index
    %641 = vector.load %arg7[%c96_306, %c128_307] : memref<240x256xf32, #tpu.memory_space<vmem>>, vector<16x128xf32>
    %642 = arith.addf %640, %641 : vector<16x128xf32>
    %c1_308 = arith.constant 1 : index
    %c0_309 = arith.constant 0 : index
    %c0_310 = arith.constant 0 : index
    %643 = vector.load %arg4[%c1_308, %c0_309, %c0_310] : memref<2x32x128xf32, #tpu.memory_space<vmem>>, vector<1x32x128xf32>
    %644 = vector.shape_cast %643 : vector<1x32x128xf32> to vector<32x128xf32>
    %cst_311 = arith.constant dense<0.000000e+00> : vector<16x128xf32>
    %645 = tpu.matmul %636, %644, %cst_311 {dimension_numbers = #tpu.dot_dimension_numbers<[1], [0], [0], [1], [0, 0, 1, 1], [], []>} : vector<16x32xf32>, vector<32x128xf32>, vector<16x128xf32> -> vector<16x128xf32>
    %646 = arith.addf %642, %645 : vector<16x128xf32>
    %647 = arith.negf %646 : vector<16x128xf32>
    %648 = math.exp %647 : vector<16x128xf32>
    %cst_312 = arith.constant 1.000000e+00 : f32
    %649 = vector.broadcast %cst_312 : f32 to vector<16x128xf32>
    %650 = arith.addf %649, %648 : vector<16x128xf32>
    %651 = arith.divf %649, %650 : vector<16x128xf32>
    %652 = vector.extract_strided_slice %646 {offsets = [0, 64], sizes = [16, 32], strides = [1, 1]} : vector<16x128xf32> to vector<16x32xf32>
    %653 = math.tanh %652 : vector<16x32xf32>
    %654 = vector.extract_strided_slice %651 {offsets = [0, 32], sizes = [16, 32], strides = [1, 1]} : vector<16x128xf32> to vector<16x32xf32>
    %655 = arith.mulf %654, %633 : vector<16x32xf32>
    %656 = vector.extract_strided_slice %651 {offsets = [0, 0], sizes = [16, 32], strides = [1, 1]} : vector<16x128xf32> to vector<16x32xf32>
    %657 = arith.mulf %656, %653 : vector<16x32xf32>
    %658 = arith.addf %655, %657 : vector<16x32xf32>
    %659 = vector.extract_strided_slice %651 {offsets = [0, 96], sizes = [16, 32], strides = [1, 1]} : vector<16x128xf32> to vector<16x32xf32>
    %660 = math.tanh %658 : vector<16x32xf32>
    %661 = arith.mulf %659, %660 : vector<16x32xf32>
    %662 = vector.extract_strided_slice %661 {offsets = [0, 0], sizes = [16, 16], strides = [1, 1]} : vector<16x32xf32> to vector<16x16xf32>
    %c0_313 = arith.constant 0 : index
    %c0_314 = arith.constant 0 : index
    %c256 = arith.constant 256 : index
    %663 = vector.load %arg6[%c0_313, %c0_314, %c256] : memref<1x16x480xf32, #tpu.memory_space<vmem>>, vector<1x16x16xf32>
    %664 = vector.shape_cast %663 : vector<1x16x16xf32> to vector<16x16xf32>
    %665 = vector.shape_cast %662 : vector<16x16xf32> to vector<1x16x16xf32>
    tpu.vector_store %arg6[%c0_313, %c0_314, %c256], %665 {strides = array<i32>} : memref<1x16x480xf32, #tpu.memory_space<vmem>>, vector<1x16x16xf32>,
    %666 = vector.extract_strided_slice %661 {offsets = [0, 16], sizes = [16, 16], strides = [1, 1]} : vector<16x32xf32> to vector<16x16xf32>
    %c0_315 = arith.constant 0 : index
    %c0_316 = arith.constant 0 : index
    %c208_317 = arith.constant 208 : index
    %667 = vector.load %arg6[%c0_315, %c0_316, %c208_317] : memref<1x16x480xf32, #tpu.memory_space<vmem>>, vector<1x16x16xf32>
    %668 = vector.shape_cast %667 : vector<1x16x16xf32> to vector<16x16xf32>
    %669 = vector.shape_cast %666 : vector<16x16xf32> to vector<1x16x16xf32>
    tpu.vector_store %arg6[%c0_315, %c0_316, %c208_317], %669 {strides = array<i32>} : memref<1x16x480xf32, #tpu.memory_space<vmem>>, vector<1x16x16xf32>,
    %c144_318 = arith.constant 144 : index
    %c0_319 = arith.constant 0 : index
    %670 = vector.load %arg7[%c144_318, %c0_319] : memref<240x256xf32, #tpu.memory_space<vmem>>, vector<16x128xf32>
    %c80_320 = arith.constant 80 : index
    %c128_321 = arith.constant 128 : index
    %671 = vector.load %arg7[%c80_320, %c128_321] : memref<240x256xf32, #tpu.memory_space<vmem>>, vector<16x128xf32>
    %672 = arith.addf %670, %671 : vector<16x128xf32>
    %c1_322 = arith.constant 1 : index
    %c0_323 = arith.constant 0 : index
    %c0_324 = arith.constant 0 : index
    %673 = vector.load %arg4[%c1_322, %c0_323, %c0_324] : memref<2x32x128xf32, #tpu.memory_space<vmem>>, vector<1x32x128xf32>
    %674 = vector.shape_cast %673 : vector<1x32x128xf32> to vector<32x128xf32>
    %cst_325 = arith.constant dense<0.000000e+00> : vector<16x128xf32>
    %675 = tpu.matmul %661, %674, %cst_325 {dimension_numbers = #tpu.dot_dimension_numbers<[1], [0], [0], [1], [0, 0, 1, 1], [], []>} : vector<16x32xf32>, vector<32x128xf32>, vector<16x128xf32> -> vector<16x128xf32>
    %676 = arith.addf %672, %675 : vector<16x128xf32>
    %677 = arith.negf %676 : vector<16x128xf32>
    %678 = math.exp %677 : vector<16x128xf32>
    %cst_326 = arith.constant 1.000000e+00 : f32
    %679 = vector.broadcast %cst_326 : f32 to vector<16x128xf32>
    %680 = arith.addf %679, %678 : vector<16x128xf32>
    %681 = arith.divf %679, %680 : vector<16x128xf32>
    %682 = vector.extract_strided_slice %676 {offsets = [0, 64], sizes = [16, 32], strides = [1, 1]} : vector<16x128xf32> to vector<16x32xf32>
    %683 = math.tanh %682 : vector<16x32xf32>
    %684 = vector.extract_strided_slice %681 {offsets = [0, 32], sizes = [16, 32], strides = [1, 1]} : vector<16x128xf32> to vector<16x32xf32>
    %685 = arith.mulf %684, %658 : vector<16x32xf32>
    %686 = vector.extract_strided_slice %681 {offsets = [0, 0], sizes = [16, 32], strides = [1, 1]} : vector<16x128xf32> to vector<16x32xf32>
    %687 = arith.mulf %686, %683 : vector<16x32xf32>
    %688 = arith.addf %685, %687 : vector<16x32xf32>
    %689 = vector.extract_strided_slice %681 {offsets = [0, 96], sizes = [16, 32], strides = [1, 1]} : vector<16x128xf32> to vector<16x32xf32>
    %690 = math.tanh %688 : vector<16x32xf32>
    %691 = arith.mulf %689, %690 : vector<16x32xf32>
    %692 = vector.extract_strided_slice %691 {offsets = [0, 0], sizes = [16, 16], strides = [1, 1]} : vector<16x32xf32> to vector<16x16xf32>
    %c0_327 = arith.constant 0 : index
    %c0_328 = arith.constant 0 : index
    %c288 = arith.constant 288 : index
    %693 = vector.load %arg6[%c0_327, %c0_328, %c288] : memref<1x16x480xf32, #tpu.memory_space<vmem>>, vector<1x16x16xf32>
    %694 = vector.shape_cast %693 : vector<1x16x16xf32> to vector<16x16xf32>
    %695 = vector.shape_cast %692 : vector<16x16xf32> to vector<1x16x16xf32>
    tpu.vector_store %arg6[%c0_327, %c0_328, %c288], %695 {strides = array<i32>} : memref<1x16x480xf32, #tpu.memory_space<vmem>>, vector<1x16x16xf32>,
    %696 = vector.extract_strided_slice %691 {offsets = [0, 16], sizes = [16, 16], strides = [1, 1]} : vector<16x32xf32> to vector<16x16xf32>
    %c0_329 = arith.constant 0 : index
    %c0_330 = arith.constant 0 : index
    %c176_331 = arith.constant 176 : index
    %697 = vector.load %arg6[%c0_329, %c0_330, %c176_331] : memref<1x16x480xf32, #tpu.memory_space<vmem>>, vector<1x16x16xf32>
    %698 = vector.shape_cast %697 : vector<1x16x16xf32> to vector<16x16xf32>
    %699 = vector.shape_cast %696 : vector<16x16xf32> to vector<1x16x16xf32>
    tpu.vector_store %arg6[%c0_329, %c0_330, %c176_331], %699 {strides = array<i32>} : memref<1x16x480xf32, #tpu.memory_space<vmem>>, vector<1x16x16xf32>,
    %c160_332 = arith.constant 160 : index
    %c0_333 = arith.constant 0 : index
    %700 = vector.load %arg7[%c160_332, %c0_333] : memref<240x256xf32, #tpu.memory_space<vmem>>, vector<16x128xf32>
    %c64_334 = arith.constant 64 : index
    %c128_335 = arith.constant 128 : index
    %701 = vector.load %arg7[%c64_334, %c128_335] : memref<240x256xf32, #tpu.memory_space<vmem>>, vector<16x128xf32>
    %702 = arith.addf %700, %701 : vector<16x128xf32>
    %c1_336 = arith.constant 1 : index
    %c0_337 = arith.constant 0 : index
    %c0_338 = arith.constant 0 : index
    %703 = vector.load %arg4[%c1_336, %c0_337, %c0_338] : memref<2x32x128xf32, #tpu.memory_space<vmem>>, vector<1x32x128xf32>
    %704 = vector.shape_cast %703 : vector<1x32x128xf32> to vector<32x128xf32>
    %cst_339 = arith.constant dense<0.000000e+00> : vector<16x128xf32>
    %705 = tpu.matmul %691, %704, %cst_339 {dimension_numbers = #tpu.dot_dimension_numbers<[1], [0], [0], [1], [0, 0, 1, 1], [], []>} : vector<16x32xf32>, vector<32x128xf32>, vector<16x128xf32> -> vector<16x128xf32>
    %706 = arith.addf %702, %705 : vector<16x128xf32>
    %707 = arith.negf %706 : vector<16x128xf32>
    %708 = math.exp %707 : vector<16x128xf32>
    %cst_340 = arith.constant 1.000000e+00 : f32
    %709 = vector.broadcast %cst_340 : f32 to vector<16x128xf32>
    %710 = arith.addf %709, %708 : vector<16x128xf32>
    %711 = arith.divf %709, %710 : vector<16x128xf32>
    %712 = vector.extract_strided_slice %706 {offsets = [0, 64], sizes = [16, 32], strides = [1, 1]} : vector<16x128xf32> to vector<16x32xf32>
    %713 = math.tanh %712 : vector<16x32xf32>
    %714 = vector.extract_strided_slice %711 {offsets = [0, 32], sizes = [16, 32], strides = [1, 1]} : vector<16x128xf32> to vector<16x32xf32>
    %715 = arith.mulf %714, %688 : vector<16x32xf32>
    %716 = vector.extract_strided_slice %711 {offsets = [0, 0], sizes = [16, 32], strides = [1, 1]} : vector<16x128xf32> to vector<16x32xf32>
    %717 = arith.mulf %716, %713 : vector<16x32xf32>
    %718 = arith.addf %715, %717 : vector<16x32xf32>
    %719 = vector.extract_strided_slice %711 {offsets = [0, 96], sizes = [16, 32], strides = [1, 1]} : vector<16x128xf32> to vector<16x32xf32>
    %720 = math.tanh %718 : vector<16x32xf32>
    %721 = arith.mulf %719, %720 : vector<16x32xf32>
    %722 = vector.extract_strided_slice %721 {offsets = [0, 0], sizes = [16, 16], strides = [1, 1]} : vector<16x32xf32> to vector<16x16xf32>
    %c0_341 = arith.constant 0 : index
    %c0_342 = arith.constant 0 : index
    %c320 = arith.constant 320 : index
    %723 = vector.load %arg6[%c0_341, %c0_342, %c320] : memref<1x16x480xf32, #tpu.memory_space<vmem>>, vector<1x16x16xf32>
    %724 = vector.shape_cast %723 : vector<1x16x16xf32> to vector<16x16xf32>
    %725 = vector.shape_cast %722 : vector<16x16xf32> to vector<1x16x16xf32>
    tpu.vector_store %arg6[%c0_341, %c0_342, %c320], %725 {strides = array<i32>} : memref<1x16x480xf32, #tpu.memory_space<vmem>>, vector<1x16x16xf32>,
    %726 = vector.extract_strided_slice %721 {offsets = [0, 16], sizes = [16, 16], strides = [1, 1]} : vector<16x32xf32> to vector<16x16xf32>
    %c0_343 = arith.constant 0 : index
    %c0_344 = arith.constant 0 : index
    %c144_345 = arith.constant 144 : index
    %727 = vector.load %arg6[%c0_343, %c0_344, %c144_345] : memref<1x16x480xf32, #tpu.memory_space<vmem>>, vector<1x16x16xf32>
    %728 = vector.shape_cast %727 : vector<1x16x16xf32> to vector<16x16xf32>
    %729 = vector.shape_cast %726 : vector<16x16xf32> to vector<1x16x16xf32>
    tpu.vector_store %arg6[%c0_343, %c0_344, %c144_345], %729 {strides = array<i32>} : memref<1x16x480xf32, #tpu.memory_space<vmem>>, vector<1x16x16xf32>,
    %c176_346 = arith.constant 176 : index
    %c0_347 = arith.constant 0 : index
    %730 = vector.load %arg7[%c176_346, %c0_347] : memref<240x256xf32, #tpu.memory_space<vmem>>, vector<16x128xf32>
    %c48_348 = arith.constant 48 : index
    %c128_349 = arith.constant 128 : index
    %731 = vector.load %arg7[%c48_348, %c128_349] : memref<240x256xf32, #tpu.memory_space<vmem>>, vector<16x128xf32>
    %732 = arith.addf %730, %731 : vector<16x128xf32>
    %c1_350 = arith.constant 1 : index
    %c0_351 = arith.constant 0 : index
    %c0_352 = arith.constant 0 : index
    %733 = vector.load %arg4[%c1_350, %c0_351, %c0_352] : memref<2x32x128xf32, #tpu.memory_space<vmem>>, vector<1x32x128xf32>
    %734 = vector.shape_cast %733 : vector<1x32x128xf32> to vector<32x128xf32>
    %cst_353 = arith.constant dense<0.000000e+00> : vector<16x128xf32>
    %735 = tpu.matmul %721, %734, %cst_353 {dimension_numbers = #tpu.dot_dimension_numbers<[1], [0], [0], [1], [0, 0, 1, 1], [], []>} : vector<16x32xf32>, vector<32x128xf32>, vector<16x128xf32> -> vector<16x128xf32>
    %736 = arith.addf %732, %735 : vector<16x128xf32>
    %737 = arith.negf %736 : vector<16x128xf32>
    %738 = math.exp %737 : vector<16x128xf32>
    %cst_354 = arith.constant 1.000000e+00 : f32
    %739 = vector.broadcast %cst_354 : f32 to vector<16x128xf32>
    %740 = arith.addf %739, %738 : vector<16x128xf32>
    %741 = arith.divf %739, %740 : vector<16x128xf32>
    %742 = vector.extract_strided_slice %736 {offsets = [0, 64], sizes = [16, 32], strides = [1, 1]} : vector<16x128xf32> to vector<16x32xf32>
    %743 = math.tanh %742 : vector<16x32xf32>
    %744 = vector.extract_strided_slice %741 {offsets = [0, 32], sizes = [16, 32], strides = [1, 1]} : vector<16x128xf32> to vector<16x32xf32>
    %745 = arith.mulf %744, %718 : vector<16x32xf32>
    %746 = vector.extract_strided_slice %741 {offsets = [0, 0], sizes = [16, 32], strides = [1, 1]} : vector<16x128xf32> to vector<16x32xf32>
    %747 = arith.mulf %746, %743 : vector<16x32xf32>
    %748 = arith.addf %745, %747 : vector<16x32xf32>
    %749 = vector.extract_strided_slice %741 {offsets = [0, 96], sizes = [16, 32], strides = [1, 1]} : vector<16x128xf32> to vector<16x32xf32>
    %750 = math.tanh %748 : vector<16x32xf32>
    %751 = arith.mulf %749, %750 : vector<16x32xf32>
    %752 = vector.extract_strided_slice %751 {offsets = [0, 0], sizes = [16, 16], strides = [1, 1]} : vector<16x32xf32> to vector<16x16xf32>
    %c0_355 = arith.constant 0 : index
    %c0_356 = arith.constant 0 : index
    %c352 = arith.constant 352 : index
    %753 = vector.load %arg6[%c0_355, %c0_356, %c352] : memref<1x16x480xf32, #tpu.memory_space<vmem>>, vector<1x16x16xf32>
    %754 = vector.shape_cast %753 : vector<1x16x16xf32> to vector<16x16xf32>
    %755 = vector.shape_cast %752 : vector<16x16xf32> to vector<1x16x16xf32>
    tpu.vector_store %arg6[%c0_355, %c0_356, %c352], %755 {strides = array<i32>} : memref<1x16x480xf32, #tpu.memory_space<vmem>>, vector<1x16x16xf32>,
    %756 = vector.extract_strided_slice %751 {offsets = [0, 16], sizes = [16, 16], strides = [1, 1]} : vector<16x32xf32> to vector<16x16xf32>
    %c0_357 = arith.constant 0 : index
    %c0_358 = arith.constant 0 : index
    %c112_359 = arith.constant 112 : index
    %757 = vector.load %arg6[%c0_357, %c0_358, %c112_359] : memref<1x16x480xf32, #tpu.memory_space<vmem>>, vector<1x16x16xf32>
    %758 = vector.shape_cast %757 : vector<1x16x16xf32> to vector<16x16xf32>
    %759 = vector.shape_cast %756 : vector<16x16xf32> to vector<1x16x16xf32>
    tpu.vector_store %arg6[%c0_357, %c0_358, %c112_359], %759 {strides = array<i32>} : memref<1x16x480xf32, #tpu.memory_space<vmem>>, vector<1x16x16xf32>,
    %c192_360 = arith.constant 192 : index
    %c0_361 = arith.constant 0 : index
    %760 = vector.load %arg7[%c192_360, %c0_361] : memref<240x256xf32, #tpu.memory_space<vmem>>, vector<16x128xf32>
    %c32_362 = arith.constant 32 : index
    %c128_363 = arith.constant 128 : index
    %761 = vector.load %arg7[%c32_362, %c128_363] : memref<240x256xf32, #tpu.memory_space<vmem>>, vector<16x128xf32>
    %762 = arith.addf %760, %761 : vector<16x128xf32>
    %c1_364 = arith.constant 1 : index
    %c0_365 = arith.constant 0 : index
    %c0_366 = arith.constant 0 : index
    %763 = vector.load %arg4[%c1_364, %c0_365, %c0_366] : memref<2x32x128xf32, #tpu.memory_space<vmem>>, vector<1x32x128xf32>
    %764 = vector.shape_cast %763 : vector<1x32x128xf32> to vector<32x128xf32>
    %cst_367 = arith.constant dense<0.000000e+00> : vector<16x128xf32>
    %765 = tpu.matmul %751, %764, %cst_367 {dimension_numbers = #tpu.dot_dimension_numbers<[1], [0], [0], [1], [0, 0, 1, 1], [], []>} : vector<16x32xf32>, vector<32x128xf32>, vector<16x128xf32> -> vector<16x128xf32>
    %766 = arith.addf %762, %765 : vector<16x128xf32>
    %767 = arith.negf %766 : vector<16x128xf32>
    %768 = math.exp %767 : vector<16x128xf32>
    %cst_368 = arith.constant 1.000000e+00 : f32
    %769 = vector.broadcast %cst_368 : f32 to vector<16x128xf32>
    %770 = arith.addf %769, %768 : vector<16x128xf32>
    %771 = arith.divf %769, %770 : vector<16x128xf32>
    %772 = vector.extract_strided_slice %766 {offsets = [0, 64], sizes = [16, 32], strides = [1, 1]} : vector<16x128xf32> to vector<16x32xf32>
    %773 = math.tanh %772 : vector<16x32xf32>
    %774 = vector.extract_strided_slice %771 {offsets = [0, 32], sizes = [16, 32], strides = [1, 1]} : vector<16x128xf32> to vector<16x32xf32>
    %775 = arith.mulf %774, %748 : vector<16x32xf32>
    %776 = vector.extract_strided_slice %771 {offsets = [0, 0], sizes = [16, 32], strides = [1, 1]} : vector<16x128xf32> to vector<16x32xf32>
    %777 = arith.mulf %776, %773 : vector<16x32xf32>
    %778 = arith.addf %775, %777 : vector<16x32xf32>
    %779 = vector.extract_strided_slice %771 {offsets = [0, 96], sizes = [16, 32], strides = [1, 1]} : vector<16x128xf32> to vector<16x32xf32>
    %780 = math.tanh %778 : vector<16x32xf32>
    %781 = arith.mulf %779, %780 : vector<16x32xf32>
    %782 = vector.extract_strided_slice %781 {offsets = [0, 0], sizes = [16, 16], strides = [1, 1]} : vector<16x32xf32> to vector<16x16xf32>
    %c0_369 = arith.constant 0 : index
    %c0_370 = arith.constant 0 : index
    %c384 = arith.constant 384 : index
    %783 = vector.load %arg6[%c0_369, %c0_370, %c384] : memref<1x16x480xf32, #tpu.memory_space<vmem>>, vector<1x16x16xf32>
    %784 = vector.shape_cast %783 : vector<1x16x16xf32> to vector<16x16xf32>
    %785 = vector.shape_cast %782 : vector<16x16xf32> to vector<1x16x16xf32>
    tpu.vector_store %arg6[%c0_369, %c0_370, %c384], %785 {strides = array<i32>} : memref<1x16x480xf32, #tpu.memory_space<vmem>>, vector<1x16x16xf32>,
    %786 = vector.extract_strided_slice %781 {offsets = [0, 16], sizes = [16, 16], strides = [1, 1]} : vector<16x32xf32> to vector<16x16xf32>
    %c0_371 = arith.constant 0 : index
    %c0_372 = arith.constant 0 : index
    %c80_373 = arith.constant 80 : index
    %787 = vector.load %arg6[%c0_371, %c0_372, %c80_373] : memref<1x16x480xf32, #tpu.memory_space<vmem>>, vector<1x16x16xf32>
    %788 = vector.shape_cast %787 : vector<1x16x16xf32> to vector<16x16xf32>
    %789 = vector.shape_cast %786 : vector<16x16xf32> to vector<1x16x16xf32>
    tpu.vector_store %arg6[%c0_371, %c0_372, %c80_373], %789 {strides = array<i32>} : memref<1x16x480xf32, #tpu.memory_space<vmem>>, vector<1x16x16xf32>,
    %c208_374 = arith.constant 208 : index
    %c0_375 = arith.constant 0 : index
    %790 = vector.load %arg7[%c208_374, %c0_375] : memref<240x256xf32, #tpu.memory_space<vmem>>, vector<16x128xf32>
    %c16_376 = arith.constant 16 : index
    %c128_377 = arith.constant 128 : index
    %791 = vector.load %arg7[%c16_376, %c128_377] : memref<240x256xf32, #tpu.memory_space<vmem>>, vector<16x128xf32>
    %792 = arith.addf %790, %791 : vector<16x128xf32>
    %c1_378 = arith.constant 1 : index
    %c0_379 = arith.constant 0 : index
    %c0_380 = arith.constant 0 : index
    %793 = vector.load %arg4[%c1_378, %c0_379, %c0_380] : memref<2x32x128xf32, #tpu.memory_space<vmem>>, vector<1x32x128xf32>
    %794 = vector.shape_cast %793 : vector<1x32x128xf32> to vector<32x128xf32>
    %cst_381 = arith.constant dense<0.000000e+00> : vector<16x128xf32>
    %795 = tpu.matmul %781, %794, %cst_381 {dimension_numbers = #tpu.dot_dimension_numbers<[1], [0], [0], [1], [0, 0, 1, 1], [], []>} : vector<16x32xf32>, vector<32x128xf32>, vector<16x128xf32> -> vector<16x128xf32>
    %796 = arith.addf %792, %795 : vector<16x128xf32>
    %797 = arith.negf %796 : vector<16x128xf32>
    %798 = math.exp %797 : vector<16x128xf32>
    %cst_382 = arith.constant 1.000000e+00 : f32
    %799 = vector.broadcast %cst_382 : f32 to vector<16x128xf32>
    %800 = arith.addf %799, %798 : vector<16x128xf32>
    %801 = arith.divf %799, %800 : vector<16x128xf32>
    %802 = vector.extract_strided_slice %796 {offsets = [0, 64], sizes = [16, 32], strides = [1, 1]} : vector<16x128xf32> to vector<16x32xf32>
    %803 = math.tanh %802 : vector<16x32xf32>
    %804 = vector.extract_strided_slice %801 {offsets = [0, 32], sizes = [16, 32], strides = [1, 1]} : vector<16x128xf32> to vector<16x32xf32>
    %805 = arith.mulf %804, %778 : vector<16x32xf32>
    %806 = vector.extract_strided_slice %801 {offsets = [0, 0], sizes = [16, 32], strides = [1, 1]} : vector<16x128xf32> to vector<16x32xf32>
    %807 = arith.mulf %806, %803 : vector<16x32xf32>
    %808 = arith.addf %805, %807 : vector<16x32xf32>
    %809 = vector.extract_strided_slice %801 {offsets = [0, 96], sizes = [16, 32], strides = [1, 1]} : vector<16x128xf32> to vector<16x32xf32>
    %810 = math.tanh %808 : vector<16x32xf32>
    %811 = arith.mulf %809, %810 : vector<16x32xf32>
    %812 = vector.extract_strided_slice %811 {offsets = [0, 0], sizes = [16, 16], strides = [1, 1]} : vector<16x32xf32> to vector<16x16xf32>
    %c0_383 = arith.constant 0 : index
    %c0_384 = arith.constant 0 : index
    %c416 = arith.constant 416 : index
    %813 = vector.load %arg6[%c0_383, %c0_384, %c416] : memref<1x16x480xf32, #tpu.memory_space<vmem>>, vector<1x16x16xf32>
    %814 = vector.shape_cast %813 : vector<1x16x16xf32> to vector<16x16xf32>
    %815 = vector.shape_cast %812 : vector<16x16xf32> to vector<1x16x16xf32>
    tpu.vector_store %arg6[%c0_383, %c0_384, %c416], %815 {strides = array<i32>} : memref<1x16x480xf32, #tpu.memory_space<vmem>>, vector<1x16x16xf32>,
    %816 = vector.extract_strided_slice %811 {offsets = [0, 16], sizes = [16, 16], strides = [1, 1]} : vector<16x32xf32> to vector<16x16xf32>
    %c0_385 = arith.constant 0 : index
    %c0_386 = arith.constant 0 : index
    %c48_387 = arith.constant 48 : index
    %817 = vector.load %arg6[%c0_385, %c0_386, %c48_387] : memref<1x16x480xf32, #tpu.memory_space<vmem>>, vector<1x16x16xf32>
    %818 = vector.shape_cast %817 : vector<1x16x16xf32> to vector<16x16xf32>
    %819 = vector.shape_cast %816 : vector<16x16xf32> to vector<1x16x16xf32>
    tpu.vector_store %arg6[%c0_385, %c0_386, %c48_387], %819 {strides = array<i32>} : memref<1x16x480xf32, #tpu.memory_space<vmem>>, vector<1x16x16xf32>,
    %c224_388 = arith.constant 224 : index
    %c0_389 = arith.constant 0 : index
    %820 = vector.load %arg7[%c224_388, %c0_389] : memref<240x256xf32, #tpu.memory_space<vmem>>, vector<16x128xf32>
    %c0_390 = arith.constant 0 : index
    %c128_391 = arith.constant 128 : index
    %821 = vector.load %arg7[%c0_390, %c128_391] : memref<240x256xf32, #tpu.memory_space<vmem>>, vector<16x128xf32>
    %822 = arith.addf %820, %821 : vector<16x128xf32>
    %c1_392 = arith.constant 1 : index
    %c0_393 = arith.constant 0 : index
    %c0_394 = arith.constant 0 : index
    %823 = vector.load %arg4[%c1_392, %c0_393, %c0_394] : memref<2x32x128xf32, #tpu.memory_space<vmem>>, vector<1x32x128xf32>
    %824 = vector.shape_cast %823 : vector<1x32x128xf32> to vector<32x128xf32>
    %cst_395 = arith.constant dense<0.000000e+00> : vector<16x128xf32>
    %825 = tpu.matmul %811, %824, %cst_395 {dimension_numbers = #tpu.dot_dimension_numbers<[1], [0], [0], [1], [0, 0, 1, 1], [], []>} : vector<16x32xf32>, vector<32x128xf32>, vector<16x128xf32> -> vector<16x128xf32>
    %826 = arith.addf %822, %825 : vector<16x128xf32>
    %827 = arith.negf %826 : vector<16x128xf32>
    %828 = math.exp %827 : vector<16x128xf32>
    %cst_396 = arith.constant 1.000000e+00 : f32
    %829 = vector.broadcast %cst_396 : f32 to vector<16x128xf32>
    %830 = arith.addf %829, %828 : vector<16x128xf32>
    %831 = arith.divf %829, %830 : vector<16x128xf32>
    %832 = vector.extract_strided_slice %826 {offsets = [0, 64], sizes = [16, 32], strides = [1, 1]} : vector<16x128xf32> to vector<16x32xf32>
    %833 = math.tanh %832 : vector<16x32xf32>
    %834 = vector.extract_strided_slice %831 {offsets = [0, 32], sizes = [16, 32], strides = [1, 1]} : vector<16x128xf32> to vector<16x32xf32>
    %835 = arith.mulf %834, %808 : vector<16x32xf32>
    %836 = vector.extract_strided_slice %831 {offsets = [0, 0], sizes = [16, 32], strides = [1, 1]} : vector<16x128xf32> to vector<16x32xf32>
    %837 = arith.mulf %836, %833 : vector<16x32xf32>
    %838 = arith.addf %835, %837 : vector<16x32xf32>
    %839 = vector.extract_strided_slice %831 {offsets = [0, 96], sizes = [16, 32], strides = [1, 1]} : vector<16x128xf32> to vector<16x32xf32>
    %840 = math.tanh %838 : vector<16x32xf32>
    %841 = arith.mulf %839, %840 : vector<16x32xf32>
    %842 = vector.extract_strided_slice %841 {offsets = [0, 0], sizes = [16, 16], strides = [1, 1]} : vector<16x32xf32> to vector<16x16xf32>
    %c0_397 = arith.constant 0 : index
    %c0_398 = arith.constant 0 : index
    %c448 = arith.constant 448 : index
    %843 = vector.load %arg6[%c0_397, %c0_398, %c448] : memref<1x16x480xf32, #tpu.memory_space<vmem>>, vector<1x16x16xf32>
    %844 = vector.shape_cast %843 : vector<1x16x16xf32> to vector<16x16xf32>
    %845 = vector.shape_cast %842 : vector<16x16xf32> to vector<1x16x16xf32>
    tpu.vector_store %arg6[%c0_397, %c0_398, %c448], %845 {strides = array<i32>} : memref<1x16x480xf32, #tpu.memory_space<vmem>>, vector<1x16x16xf32>,
    %846 = vector.extract_strided_slice %841 {offsets = [0, 16], sizes = [16, 16], strides = [1, 1]} : vector<16x32xf32> to vector<16x16xf32>
    %c0_399 = arith.constant 0 : index
    %c0_400 = arith.constant 0 : index
    %c16_401 = arith.constant 16 : index
    %847 = vector.load %arg6[%c0_399, %c0_400, %c16_401] : memref<1x16x480xf32, #tpu.memory_space<vmem>>, vector<1x16x16xf32>
    %848 = vector.shape_cast %847 : vector<1x16x16xf32> to vector<16x16xf32>
    %849 = vector.shape_cast %846 : vector<16x16xf32> to vector<1x16x16xf32>
    tpu.vector_store %arg6[%c0_399, %c0_400, %c16_401], %849 {strides = array<i32>} : memref<1x16x480xf32, #tpu.memory_space<vmem>>, vector<1x16x16xf32>,
    return
  }
  func.func @transform_0(%arg0: i32) -> (i32, i32, i32) {
    %c0_i32 = arith.constant 0 : i32
    %c0_i32_0 = arith.constant 0 : i32
    %c0_i32_1 = arith.constant 0 : i32
    return %arg0, %c0_i32, %c0_i32_0 : i32, i32, i32
  }
  func.func @transform_1(%arg0: i32) -> (i32, i32) {
    %c0_i32 = arith.constant 0 : i32
    %c0_i32_0 = arith.constant 0 : i32
    %c0_i32_1 = arith.constant 0 : i32
    return %c0_i32, %c0_i32_0 : i32, i32
  }
  func.func @transform_2(%arg0: i32) -> (i32, i32) {
    %c0_i32 = arith.constant 0 : i32
    %c0_i32_0 = arith.constant 0 : i32
    %c0_i32_1 = arith.constant 0 : i32
    return %c0_i32, %c0_i32_0 : i32, i32
  }
  func.func @transform_3(%arg0: i32) -> (i32, i32, i32) {
    %c0_i32 = arith.constant 0 : i32
    %c0_i32_0 = arith.constant 0 : i32
    %c0_i32_1 = arith.constant 0 : i32
    %c0_i32_2 = arith.constant 0 : i32
    return %c0_i32, %c0_i32_0, %c0_i32_1 : i32, i32, i32
  }
  func.func @transform_4(%arg0: i32) -> (i32, i32) {
    %c0_i32 = arith.constant 0 : i32
    %c0_i32_0 = arith.constant 0 : i32
    %c0_i32_1 = arith.constant 0 : i32
    return %c0_i32, %c0_i32_0 : i32, i32
  }
  func.func @transform_5(%arg0: i32) -> (i32, i32, i32) {
    %c0_i32 = arith.constant 0 : i32
    %c0_i32_0 = arith.constant 0 : i32
    %c0_i32_1 = arith.constant 0 : i32
    return %arg0, %c0_i32, %c0_i32_0 : i32, i32, i32
  }
}

</mosaic_0001>

<llo_original>
// kernel: character_model_forward.1
$region0: #{character_model_forward.1}
  #allocation0 [shape = 'u32[]', space=smem, size = 0x4, offset = 0x4, fixed_abs, tag = 'smem constant byte address 0x4 - core index']
  #allocation1 [shape = 'u32[144,128]{1,0:T(1,128)}', space=vmem, size = 0x12000, scoped, tag = 'internal scratch']
  #allocation2 [shape = 'f32[240,256]{1,0:T(8,128)}', space=vmem, size = 0x3c000, scoped, tag = 'scratch operand']
  #allocation3 [shape = 'f32[240,32]{1,0:T(8,128)}', space=vmem, size = 0x1e000, scoped, tag = 'scratch operand']
  %s0 = inlined_call_operand.vmem [shape: s32[1,240,1], index: 0, kind: input, shape index: {}]
  %s1 = inlined_call_operand.vmem [shape: f32[96,256], index: 1, kind: input, shape index: {}]
  %s2 = inlined_call_operand.vmem [shape: f32[32,256], index: 2, kind: input, shape index: {}]
  %s3 = inlined_call_operand.hbm [shape: f32[2,32,128], index: 3, kind: input, shape index: {}]
  %s4 = inlined_call_operand.vmem [shape: f32[1,256], index: 4, kind: input, shape index: {}]
  %s5 = inlined_call_operand.hbm [shape: f32[1,16,480], index: 5, kind: output, shape index: {}]
  %s6 = sld [smem:[#allocation0]]
  $region34: #{character_model_forward.1} parent=0
    _
  %s8 = ssub.s32 1, %s6
  %s9 = scalar_select 0, %s8, %s6
  $region1: #{character_model_forward.1} parent=0
    #allocation4 [shape = 'u8[32768]{0}', space=vmem, size = 0x8000, scoped, tag = 'input window, operand 3, single buffered']
    #allocation5 [shape = 's32[1]{0}', space=sflag, size = 0x4, scoped, tag = 'scoped memory for character_model_forward.1']
    #allocation6 [shape = 's32[1]{0}', space=sflag, size = 0x4, scoped, tag = 'scoped memory for character_model_forward.1']
    #allocation7 [shape = 'u8[32768]{0}', space=vmem, size = 0x8000, scoped, tag = 'output window, operand 0, single buffered']
    %10 = vsyncpa [#allocation5], 0
    %11 = vsyncpa [#allocation6], 0
    // Predicated region
    $region2: #{character_model_forward.1} parent=1 // pred_check
      _
    $region3: #{character_model_forward.1} parent=1 // pred_check_branch
      %13 = sbr.rel (0) target = $region5
    $region4: #{character_model_forward.1} parent=1 // pred_region
      _
    $region5: #{character_model_forward.1} parent=1 // pred_fallthru
      _
    // Predicated region
    $region6: #{character_model_forward.1} parent=1 // pred_check
      _
    $region7: #{character_model_forward.1} parent=1 // pred_check_branch
      %15 = sbr.rel (0) target = $region9
    $region8: #{character_model_forward.1} parent=1 // pred_region
      _
    $region9: #{character_model_forward.1} parent=1 // pred_fallthru
      _
    // Predicated region
    $region10: #{character_model_forward.1} parent=1 // pred_check
      _
    $region11: #{character_model_forward.1} parent=1 // pred_check_branch
      %17 = sbr.rel (0) target = $region13
    $region12: #{character_model_forward.1} parent=1 // pred_region
      _
    $region13: #{character_model_forward.1} parent=1 // pred_fallthru
      _
    // Predicated region
    $region14: #{character_model_forward.1} parent=1 // pred_check
      _
    $region15: #{character_model_forward.1} parent=1 // pred_check_branch
      %19 = sbr.rel (0) target = $region17
    $region16: #{character_model_forward.1} parent=1 // pred_region
      %s21 = ssub.s32 1024, 1024
      %22 = vsyncadd [#allocation5], %s21
      %s23 = sshll.u32 [#allocation4], 4
      %s24 = int_to_ptr.vmem [resolvable:$true] %s23
      %29 = dma.hbm_to_vmem [thread:$0]  %s3, 1024, %s24, [#allocation5], 128, 128, 8
    $region17: #{character_model_forward.1} parent=1 // pred_fallthru
      _
    // Predicated region
    $region18: #{character_model_forward.1} parent=1 // pred_check
      _
    $region19: #{character_model_forward.1} parent=1 // pred_check_branch
      %31 = sbr.rel (0) target = $region21
    $region20: #{character_model_forward.1} parent=1 // pred_region
      _
    $region21: #{character_model_forward.1} parent=1 // pred_fallthru
      _
    // Predicated region
    $region22: #{character_model_forward.1} parent=1 // pred_check
      _
    $region23: #{character_model_forward.1} parent=1 // pred_check_branch
      %33 = sbr.rel (0) target = $region25
    $region24: #{character_model_forward.1} parent=1 // pred_region
      %34 = dma.done [#allocation5], 1024
    $region25: #{character_model_forward.1} parent=1 // pred_fallthru
      _
    %v35 = vld [vmem:[%s0] sm:$0xff]
    %v36 = vld [vmem:[%s0 + $0x8] sm:$0xff]
    %v37 = vld [vmem:[%s0 + $0x10] sm:$0xff]
    %v38 = vld [vmem:[%s0 + $0x18] sm:$0xff]
    %v39 = vld [vmem:[%s0 + $0x20] sm:$0xff]
    %v40 = vld [vmem:[%s0 + $0x28] sm:$0xff]
    %v41 = vld [vmem:[%s0 + $0x30] sm:$0xff]
    %v42 = vld [vmem:[%s0 + $0x38] sm:$0xff]
    %v43 = vld [vmem:[%s0 + $0x40] sm:$0xff]
    %v44 = vld [vmem:[%s0 + $0x48] sm:$0xff]
    %v45 = vld [vmem:[%s0 + $0x50] sm:$0xff]
    %v46 = vld [vmem:[%s0 + $0x58] sm:$0xff]
    %v47 = vld [vmem:[%s0 + $0x60] sm:$0xff]
    %v48 = vld [vmem:[%s0 + $0x68] sm:$0xff]
    %v49 = vld [vmem:[%s0 + $0x70] sm:$0xff]
    %v50 = vld [vmem:[%s0 + $0x78] sm:$0xff]
    %v51 = vld [vmem:[%s0 + $0x80] sm:$0xff]
    %v52 = vld [vmem:[%s0 + $0x88] sm:$0xff]
    %v53 = vld [vmem:[%s0 + $0x90] sm:$0xff]
    %v54 = vld [vmem:[%s0 + $0x98] sm:$0xff]
    %v55 = vld [vmem:[%s0 + $0xa0] sm:$0xff]
    %v56 = vld [vmem:[%s0 + $0xa8] sm:$0xff]
    %v57 = vld [vmem:[%s0 + $0xb0] sm:$0xff]
    %v58 = vld [vmem:[%s0 + $0xb8] sm:$0xff]
    %v59 = vld [vmem:[%s0 + $0xc0] sm:$0xff]
    %v60 = vld [vmem:[%s0 + $0xc8] sm:$0xff]
    %v61 = vld [vmem:[%s0 + $0xd0] sm:$0xff]
    %v62 = vld [vmem:[%s0 + $0xd8] sm:$0xff]
    %v63 = vld [vmem:[%s0 + $0xe0] sm:$0xff]
    %v64 = vld [vmem:[%s0 + $0xe8] sm:$0xff]
    %v65 = vlaneseq
    %v66 = vand.u32 %v65, 127
    %67 = vset.pattern.permute.xlu0 0
    %68 = vperm.xlu0 %67, %v35
    %v69 = vpop.permute.xlu0 %68
    %70 = vset.pattern.permute.xlu0 0
    %71 = vperm.xlu0 %70, %v36
    %v72 = vpop.permute.xlu0 %71
    %73 = vset.pattern.permute.xlu0 0
    %74 = vperm.xlu0 %73, %v37
    %v75 = vpop.permute.xlu0 %74
    %76 = vset.pattern.permute.xlu0 0
    %77 = vperm.xlu0 %76, %v38
    %v78 = vpop.permute.xlu0 %77
    %79 = vset.pattern.permute.xlu0 0
    %80 = vperm.xlu0 %79, %v39
    %v81 = vpop.permute.xlu0 %80
    %82 = vset.pattern.permute.xlu0 0
    %83 = vperm.xlu0 %82, %v40
    %v84 = vpop.permute.xlu0 %83
    %85 = vset.pattern.permute.xlu0 0
    %86 = vperm.xlu0 %85, %v41
    %v87 = vpop.permute.xlu0 %86
    %88 = vset.pattern.permute.xlu0 0
    %89 = vperm.xlu0 %88, %v42
    %v90 = vpop.permute.xlu0 %89
    %91 = vset.pattern.permute.xlu0 0
    %92 = vperm.xlu0 %91, %v43
    %v93 = vpop.permute.xlu0 %92
    %94 = vset.pattern.permute.xlu0 0
    %95 = vperm.xlu0 %94, %v44
    %v96 = vpop.permute.xlu0 %95
    %97 = vset.pattern.permute.xlu0 0
    %98 = vperm.xlu0 %97, %v45
    %v99 = vpop.permute.xlu0 %98
    %100 = vset.pattern.permute.xlu0 0
    %101 = vperm.xlu0 %100, %v46
    %v102 = vpop.permute.xlu0 %101
    %103 = vset.pattern.permute.xlu0 0
    %104 = vperm.xlu0 %103, %v47
    %v105 = vpop.permute.xlu0 %104
    %106 = vset.pattern.permute.xlu0 0
    %107 = vperm.xlu0 %106, %v48
    %v108 = vpop.permute.xlu0 %107
    %109 = vset.pattern.permute.xlu0 0
    %110 = vperm.xlu0 %109, %v49
    %v111 = vpop.permute.xlu0 %110
    %112 = vset.pattern.permute.xlu0 0
    %113 = vperm.xlu0 %112, %v50
    %v114 = vpop.permute.xlu0 %113
    %115 = vset.pattern.permute.xlu0 0
    %116 = vperm.xlu0 %115, %v51
    %v117 = vpop.permute.xlu0 %116
    %118 = vset.pattern.permute.xlu0 0
    %119 = vperm.xlu0 %118, %v52
    %v120 = vpop.permute.xlu0 %119
    %121 = vset.pattern.permute.xlu0 0
    %122 = vperm.xlu0 %121, %v53
    %v123 = vpop.permute.xlu0 %122
    %124 = vset.pattern.permute.xlu0 0
    %125 = vperm.xlu0 %124, %v54
    %v126 = vpop.permute.xlu0 %125
    %127 = vset.pattern.permute.xlu0 0
    %128 = vperm.xlu0 %127, %v55
    %v129 = vpop.permute.xlu0 %128
    %130 = vset.pattern.permute.xlu0 0
    %131 = vperm.xlu0 %130, %v56
    %v132 = vpop.permute.xlu0 %131
    %133 = vset.pattern.permute.xlu0 0
    %134 = vperm.xlu0 %133, %v57
    %v135 = vpop.permute.xlu0 %134
    %136 = vset.pattern.permute.xlu0 0
    %137 = vperm.xlu0 %136, %v58
    %v138 = vpop.permute.xlu0 %137
    %139 = vset.pattern.permute.xlu0 0
    %140 = vperm.xlu0 %139, %v59
    %v141 = vpop.permute.xlu0 %140
    %142 = vset.pattern.permute.xlu0 0
    %143 = vperm.xlu0 %142, %v60
    %v144 = vpop.permute.xlu0 %143
    %145 = vset.pattern.permute.xlu0 0
    %146 = vperm.xlu0 %145, %v61
    %v147 = vpop.permute.xlu0 %146
    %148 = vset.pattern.permute.xlu0 0
    %149 = vperm.xlu0 %148, %v62
    %v150 = vpop.permute.xlu0 %149
    %151 = vset.pattern.permute.xlu0 0
    %152 = vperm.xlu0 %151, %v63
    %v153 = vpop.permute.xlu0 %152
    %154 = vset.pattern.permute.xlu0 0
    %155 = vperm.xlu0 %154, %v64
    %v156 = vpop.permute.xlu0 %155
    %vm157 = vcmp.eq.s32.totalorder %v69, %v66
    %vm158 = vcmp.eq.s32.totalorder %v72, %v66
    %vm159 = vcmp.eq.s32.totalorder %v75, %v66
    %vm160 = vcmp.eq.s32.totalorder %v78, %v66
    %vm161 = vcmp.eq.s32.totalorder %v81, %v66
    %vm162 = vcmp.eq.s32.totalorder %v84, %v66
    %vm163 = vcmp.eq.s32.totalorder %v87, %v66
    %vm164 = vcmp.eq.s32.totalorder %v90, %v66
    %vm165 = vcmp.eq.s32.totalorder %v93, %v66
    %vm166 = vcmp.eq.s32.totalorder %v96, %v66
    %vm167 = vcmp.eq.s32.totalorder %v99, %v66
    %vm168 = vcmp.eq.s32.totalorder %v102, %v66
    %vm169 = vcmp.eq.s32.totalorder %v105, %v66
    %vm170 = vcmp.eq.s32.totalorder %v108, %v66
    %vm171 = vcmp.eq.s32.totalorder %v111, %v66
    %vm172 = vcmp.eq.s32.totalorder %v114, %v66
    %vm173 = vcmp.eq.s32.totalorder %v117, %v66
    %vm174 = vcmp.eq.s32.totalorder %v120, %v66
    %vm175 = vcmp.eq.s32.totalorder %v123, %v66
    %vm176 = vcmp.eq.s32.totalorder %v126, %v66
    %vm177 = vcmp.eq.s32.totalorder %v129, %v66
    %vm178 = vcmp.eq.s32.totalorder %v132, %v66
    %vm179 = vcmp.eq.s32.totalorder %v135, %v66
    %vm180 = vcmp.eq.s32.totalorder %v138, %v66
    %vm181 = vcmp.eq.s32.totalorder %v141, %v66
    %vm182 = vcmp.eq.s32.totalorder %v144, %v66
    %vm183 = vcmp.eq.s32.totalorder %v147, %v66
    %vm184 = vcmp.eq.s32.totalorder %v150, %v66
    %vm185 = vcmp.eq.s32.totalorder %v153, %v66
    %vm186 = vcmp.eq.s32.totalorder %v156, %v66
    %v187 = vsel %vm157, 1, 0
    %v188 = vsel %vm158, 1, 0
    %v189 = vsel %vm159, 1, 0
    %v190 = vsel %vm160, 1, 0
    %v191 = vsel %vm161, 1, 0
    %v192 = vsel %vm162, 1, 0
    %v193 = vsel %vm163, 1, 0
    %v194 = vsel %vm164, 1, 0
    %v195 = vsel %vm165, 1, 0
    %v196 = vsel %vm166, 1, 0
    %v197 = vsel %vm167, 1, 0
    %v198 = vsel %vm168, 1, 0
    %v199 = vsel %vm169, 1, 0
    %v200 = vsel %vm170, 1, 0
    %v201 = vsel %vm171, 1, 0
    %v202 = vsel %vm172, 1, 0
    %v203 = vsel %vm173, 1, 0
    %v204 = vsel %vm174, 1, 0
    %v205 = vsel %vm175, 1, 0
    %v206 = vsel %vm176, 1, 0
    %v207 = vsel %vm177, 1, 0
    %v208 = vsel %vm178, 1, 0
    %v209 = vsel %vm179, 1, 0
    %v210 = vsel %vm180, 1, 0
    %v211 = vsel %vm181, 1, 0
    %v212 = vsel %vm182, 1, 0
    %v213 = vsel %vm183, 1, 0
    %v214 = vsel %vm184, 1, 0
    %v215 = vsel %vm185, 1, 0
    %v216 = vsel %vm186, 1, 0
    %v217 = vcvt.s32.f32 %v187
    %v218 = vcvt.s32.f32 %v188
    %v219 = vcvt.s32.f32 %v189
    %v220 = vcvt.s32.f32 %v190
    %v221 = vcvt.s32.f32 %v191
    %v222 = vcvt.s32.f32 %v192
    %v223 = vcvt.s32.f32 %v193
    %v224 = vcvt.s32.f32 %v194
    %v225 = vcvt.s32.f32 %v195
    %v226 = vcvt.s32.f32 %v196
    %v227 = vcvt.s32.f32 %v197
    %v228 = vcvt.s32.f32 %v198
    %v229 = vcvt.s32.f32 %v199
    %v230 = vcvt.s32.f32 %v200
    %v231 = vcvt.s32.f32 %v201
    %v232 = vcvt.s32.f32 %v202
    %v233 = vcvt.s32.f32 %v203
    %v234 = vcvt.s32.f32 %v204
    %v235 = vcvt.s32.f32 %v205
    %v236 = vcvt.s32.f32 %v206
    %v237 = vcvt.s32.f32 %v207
    %v238 = vcvt.s32.f32 %v208
    %v239 = vcvt.s32.f32 %v209
    %v240 = vcvt.s32.f32 %v210
    %v241 = vcvt.s32.f32 %v211
    %v242 = vcvt.s32.f32 %v212
    %v243 = vcvt.s32.f32 %v213
    %v244 = vcvt.s32.f32 %v214
    %v245 = vcvt.s32.f32 %v215
    %v246 = vcvt.s32.f32 %v216
    %v247 = vld [vmem:[%s1] sm:$0xff]
    %v248 = vld [vmem:[%s1 + $0x8] sm:$0xff]
    %v249 = vld [vmem:[%s1 + $0x10] sm:$0xff]
    %v250 = vld [vmem:[%s1 + $0x18] sm:$0xff]
    %v251 = vld [vmem:[%s1 + $0x20] sm:$0xff]
    %v252 = vld [vmem:[%s1 + $0x28] sm:$0xff]
    %v253 = vld [vmem:[%s1 + $0x30] sm:$0xff]
    %v254 = vld [vmem:[%s1 + $0x38] sm:$0xff]
    %v255 = vld [vmem:[%s1 + $0x40] sm:$0xff]
    %v256 = vld [vmem:[%s1 + $0x48] sm:$0xff]
    %v257 = vld [vmem:[%s1 + $0x50] sm:$0xff]
    %v258 = vld [vmem:[%s1 + $0x58] sm:$0xff]
    %v259 = vld [vmem:[%s1 + $0x60] sm:$0xff]
    %v260 = vld [vmem:[%s1 + $0x68] sm:$0xff]
    %v261 = vld [vmem:[%s1 + $0x70] sm:$0xff]
    %v262 = vld [vmem:[%s1 + $0x78] sm:$0xff]
    %v263 = vld [vmem:[%s1 + $0x80] sm:$0xff]
    %v264 = vld [vmem:[%s1 + $0x88] sm:$0xff]
    %v265 = vld [vmem:[%s1 + $0x90] sm:$0xff]
    %v266 = vld [vmem:[%s1 + $0x98] sm:$0xff]
    %v267 = vld [vmem:[%s1 + $0xa0] sm:$0xff]
    %v268 = vld [vmem:[%s1 + $0xa8] sm:$0xff]
    %v269 = vld [vmem:[%s1 + $0xb0] sm:$0xff]
    %v270 = vld [vmem:[%s1 + $0xb8] sm:$0xff]
    %vm271 = vcmask 785408
    %v273 = vsel %vm271, %v217, 0
    %v276 = vsel %vm271, %v218, 0
    %v279 = vsel %vm271, %v219, 0
    %v282 = vsel %vm271, %v220, 0
    %v285 = vsel %vm271, %v221, 0
    %v288 = vsel %vm271, %v222, 0
    %v291 = vsel %vm271, %v223, 0
    %v294 = vsel %vm271, %v224, 0
    %v297 = vsel %vm271, %v225, 0
    %v300 = vsel %vm271, %v226, 0
    %v303 = vsel %vm271, %v227, 0
    %v306 = vsel %vm271, %v228, 0
    %v309 = vsel %vm271, %v229, 0
    %v312 = vsel %vm271, %v230, 0
    %v315 = vsel %vm271, %v231, 0
    %v318 = vsel %vm271, %v232, 0
    %v321 = vsel %vm271, %v233, 0
    %v324 = vsel %vm271, %v234, 0
    %v327 = vsel %vm271, %v235, 0
    %v330 = vsel %vm271, %v236, 0
    %v333 = vsel %vm271, %v237, 0
    %v336 = vsel %vm271, %v238, 0
    %v339 = vsel %vm271, %v239, 0
    %v342 = vsel %vm271, %v240, 0
    %v345 = vsel %vm271, %v241, 0
    %v348 = vsel %vm271, %v242, 0
    %v351 = vsel %vm271, %v243, 0
    %v354 = vsel %vm271, %v244, 0
    %v357 = vsel %vm271, %v245, 0
    %v360 = vsel %vm271, %v246, 0
    %362 = vmatprep.subr.mxu0 0.0
    %363 = vmatpush1.msra.mxu0 0.0
    %364 = vmatprep.subr.mxu0 0.0
    %365 = vmatpush1.msra.mxu0 0.0
    %366 = vmatprep.subr.mxu0 0.0
    %367 = vmatpush1.msra.mxu0 0.0
    %368 = vmatprep.subr.mxu0 0.0
    %369 = vmatpush1.msra.mxu0 0.0
    %370 = vmatprep.subr.mxu0 %v270
    %371 = vmatpush1.msra.mxu0 %v269
    %372 = vmatprep.subr.mxu0 %v268
    %373 = vmatpush1.msra.mxu0 %v267
    %374 = vmatprep.subr.mxu0 %v266
    %375 = vmatpush1.msra.mxu0 %v265
    %376 = vmatprep.subr.mxu0 %v264
    %377 = vmatpush1.msra.mxu0 %v263
    %378 = vmatprep.subr.mxu0 %v262
    %379 = vmatpush1.msra.mxu0 %v261
    %380 = vmatprep.subr.mxu0 %v260
    %381 = vmatpush1.msra.mxu0 %v259
    %382 = vmatprep.subr.mxu0 %v258
    %383 = vmatpush1.msra.mxu0 %v257
    %384 = vmatprep.subr.mxu0 %v256
    %385 = vmatpush1.msra.mxu0 %v255
    %386 = vmatprep.subr.mxu0 %v254
    %387 = vmatpush1.msra.mxu0 %v253
    %388 = vmatprep.subr.mxu0 %v252
    %389 = vmatpush1.msra.mxu0 %v251
    %390 = vmatprep.subr.mxu0 %v250
    %391 = vmatpush1.msra.mxu0 %v249
    %392 = vmatprep.subr.mxu0 %v248
    %393 = vmatpush1.msra.mxu0 %v247
    %394 = vmatprep.subr.mxu0 0.0
    %395 = vmatpush2.msra.mxu0 0.0
    %396 = vmatprep.subr.mxu0 0.0
    %397 = vmatpush2.msra.mxu0 0.0
    %398 = vmatprep.subr.mxu0 0.0
    %399 = vmatpush2.msra.mxu0 0.0
    %400 = vmatprep.subr.mxu0 0.0
    %401 = vmatpush2.msra.mxu0 0.0
    %402 = vmatprep.subr.mxu0 0.0
    %403 = vmatpush2.msra.mxu0 0.0
    %404 = vmatprep.subr.mxu0 0.0
    %405 = vmatpush2.msra.mxu0 0.0
    %406 = vmatprep.subr.mxu0 0.0
    %407 = vmatpush2.msra.mxu0 0.0
    %408 = vmatprep.subr.mxu0 0.0
    %409 = vmatpush2.msra.mxu0 0.0
    %410 = vmatprep.subr.mxu0 0.0
    %411 = vmatpush2.msra.mxu0 0.0
    %412 = vmatprep.subr.mxu0 0.0
    %413 = vmatpush2.msra.mxu0 0.0
    %414 = vmatprep.subr.mxu0 0.0
    %415 = vmatpush2.msra.mxu0 0.0
    %416 = vmatprep.subr.mxu0 0.0
    %417 = vmatpush2.msra.mxu0 0.0
    %418 = vmatprep.subr.mxu0 0.0
    %419 = vmatpush2.msra.mxu0 0.0
    %420 = vmatprep.subr.mxu0 0.0
    %421 = vmatpush2.msra.mxu0 0.0
    %422 = vmatprep.subr.mxu0 0.0
    %423 = vmatpush2.msra.mxu0 0.0
    %424 = vmatprep.subr.mxu0 0.0
    %425 = vmatpush2.msra.mxu0 0.0
    %426 = vmatprep.mubr.f32.mxu0 0.0
    %427 = vmatmul.mubr.f32.gmra.mxu0 %v273
    %v428 = vpop.f32.mrf.mxu0
    %v429 = vadd.f32 0.0, %v428
    %v430 = vpop.f32.mrf.mxu0
    %v431 = vadd.f32 0.0, %v430
    %432 = vmatprep.mubr.f32.mxu0 0.0
    %433 = vmatmul.mubr.f32.gmra.mxu0 %v276
    %v434 = vpop.f32.mrf.mxu0
    %v435 = vadd.f32 0.0, %v434
    %v436 = vpop.f32.mrf.mxu0
    %v437 = vadd.f32 0.0, %v436
    %438 = vmatprep.mubr.f32.mxu0 0.0
    %439 = vmatmul.mubr.f32.gmra.mxu0 %v279
    %v440 = vpop.f32.mrf.mxu0
    %v441 = vadd.f32 0.0, %v440
    %v442 = vpop.f32.mrf.mxu0
    %v443 = vadd.f32 0.0, %v442
    %444 = vmatprep.mubr.f32.mxu0 0.0
    %445 = vmatmul.mubr.f32.gmra.mxu0 %v282
    %v446 = vpop.f32.mrf.mxu0
    %v447 = vadd.f32 0.0, %v446
    %v448 = vpop.f32.mrf.mxu0
    %v449 = vadd.f32 0.0, %v448
    %450 = vmatprep.mubr.f32.mxu0 0.0
    %451 = vmatmul.mubr.f32.gmra.mxu0 %v285
    %v452 = vpop.f32.mrf.mxu0
    %v453 = vadd.f32 0.0, %v452
    %v454 = vpop.f32.mrf.mxu0
    %v455 = vadd.f32 0.0, %v454
    %456 = vmatprep.mubr.f32.mxu0 0.0
    %457 = vmatmul.mubr.f32.gmra.mxu0 %v288
    %v458 = vpop.f32.mrf.mxu0
    %v459 = vadd.f32 0.0, %v458
    %v460 = vpop.f32.mrf.mxu0
    %v461 = vadd.f32 0.0, %v460
    %462 = vmatprep.mubr.f32.mxu0 0.0
    %463 = vmatmul.mubr.f32.gmra.mxu0 %v291
    %v464 = vpop.f32.mrf.mxu0
    %v465 = vadd.f32 0.0, %v464
    %v466 = vpop.f32.mrf.mxu0
    %v467 = vadd.f32 0.0, %v466
    %468 = vmatprep.mubr.f32.mxu0 0.0
    %469 = vmatmul.mubr.f32.gmra.mxu0 %v294
    %v470 = vpop.f32.mrf.mxu0
    %v471 = vadd.f32 0.0, %v470
    %v472 = vpop.f32.mrf.mxu0
    %v473 = vadd.f32 0.0, %v472
    %474 = vmatprep.mubr.f32.mxu0 0.0
    %475 = vmatmul.mubr.f32.gmra.mxu0 %v297
    %v476 = vpop.f32.mrf.mxu0
    %v477 = vadd.f32 0.0, %v476
    %v478 = vpop.f32.mrf.mxu0
    %v479 = vadd.f32 0.0, %v478
    %480 = vmatprep.mubr.f32.mxu0 0.0
    %481 = vmatmul.mubr.f32.gmra.mxu0 %v300
    %v482 = vpop.f32.mrf.mxu0
    %v483 = vadd.f32 0.0, %v482
    %v484 = vpop.f32.mrf.mxu0
    %v485 = vadd.f32 0.0, %v484
    %486 = vmatprep.mubr.f32.mxu0 0.0
    %487 = vmatmul.mubr.f32.gmra.mxu0 %v303
    %v488 = vpop.f32.mrf.mxu0
    %v489 = vadd.f32 0.0, %v488
    %v490 = vpop.f32.mrf.mxu0
    %v491 = vadd.f32 0.0, %v490
    %492 = vmatprep.mubr.f32.mxu0 0.0
    %493 = vmatmul.mubr.f32.gmra.mxu0 %v306
    %v494 = vpop.f32.mrf.mxu0
    %v495 = vadd.f32 0.0, %v494
    %v496 = vpop.f32.mrf.mxu0
    %v497 = vadd.f32 0.0, %v496
    %498 = vmatprep.mubr.f32.mxu0 0.0
    %499 = vmatmul.mubr.f32.gmra.mxu0 %v309
    %v500 = vpop.f32.mrf.mxu0
    %v501 = vadd.f32 0.0, %v500
    %v502 = vpop.f32.mrf.mxu0
    %v503 = vadd.f32 0.0, %v502
    %504 = vmatprep.mubr.f32.mxu0 0.0
    %505 = vmatmul.mubr.f32.gmra.mxu0 %v312
    %v506 = vpop.f32.mrf.mxu0
    %v507 = vadd.f32 0.0, %v506
    %v508 = vpop.f32.mrf.mxu0
    %v509 = vadd.f32 0.0, %v508
    %510 = vmatprep.mubr.f32.mxu0 0.0
    %511 = vmatmul.mubr.f32.gmra.mxu0 %v315
    %v512 = vpop.f32.mrf.mxu0
    %v513 = vadd.f32 0.0, %v512
    %v514 = vpop.f32.mrf.mxu0
    %v515 = vadd.f32 0.0, %v514
    %516 = vmatprep.mubr.f32.mxu0 0.0
    %517 = vmatmul.mubr.f32.gmra.mxu0 %v318
    %v518 = vpop.f32.mrf.mxu0
    %v519 = vadd.f32 0.0, %v518
    %v520 = vpop.f32.mrf.mxu0
    %v521 = vadd.f32 0.0, %v520
    %522 = vmatprep.mubr.f32.mxu0 0.0
    %523 = vmatmul.mubr.f32.gmra.mxu0 %v321
    %v524 = vpop.f32.mrf.mxu0
    %v525 = vadd.f32 0.0, %v524
    %v526 = vpop.f32.mrf.mxu0
    %v527 = vadd.f32 0.0, %v526
    %528 = vmatprep.mubr.f32.mxu0 0.0
    %529 = vmatmul.mubr.f32.gmra.mxu0 %v324
    %v530 = vpop.f32.mrf.mxu0
    %v531 = vadd.f32 0.0, %v530
    %v532 = vpop.f32.mrf.mxu0
    %v533 = vadd.f32 0.0, %v532
    %534 = vmatprep.mubr.f32.mxu0 0.0
    %535 = vmatmul.mubr.f32.gmra.mxu0 %v327
    %v536 = vpop.f32.mrf.mxu0
    %v537 = vadd.f32 0.0, %v536
    %v538 = vpop.f32.mrf.mxu0
    %v539 = vadd.f32 0.0, %v538
    %540 = vmatprep.mubr.f32.mxu0 0.0
    %541 = vmatmul.mubr.f32.gmra.mxu0 %v330
    %v542 = vpop.f32.mrf.mxu0
    %v543 = vadd.f32 0.0, %v542
    %v544 = vpop.f32.mrf.mxu0
    %v545 = vadd.f32 0.0, %v544
    %546 = vmatprep.mubr.f32.mxu0 0.0
    %547 = vmatmul.mubr.f32.gmra.mxu0 %v333
    %v548 = vpop.f32.mrf.mxu0
    %v549 = vadd.f32 0.0, %v548
    %v550 = vpop.f32.mrf.mxu0
    %v551 = vadd.f32 0.0, %v550
    %552 = vmatprep.mubr.f32.mxu0 0.0
    %553 = vmatmul.mubr.f32.gmra.mxu0 %v336
    %v554 = vpop.f32.mrf.mxu0
    %v555 = vadd.f32 0.0, %v554
    %v556 = vpop.f32.mrf.mxu0
    %v557 = vadd.f32 0.0, %v556
    %558 = vmatprep.mubr.f32.mxu0 0.0
    %559 = vmatmul.mubr.f32.gmra.mxu0 %v339
    %v560 = vpop.f32.mrf.mxu0
    %v561 = vadd.f32 0.0, %v560
    %v562 = vpop.f32.mrf.mxu0
    %v563 = vadd.f32 0.0, %v562
    %564 = vmatprep.mubr.f32.mxu0 0.0
    %565 = vmatmul.mubr.f32.gmra.mxu0 %v342
    %v566 = vpop.f32.mrf.mxu0
    %v567 = vadd.f32 0.0, %v566
    %v568 = vpop.f32.mrf.mxu0
    %v569 = vadd.f32 0.0, %v568
    %570 = vmatprep.mubr.f32.mxu0 0.0
    %571 = vmatmul.mubr.f32.gmra.mxu0 %v345
    %v572 = vpop.f32.mrf.mxu0
    %v573 = vadd.f32 0.0, %v572
    %v574 = vpop.f32.mrf.mxu0
    %v575 = vadd.f32 0.0, %v574
    %576 = vmatprep.mubr.f32.mxu0 0.0
    %577 = vmatmul.mubr.f32.gmra.mxu0 %v348
    %v578 = vpop.f32.mrf.mxu0
    %v579 = vadd.f32 0.0, %v578
    %v580 = vpop.f32.mrf.mxu0
    %v581 = vadd.f32 0.0, %v580
    %582 = vmatprep.mubr.f32.mxu0 0.0
    %583 = vmatmul.mubr.f32.gmra.mxu0 %v351
    %v584 = vpop.f32.mrf.mxu0
    %v585 = vadd.f32 0.0, %v584
    %v586 = vpop.f32.mrf.mxu0
    %v587 = vadd.f32 0.0, %v586
    %588 = vmatprep.mubr.f32.mxu0 0.0
    %589 = vmatmul.mubr.f32.gmra.mxu0 %v354
    %v590 = vpop.f32.mrf.mxu0
    %v591 = vadd.f32 0.0, %v590
    %v592 = vpop.f32.mrf.mxu0
    %v593 = vadd.f32 0.0, %v592
    %594 = vmatprep.mubr.f32.mxu0 0.0
    %595 = vmatmul.mubr.f32.gmra.mxu0 %v357
    %v596 = vpop.f32.mrf.mxu0
    %v597 = vadd.f32 0.0, %v596
    %v598 = vpop.f32.mrf.mxu0
    %v599 = vadd.f32 0.0, %v598
    %600 = vmatprep.mubr.f32.mxu0 0.0
    %601 = vmatmul.mubr.f32.gmra.mxu0 %v360
    %v602 = vpop.f32.mrf.mxu0
    %v603 = vadd.f32 0.0, %v602
    %v604 = vpop.f32.mrf.mxu0
    %v605 = vadd.f32 0.0, %v604
    %606 = vdwg.mxu0
    %607 = vst [vmem:[#allocation2] sm:$0xff] %v429
    %608 = vst [vmem:[#allocation2 + $0x8] sm:$0xff] %v431
    %609 = vst [vmem:[#allocation2 + $0x10] sm:$0xff] %v435
    %610 = vst [vmem:[#allocation2 + $0x18] sm:$0xff] %v437
    %611 = vst [vmem:[#allocation2 + $0x20] sm:$0xff] %v441
    %612 = vst [vmem:[#allocation2 + $0x28] sm:$0xff] %v443
    %613 = vst [vmem:[#allocation2 + $0x30] sm:$0xff] %v447
    %614 = vst [vmem:[#allocation2 + $0x38] sm:$0xff] %v449
    %615 = vst [vmem:[#allocation2 + $0x40] sm:$0xff] %v453
    %616 = vst [vmem:[#allocation2 + $0x48] sm:$0xff] %v455
    %617 = vst [vmem:[#allocation2 + $0x50] sm:$0xff] %v459
    %618 = vst [vmem:[#allocation2 + $0x58] sm:$0xff] %v461
    %619 = vst [vmem:[#allocation2 + $0x60] sm:$0xff] %v465
    %620 = vst [vmem:[#allocation2 + $0x68] sm:$0xff] %v467
    %621 = vst [vmem:[#allocation2 + $0x70] sm:$0xff] %v471
    %622 = vst [vmem:[#allocation2 + $0x78] sm:$0xff] %v473
    %623 = vst [vmem:[#allocation2 + $0x80] sm:$0xff] %v477
    %624 = vst [vmem:[#allocation2 + $0x88] sm:$0xff] %v479
    %625 = vst [vmem:[#allocation2 + $0x90] sm:$0xff] %v483
    %626 = vst [vmem:[#allocation2 + $0x98] sm:$0xff] %v485
    %627 = vst [vmem:[#allocation2 + $0xa0] sm:$0xff] %v489
    %628 = vst [vmem:[#allocation2 + $0xa8] sm:$0xff] %v491
    %629 = vst [vmem:[#allocation2 + $0xb0] sm:$0xff] %v495
    %630 = vst [vmem:[#allocation2 + $0xb8] sm:$0xff] %v497
    %631 = vst [vmem:[#allocation2 + $0xc0] sm:$0xff] %v501
    %632 = vst [vmem:[#allocation2 + $0xc8] sm:$0xff] %v503
    %633 = vst [vmem:[#allocation2 + $0xd0] sm:$0xff] %v507
    %634 = vst [vmem:[#allocation2 + $0xd8] sm:$0xff] %v509
    %635 = vst [vmem:[#allocation2 + $0xe0] sm:$0xff] %v513
    %636 = vst [vmem:[#allocation2 + $0xe8] sm:$0xff] %v515
    %637 = vst [vmem:[#allocation2 + $0xf0] sm:$0xff] %v519
    %638 = vst [vmem:[#allocation2 + $0xf8] sm:$0xff] %v521
    %639 = vst [vmem:[#allocation2 + $0x100] sm:$0xff] %v525
    %640 = vst [vmem:[#allocation2 + $0x108] sm:$0xff] %v527
    %641 = vst [vmem:[#allocation2 + $0x110] sm:$0xff] %v531
    %642 = vst [vmem:[#allocation2 + $0x118] sm:$0xff] %v533
    %643 = vst [vmem:[#allocation2 + $0x120] sm:$0xff] %v537
    %644 = vst [vmem:[#allocation2 + $0x128] sm:$0xff] %v539
    %645 = vst [vmem:[#allocation2 + $0x130] sm:$0xff] %v543
    %646 = vst [vmem:[#allocation2 + $0x138] sm:$0xff] %v545
    %647 = vst [vmem:[#allocation2 + $0x140] sm:$0xff] %v549
    %648 = vst [vmem:[#allocation2 + $0x148] sm:$0xff] %v551
    %649 = vst [vmem:[#allocation2 + $0x150] sm:$0xff] %v555
    %650 = vst [vmem:[#allocation2 + $0x158] sm:$0xff] %v557
    %651 = vst [vmem:[#allocation2 + $0x160] sm:$0xff] %v561
    %652 = vst [vmem:[#allocation2 + $0x168] sm:$0xff] %v563
    %653 = vst [vmem:[#allocation2 + $0x170] sm:$0xff] %v567
    %654 = vst [vmem:[#allocation2 + $0x178] sm:$0xff] %v569
    %655 = vst [vmem:[#allocation2 + $0x180] sm:$0xff] %v573
    %656 = vst [vmem:[#allocation2 + $0x188] sm:$0xff] %v575
    %657 = vst [vmem:[#allocation2 + $0x190] sm:$0xff] %v579
    %658 = vst [vmem:[#allocation2 + $0x198] sm:$0xff] %v581
    %659 = vst [vmem:[#allocation2 + $0x1a0] sm:$0xff] %v585
    %660 = vst [vmem:[#allocation2 + $0x1a8] sm:$0xff] %v587
    %661 = vst [vmem:[#allocation2 + $0x1b0] sm:$0xff] %v591
    %662 = vst [vmem:[#allocation2 + $0x1b8] sm:$0xff] %v593
    %663 = vst [vmem:[#allocation2 + $0x1c0] sm:$0xff] %v597
    %664 = vst [vmem:[#allocation2 + $0x1c8] sm:$0xff] %v599
    %665 = vst [vmem:[#allocation2 + $0x1d0] sm:$0xff] %v603
    %666 = vst [vmem:[#allocation2 + $0x1d8] sm:$0xff] %v605
    %v667 = vld [vmem:[#allocation2] sm:$0xff]
    %v668 = vld [vmem:[#allocation2 + $0x10] sm:$0xff]
    %v669 = vld [vmem:[#allocation2 + $0x1c8] sm:$0xff]
    %v670 = vld [vmem:[#allocation2 + $0x1d8] sm:$0xff]
    %v671 = vadd.f32 %v667, %v669
    %v672 = vadd.f32 %v668, %v670
    %v673 = vld [vmem:[#allocation4] sm:$0xff]
    %v674 = vld [vmem:[#allocation4 + $0x8] sm:$0xff]
    %v675 = vld [vmem:[#allocation4 + $0x10] sm:$0xff]
    %v676 = vld [vmem:[#allocation4 + $0x18] sm:$0xff]
    %vm677 = vcmask 261120
    %v679 = vsel %vm677, 0.0, 0
    %681 = vmatprep.subr.mxu0 0.0
    %682 = vmatpush1.msra.mxu0 0.0
    %683 = vmatprep.subr.mxu0 0.0
    %684 = vmatpush1.msra.mxu0 0.0
    %685 = vmatprep.subr.mxu0 0.0
    %686 = vmatpush1.msra.mxu0 0.0
    %687 = vmatprep.subr.mxu0 0.0
    %688 = vmatpush1.msra.mxu0 0.0
    %689 = vmatprep.subr.mxu0 0.0
    %690 = vmatpush1.msra.mxu0 0.0
    %691 = vmatprep.subr.mxu0 0.0
    %692 = vmatpush1.msra.mxu0 0.0
    %693 = vmatprep.subr.mxu0 0.0
    %694 = vmatpush1.msra.mxu0 0.0
    %695 = vmatprep.subr.mxu0 0.0
    %696 = vmatpush1.msra.mxu0 0.0
    %697 = vmatprep.subr.mxu0 0.0
    %698 = vmatpush1.msra.mxu0 0.0
    %699 = vmatprep.subr.mxu0 0.0
    %700 = vmatpush1.msra.mxu0 0.0
    %701 = vmatprep.subr.mxu0 0.0
    %702 = vmatpush1.msra.mxu0 0.0
    %703 = vmatprep.subr.mxu0 0.0
    %704 = vmatpush1.msra.mxu0 0.0
    %705 = vmatprep.subr.mxu0 0.0
    %706 = vmatpush1.msra.mxu0 %v676
    %707 = vmatprep.subr.mxu0 0.0
    %708 = vmatpush1.msra.mxu0 %v675
    %709 = vmatprep.subr.mxu0 0.0
    %710 = vmatpush1.msra.mxu0 %v674
    %711 = vmatprep.subr.mxu0 0.0
    %712 = vmatpush1.msra.mxu0 %v673
    %713 = vmatprep.subr.mxu0 0.0
    %714 = vmatpush2.msra.mxu0 0.0
    %715 = vmatprep.subr.mxu0 0.0
    %716 = vmatpush2.msra.mxu0 0.0
    %717 = vmatprep.subr.mxu0 0.0
    %718 = vmatpush2.msra.mxu0 0.0
    %719 = vmatprep.subr.mxu0 0.0
    %720 = vmatpush2.msra.mxu0 0.0
    %721 = vmatprep.subr.mxu0 0.0
    %722 = vmatpush2.msra.mxu0 0.0
    %723 = vmatprep.subr.mxu0 0.0
    %724 = vmatpush2.msra.mxu0 0.0
    %725 = vmatprep.subr.mxu0 0.0
    %726 = vmatpush2.msra.mxu0 0.0
    %727 = vmatprep.subr.mxu0 0.0
    %728 = vmatpush2.msra.mxu0 0.0
    %729 = vmatprep.subr.mxu0 0.0
    %730 = vmatpush2.msra.mxu0 0.0
    %731 = vmatprep.subr.mxu0 0.0
    %732 = vmatpush2.msra.mxu0 0.0
    %733 = vmatprep.subr.mxu0 0.0
    %734 = vmatpush2.msra.mxu0 0.0
    %735 = vmatprep.subr.mxu0 0.0
    %736 = vmatpush2.msra.mxu0 0.0
    %737 = vmatprep.subr.mxu0 0.0
    %738 = vmatpush2.msra.mxu0 0.0
    %739 = vmatprep.subr.mxu0 0.0
    %740 = vmatpush2.msra.mxu0 0.0
    %741 = vmatprep.subr.mxu0 0.0
    %742 = vmatpush2.msra.mxu0 0.0
    %743 = vmatprep.subr.mxu0 0.0
    %744 = vmatpush2.msra.mxu0 0.0
    %745 = vmatprep.mubr.f32.mxu0 0.0
    %746 = vmatmul.mubr.f32.gmra.mxu0 %v679
    %v747 = vpop.f32.mrf.mxu0
    %v748 = vadd.f32 0.0, %v747
    %v749 = vpop.f32.mrf.mxu0
    %750 = vmatprep.mubr.f32.mxu0 0.0
    %751 = vmatmul.mubr.f32.gmra.mxu0 %v679
    %v752 = vpop.f32.mrf.mxu0
    %v753 = vadd.f32 0.0, %v752
    %v754 = vpop.f32.mrf.mxu0
    %755 = vdwg.mxu0
    %v756 = vadd.f32 %v671, %v748
    %v757 = vadd.f32 %v672, %v753
    %v758 = vxor.u32 %v756, 2147483648
    %v759 = vxor.u32 %v757, 2147483648
    %v760 = vmul.f32 %v758, 1.442695
    %v761 = vpow.pop %v760
    %v762 = vmul.f32 %v759, 1.442695
    %v763 = vpow.pop %v762
    %v764 = vadd.f32 %v761, 1.0
    %v765 = vadd.f32 %v763, 1.0
    %v766 = vrcp.pop %v764
    %v767 = vmul.f32 1.0, %v766
    %v768 = vrcp.pop %v765
    %v769 = vmul.f32 1.0, %v768
    %v770 = vtanh.pop %v756
    %v771 = vtanh.pop %v757
    %v772 = vmul.f32 %v767, 0.0
    %v773 = vmul.f32 %v769, 0.0
    %776 = vrot.lane.b32.xlu0 %v770, 64
    %v777 = vpop.permute.xlu0 %776
    %778 = vrot.lane.b32.xlu0 %v771, 64
    %v779 = vpop.permute.xlu0 %778
    %v782 = vmul.f32 %v767, %v777
    %v783 = vmul.f32 %v769, %v779
    %786 = vrot.lane.b32.xlu0 %v782, 32
    %v787 = vpop.permute.xlu0 %786
    %788 = vrot.lane.b32.xlu0 %v783, 32
    %v789 = vpop.permute.xlu0 %788
    %v792 = vadd.f32 %v772, %v787
    %v793 = vadd.f32 %v773, %v789
    %v794 = vtanh.pop %v792
    %v795 = vtanh.pop %v793
    %798 = vrot.lane.b32.xlu0 %v794, 64
    %v799 = vpop.permute.xlu0 %798
    %800 = vrot.lane.b32.xlu0 %v795, 64
    %v801 = vpop.permute.xlu0 %800
    %v804 = vmul.f32 %v767, %v799
    %v805 = vmul.f32 %v769, %v801
    %808 = vrot.lane.b32.xlu0 %v804, 32
    %v809 = vpop.permute.xlu0 %808
    %810 = vrot.lane.b32.xlu0 %v805, 32
    %v811 = vpop.permute.xlu0 %810
    %vm814 = vcmask 130048
    %815 = vst.msk [vmem:[#allocation3] sm:$0xff] %vm814, %v809
    %816 = vst.msk [vmem:[#allocation3 + $0x8] sm:$0xff] %vm814, %v811
    %vm817 = vcmask 261248
    %818 = vst.msk [vmem:[#allocation3 + $0xe0] sm:$0xff] %vm817, %v809
    %819 = vst.msk [vmem:[#allocation3 + $0xe8] sm:$0xff] %vm817, %v811
    %v820 = vld [vmem:[#allocation2 + $0x20] sm:$0xff]
    %v821 = vld [vmem:[#allocation2 + $0x30] sm:$0xff]
    %v822 = vld [vmem:[#allocation2 + $0x1a8] sm:$0xff]
    %v823 = vld [vmem:[#allocation2 + $0x1b8] sm:$0xff]
    %v824 = vadd.f32 %v820, %v822
    %v825 = vadd.f32 %v821, %v823
    %v826 = vld [vmem:[#allocation4] sm:$0xff]
    %v827 = vld [vmem:[#allocation4 + $0x8] sm:$0xff]
    %v828 = vld [vmem:[#allocation4 + $0x10] sm:$0xff]
    %v829 = vld [vmem:[#allocation4 + $0x18] sm:$0xff]
    %v830 = vsel %vm677, %v809, 0
    %v832 = vsel %vm677, %v811, 0
    %834 = vmatprep.subr.mxu0 0.0
    %835 = vmatpush1.msra.mxu0 0.0
    %836 = vmatprep.subr.mxu0 0.0
    %837 = vmatpush1.msra.mxu0 0.0
    %838 = vmatprep.subr.mxu0 0.0
    %839 = vmatpush1.msra.mxu0 0.0
    %840 = vmatprep.subr.mxu0 0.0
    %841 = vmatpush1.msra.mxu0 0.0
    %842 = vmatprep.subr.mxu0 0.0
    %843 = vmatpush1.msra.mxu0 0.0
    %844 = vmatprep.subr.mxu0 0.0
    %845 = vmatpush1.msra.mxu0 0.0
    %846 = vmatprep.subr.mxu0 0.0
    %847 = vmatpush1.msra.mxu0 0.0
    %848 = vmatprep.subr.mxu0 0.0
    %849 = vmatpush1.msra.mxu0 0.0
    %850 = vmatprep.subr.mxu0 0.0
    %851 = vmatpush1.msra.mxu0 0.0
    %852 = vmatprep.subr.mxu0 0.0
    %853 = vmatpush1.msra.mxu0 0.0
    %854 = vmatprep.subr.mxu0 0.0
    %855 = vmatpush1.msra.mxu0 0.0
    %856 = vmatprep.subr.mxu0 0.0
    %857 = vmatpush1.msra.mxu0 0.0
    %858 = vmatprep.subr.mxu0 0.0
    %859 = vmatpush1.msra.mxu0 %v829
    %860 = vmatprep.subr.mxu0 0.0
    %861 = vmatpush1.msra.mxu0 %v828
    %862 = vmatprep.subr.mxu0 0.0
    %863 = vmatpush1.msra.mxu0 %v827
    %864 = vmatprep.subr.mxu0 0.0
    %865 = vmatpush1.msra.mxu0 %v826
    %866 = vmatprep.subr.mxu0 0.0
    %867 = vmatpush2.msra.mxu0 0.0
    %868 = vmatprep.subr.mxu0 0.0
    %869 = vmatpush2.msra.mxu0 0.0
    %870 = vmatprep.subr.mxu0 0.0
    %871 = vmatpush2.msra.mxu0 0.0
    %872 = vmatprep.subr.mxu0 0.0
    %873 = vmatpush2.msra.mxu0 0.0
    %874 = vmatprep.subr.mxu0 0.0
    %875 = vmatpush2.msra.mxu0 0.0
    %876 = vmatprep.subr.mxu0 0.0
    %877 = vmatpush2.msra.mxu0 0.0
    %878 = vmatprep.subr.mxu0 0.0
    %879 = vmatpush2.msra.mxu0 0.0
    %880 = vmatprep.subr.mxu0 0.0
    %881 = vmatpush2.msra.mxu0 0.0
    %882 = vmatprep.subr.mxu0 0.0
    %883 = vmatpush2.msra.mxu0 0.0
    %884 = vmatprep.subr.mxu0 0.0
    %885 = vmatpush2.msra.mxu0 0.0
    %886 = vmatprep.subr.mxu0 0.0
    %887 = vmatpush2.msra.mxu0 0.0
    %888 = vmatprep.subr.mxu0 0.0
    %889 = vmatpush2.msra.mxu0 0.0
    %890 = vmatprep.subr.mxu0 0.0
    %891 = vmatpush2.msra.mxu0 0.0
    %892 = vmatprep.subr.mxu0 0.0
    %893 = vmatpush2.msra.mxu0 0.0
    %894 = vmatprep.subr.mxu0 0.0
    %895 = vmatpush2.msra.mxu0 0.0
    %896 = vmatprep.subr.mxu0 0.0
    %897 = vmatpush2.msra.mxu0 0.0
    %898 = vmatprep.mubr.f32.mxu0 0.0
    %899 = vmatmul.mubr.f32.gmra.mxu0 %v830
    %v900 = vpop.f32.mrf.mxu0
    %v901 = vadd.f32 0.0, %v900
    %v902 = vpop.f32.mrf.mxu0
    %903 = vmatprep.mubr.f32.mxu0 0.0
    %904 = vmatmul.mubr.f32.gmra.mxu0 %v832
    %v905 = vpop.f32.mrf.mxu0
    %v906 = vadd.f32 0.0, %v905
    %v907 = vpop.f32.mrf.mxu0
    %908 = vdwg.mxu0
    %v909 = vadd.f32 %v824, %v901
    %v910 = vadd.f32 %v825, %v906
    %v911 = vxor.u32 %v909, 2147483648
    %v912 = vxor.u32 %v910, 2147483648
    %v913 = vmul.f32 %v911, 1.442695
    %v914 = vpow.pop %v913
    %v915 = vmul.f32 %v912, 1.442695
    %v916 = vpow.pop %v915
    %v917 = vadd.f32 %v914, 1.0
    %v918 = vadd.f32 %v916, 1.0
    %v919 = vrcp.pop %v917
    %v920 = vmul.f32 1.0, %v919
    %v921 = vrcp.pop %v918
    %v922 = vmul.f32 1.0, %v921
    %v923 = vtanh.pop %v909
    %v924 = vtanh.pop %v910
    %v925 = vmul.f32 %v920, %v792
    %v926 = vmul.f32 %v922, %v793
    %929 = vrot.lane.b32.xlu0 %v923, 64
    %v930 = vpop.permute.xlu0 %929
    %931 = vrot.lane.b32.xlu0 %v924, 64
    %v932 = vpop.permute.xlu0 %931
    %v935 = vmul.f32 %v920, %v930
    %v936 = vmul.f32 %v922, %v932
    %939 = vrot.lane.b32.xlu0 %v935, 32
    %v940 = vpop.permute.xlu0 %939
    %941 = vrot.lane.b32.xlu0 %v936, 32
    %v942 = vpop.permute.xlu0 %941
    %v945 = vadd.f32 %v925, %v940
    %v946 = vadd.f32 %v926, %v942
    %v947 = vtanh.pop %v945
    %v948 = vtanh.pop %v946
    %951 = vrot.lane.b32.xlu0 %v947, 64
    %v952 = vpop.permute.xlu0 %951
    %953 = vrot.lane.b32.xlu0 %v948, 64
    %v954 = vpop.permute.xlu0 %953
    %v957 = vmul.f32 %v920, %v952
    %v958 = vmul.f32 %v922, %v954
    %961 = vrot.lane.b32.xlu0 %v957, 32
    %v962 = vpop.permute.xlu0 %961
    %963 = vrot.lane.b32.xlu0 %v958, 32
    %v964 = vpop.permute.xlu0 %963
    %967 = vst.msk [vmem:[#allocation3 + $0x10] sm:$0xff] %vm814, %v962
    %968 = vst.msk [vmem:[#allocation3 + $0x18] sm:$0xff] %vm814, %v964
    %969 = vst.msk [vmem:[#allocation3 + $0xd0] sm:$0xff] %vm817, %v962
    %970 = vst.msk [vmem:[#allocation3 + $0xd8] sm:$0xff] %vm817, %v964
    %v971 = vld [vmem:[#allocation2 + $0x40] sm:$0xff]
    %v972 = vld [vmem:[#allocation2 + $0x50] sm:$0xff]
    %v973 = vld [vmem:[#allocation2 + $0x188] sm:$0xff]
    %v974 = vld [vmem:[#allocation2 + $0x198] sm:$0xff]
    %v975 = vadd.f32 %v971, %v973
    %v976 = vadd.f32 %v972, %v974
    %v977 = vld [vmem:[#allocation4] sm:$0xff]
    %v978 = vld [vmem:[#allocation4 + $0x8] sm:$0xff]
    %v979 = vld [vmem:[#allocation4 + $0x10] sm:$0xff]
    %v980 = vld [vmem:[#allocation4 + $0x18] sm:$0xff]
    %v981 = vsel %vm677, %v962, 0
    %v983 = vsel %vm677, %v964, 0
    %985 = vmatprep.subr.mxu0 0.0
    %986 = vmatpush1.msra.mxu0 0.0
    %987 = vmatprep.subr.mxu0 0.0
    %988 = vmatpush1.msra.mxu0 0.0
    %989 = vmatprep.subr.mxu0 0.0
    %990 = vmatpush1.msra.mxu0 0.0
    %991 = vmatprep.subr.mxu0 0.0
    %992 = vmatpush1.msra.mxu0 0.0
    %993 = vmatprep.subr.mxu0 0.0
    %994 = vmatpush1.msra.mxu0 0.0
    %995 = vmatprep.subr.mxu0 0.0
    %996 = vmatpush1.msra.mxu0 0.0
    %997 = vmatprep.subr.mxu0 0.0
    %998 = vmatpush1.msra.mxu0 0.0
    %999 = vmatprep.subr.mxu0 0.0
    %1000 = vmatpush1.msra.mxu0 0.0
    %1001 = vmatprep.subr.mxu0 0.0
    %1002 = vmatpush1.msra.mxu0 0.0
    %1003 = vmatprep.subr.mxu0 0.0
    %1004 = vmatpush1.msra.mxu0 0.0
    %1005 = vmatprep.subr.mxu0 0.0
    %1006 = vmatpush1.msra.mxu0 0.0
    %1007 = vmatprep.subr.mxu0 0.0
    %1008 = vmatpush1.msra.mxu0 0.0
    %1009 = vmatprep.subr.mxu0 0.0
    %1010 = vmatpush1.msra.mxu0 %v980
    %1011 = vmatprep.subr.mxu0 0.0
    %1012 = vmatpush1.msra.mxu0 %v979
    %1013 = vmatprep.subr.mxu0 0.0
    %1014 = vmatpush1.msra.mxu0 %v978
    %1015 = vmatprep.subr.mxu0 0.0
    %1016 = vmatpush1.msra.mxu0 %v977
    %1017 = vmatprep.subr.mxu0 0.0
    %1018 = vmatpush2.msra.mxu0 0.0
    %1019 = vmatprep.subr.mxu0 0.0
    %1020 = vmatpush2.msra.mxu0 0.0
    %1021 = vmatprep.subr.mxu0 0.0
    %1022 = vmatpush2.msra.mxu0 0.0
    %1023 = vmatprep.subr.mxu0 0.0
    %1024 = vmatpush2.msra.mxu0 0.0
    %1025 = vmatprep.subr.mxu0 0.0
    %1026 = vmatpush2.msra.mxu0 0.0
    %1027 = vmatprep.subr.mxu0 0.0
    %1028 = vmatpush2.msra.mxu0 0.0
    %1029 = vmatprep.subr.mxu0 0.0
    %1030 = vmatpush2.msra.mxu0 0.0
    %1031 = vmatprep.subr.mxu0 0.0
    %1032 = vmatpush2.msra.mxu0 0.0
    %1033 = vmatprep.subr.mxu0 0.0
    %1034 = vmatpush2.msra.mxu0 0.0
    %1035 = vmatprep.subr.mxu0 0.0
    %1036 = vmatpush2.msra.mxu0 0.0
    %1037 = vmatprep.subr.mxu0 0.0
    %1038 = vmatpush2.msra.mxu0 0.0
    %1039 = vmatprep.subr.mxu0 0.0
    %1040 = vmatpush2.msra.mxu0 0.0
    %1041 = vmatprep.subr.mxu0 0.0
    %1042 = vmatpush2.msra.mxu0 0.0
    %1043 = vmatprep.subr.mxu0 0.0
    %1044 = vmatpush2.msra.mxu0 0.0
    %1045 = vmatprep.subr.mxu0 0.0
    %1046 = vmatpush2.msra.mxu0 0.0
    %1047 = vmatprep.subr.mxu0 0.0
    %1048 = vmatpush2.msra.mxu0 0.0
    %1049 = vmatprep.mubr.f32.mxu0 0.0
    %1050 = vmatmul.mubr.f32.gmra.mxu0 %v981
    %v1051 = vpop.f32.mrf.mxu0
    %v1052 = vadd.f32 0.0, %v1051
    %v1053 = vpop.f32.mrf.mxu0
    %1054 = vmatprep.mubr.f32.mxu0 0.0
    %1055 = vmatmul.mubr.f32.gmra.mxu0 %v983
    %v1056 = vpop.f32.mrf.mxu0
    %v1057 = vadd.f32 0.0, %v1056
    %v1058 = vpop.f32.mrf.mxu0
    %1059 = vdwg.mxu0
    %v1060 = vadd.f32 %v975, %v1052
    %v1061 = vadd.f32 %v976, %v1057
    %v1062 = vxor.u32 %v1060, 2147483648
    %v1063 = vxor.u32 %v1061, 2147483648
    %v1064 = vmul.f32 %v1062, 1.442695
    %v1065 = vpow.pop %v1064
    %v1066 = vmul.f32 %v1063, 1.442695
    %v1067 = vpow.pop %v1066
    %v1068 = vadd.f32 %v1065, 1.0
    %v1069 = vadd.f32 %v1067, 1.0
    %v1070 = vrcp.pop %v1068
    %v1071 = vmul.f32 1.0, %v1070
    %v1072 = vrcp.pop %v1069
    %v1073 = vmul.f32 1.0, %v1072
    %v1074 = vtanh.pop %v1060
    %v1075 = vtanh.pop %v1061
    %v1076 = vmul.f32 %v1071, %v945
    %v1077 = vmul.f32 %v1073, %v946
    %1080 = vrot.lane.b32.xlu0 %v1074, 64
    %v1081 = vpop.permute.xlu0 %1080
    %1082 = vrot.lane.b32.xlu0 %v1075, 64
    %v1083 = vpop.permute.xlu0 %1082
    %v1086 = vmul.f32 %v1071, %v1081
    %v1087 = vmul.f32 %v1073, %v1083
    %1090 = vrot.lane.b32.xlu0 %v1086, 32
    %v1091 = vpop.permute.xlu0 %1090
    %1092 = vrot.lane.b32.xlu0 %v1087, 32
    %v1093 = vpop.permute.xlu0 %1092
    %v1096 = vadd.f32 %v1076, %v1091
    %v1097 = vadd.f32 %v1077, %v1093
    %v1098 = vtanh.pop %v1096
    %v1099 = vtanh.pop %v1097
    %1102 = vrot.lane.b32.xlu0 %v1098, 64
    %v1103 = vpop.permute.xlu0 %1102
    %1104 = vrot.lane.b32.xlu0 %v1099, 64
    %v1105 = vpop.permute.xlu0 %1104
    %v1108 = vmul.f32 %v1071, %v1103
    %v1109 = vmul.f32 %v1073, %v1105
    %1112 = vrot.lane.b32.xlu0 %v1108, 32
    %v1113 = vpop.permute.xlu0 %1112
    %1114 = vrot.lane.b32.xlu0 %v1109, 32
    %v1115 = vpop.permute.xlu0 %1114
    %1118 = vst.msk [vmem:[#allocation3 + $0x20] sm:$0xff] %vm814, %v1113
    %1119 = vst.msk [vmem:[#allocation3 + $0x28] sm:$0xff] %vm814, %v1115
    %1120 = vst.msk [vmem:[#allocation3 + $0xc0] sm:$0xff] %vm817, %v1113
    %1121 = vst.msk [vmem:[#allocation3 + $0xc8] sm:$0xff] %vm817, %v1115
    %v1122 = vld [vmem:[#allocation2 + $0x60] sm:$0xff]
    %v1123 = vld [vmem:[#allocation2 + $0x70] sm:$0xff]
    %v1124 = vld [vmem:[#allocation2 + $0x168] sm:$0xff]
    %v1125 = vld [vmem:[#allocation2 + $0x178] sm:$0xff]
    %v1126 = vadd.f32 %v1122, %v1124
    %v1127 = vadd.f32 %v1123, %v1125
    %v1128 = vld [vmem:[#allocation4] sm:$0xff]
    %v1129 = vld [vmem:[#allocation4 + $0x8] sm:$0xff]
    %v1130 = vld [vmem:[#allocation4 + $0x10] sm:$0xff]
    %v1131 = vld [vmem:[#allocation4 + $0x18] sm:$0xff]
    %v1132 = vsel %vm677, %v1113, 0
    %v1134 = vsel %vm677, %v1115, 0
    %1136 = vmatprep.subr.mxu0 0.0
    %1137 = vmatpush1.msra.mxu0 0.0
    %1138 = vmatprep.subr.mxu0 0.0
    %1139 = vmatpush1.msra.mxu0 0.0
    %1140 = vmatprep.subr.mxu0 0.0
    %1141 = vmatpush1.msra.mxu0 0.0
    %1142 = vmatprep.subr.mxu0 0.0
    %1143 = vmatpush1.msra.mxu0 0.0
    %1144 = vmatprep.subr.mxu0 0.0
    %1145 = vmatpush1.msra.mxu0 0.0
    %1146 = vmatprep.subr.mxu0 0.0
    %1147 = vmatpush1.msra.mxu0 0.0
    %1148 = vmatprep.subr.mxu0 0.0
    %1149 = vmatpush1.msra.mxu0 0.0
    %1150 = vmatprep.subr.mxu0 0.0
    %1151 = vmatpush1.msra.mxu0 0.0
    %1152 = vmatprep.subr.mxu0 0.0
    %1153 = vmatpush1.msra.mxu0 0.0
    %1154 = vmatprep.subr.mxu0 0.0
    %1155 = vmatpush1.msra.mxu0 0.0
    %1156 = vmatprep.subr.mxu0 0.0
    %1157 = vmatpush1.msra.mxu0 0.0
    %1158 = vmatprep.subr.mxu0 0.0
    %1159 = vmatpush1.msra.mxu0 0.0
    %1160 = vmatprep.subr.mxu0 0.0
    %1161 = vmatpush1.msra.mxu0 %v1131
    %1162 = vmatprep.subr.mxu0 0.0
    %1163 = vmatpush1.msra.mxu0 %v1130
    %1164 = vmatprep.subr.mxu0 0.0
    %1165 = vmatpush1.msra.mxu0 %v1129
    %1166 = vmatprep.subr.mxu0 0.0
    %1167 = vmatpush1.msra.mxu0 %v1128
    %1168 = vmatprep.subr.mxu0 0.0
    %1169 = vmatpush2.msra.mxu0 0.0
    %1170 = vmatprep.subr.mxu0 0.0
    %1171 = vmatpush2.msra.mxu0 0.0
    %1172 = vmatprep.subr.mxu0 0.0
    %1173 = vmatpush2.msra.mxu0 0.0
    %1174 = vmatprep.subr.mxu0 0.0
    %1175 = vmatpush2.msra.mxu0 0.0
    %1176 = vmatprep.subr.mxu0 0.0
    %1177 = vmatpush2.msra.mxu0 0.0
    %1178 = vmatprep.subr.mxu0 0.0
    %1179 = vmatpush2.msra.mxu0 0.0
    %1180 = vmatprep.subr.mxu0 0.0
    %1181 = vmatpush2.msra.mxu0 0.0
    %1182 = vmatprep.subr.mxu0 0.0
    %1183 = vmatpush2.msra.mxu0 0.0
    %1184 = vmatprep.subr.mxu0 0.0
    %1185 = vmatpush2.msra.mxu0 0.0
    %1186 = vmatprep.subr.mxu0 0.0
    %1187 = vmatpush2.msra.mxu0 0.0
    %1188 = vmatprep.subr.mxu0 0.0
    %1189 = vmatpush2.msra.mxu0 0.0
    %1190 = vmatprep.subr.mxu0 0.0
    %1191 = vmatpush2.msra.mxu0 0.0
    %1192 = vmatprep.subr.mxu0 0.0
    %1193 = vmatpush2.msra.mxu0 0.0
    %1194 = vmatprep.subr.mxu0 0.0
    %1195 = vmatpush2.msra.mxu0 0.0
    %1196 = vmatprep.subr.mxu0 0.0
    %1197 = vmatpush2.msra.mxu0 0.0
    %1198 = vmatprep.subr.mxu0 0.0
    %1199 = vmatpush2.msra.mxu0 0.0
    %1200 = vmatprep.mubr.f32.mxu0 0.0
    %1201 = vmatmul.mubr.f32.gmra.mxu0 %v1132
    %v1202 = vpop.f32.mrf.mxu0
    %v1203 = vadd.f32 0.0, %v1202
    %v1204 = vpop.f32.mrf.mxu0
    %1205 = vmatprep.mubr.f32.mxu0 0.0
    %1206 = vmatmul.mubr.f32.gmra.mxu0 %v1134
    %v1207 = vpop.f32.mrf.mxu0
    %v1208 = vadd.f32 0.0, %v1207
    %v1209 = vpop.f32.mrf.mxu0
    %1210 = vdwg.mxu0
    %v1211 = vadd.f32 %v1126, %v1203
    %v1212 = vadd.f32 %v1127, %v1208
    %v1213 = vxor.u32 %v1211, 2147483648
    %v1214 = vxor.u32 %v1212, 2147483648
    %v1215 = vmul.f32 %v1213, 1.442695
    %v1216 = vpow.pop %v1215
    %v1217 = vmul.f32 %v1214, 1.442695
    %v1218 = vpow.pop %v1217
    %v1219 = vadd.f32 %v1216, 1.0
    %v1220 = vadd.f32 %v1218, 1.0
    %v1221 = vrcp.pop %v1219
    %v1222 = vmul.f32 1.0, %v1221
    %v1223 = vrcp.pop %v1220
    %v1224 = vmul.f32 1.0, %v1223
    %v1225 = vtanh.pop %v1211
    %v1226 = vtanh.pop %v1212
    %v1227 = vmul.f32 %v1222, %v1096
    %v1228 = vmul.f32 %v1224, %v1097
    %1231 = vrot.lane.b32.xlu0 %v1225, 64
    %v1232 = vpop.permute.xlu0 %1231
    %1233 = vrot.lane.b32.xlu0 %v1226, 64
    %v1234 = vpop.permute.xlu0 %1233
    %v1237 = vmul.f32 %v1222, %v1232
    %v1238 = vmul.f32 %v1224, %v1234
    %1241 = vrot.lane.b32.xlu0 %v1237, 32
    %v1242 = vpop.permute.xlu0 %1241
    %1243 = vrot.lane.b32.xlu0 %v1238, 32
    %v1244 = vpop.permute.xlu0 %1243
    %v1247 = vadd.f32 %v1227, %v1242
    %v1248 = vadd.f32 %v1228, %v1244
    %v1249 = vtanh.pop %v1247
    %v1250 = vtanh.pop %v1248
    %1253 = vrot.lane.b32.xlu0 %v1249, 64
    %v1254 = vpop.permute.xlu0 %1253
    %1255 = vrot.lane.b32.xlu0 %v1250, 64
    %v1256 = vpop.permute.xlu0 %1255
    %v1259 = vmul.f32 %v1222, %v1254
    %v1260 = vmul.f32 %v1224, %v1256
    %1263 = vrot.lane.b32.xlu0 %v1259, 32
    %v1264 = vpop.permute.xlu0 %1263
    %1265 = vrot.lane.b32.xlu0 %v1260, 32
    %v1266 = vpop.permute.xlu0 %1265
    %1269 = vst.msk [vmem:[#allocation3 + $0x30] sm:$0xff] %vm814, %v1264
    %1270 = vst.msk [vmem:[#allocation3 + $0x38] sm:$0xff] %vm814, %v1266
    %1271 = vst.msk [vmem:[#allocation3 + $0xb0] sm:$0xff] %vm817, %v1264
    %1272 = vst.msk [vmem:[#allocation3 + $0xb8] sm:$0xff] %vm817, %v1266
    %v1273 = vld [vmem:[#allocation2 + $0x80] sm:$0xff]
    %v1274 = vld [vmem:[#allocation2 + $0x90] sm:$0xff]
    %v1275 = vld [vmem:[#allocation2 + $0x148] sm:$0xff]
    %v1276 = vld [vmem:[#allocation2 + $0x158] sm:$0xff]
    %v1277 = vadd.f32 %v1273, %v1275
    %v1278 = vadd.f32 %v1274, %v1276
    %v1279 = vld [vmem:[#allocation4] sm:$0xff]
    %v1280 = vld [vmem:[#allocation4 + $0x8] sm:$0xff]
    %v1281 = vld [vmem:[#allocation4 + $0x10] sm:$0xff]
    %v1282 = vld [vmem:[#allocation4 + $0x18] sm:$0xff]
    %v1283 = vsel %vm677, %v1264, 0
    %v1285 = vsel %vm677, %v1266, 0
    %1287 = vmatprep.subr.mxu0 0.0
    %1288 = vmatpush1.msra.mxu0 0.0
    %1289 = vmatprep.subr.mxu0 0.0
    %1290 = vmatpush1.msra.mxu0 0.0
    %1291 = vmatprep.subr.mxu0 0.0
    %1292 = vmatpush1.msra.mxu0 0.0
    %1293 = vmatprep.subr.mxu0 0.0
    %1294 = vmatpush1.msra.mxu0 0.0
    %1295 = vmatprep.subr.mxu0 0.0
    %1296 = vmatpush1.msra.mxu0 0.0
    %1297 = vmatprep.subr.mxu0 0.0
    %1298 = vmatpush1.msra.mxu0 0.0
    %1299 = vmatprep.subr.mxu0 0.0
    %1300 = vmatpush1.msra.mxu0 0.0
    %1301 = vmatprep.subr.mxu0 0.0
    %1302 = vmatpush1.msra.mxu0 0.0
    %1303 = vmatprep.subr.mxu0 0.0
    %1304 = vmatpush1.msra.mxu0 0.0
    %1305 = vmatprep.subr.mxu0 0.0
    %1306 = vmatpush1.msra.mxu0 0.0
    %1307 = vmatprep.subr.mxu0 0.0
    %1308 = vmatpush1.msra.mxu0 0.0
    %1309 = vmatprep.subr.mxu0 0.0
    %1310 = vmatpush1.msra.mxu0 0.0
    %1311 = vmatprep.subr.mxu0 0.0
    %1312 = vmatpush1.msra.mxu0 %v1282
    %1313 = vmatprep.subr.mxu0 0.0
    %1314 = vmatpush1.msra.mxu0 %v1281
    %1315 = vmatprep.subr.mxu0 0.0
    %1316 = vmatpush1.msra.mxu0 %v1280
    %1317 = vmatprep.subr.mxu0 0.0
    %1318 = vmatpush1.msra.mxu0 %v1279
    %1319 = vmatprep.subr.mxu0 0.0
    %1320 = vmatpush2.msra.mxu0 0.0
    %1321 = vmatprep.subr.mxu0 0.0
    %1322 = vmatpush2.msra.mxu0 0.0
    %1323 = vmatprep.subr.mxu0 0.0
    %1324 = vmatpush2.msra.mxu0 0.0
    %1325 = vmatprep.subr.mxu0 0.0
    %1326 = vmatpush2.msra.mxu0 0.0
    %1327 = vmatprep.subr.mxu0 0.0
    %1328 = vmatpush2.msra.mxu0 0.0
    %1329 = vmatprep.subr.mxu0 0.0
    %1330 = vmatpush2.msra.mxu0 0.0
    %1331 = vmatprep.subr.mxu0 0.0
    %1332 = vmatpush2.msra.mxu0 0.0
    %1333 = vmatprep.subr.mxu0 0.0
    %1334 = vmatpush2.msra.mxu0 0.0
    %1335 = vmatprep.subr.mxu0 0.0
    %1336 = vmatpush2.msra.mxu0 0.0
    %1337 = vmatprep.subr.mxu0 0.0
    %1338 = vmatpush2.msra.mxu0 0.0
    %1339 = vmatprep.subr.mxu0 0.0
    %1340 = vmatpush2.msra.mxu0 0.0
    %1341 = vmatprep.subr.mxu0 0.0
    %1342 = vmatpush2.msra.mxu0 0.0
    %1343 = vmatprep.subr.mxu0 0.0
    %1344 = vmatpush2.msra.mxu0 0.0
    %1345 = vmatprep.subr.mxu0 0.0
    %1346 = vmatpush2.msra.mxu0 0.0
    %1347 = vmatprep.subr.mxu0 0.0
    %1348 = vmatpush2.msra.mxu0 0.0
    %1349 = vmatprep.subr.mxu0 0.0
    %1350 = vmatpush2.msra.mxu0 0.0
    %1351 = vmatprep.mubr.f32.mxu0 0.0
    %1352 = vmatmul.mubr.f32.gmra.mxu0 %v1283
    %v1353 = vpop.f32.mrf.mxu0
    %v1354 = vadd.f32 0.0, %v1353
    %v1355 = vpop.f32.mrf.mxu0
    %1356 = vmatprep.mubr.f32.mxu0 0.0
    %1357 = vmatmul.mubr.f32.gmra.mxu0 %v1285
    %v1358 = vpop.f32.mrf.mxu0
    %v1359 = vadd.f32 0.0, %v1358
    %v1360 = vpop.f32.mrf.mxu0
    %1361 = vdwg.mxu0
    %v1362 = vadd.f32 %v1277, %v1354
    %v1363 = vadd.f32 %v1278, %v1359
    %v1364 = vxor.u32 %v1362, 2147483648
    %v1365 = vxor.u32 %v1363, 2147483648
    %v1366 = vmul.f32 %v1364, 1.442695
    %v1367 = vpow.pop %v1366
    %v1368 = vmul.f32 %v1365, 1.442695
    %v1369 = vpow.pop %v1368
    %v1370 = vadd.f32 %v1367, 1.0
    %v1371 = vadd.f32 %v1369, 1.0
    %v1372 = vrcp.pop %v1370
    %v1373 = vmul.f32 1.0, %v1372
    %v1374 = vrcp.pop %v1371
    %v1375 = vmul.f32 1.0, %v1374
    %v1376 = vtanh.pop %v1362
    %v1377 = vtanh.pop %v1363
    %v1378 = vmul.f32 %v1373, %v1247
    %v1379 = vmul.f32 %v1375, %v1248
    %1382 = vrot.lane.b32.xlu0 %v1376, 64
    %v1383 = vpop.permute.xlu0 %1382
    %1384 = vrot.lane.b32.xlu0 %v1377, 64
    %v1385 = vpop.permute.xlu0 %1384
    %v1388 = vmul.f32 %v1373, %v1383
    %v1389 = vmul.f32 %v1375, %v1385
    %1392 = vrot.lane.b32.xlu0 %v1388, 32
    %v1393 = vpop.permute.xlu0 %1392
    %1394 = vrot.lane.b32.xlu0 %v1389, 32
    %v1395 = vpop.permute.xlu0 %1394
    %v1398 = vadd.f32 %v1378, %v1393
    %v1399 = vadd.f32 %v1379, %v1395
    %v1400 = vtanh.pop %v1398
    %v1401 = vtanh.pop %v1399
    %1404 = vrot.lane.b32.xlu0 %v1400, 64
    %v1405 = vpop.permute.xlu0 %1404
    %1406 = vrot.lane.b32.xlu0 %v1401, 64
    %v1407 = vpop.permute.xlu0 %1406
    %v1410 = vmul.f32 %v1373, %v1405
    %v1411 = vmul.f32 %v1375, %v1407
    %1414 = vrot.lane.b32.xlu0 %v1410, 32
    %v1415 = vpop.permute.xlu0 %1414
    %1416 = vrot.lane.b32.xlu0 %v1411, 32
    %v1417 = vpop.permute.xlu0 %1416
    %1420 = vst.msk [vmem:[#allocation3 + $0x40] sm:$0xff] %vm814, %v1415
    %1421 = vst.msk [vmem:[#allocation3 + $0x48] sm:$0xff] %vm814, %v1417
    %1422 = vst.msk [vmem:[#allocation3 + $0xa0] sm:$0xff] %vm817, %v1415
    %1423 = vst.msk [vmem:[#allocation3 + $0xa8] sm:$0xff] %vm817, %v1417
    %v1424 = vld [vmem:[#allocation2 + $0xa0] sm:$0xff]
    %v1425 = vld [vmem:[#allocation2 + $0xb0] sm:$0xff]
    %v1426 = vld [vmem:[#allocation2 + $0x128] sm:$0xff]
    %v1427 = vld [vmem:[#allocation2 + $0x138] sm:$0xff]
    %v1428 = vadd.f32 %v1424, %v1426
    %v1429 = vadd.f32 %v1425, %v1427
    %v1430 = vld [vmem:[#allocation4] sm:$0xff]
    %v1431 = vld [vmem:[#allocation4 + $0x8] sm:$0xff]
    %v1432 = vld [vmem:[#allocation4 + $0x10] sm:$0xff]
    %v1433 = vld [vmem:[#allocation4 + $0x18] sm:$0xff]
    %v1434 = vsel %vm677, %v1415, 0
    %v1436 = vsel %vm677, %v1417, 0
    %1438 = vmatprep.subr.mxu0 0.0
    %1439 = vmatpush1.msra.mxu0 0.0
    %1440 = vmatprep.subr.mxu0 0.0
    %1441 = vmatpush1.msra.mxu0 0.0
    %1442 = vmatprep.subr.mxu0 0.0
    %1443 = vmatpush1.msra.mxu0 0.0
    %1444 = vmatprep.subr.mxu0 0.0
    %1445 = vmatpush1.msra.mxu0 0.0
    %1446 = vmatprep.subr.mxu0 0.0
    %1447 = vmatpush1.msra.mxu0 0.0
    %1448 = vmatprep.subr.mxu0 0.0
    %1449 = vmatpush1.msra.mxu0 0.0
    %1450 = vmatprep.subr.mxu0 0.0
    %1451 = vmatpush1.msra.mxu0 0.0
    %1452 = vmatprep.subr.mxu0 0.0
    %1453 = vmatpush1.msra.mxu0 0.0
    %1454 = vmatprep.subr.mxu0 0.0
    %1455 = vmatpush1.msra.mxu0 0.0
    %1456 = vmatprep.subr.mxu0 0.0
    %1457 = vmatpush1.msra.mxu0 0.0
    %1458 = vmatprep.subr.mxu0 0.0
    %1459 = vmatpush1.msra.mxu0 0.0
    %1460 = vmatprep.subr.mxu0 0.0
    %1461 = vmatpush1.msra.mxu0 0.0
    %1462 = vmatprep.subr.mxu0 0.0
    %1463 = vmatpush1.msra.mxu0 %v1433
    %1464 = vmatprep.subr.mxu0 0.0
    %1465 = vmatpush1.msra.mxu0 %v1432
    %1466 = vmatprep.subr.mxu0 0.0
    %1467 = vmatpush1.msra.mxu0 %v1431
    %1468 = vmatprep.subr.mxu0 0.0
    %1469 = vmatpush1.msra.mxu0 %v1430
    %1470 = vmatprep.subr.mxu0 0.0
    %1471 = vmatpush2.msra.mxu0 0.0
    %1472 = vmatprep.subr.mxu0 0.0
    %1473 = vmatpush2.msra.mxu0 0.0
    %1474 = vmatprep.subr.mxu0 0.0
    %1475 = vmatpush2.msra.mxu0 0.0
    %1476 = vmatprep.subr.mxu0 0.0
    %1477 = vmatpush2.msra.mxu0 0.0
    %1478 = vmatprep.subr.mxu0 0.0
    %1479 = vmatpush2.msra.mxu0 0.0
    %1480 = vmatprep.subr.mxu0 0.0
    %1481 = vmatpush2.msra.mxu0 0.0
    %1482 = vmatprep.subr.mxu0 0.0
    %1483 = vmatpush2.msra.mxu0 0.0
    %1484 = vmatprep.subr.mxu0 0.0
    %1485 = vmatpush2.msra.mxu0 0.0
    %1486 = vmatprep.subr.mxu0 0.0
    %1487 = vmatpush2.msra.mxu0 0.0
    %1488 = vmatprep.subr.mxu0 0.0
    %1489 = vmatpush2.msra.mxu0 0.0
    %1490 = vmatprep.subr.mxu0 0.0
    %1491 = vmatpush2.msra.mxu0 0.0
    %1492 = vmatprep.subr.mxu0 0.0
    %1493 = vmatpush2.msra.mxu0 0.0
    %1494 = vmatprep.subr.mxu0 0.0
    %1495 = vmatpush2.msra.mxu0 0.0
    %1496 = vmatprep.subr.mxu0 0.0
    %1497 = vmatpush2.msra.mxu0 0.0
    %1498 = vmatprep.subr.mxu0 0.0
    %1499 = vmatpush2.msra.mxu0 0.0
    %1500 = vmatprep.subr.mxu0 0.0
    %1501 = vmatpush2.msra.mxu0 0.0
    %1502 = vmatprep.mubr.f32.mxu0 0.0
    %1503 = vmatmul.mubr.f32.gmra.mxu0 %v1434
    %v1504 = vpop.f32.mrf.mxu0
    %v1505 = vadd.f32 0.0, %v1504
    %v1506 = vpop.f32.mrf.mxu0
    %1507 = vmatprep.mubr.f32.mxu0 0.0
    %1508 = vmatmul.mubr.f32.gmra.mxu0 %v1436
    %v1509 = vpop.f32.mrf.mxu0
    %v1510 = vadd.f32 0.0, %v1509
    %v1511 = vpop.f32.mrf.mxu0
    %1512 = vdwg.mxu0
    %v1513 = vadd.f32 %v1428, %v1505
    %v1514 = vadd.f32 %v1429, %v1510
    %v1515 = vxor.u32 %v1513, 2147483648
    %v1516 = vxor.u32 %v1514, 2147483648
    %v1517 = vmul.f32 %v1515, 1.442695
    %v1518 = vpow.pop %v1517
    %v1519 = vmul.f32 %v1516, 1.442695
    %v1520 = vpow.pop %v1519
    %v1521 = vadd.f32 %v1518, 1.0
    %v1522 = vadd.f32 %v1520, 1.0
    %v1523 = vrcp.pop %v1521
    %v1524 = vmul.f32 1.0, %v1523
    %v1525 = vrcp.pop %v1522
    %v1526 = vmul.f32 1.0, %v1525
    %v1527 = vtanh.pop %v1513
    %v1528 = vtanh.pop %v1514
    %v1529 = vmul.f32 %v1524, %v1398
    %v1530 = vmul.f32 %v1526, %v1399
    %1533 = vrot.lane.b32.xlu0 %v1527, 64
    %v1534 = vpop.permute.xlu0 %1533
    %1535 = vrot.lane.b32.xlu0 %v1528, 64
    %v1536 = vpop.permute.xlu0 %1535
    %v1539 = vmul.f32 %v1524, %v1534
    %v1540 = vmul.f32 %v1526, %v1536
    %1543 = vrot.lane.b32.xlu0 %v1539, 32
    %v1544 = vpop.permute.xlu0 %1543
    %1545 = vrot.lane.b32.xlu0 %v1540, 32
    %v1546 = vpop.permute.xlu0 %1545
    %v1549 = vadd.f32 %v1529, %v1544
    %v1550 = vadd.f32 %v1530, %v1546
    %v1551 = vtanh.pop %v1549
    %v1552 = vtanh.pop %v1550
    %1555 = vrot.lane.b32.xlu0 %v1551, 64
    %v1556 = vpop.permute.xlu0 %1555
    %1557 = vrot.lane.b32.xlu0 %v1552, 64
    %v1558 = vpop.permute.xlu0 %1557
    %v1561 = vmul.f32 %v1524, %v1556
    %v1562 = vmul.f32 %v1526, %v1558
    %1565 = vrot.lane.b32.xlu0 %v1561, 32
    %v1566 = vpop.permute.xlu0 %1565
    %1567 = vrot.lane.b32.xlu0 %v1562, 32
    %v1568 = vpop.permute.xlu0 %1567
    %1571 = vst.msk [vmem:[#allocation3 + $0x50] sm:$0xff] %vm814, %v1566
    %1572 = vst.msk [vmem:[#allocation3 + $0x58] sm:$0xff] %vm814, %v1568
    %1573 = vst.msk [vmem:[#allocation3 + $0x90] sm:$0xff] %vm817, %v1566
    %1574 = vst.msk [vmem:[#allocation3 + $0x98] sm:$0xff] %vm817, %v1568
    %v1575 = vld [vmem:[#allocation2 + $0xc0] sm:$0xff]
    %v1576 = vld [vmem:[#allocation2 + $0xd0] sm:$0xff]
    %v1577 = vld [vmem:[#allocation2 + $0x108] sm:$0xff]
    %v1578 = vld [vmem:[#allocation2 + $0x118] sm:$0xff]
    %v1579 = vadd.f32 %v1575, %v1577
    %v1580 = vadd.f32 %v1576, %v1578
    %v1581 = vld [vmem:[#allocation4] sm:$0xff]
    %v1582 = vld [vmem:[#allocation4 + $0x8] sm:$0xff]
    %v1583 = vld [vmem:[#allocation4 + $0x10] sm:$0xff]
    %v1584 = vld [vmem:[#allocation4 + $0x18] sm:$0xff]
    %v1585 = vsel %vm677, %v1566, 0
    %v1587 = vsel %vm677, %v1568, 0
    %1589 = vmatprep.subr.mxu0 0.0
    %1590 = vmatpush1.msra.mxu0 0.0
    %1591 = vmatprep.subr.mxu0 0.0
    %1592 = vmatpush1.msra.mxu0 0.0
    %1593 = vmatprep.subr.mxu0 0.0
    %1594 = vmatpush1.msra.mxu0 0.0
    %1595 = vmatprep.subr.mxu0 0.0
    %1596 = vmatpush1.msra.mxu0 0.0
    %1597 = vmatprep.subr.mxu0 0.0
    %1598 = vmatpush1.msra.mxu0 0.0
    %1599 = vmatprep.subr.mxu0 0.0
    %1600 = vmatpush1.msra.mxu0 0.0
    %1601 = vmatprep.subr.mxu0 0.0
    %1602 = vmatpush1.msra.mxu0 0.0
    %1603 = vmatprep.subr.mxu0 0.0
    %1604 = vmatpush1.msra.mxu0 0.0
    %1605 = vmatprep.subr.mxu0 0.0
    %1606 = vmatpush1.msra.mxu0 0.0
    %1607 = vmatprep.subr.mxu0 0.0
    %1608 = vmatpush1.msra.mxu0 0.0
    %1609 = vmatprep.subr.mxu0 0.0
    %1610 = vmatpush1.msra.mxu0 0.0
    %1611 = vmatprep.subr.mxu0 0.0
    %1612 = vmatpush1.msra.mxu0 0.0
    %1613 = vmatprep.subr.mxu0 0.0
    %1614 = vmatpush1.msra.mxu0 %v1584
    %1615 = vmatprep.subr.mxu0 0.0
    %1616 = vmatpush1.msra.mxu0 %v1583
    %1617 = vmatprep.subr.mxu0 0.0
    %1618 = vmatpush1.msra.mxu0 %v1582
    %1619 = vmatprep.subr.mxu0 0.0
    %1620 = vmatpush1.msra.mxu0 %v1581
    %1621 = vmatprep.subr.mxu0 0.0
    %1622 = vmatpush2.msra.mxu0 0.0
    %1623 = vmatprep.subr.mxu0 0.0
    %1624 = vmatpush2.msra.mxu0 0.0
    %1625 = vmatprep.subr.mxu0 0.0
    %1626 = vmatpush2.msra.mxu0 0.0
    %1627 = vmatprep.subr.mxu0 0.0
    %1628 = vmatpush2.msra.mxu0 0.0
    %1629 = vmatprep.subr.mxu0 0.0
    %1630 = vmatpush2.msra.mxu0 0.0
    %1631 = vmatprep.subr.mxu0 0.0
    %1632 = vmatpush2.msra.mxu0 0.0
    %1633 = vmatprep.subr.mxu0 0.0
    %1634 = vmatpush2.msra.mxu0 0.0
    %1635 = vmatprep.subr.mxu0 0.0
    %1636 = vmatpush2.msra.mxu0 0.0
    %1637 = vmatprep.subr.mxu0 0.0
    %1638 = vmatpush2.msra.mxu0 0.0
    %1639 = vmatprep.subr.mxu0 0.0
    %1640 = vmatpush2.msra.mxu0 0.0
    %1641 = vmatprep.subr.mxu0 0.0
    %1642 = vmatpush2.msra.mxu0 0.0
    %1643 = vmatprep.subr.mxu0 0.0
    %1644 = vmatpush2.msra.mxu0 0.0
    %1645 = vmatprep.subr.mxu0 0.0
    %1646 = vmatpush2.msra.mxu0 0.0
    %1647 = vmatprep.subr.mxu0 0.0
    %1648 = vmatpush2.msra.mxu0 0.0
    %1649 = vmatprep.subr.mxu0 0.0
    %1650 = vmatpush2.msra.mxu0 0.0
    %1651 = vmatprep.subr.mxu0 0.0
    %1652 = vmatpush2.msra.mxu0 0.0
    %1653 = vmatprep.mubr.f32.mxu0 0.0
    %1654 = vmatmul.mubr.f32.gmra.mxu0 %v1585
    %v1655 = vpop.f32.mrf.mxu0
    %v1656 = vadd.f32 0.0, %v1655
    %v1657 = vpop.f32.mrf.mxu0
    %1658 = vmatprep.mubr.f32.mxu0 0.0
    %1659 = vmatmul.mubr.f32.gmra.mxu0 %v1587
    %v1660 = vpop.f32.mrf.mxu0
    %v1661 = vadd.f32 0.0, %v1660
    %v1662 = vpop.f32.mrf.mxu0
    %1663 = vdwg.mxu0
    %v1664 = vadd.f32 %v1579, %v1656
    %v1665 = vadd.f32 %v1580, %v1661
    %v1666 = vxor.u32 %v1664, 2147483648
    %v1667 = vxor.u32 %v1665, 2147483648
    %v1668 = vmul.f32 %v1666, 1.442695
    %v1669 = vpow.pop %v1668
    %v1670 = vmul.f32 %v1667, 1.442695
    %v1671 = vpow.pop %v1670
    %v1672 = vadd.f32 %v1669, 1.0
    %v1673 = vadd.f32 %v1671, 1.0
    %v1674 = vrcp.pop %v1672
    %v1675 = vmul.f32 1.0, %v1674
    %v1676 = vrcp.pop %v1673
    %v1677 = vmul.f32 1.0, %v1676
    %v1678 = vtanh.pop %v1664
    %v1679 = vtanh.pop %v1665
    %v1680 = vmul.f32 %v1675, %v1549
    %v1681 = vmul.f32 %v1677, %v1550
    %1684 = vrot.lane.b32.xlu0 %v1678, 64
    %v1685 = vpop.permute.xlu0 %1684
    %1686 = vrot.lane.b32.xlu0 %v1679, 64
    %v1687 = vpop.permute.xlu0 %1686
    %v1690 = vmul.f32 %v1675, %v1685
    %v1691 = vmul.f32 %v1677, %v1687
    %1694 = vrot.lane.b32.xlu0 %v1690, 32
    %v1695 = vpop.permute.xlu0 %1694
    %1696 = vrot.lane.b32.xlu0 %v1691, 32
    %v1697 = vpop.permute.xlu0 %1696
    %v1700 = vadd.f32 %v1680, %v1695
    %v1701 = vadd.f32 %v1681, %v1697
    %v1702 = vtanh.pop %v1700
    %v1703 = vtanh.pop %v1701
    %1706 = vrot.lane.b32.xlu0 %v1702, 64
    %v1707 = vpop.permute.xlu0 %1706
    %1708 = vrot.lane.b32.xlu0 %v1703, 64
    %v1709 = vpop.permute.xlu0 %1708
    %v1712 = vmul.f32 %v1675, %v1707
    %v1713 = vmul.f32 %v1677, %v1709
    %1716 = vrot.lane.b32.xlu0 %v1712, 32
    %v1717 = vpop.permute.xlu0 %1716
    %1718 = vrot.lane.b32.xlu0 %v1713, 32
    %v1719 = vpop.permute.xlu0 %1718
    %1722 = vst.msk [vmem:[#allocation3 + $0x60] sm:$0xff] %vm814, %v1717
    %1723 = vst.msk [vmem:[#allocation3 + $0x68] sm:$0xff] %vm814, %v1719
    %1724 = vst.msk [vmem:[#allocation3 + $0x80] sm:$0xff] %vm817, %v1717
    %1725 = vst.msk [vmem:[#allocation3 + $0x88] sm:$0xff] %vm817, %v1719
    %v1726 = vld [vmem:[#allocation2 + $0xe0] sm:$0xff]
    %v1727 = vld [vmem:[#allocation2 + $0xf0] sm:$0xff]
    %v1728 = vld [vmem:[#allocation2 + $0xe8] sm:$0xff]
    %v1729 = vld [vmem:[#allocation2 + $0xf8] sm:$0xff]
    %v1730 = vadd.f32 %v1726, %v1728
    %v1731 = vadd.f32 %v1727, %v1729
    %v1732 = vld [vmem:[#allocation4] sm:$0xff]
    %v1733 = vld [vmem:[#allocation4 + $0x8] sm:$0xff]
    %v1734 = vld [vmem:[#allocation4 + $0x10] sm:$0xff]
    %v1735 = vld [vmem:[#allocation4 + $0x18] sm:$0xff]
    %v1736 = vsel %vm677, %v1717, 0
    %v1738 = vsel %vm677, %v1719, 0
    %1740 = vmatprep.subr.mxu0 0.0
    %1741 = vmatpush1.msra.mxu0 0.0
    %1742 = vmatprep.subr.mxu0 0.0
    %1743 = vmatpush1.msra.mxu0 0.0
    %1744 = vmatprep.subr.mxu0 0.0
    %1745 = vmatpush1.msra.mxu0 0.0
    %1746 = vmatprep.subr.mxu0 0.0
    %1747 = vmatpush1.msra.mxu0 0.0
    %1748 = vmatprep.subr.mxu0 0.0
    %1749 = vmatpush1.msra.mxu0 0.0
    %1750 = vmatprep.subr.mxu0 0.0
    %1751 = vmatpush1.msra.mxu0 0.0
    %1752 = vmatprep.subr.mxu0 0.0
    %1753 = vmatpush1.msra.mxu0 0.0
    %1754 = vmatprep.subr.mxu0 0.0
    %1755 = vmatpush1.msra.mxu0 0.0
    %1756 = vmatprep.subr.mxu0 0.0
    %1757 = vmatpush1.msra.mxu0 0.0
    %1758 = vmatprep.subr.mxu0 0.0
    %1759 = vmatpush1.msra.mxu0 0.0
    %1760 = vmatprep.subr.mxu0 0.0
    %1761 = vmatpush1.msra.mxu0 0.0
    %1762 = vmatprep.subr.mxu0 0.0
    %1763 = vmatpush1.msra.mxu0 0.0
    %1764 = vmatprep.subr.mxu0 0.0
    %1765 = vmatpush1.msra.mxu0 %v1735
    %1766 = vmatprep.subr.mxu0 0.0
    %1767 = vmatpush1.msra.mxu0 %v1734
    %1768 = vmatprep.subr.mxu0 0.0
    %1769 = vmatpush1.msra.mxu0 %v1733
    %1770 = vmatprep.subr.mxu0 0.0
    %1771 = vmatpush1.msra.mxu0 %v1732
    %1772 = vmatprep.subr.mxu0 0.0
    %1773 = vmatpush2.msra.mxu0 0.0
    %1774 = vmatprep.subr.mxu0 0.0
    %1775 = vmatpush2.msra.mxu0 0.0
    %1776 = vmatprep.subr.mxu0 0.0
    %1777 = vmatpush2.msra.mxu0 0.0
    %1778 = vmatprep.subr.mxu0 0.0
    %1779 = vmatpush2.msra.mxu0 0.0
    %1780 = vmatprep.subr.mxu0 0.0
    %1781 = vmatpush2.msra.mxu0 0.0
    %1782 = vmatprep.subr.mxu0 0.0
    %1783 = vmatpush2.msra.mxu0 0.0
    %1784 = vmatprep.subr.mxu0 0.0
    %1785 = vmatpush2.msra.mxu0 0.0
    %1786 = vmatprep.subr.mxu0 0.0
    %1787 = vmatpush2.msra.mxu0 0.0
    %1788 = vmatprep.subr.mxu0 0.0
    %1789 = vmatpush2.msra.mxu0 0.0
    %1790 = vmatprep.subr.mxu0 0.0
    %1791 = vmatpush2.msra.mxu0 0.0
    %1792 = vmatprep.subr.mxu0 0.0
    %1793 = vmatpush2.msra.mxu0 0.0
    %1794 = vmatprep.subr.mxu0 0.0
    %1795 = vmatpush2.msra.mxu0 0.0
    %1796 = vmatprep.subr.mxu0 0.0
    %1797 = vmatpush2.msra.mxu0 0.0
    %1798 = vmatprep.subr.mxu0 0.0
    %1799 = vmatpush2.msra.mxu0 0.0
    %1800 = vmatprep.subr.mxu0 0.0
    %1801 = vmatpush2.msra.mxu0 0.0
    %1802 = vmatprep.subr.mxu0 0.0
    %1803 = vmatpush2.msra.mxu0 0.0
    %1804 = vmatprep.mubr.f32.mxu0 0.0
    %1805 = vmatmul.mubr.f32.gmra.mxu0 %v1736
    %v1806 = vpop.f32.mrf.mxu0
    %v1807 = vadd.f32 0.0, %v1806
    %v1808 = vpop.f32.mrf.mxu0
    %1809 = vmatprep.mubr.f32.mxu0 0.0
    %1810 = vmatmul.mubr.f32.gmra.mxu0 %v1738
    %v1811 = vpop.f32.mrf.mxu0
    %v1812 = vadd.f32 0.0, %v1811
    %v1813 = vpop.f32.mrf.mxu0
    %1814 = vdwg.mxu0
    %v1815 = vadd.f32 %v1730, %v1807
    %v1816 = vadd.f32 %v1731, %v1812
    %v1817 = vxor.u32 %v1815, 2147483648
    %v1818 = vxor.u32 %v1816, 2147483648
    %v1819 = vmul.f32 %v1817, 1.442695
    %v1820 = vpow.pop %v1819
    %v1821 = vmul.f32 %v1818, 1.442695
    %v1822 = vpow.pop %v1821
    %v1823 = vadd.f32 %v1820, 1.0
    %v1824 = vadd.f32 %v1822, 1.0
    %v1825 = vrcp.pop %v1823
    %v1826 = vmul.f32 1.0, %v1825
    %v1827 = vrcp.pop %v1824
    %v1828 = vmul.f32 1.0, %v1827
    %v1829 = vtanh.pop %v1815
    %v1830 = vtanh.pop %v1816
    %v1831 = vmul.f32 %v1826, %v1700
    %v1832 = vmul.f32 %v1828, %v1701
    %1835 = vrot.lane.b32.xlu0 %v1829, 64
    %v1836 = vpop.permute.xlu0 %1835
    %1837 = vrot.lane.b32.xlu0 %v1830, 64
    %v1838 = vpop.permute.xlu0 %1837
    %v1841 = vmul.f32 %v1826, %v1836
    %v1842 = vmul.f32 %v1828, %v1838
    %1845 = vrot.lane.b32.xlu0 %v1841, 32
    %v1846 = vpop.permute.xlu0 %1845
    %1847 = vrot.lane.b32.xlu0 %v1842, 32
    %v1848 = vpop.permute.xlu0 %1847
    %v1851 = vadd.f32 %v1831, %v1846
    %v1852 = vadd.f32 %v1832, %v1848
    %v1853 = vtanh.pop %v1851
    %v1854 = vtanh.pop %v1852
    %1857 = vrot.lane.b32.xlu0 %v1853, 64
    %v1858 = vpop.permute.xlu0 %1857
    %1859 = vrot.lane.b32.xlu0 %v1854, 64
    %v1860 = vpop.permute.xlu0 %1859
    %v1863 = vmul.f32 %v1826, %v1858
    %v1864 = vmul.f32 %v1828, %v1860
    %1867 = vrot.lane.b32.xlu0 %v1863, 32
    %v1868 = vpop.permute.xlu0 %1867
    %1869 = vrot.lane.b32.xlu0 %v1864, 32
    %v1870 = vpop.permute.xlu0 %1869
    %1873 = vst.msk [vmem:[#allocation3 + $0x70] sm:$0xff] %vm677, %v1868
    %1874 = vst.msk [vmem:[#allocation3 + $0x78] sm:$0xff] %vm677, %v1870
    %v1875 = vld [vmem:[#allocation2 + $0x100] sm:$0xff]
    %v1876 = vld [vmem:[#allocation2 + $0x110] sm:$0xff]
    %v1877 = vld [vmem:[#allocation2 + $0xc8] sm:$0xff]
    %v1878 = vld [vmem:[#allocation2 + $0xd8] sm:$0xff]
    %v1879 = vadd.f32 %v1875, %v1877
    %v1880 = vadd.f32 %v1876, %v1878
    %v1881 = vld [vmem:[#allocation4] sm:$0xff]
    %v1882 = vld [vmem:[#allocation4 + $0x8] sm:$0xff]
    %v1883 = vld [vmem:[#allocation4 + $0x10] sm:$0xff]
    %v1884 = vld [vmem:[#allocation4 + $0x18] sm:$0xff]
    %v1885 = vsel %vm677, %v1868, 0
    %v1887 = vsel %vm677, %v1870, 0
    %1889 = vmatprep.subr.mxu0 0.0
    %1890 = vmatpush1.msra.mxu0 0.0
    %1891 = vmatprep.subr.mxu0 0.0
    %1892 = vmatpush1.msra.mxu0 0.0
    %1893 = vmatprep.subr.mxu0 0.0
    %1894 = vmatpush1.msra.mxu0 0.0
    %1895 = vmatprep.subr.mxu0 0.0
    %1896 = vmatpush1.msra.mxu0 0.0
    %1897 = vmatprep.subr.mxu0 0.0
    %1898 = vmatpush1.msra.mxu0 0.0
    %1899 = vmatprep.subr.mxu0 0.0
    %1900 = vmatpush1.msra.mxu0 0.0
    %1901 = vmatprep.subr.mxu0 0.0
    %1902 = vmatpush1.msra.mxu0 0.0
    %1903 = vmatprep.subr.mxu0 0.0
    %1904 = vmatpush1.msra.mxu0 0.0
    %1905 = vmatprep.subr.mxu0 0.0
    %1906 = vmatpush1.msra.mxu0 0.0
    %1907 = vmatprep.subr.mxu0 0.0
    %1908 = vmatpush1.msra.mxu0 0.0
    %1909 = vmatprep.subr.mxu0 0.0
    %1910 = vmatpush1.msra.mxu0 0.0
    %1911 = vmatprep.subr.mxu0 0.0
    %1912 = vmatpush1.msra.mxu0 0.0
    %1913 = vmatprep.subr.mxu0 0.0
    %1914 = vmatpush1.msra.mxu0 %v1884
    %1915 = vmatprep.subr.mxu0 0.0
    %1916 = vmatpush1.msra.mxu0 %v1883
    %1917 = vmatprep.subr.mxu0 0.0
    %1918 = vmatpush1.msra.mxu0 %v1882
    %1919 = vmatprep.subr.mxu0 0.0
    %1920 = vmatpush1.msra.mxu0 %v1881
    %1921 = vmatprep.subr.mxu0 0.0
    %1922 = vmatpush2.msra.mxu0 0.0
    %1923 = vmatprep.subr.mxu0 0.0
    %1924 = vmatpush2.msra.mxu0 0.0
    %1925 = vmatprep.subr.mxu0 0.0
    %1926 = vmatpush2.msra.mxu0 0.0
    %1927 = vmatprep.subr.mxu0 0.0
    %1928 = vmatpush2.msra.mxu0 0.0
    %1929 = vmatprep.subr.mxu0 0.0
    %1930 = vmatpush2.msra.mxu0 0.0
    %1931 = vmatprep.subr.mxu0 0.0
    %1932 = vmatpush2.msra.mxu0 0.0
    %1933 = vmatprep.subr.mxu0 0.0
    %1934 = vmatpush2.msra.mxu0 0.0
    %1935 = vmatprep.subr.mxu0 0.0
    %1936 = vmatpush2.msra.mxu0 0.0
    %1937 = vmatprep.subr.mxu0 0.0
    %1938 = vmatpush2.msra.mxu0 0.0
    %1939 = vmatprep.subr.mxu0 0.0
    %1940 = vmatpush2.msra.mxu0 0.0
    %1941 = vmatprep.subr.mxu0 0.0
    %1942 = vmatpush2.msra.mxu0 0.0
    %1943 = vmatprep.subr.mxu0 0.0
    %1944 = vmatpush2.msra.mxu0 0.0
    %1945 = vmatprep.subr.mxu0 0.0
    %1946 = vmatpush2.msra.mxu0 0.0
    %1947 = vmatprep.subr.mxu0 0.0
    %1948 = vmatpush2.msra.mxu0 0.0
    %1949 = vmatprep.subr.mxu0 0.0
    %1950 = vmatpush2.msra.mxu0 0.0
    %1951 = vmatprep.subr.mxu0 0.0
    %1952 = vmatpush2.msra.mxu0 0.0
    %1953 = vmatprep.mubr.f32.mxu0 0.0
    %1954 = vmatmul.mubr.f32.gmra.mxu0 %v1885
    %v1955 = vpop.f32.mrf.mxu0
    %v1956 = vadd.f32 0.0, %v1955
    %v1957 = vpop.f32.mrf.mxu0
    %1958 = vmatprep.mubr.f32.mxu0 0.0
    %1959 = vmatmul.mubr.f32.gmra.mxu0 %v1887
    %v1960 = vpop.f32.mrf.mxu0
    %v1961 = vadd.f32 0.0, %v1960
    %v1962 = vpop.f32.mrf.mxu0
    %1963 = vdwg.mxu0
    %v1964 = vadd.f32 %v1879, %v1956
    %v1965 = vadd.f32 %v1880, %v1961
    %v1966 = vxor.u32 %v1964, 2147483648
    %v1967 = vxor.u32 %v1965, 2147483648
    %v1968 = vmul.f32 %v1966, 1.442695
    %v1969 = vpow.pop %v1968
    %v1970 = vmul.f32 %v1967, 1.442695
    %v1971 = vpow.pop %v1970
    %v1972 = vadd.f32 %v1969, 1.0
    %v1973 = vadd.f32 %v1971, 1.0
    %v1974 = vrcp.pop %v1972
    %v1975 = vmul.f32 1.0, %v1974
    %v1976 = vrcp.pop %v1973
    %v1977 = vmul.f32 1.0, %v1976
    %v1978 = vtanh.pop %v1964
    %v1979 = vtanh.pop %v1965
    %v1980 = vmul.f32 %v1975, %v1851
    %v1981 = vmul.f32 %v1977, %v1852
    %1984 = vrot.lane.b32.xlu0 %v1978, 64
    %v1985 = vpop.permute.xlu0 %1984
    %1986 = vrot.lane.b32.xlu0 %v1979, 64
    %v1987 = vpop.permute.xlu0 %1986
    %v1990 = vmul.f32 %v1975, %v1985
    %v1991 = vmul.f32 %v1977, %v1987
    %1994 = vrot.lane.b32.xlu0 %v1990, 32
    %v1995 = vpop.permute.xlu0 %1994
    %1996 = vrot.lane.b32.xlu0 %v1991, 32
    %v1997 = vpop.permute.xlu0 %1996
    %v2000 = vadd.f32 %v1980, %v1995
    %v2001 = vadd.f32 %v1981, %v1997
    %v2002 = vtanh.pop %v2000
    %v2003 = vtanh.pop %v2001
    %2006 = vrot.lane.b32.xlu0 %v2002, 64
    %v2007 = vpop.permute.xlu0 %2006
    %2008 = vrot.lane.b32.xlu0 %v2003, 64
    %v2009 = vpop.permute.xlu0 %2008
    %v2012 = vmul.f32 %v1975, %v2007
    %v2013 = vmul.f32 %v1977, %v2009
    %2016 = vrot.lane.b32.xlu0 %v2012, 32
    %v2017 = vpop.permute.xlu0 %2016
    %2018 = vrot.lane.b32.xlu0 %v2013, 32
    %v2019 = vpop.permute.xlu0 %2018
    %2022 = vst.msk [vmem:[#allocation3 + $0x80] sm:$0xff] %vm814, %v2017
    %2023 = vst.msk [vmem:[#allocation3 + $0x88] sm:$0xff] %vm814, %v2019
    %2024 = vst.msk [vmem:[#allocation3 + $0x60] sm:$0xff] %vm817, %v2017
    %2025 = vst.msk [vmem:[#allocation3 + $0x68] sm:$0xff] %vm817, %v2019
    %v2026 = vld [vmem:[#allocation2 + $0x120] sm:$0xff]
    %v2027 = vld [vmem:[#allocation2 + $0x130] sm:$0xff]
    %v2028 = vld [vmem:[#allocation2 + $0xa8] sm:$0xff]
    %v2029 = vld [vmem:[#allocation2 + $0xb8] sm:$0xff]
    %v2030 = vadd.f32 %v2026, %v2028
    %v2031 = vadd.f32 %v2027, %v2029
    %v2032 = vld [vmem:[#allocation4] sm:$0xff]
    %v2033 = vld [vmem:[#allocation4 + $0x8] sm:$0xff]
    %v2034 = vld [vmem:[#allocation4 + $0x10] sm:$0xff]
    %v2035 = vld [vmem:[#allocation4 + $0x18] sm:$0xff]
    %v2036 = vsel %vm677, %v2017, 0
    %v2038 = vsel %vm677, %v2019, 0
    %2040 = vmatprep.subr.mxu0 0.0
    %2041 = vmatpush1.msra.mxu0 0.0
    %2042 = vmatprep.subr.mxu0 0.0
    %2043 = vmatpush1.msra.mxu0 0.0
    %2044 = vmatprep.subr.mxu0 0.0
    %2045 = vmatpush1.msra.mxu0 0.0
    %2046 = vmatprep.subr.mxu0 0.0
    %2047 = vmatpush1.msra.mxu0 0.0
    %2048 = vmatprep.subr.mxu0 0.0
    %2049 = vmatpush1.msra.mxu0 0.0
    %2050 = vmatprep.subr.mxu0 0.0
    %2051 = vmatpush1.msra.mxu0 0.0
    %2052 = vmatprep.subr.mxu0 0.0
    %2053 = vmatpush1.msra.mxu0 0.0
    %2054 = vmatprep.subr.mxu0 0.0
    %2055 = vmatpush1.msra.mxu0 0.0
    %2056 = vmatprep.subr.mxu0 0.0
    %2057 = vmatpush1.msra.mxu0 0.0
    %2058 = vmatprep.subr.mxu0 0.0
    %2059 = vmatpush1.msra.mxu0 0.0
    %2060 = vmatprep.subr.mxu0 0.0
    %2061 = vmatpush1.msra.mxu0 0.0
    %2062 = vmatprep.subr.mxu0 0.0
    %2063 = vmatpush1.msra.mxu0 0.0
    %2064 = vmatprep.subr.mxu0 0.0
    %2065 = vmatpush1.msra.mxu0 %v2035
    %2066 = vmatprep.subr.mxu0 0.0
    %2067 = vmatpush1.msra.mxu0 %v2034
    %2068 = vmatprep.subr.mxu0 0.0
    %2069 = vmatpush1.msra.mxu0 %v2033
    %2070 = vmatprep.subr.mxu0 0.0
    %2071 = vmatpush1.msra.mxu0 %v2032
    %2072 = vmatprep.subr.mxu0 0.0
    %2073 = vmatpush2.msra.mxu0 0.0
    %2074 = vmatprep.subr.mxu0 0.0
    %2075 = vmatpush2.msra.mxu0 0.0
    %2076 = vmatprep.subr.mxu0 0.0
    %2077 = vmatpush2.msra.mxu0 0.0
    %2078 = vmatprep.subr.mxu0 0.0
    %2079 = vmatpush2.msra.mxu0 0.0
    %2080 = vmatprep.subr.mxu0 0.0
    %2081 = vmatpush2.msra.mxu0 0.0
    %2082 = vmatprep.subr.mxu0 0.0
    %2083 = vmatpush2.msra.mxu0 0.0
    %2084 = vmatprep.subr.mxu0 0.0
    %2085 = vmatpush2.msra.mxu0 0.0
    %2086 = vmatprep.subr.mxu0 0.0
    %2087 = vmatpush2.msra.mxu0 0.0
    %2088 = vmatprep.subr.mxu0 0.0
    %2089 = vmatpush2.msra.mxu0 0.0
    %2090 = vmatprep.subr.mxu0 0.0
    %2091 = vmatpush2.msra.mxu0 0.0
    %2092 = vmatprep.subr.mxu0 0.0
    %2093 = vmatpush2.msra.mxu0 0.0
    %2094 = vmatprep.subr.mxu0 0.0
    %2095 = vmatpush2.msra.mxu0 0.0
    %2096 = vmatprep.subr.mxu0 0.0
    %2097 = vmatpush2.msra.mxu0 0.0
    %2098 = vmatprep.subr.mxu0 0.0
    %2099 = vmatpush2.msra.mxu0 0.0
    %2100 = vmatprep.subr.mxu0 0.0
    %2101 = vmatpush2.msra.mxu0 0.0
    %2102 = vmatprep.subr.mxu0 0.0
    %2103 = vmatpush2.msra.mxu0 0.0
    %2104 = vmatprep.mubr.f32.mxu0 0.0
    %2105 = vmatmul.mubr.f32.gmra.mxu0 %v2036
    %v2106 = vpop.f32.mrf.mxu0
    %v2107 = vadd.f32 0.0, %v2106
    %v2108 = vpop.f32.mrf.mxu0
    %2109 = vmatprep.mubr.f32.mxu0 0.0
    %2110 = vmatmul.mubr.f32.gmra.mxu0 %v2038
    %v2111 = vpop.f32.mrf.mxu0
    %v2112 = vadd.f32 0.0, %v2111
    %v2113 = vpop.f32.mrf.mxu0
    %2114 = vdwg.mxu0
    %v2115 = vadd.f32 %v2030, %v2107
    %v2116 = vadd.f32 %v2031, %v2112
    %v2117 = vxor.u32 %v2115, 2147483648
    %v2118 = vxor.u32 %v2116, 2147483648
    %v2119 = vmul.f32 %v2117, 1.442695
    %v2120 = vpow.pop %v2119
    %v2121 = vmul.f32 %v2118, 1.442695
    %v2122 = vpow.pop %v2121
    %v2123 = vadd.f32 %v2120, 1.0
    %v2124 = vadd.f32 %v2122, 1.0
    %v2125 = vrcp.pop %v2123
    %v2126 = vmul.f32 1.0, %v2125
    %v2127 = vrcp.pop %v2124
    %v2128 = vmul.f32 1.0, %v2127
    %v2129 = vtanh.pop %v2115
    %v2130 = vtanh.pop %v2116
    %v2131 = vmul.f32 %v2126, %v2000
    %v2132 = vmul.f32 %v2128, %v2001
    %2135 = vrot.lane.b32.xlu0 %v2129, 64
    %v2136 = vpop.permute.xlu0 %2135
    %2137 = vrot.lane.b32.xlu0 %v2130, 64
    %v2138 = vpop.permute.xlu0 %2137
    %v2141 = vmul.f32 %v2126, %v2136
    %v2142 = vmul.f32 %v2128, %v2138
    %2145 = vrot.lane.b32.xlu0 %v2141, 32
    %v2146 = vpop.permute.xlu0 %2145
    %2147 = vrot.lane.b32.xlu0 %v2142, 32
    %v2148 = vpop.permute.xlu0 %2147
    %v2151 = vadd.f32 %v2131, %v2146
    %v2152 = vadd.f32 %v2132, %v2148
    %v2153 = vtanh.pop %v2151
    %v2154 = vtanh.pop %v2152
    %2157 = vrot.lane.b32.xlu0 %v2153, 64
    %v2158 = vpop.permute.xlu0 %2157
    %2159 = vrot.lane.b32.xlu0 %v2154, 64
    %v2160 = vpop.permute.xlu0 %2159
    %v2163 = vmul.f32 %v2126, %v2158
    %v2164 = vmul.f32 %v2128, %v2160
    %2167 = vrot.lane.b32.xlu0 %v2163, 32
    %v2168 = vpop.permute.xlu0 %2167
    %2169 = vrot.lane.b32.xlu0 %v2164, 32
    %v2170 = vpop.permute.xlu0 %2169
    %2173 = vst.msk [vmem:[#allocation3 + $0x90] sm:$0xff] %vm814, %v2168
    %2174 = vst.msk [vmem:[#allocation3 + $0x98] sm:$0xff] %vm814, %v2170
    %2175 = vst.msk [vmem:[#allocation3 + $0x50] sm:$0xff] %vm817, %v2168
    %2176 = vst.msk [vmem:[#allocation3 + $0x58] sm:$0xff] %vm817, %v2170
    %v2177 = vld [vmem:[#allocation2 + $0x140] sm:$0xff]
    %v2178 = vld [vmem:[#allocation2 + $0x150] sm:$0xff]
    %v2179 = vld [vmem:[#allocation2 + $0x88] sm:$0xff]
    %v2180 = vld [vmem:[#allocation2 + $0x98] sm:$0xff]
    %v2181 = vadd.f32 %v2177, %v2179
    %v2182 = vadd.f32 %v2178, %v2180
    %v2183 = vld [vmem:[#allocation4] sm:$0xff]
    %v2184 = vld [vmem:[#allocation4 + $0x8] sm:$0xff]
    %v2185 = vld [vmem:[#allocation4 + $0x10] sm:$0xff]
    %v2186 = vld [vmem:[#allocation4 + $0x18] sm:$0xff]
    %v2187 = vsel %vm677, %v2168, 0
    %v2189 = vsel %vm677, %v2170, 0
    %2191 = vmatprep.subr.mxu0 0.0
    %2192 = vmatpush1.msra.mxu0 0.0
    %2193 = vmatprep.subr.mxu0 0.0
    %2194 = vmatpush1.msra.mxu0 0.0
    %2195 = vmatprep.subr.mxu0 0.0
    %2196 = vmatpush1.msra.mxu0 0.0
    %2197 = vmatprep.subr.mxu0 0.0
    %2198 = vmatpush1.msra.mxu0 0.0
    %2199 = vmatprep.subr.mxu0 0.0
    %2200 = vmatpush1.msra.mxu0 0.0
    %2201 = vmatprep.subr.mxu0 0.0
    %2202 = vmatpush1.msra.mxu0 0.0
    %2203 = vmatprep.subr.mxu0 0.0
    %2204 = vmatpush1.msra.mxu0 0.0
    %2205 = vmatprep.subr.mxu0 0.0
    %2206 = vmatpush1.msra.mxu0 0.0
    %2207 = vmatprep.subr.mxu0 0.0
    %2208 = vmatpush1.msra.mxu0 0.0
    %2209 = vmatprep.subr.mxu0 0.0
    %2210 = vmatpush1.msra.mxu0 0.0
    %2211 = vmatprep.subr.mxu0 0.0
    %2212 = vmatpush1.msra.mxu0 0.0
    %2213 = vmatprep.subr.mxu0 0.0
    %2214 = vmatpush1.msra.mxu0 0.0
    %2215 = vmatprep.subr.mxu0 0.0
    %2216 = vmatpush1.msra.mxu0 %v2186
    %2217 = vmatprep.subr.mxu0 0.0
    %2218 = vmatpush1.msra.mxu0 %v2185
    %2219 = vmatprep.subr.mxu0 0.0
    %2220 = vmatpush1.msra.mxu0 %v2184
    %2221 = vmatprep.subr.mxu0 0.0
    %2222 = vmatpush1.msra.mxu0 %v2183
    %2223 = vmatprep.subr.mxu0 0.0
    %2224 = vmatpush2.msra.mxu0 0.0
    %2225 = vmatprep.subr.mxu0 0.0
    %2226 = vmatpush2.msra.mxu0 0.0
    %2227 = vmatprep.subr.mxu0 0.0
    %2228 = vmatpush2.msra.mxu0 0.0
    %2229 = vmatprep.subr.mxu0 0.0
    %2230 = vmatpush2.msra.mxu0 0.0
    %2231 = vmatprep.subr.mxu0 0.0
    %2232 = vmatpush2.msra.mxu0 0.0
    %2233 = vmatprep.subr.mxu0 0.0
    %2234 = vmatpush2.msra.mxu0 0.0
    %2235 = vmatprep.subr.mxu0 0.0
    %2236 = vmatpush2.msra.mxu0 0.0
    %2237 = vmatprep.subr.mxu0 0.0
    %2238 = vmatpush2.msra.mxu0 0.0
    %2239 = vmatprep.subr.mxu0 0.0
    %2240 = vmatpush2.msra.mxu0 0.0
    %2241 = vmatprep.subr.mxu0 0.0
    %2242 = vmatpush2.msra.mxu0 0.0
    %2243 = vmatprep.subr.mxu0 0.0
    %2244 = vmatpush2.msra.mxu0 0.0
    %2245 = vmatprep.subr.mxu0 0.0
    %2246 = vmatpush2.msra.mxu0 0.0
    %2247 = vmatprep.subr.mxu0 0.0
    %2248 = vmatpush2.msra.mxu0 0.0
    %2249 = vmatprep.subr.mxu0 0.0
    %2250 = vmatpush2.msra.mxu0 0.0
    %2251 = vmatprep.subr.mxu0 0.0
    %2252 = vmatpush2.msra.mxu0 0.0
    %2253 = vmatprep.subr.mxu0 0.0
    %2254 = vmatpush2.msra.mxu0 0.0
    %2255 = vmatprep.mubr.f32.mxu0 0.0
    %2256 = vmatmul.mubr.f32.gmra.mxu0 %v2187
    %v2257 = vpop.f32.mrf.mxu0
    %v2258 = vadd.f32 0.0, %v2257
    %v2259 = vpop.f32.mrf.mxu0
    %2260 = vmatprep.mubr.f32.mxu0 0.0
    %2261 = vmatmul.mubr.f32.gmra.mxu0 %v2189
    %v2262 = vpop.f32.mrf.mxu0
    %v2263 = vadd.f32 0.0, %v2262
    %v2264 = vpop.f32.mrf.mxu0
    %2265 = vdwg.mxu0
    %v2266 = vadd.f32 %v2181, %v2258
    %v2267 = vadd.f32 %v2182, %v2263
    %v2268 = vxor.u32 %v2266, 2147483648
    %v2269 = vxor.u32 %v2267, 2147483648
    %v2270 = vmul.f32 %v2268, 1.442695
    %v2271 = vpow.pop %v2270
    %v2272 = vmul.f32 %v2269, 1.442695
    %v2273 = vpow.pop %v2272
    %v2274 = vadd.f32 %v2271, 1.0
    %v2275 = vadd.f32 %v2273, 1.0
    %v2276 = vrcp.pop %v2274
    %v2277 = vmul.f32 1.0, %v2276
    %v2278 = vrcp.pop %v2275
    %v2279 = vmul.f32 1.0, %v2278
    %v2280 = vtanh.pop %v2266
    %v2281 = vtanh.pop %v2267
    %v2282 = vmul.f32 %v2277, %v2151
    %v2283 = vmul.f32 %v2279, %v2152
    %2286 = vrot.lane.b32.xlu0 %v2280, 64
    %v2287 = vpop.permute.xlu0 %2286
    %2288 = vrot.lane.b32.xlu0 %v2281, 64
    %v2289 = vpop.permute.xlu0 %2288
    %v2292 = vmul.f32 %v2277, %v2287
    %v2293 = vmul.f32 %v2279, %v2289
    %2296 = vrot.lane.b32.xlu0 %v2292, 32
    %v2297 = vpop.permute.xlu0 %2296
    %2298 = vrot.lane.b32.xlu0 %v2293, 32
    %v2299 = vpop.permute.xlu0 %2298
    %v2302 = vadd.f32 %v2282, %v2297
    %v2303 = vadd.f32 %v2283, %v2299
    %v2304 = vtanh.pop %v2302
    %v2305 = vtanh.pop %v2303
    %2308 = vrot.lane.b32.xlu0 %v2304, 64
    %v2309 = vpop.permute.xlu0 %2308
    %2310 = vrot.lane.b32.xlu0 %v2305, 64
    %v2311 = vpop.permute.xlu0 %2310
    %v2314 = vmul.f32 %v2277, %v2309
    %v2315 = vmul.f32 %v2279, %v2311
    %2318 = vrot.lane.b32.xlu0 %v2314, 32
    %v2319 = vpop.permute.xlu0 %2318
    %2320 = vrot.lane.b32.xlu0 %v2315, 32
    %v2321 = vpop.permute.xlu0 %2320
    %2324 = vst.msk [vmem:[#allocation3 + $0xa0] sm:$0xff] %vm814, %v2319
    %2325 = vst.msk [vmem:[#allocation3 + $0xa8] sm:$0xff] %vm814, %v2321
    %2326 = vst.msk [vmem:[#allocation3 + $0x40] sm:$0xff] %vm817, %v2319
    %2327 = vst.msk [vmem:[#allocation3 + $0x48] sm:$0xff] %vm817, %v2321
    %v2328 = vld [vmem:[#allocation2 + $0x160] sm:$0xff]
    %v2329 = vld [vmem:[#allocation2 + $0x170] sm:$0xff]
    %v2330 = vld [vmem:[#allocation2 + $0x68] sm:$0xff]
    %v2331 = vld [vmem:[#allocation2 + $0x78] sm:$0xff]
    %v2332 = vadd.f32 %v2328, %v2330
    %v2333 = vadd.f32 %v2329, %v2331
    %v2334 = vld [vmem:[#allocation4] sm:$0xff]
    %v2335 = vld [vmem:[#allocation4 + $0x8] sm:$0xff]
    %v2336 = vld [vmem:[#allocation4 + $0x10] sm:$0xff]
    %v2337 = vld [vmem:[#allocation4 + $0x18] sm:$0xff]
    %v2338 = vsel %vm677, %v2319, 0
    %v2340 = vsel %vm677, %v2321, 0
    %2342 = vmatprep.subr.mxu0 0.0
    %2343 = vmatpush1.msra.mxu0 0.0
    %2344 = vmatprep.subr.mxu0 0.0
    %2345 = vmatpush1.msra.mxu0 0.0
    %2346 = vmatprep.subr.mxu0 0.0
    %2347 = vmatpush1.msra.mxu0 0.0
    %2348 = vmatprep.subr.mxu0 0.0
    %2349 = vmatpush1.msra.mxu0 0.0
    %2350 = vmatprep.subr.mxu0 0.0
    %2351 = vmatpush1.msra.mxu0 0.0
    %2352 = vmatprep.subr.mxu0 0.0
    %2353 = vmatpush1.msra.mxu0 0.0
    %2354 = vmatprep.subr.mxu0 0.0
    %2355 = vmatpush1.msra.mxu0 0.0
    %2356 = vmatprep.subr.mxu0 0.0
    %2357 = vmatpush1.msra.mxu0 0.0
    %2358 = vmatprep.subr.mxu0 0.0
    %2359 = vmatpush1.msra.mxu0 0.0
    %2360 = vmatprep.subr.mxu0 0.0
    %2361 = vmatpush1.msra.mxu0 0.0
    %2362 = vmatprep.subr.mxu0 0.0
    %2363 = vmatpush1.msra.mxu0 0.0
    %2364 = vmatprep.subr.mxu0 0.0
    %2365 = vmatpush1.msra.mxu0 0.0
    %2366 = vmatprep.subr.mxu0 0.0
    %2367 = vmatpush1.msra.mxu0 %v2337
    %2368 = vmatprep.subr.mxu0 0.0
    %2369 = vmatpush1.msra.mxu0 %v2336
    %2370 = vmatprep.subr.mxu0 0.0
    %2371 = vmatpush1.msra.mxu0 %v2335
    %2372 = vmatprep.subr.mxu0 0.0
    %2373 = vmatpush1.msra.mxu0 %v2334
    %2374 = vmatprep.subr.mxu0 0.0
    %2375 = vmatpush2.msra.mxu0 0.0
    %2376 = vmatprep.subr.mxu0 0.0
    %2377 = vmatpush2.msra.mxu0 0.0
    %2378 = vmatprep.subr.mxu0 0.0
    %2379 = vmatpush2.msra.mxu0 0.0
    %2380 = vmatprep.subr.mxu0 0.0
    %2381 = vmatpush2.msra.mxu0 0.0
    %2382 = vmatprep.subr.mxu0 0.0
    %2383 = vmatpush2.msra.mxu0 0.0
    %2384 = vmatprep.subr.mxu0 0.0
    %2385 = vmatpush2.msra.mxu0 0.0
    %2386 = vmatprep.subr.mxu0 0.0
    %2387 = vmatpush2.msra.mxu0 0.0
    %2388 = vmatprep.subr.mxu0 0.0
    %2389 = vmatpush2.msra.mxu0 0.0
    %2390 = vmatprep.subr.mxu0 0.0
    %2391 = vmatpush2.msra.mxu0 0.0
    %2392 = vmatprep.subr.mxu0 0.0
    %2393 = vmatpush2.msra.mxu0 0.0
    %2394 = vmatprep.subr.mxu0 0.0
    %2395 = vmatpush2.msra.mxu0 0.0
    %2396 = vmatprep.subr.mxu0 0.0
    %2397 = vmatpush2.msra.mxu0 0.0
    %2398 = vmatprep.subr.mxu0 0.0
    %2399 = vmatpush2.msra.mxu0 0.0
    %2400 = vmatprep.subr.mxu0 0.0
    %2401 = vmatpush2.msra.mxu0 0.0
    %2402 = vmatprep.subr.mxu0 0.0
    %2403 = vmatpush2.msra.mxu0 0.0
    %2404 = vmatprep.subr.mxu0 0.0
    %2405 = vmatpush2.msra.mxu0 0.0
    %2406 = vmatprep.mubr.f32.mxu0 0.0
    %2407 = vmatmul.mubr.f32.gmra.mxu0 %v2338
    %v2408 = vpop.f32.mrf.mxu0
    %v2409 = vadd.f32 0.0, %v2408
    %v2410 = vpop.f32.mrf.mxu0
    %2411 = vmatprep.mubr.f32.mxu0 0.0
    %2412 = vmatmul.mubr.f32.gmra.mxu0 %v2340
    %v2413 = vpop.f32.mrf.mxu0
    %v2414 = vadd.f32 0.0, %v2413
    %v2415 = vpop.f32.mrf.mxu0
    %2416 = vdwg.mxu0
    %v2417 = vadd.f32 %v2332, %v2409
    %v2418 = vadd.f32 %v2333, %v2414
    %v2419 = vxor.u32 %v2417, 2147483648
    %v2420 = vxor.u32 %v2418, 2147483648
    %v2421 = vmul.f32 %v2419, 1.442695
    %v2422 = vpow.pop %v2421
    %v2423 = vmul.f32 %v2420, 1.442695
    %v2424 = vpow.pop %v2423
    %v2425 = vadd.f32 %v2422, 1.0
    %v2426 = vadd.f32 %v2424, 1.0
    %v2427 = vrcp.pop %v2425
    %v2428 = vmul.f32 1.0, %v2427
    %v2429 = vrcp.pop %v2426
    %v2430 = vmul.f32 1.0, %v2429
    %v2431 = vtanh.pop %v2417
    %v2432 = vtanh.pop %v2418
    %v2433 = vmul.f32 %v2428, %v2302
    %v2434 = vmul.f32 %v2430, %v2303
    %2437 = vrot.lane.b32.xlu0 %v2431, 64
    %v2438 = vpop.permute.xlu0 %2437
    %2439 = vrot.lane.b32.xlu0 %v2432, 64
    %v2440 = vpop.permute.xlu0 %2439
    %v2443 = vmul.f32 %v2428, %v2438
    %v2444 = vmul.f32 %v2430, %v2440
    %2447 = vrot.lane.b32.xlu0 %v2443, 32
    %v2448 = vpop.permute.xlu0 %2447
    %2449 = vrot.lane.b32.xlu0 %v2444, 32
    %v2450 = vpop.permute.xlu0 %2449
    %v2453 = vadd.f32 %v2433, %v2448
    %v2454 = vadd.f32 %v2434, %v2450
    %v2455 = vtanh.pop %v2453
    %v2456 = vtanh.pop %v2454
    %2459 = vrot.lane.b32.xlu0 %v2455, 64
    %v2460 = vpop.permute.xlu0 %2459
    %2461 = vrot.lane.b32.xlu0 %v2456, 64
    %v2462 = vpop.permute.xlu0 %2461
    %v2465 = vmul.f32 %v2428, %v2460
    %v2466 = vmul.f32 %v2430, %v2462
    %2469 = vrot.lane.b32.xlu0 %v2465, 32
    %v2470 = vpop.permute.xlu0 %2469
    %2471 = vrot.lane.b32.xlu0 %v2466, 32
    %v2472 = vpop.permute.xlu0 %2471
    %2475 = vst.msk [vmem:[#allocation3 + $0xb0] sm:$0xff] %vm814, %v2470
    %2476 = vst.msk [vmem:[#allocation3 + $0xb8] sm:$0xff] %vm814, %v2472
    %2477 = vst.msk [vmem:[#allocation3 + $0x30] sm:$0xff] %vm817, %v2470
    %2478 = vst.msk [vmem:[#allocation3 + $0x38] sm:$0xff] %vm817, %v2472
    %v2479 = vld [vmem:[#allocation2 + $0x180] sm:$0xff]
    %v2480 = vld [vmem:[#allocation2 + $0x190] sm:$0xff]
    %v2481 = vld [vmem:[#allocation2 + $0x48] sm:$0xff]
    %v2482 = vld [vmem:[#allocation2 + $0x58] sm:$0xff]
    %v2483 = vadd.f32 %v2479, %v2481
    %v2484 = vadd.f32 %v2480, %v2482
    %v2485 = vld [vmem:[#allocation4] sm:$0xff]
    %v2486 = vld [vmem:[#allocation4 + $0x8] sm:$0xff]
    %v2487 = vld [vmem:[#allocation4 + $0x10] sm:$0xff]
    %v2488 = vld [vmem:[#allocation4 + $0x18] sm:$0xff]
    %v2489 = vsel %vm677, %v2470, 0
    %v2491 = vsel %vm677, %v2472, 0
    %2493 = vmatprep.subr.mxu0 0.0
    %2494 = vmatpush1.msra.mxu0 0.0
    %2495 = vmatprep.subr.mxu0 0.0
    %2496 = vmatpush1.msra.mxu0 0.0
    %2497 = vmatprep.subr.mxu0 0.0
    %2498 = vmatpush1.msra.mxu0 0.0
    %2499 = vmatprep.subr.mxu0 0.0
    %2500 = vmatpush1.msra.mxu0 0.0
    %2501 = vmatprep.subr.mxu0 0.0
    %2502 = vmatpush1.msra.mxu0 0.0
    %2503 = vmatprep.subr.mxu0 0.0
    %2504 = vmatpush1.msra.mxu0 0.0
    %2505 = vmatprep.subr.mxu0 0.0
    %2506 = vmatpush1.msra.mxu0 0.0
    %2507 = vmatprep.subr.mxu0 0.0
    %2508 = vmatpush1.msra.mxu0 0.0
    %2509 = vmatprep.subr.mxu0 0.0
    %2510 = vmatpush1.msra.mxu0 0.0
    %2511 = vmatprep.subr.mxu0 0.0
    %2512 = vmatpush1.msra.mxu0 0.0
    %2513 = vmatprep.subr.mxu0 0.0
    %2514 = vmatpush1.msra.mxu0 0.0
    %2515 = vmatprep.subr.mxu0 0.0
    %2516 = vmatpush1.msra.mxu0 0.0
    %2517 = vmatprep.subr.mxu0 0.0
    %2518 = vmatpush1.msra.mxu0 %v2488
    %2519 = vmatprep.subr.mxu0 0.0
    %2520 = vmatpush1.msra.mxu0 %v2487
    %2521 = vmatprep.subr.mxu0 0.0
    %2522 = vmatpush1.msra.mxu0 %v2486
    %2523 = vmatprep.subr.mxu0 0.0
    %2524 = vmatpush1.msra.mxu0 %v2485
    %2525 = vmatprep.subr.mxu0 0.0
    %2526 = vmatpush2.msra.mxu0 0.0
    %2527 = vmatprep.subr.mxu0 0.0
    %2528 = vmatpush2.msra.mxu0 0.0
    %2529 = vmatprep.subr.mxu0 0.0
    %2530 = vmatpush2.msra.mxu0 0.0
    %2531 = vmatprep.subr.mxu0 0.0
    %2532 = vmatpush2.msra.mxu0 0.0
    %2533 = vmatprep.subr.mxu0 0.0
    %2534 = vmatpush2.msra.mxu0 0.0
    %2535 = vmatprep.subr.mxu0 0.0
    %2536 = vmatpush2.msra.mxu0 0.0
    %2537 = vmatprep.subr.mxu0 0.0
    %2538 = vmatpush2.msra.mxu0 0.0
    %2539 = vmatprep.subr.mxu0 0.0
    %2540 = vmatpush2.msra.mxu0 0.0
    %2541 = vmatprep.subr.mxu0 0.0
    %2542 = vmatpush2.msra.mxu0 0.0
    %2543 = vmatprep.subr.mxu0 0.0
    %2544 = vmatpush2.msra.mxu0 0.0
    %2545 = vmatprep.subr.mxu0 0.0
    %2546 = vmatpush2.msra.mxu0 0.0
    %2547 = vmatprep.subr.mxu0 0.0
    %2548 = vmatpush2.msra.mxu0 0.0
    %2549 = vmatprep.subr.mxu0 0.0
    %2550 = vmatpush2.msra.mxu0 0.0
    %2551 = vmatprep.subr.mxu0 0.0
    %2552 = vmatpush2.msra.mxu0 0.0
    %2553 = vmatprep.subr.mxu0 0.0
    %2554 = vmatpush2.msra.mxu0 0.0
    %2555 = vmatprep.subr.mxu0 0.0
    %2556 = vmatpush2.msra.mxu0 0.0
    %2557 = vmatprep.mubr.f32.mxu0 0.0
    %2558 = vmatmul.mubr.f32.gmra.mxu0 %v2489
    %v2559 = vpop.f32.mrf.mxu0
    %v2560 = vadd.f32 0.0, %v2559
    %v2561 = vpop.f32.mrf.mxu0
    %2562 = vmatprep.mubr.f32.mxu0 0.0
    %2563 = vmatmul.mubr.f32.gmra.mxu0 %v2491
    %v2564 = vpop.f32.mrf.mxu0
    %v2565 = vadd.f32 0.0, %v2564
    %v2566 = vpop.f32.mrf.mxu0
    %2567 = vdwg.mxu0
    %v2568 = vadd.f32 %v2483, %v2560
    %v2569 = vadd.f32 %v2484, %v2565
    %v2570 = vxor.u32 %v2568, 2147483648
    %v2571 = vxor.u32 %v2569, 2147483648
    %v2572 = vmul.f32 %v2570, 1.442695
    %v2573 = vpow.pop %v2572
    %v2574 = vmul.f32 %v2571, 1.442695
    %v2575 = vpow.pop %v2574
    %v2576 = vadd.f32 %v2573, 1.0
    %v2577 = vadd.f32 %v2575, 1.0
    %v2578 = vrcp.pop %v2576
    %v2579 = vmul.f32 1.0, %v2578
    %v2580 = vrcp.pop %v2577
    %v2581 = vmul.f32 1.0, %v2580
    %v2582 = vtanh.pop %v2568
    %v2583 = vtanh.pop %v2569
    %v2584 = vmul.f32 %v2579, %v2453
    %v2585 = vmul.f32 %v2581, %v2454
    %2588 = vrot.lane.b32.xlu0 %v2582, 64
    %v2589 = vpop.permute.xlu0 %2588
    %2590 = vrot.lane.b32.xlu0 %v2583, 64
    %v2591 = vpop.permute.xlu0 %2590
    %v2594 = vmul.f32 %v2579, %v2589
    %v2595 = vmul.f32 %v2581, %v2591
    %2598 = vrot.lane.b32.xlu0 %v2594, 32
    %v2599 = vpop.permute.xlu0 %2598
    %2600 = vrot.lane.b32.xlu0 %v2595, 32
    %v2601 = vpop.permute.xlu0 %2600
    %v2604 = vadd.f32 %v2584, %v2599
    %v2605 = vadd.f32 %v2585, %v2601
    %v2606 = vtanh.pop %v2604
    %v2607 = vtanh.pop %v2605
    %2610 = vrot.lane.b32.xlu0 %v2606, 64
    %v2611 = vpop.permute.xlu0 %2610
    %2612 = vrot.lane.b32.xlu0 %v2607, 64
    %v2613 = vpop.permute.xlu0 %2612
    %v2616 = vmul.f32 %v2579, %v2611
    %v2617 = vmul.f32 %v2581, %v2613
    %2620 = vrot.lane.b32.xlu0 %v2616, 32
    %v2621 = vpop.permute.xlu0 %2620
    %2622 = vrot.lane.b32.xlu0 %v2617, 32
    %v2623 = vpop.permute.xlu0 %2622
    %2626 = vst.msk [vmem:[#allocation3 + $0xc0] sm:$0xff] %vm814, %v2621
    %2627 = vst.msk [vmem:[#allocation3 + $0xc8] sm:$0xff] %vm814, %v2623
    %2628 = vst.msk [vmem:[#allocation3 + $0x20] sm:$0xff] %vm817, %v2621
    %2629 = vst.msk [vmem:[#allocation3 + $0x28] sm:$0xff] %vm817, %v2623
    %v2630 = vld [vmem:[#allocation2 + $0x1a0] sm:$0xff]
    %v2631 = vld [vmem:[#allocation2 + $0x1b0] sm:$0xff]
    %v2632 = vld [vmem:[#allocation2 + $0x28] sm:$0xff]
    %v2633 = vld [vmem:[#allocation2 + $0x38] sm:$0xff]
    %v2634 = vadd.f32 %v2630, %v2632
    %v2635 = vadd.f32 %v2631, %v2633
    %v2636 = vld [vmem:[#allocation4] sm:$0xff]
    %v2637 = vld [vmem:[#allocation4 + $0x8] sm:$0xff]
    %v2638 = vld [vmem:[#allocation4 + $0x10] sm:$0xff]
    %v2639 = vld [vmem:[#allocation4 + $0x18] sm:$0xff]
    %v2640 = vsel %vm677, %v2621, 0
    %v2642 = vsel %vm677, %v2623, 0
    %2644 = vmatprep.subr.mxu0 0.0
    %2645 = vmatpush1.msra.mxu0 0.0
    %2646 = vmatprep.subr.mxu0 0.0
    %2647 = vmatpush1.msra.mxu0 0.0
    %2648 = vmatprep.subr.mxu0 0.0
    %2649 = vmatpush1.msra.mxu0 0.0
    %2650 = vmatprep.subr.mxu0 0.0
    %2651 = vmatpush1.msra.mxu0 0.0
    %2652 = vmatprep.subr.mxu0 0.0
    %2653 = vmatpush1.msra.mxu0 0.0
    %2654 = vmatprep.subr.mxu0 0.0
    %2655 = vmatpush1.msra.mxu0 0.0
    %2656 = vmatprep.subr.mxu0 0.0
    %2657 = vmatpush1.msra.mxu0 0.0
    %2658 = vmatprep.subr.mxu0 0.0
    %2659 = vmatpush1.msra.mxu0 0.0
    %2660 = vmatprep.subr.mxu0 0.0
    %2661 = vmatpush1.msra.mxu0 0.0
    %2662 = vmatprep.subr.mxu0 0.0
    %2663 = vmatpush1.msra.mxu0 0.0
    %2664 = vmatprep.subr.mxu0 0.0
    %2665 = vmatpush1.msra.mxu0 0.0
    %2666 = vmatprep.subr.mxu0 0.0
    %2667 = vmatpush1.msra.mxu0 0.0
    %2668 = vmatprep.subr.mxu0 0.0
    %2669 = vmatpush1.msra.mxu0 %v2639
    %2670 = vmatprep.subr.mxu0 0.0
    %2671 = vmatpush1.msra.mxu0 %v2638
    %2672 = vmatprep.subr.mxu0 0.0
    %2673 = vmatpush1.msra.mxu0 %v2637
    %2674 = vmatprep.subr.mxu0 0.0
    %2675 = vmatpush1.msra.mxu0 %v2636
    %2676 = vmatprep.subr.mxu0 0.0
    %2677 = vmatpush2.msra.mxu0 0.0
    %2678 = vmatprep.subr.mxu0 0.0
    %2679 = vmatpush2.msra.mxu0 0.0
    %2680 = vmatprep.subr.mxu0 0.0
    %2681 = vmatpush2.msra.mxu0 0.0
    %2682 = vmatprep.subr.mxu0 0.0
    %2683 = vmatpush2.msra.mxu0 0.0
    %2684 = vmatprep.subr.mxu0 0.0
    %2685 = vmatpush2.msra.mxu0 0.0
    %2686 = vmatprep.subr.mxu0 0.0
    %2687 = vmatpush2.msra.mxu0 0.0
    %2688 = vmatprep.subr.mxu0 0.0
    %2689 = vmatpush2.msra.mxu0 0.0
    %2690 = vmatprep.subr.mxu0 0.0
    %2691 = vmatpush2.msra.mxu0 0.0
    %2692 = vmatprep.subr.mxu0 0.0
    %2693 = vmatpush2.msra.mxu0 0.0
    %2694 = vmatprep.subr.mxu0 0.0
    %2695 = vmatpush2.msra.mxu0 0.0
    %2696 = vmatprep.subr.mxu0 0.0
    %2697 = vmatpush2.msra.mxu0 0.0
    %2698 = vmatprep.subr.mxu0 0.0
    %2699 = vmatpush2.msra.mxu0 0.0
    %2700 = vmatprep.subr.mxu0 0.0
    %2701 = vmatpush2.msra.mxu0 0.0
    %2702 = vmatprep.subr.mxu0 0.0
    %2703 = vmatpush2.msra.mxu0 0.0
    %2704 = vmatprep.subr.mxu0 0.0
    %2705 = vmatpush2.msra.mxu0 0.0
    %2706 = vmatprep.subr.mxu0 0.0
    %2707 = vmatpush2.msra.mxu0 0.0
    %2708 = vmatprep.mubr.f32.mxu0 0.0
    %2709 = vmatmul.mubr.f32.gmra.mxu0 %v2640
    %v2710 = vpop.f32.mrf.mxu0
    %v2711 = vadd.f32 0.0, %v2710
    %v2712 = vpop.f32.mrf.mxu0
    %2713 = vmatprep.mubr.f32.mxu0 0.0
    %2714 = vmatmul.mubr.f32.gmra.mxu0 %v2642
    %v2715 = vpop.f32.mrf.mxu0
    %v2716 = vadd.f32 0.0, %v2715
    %v2717 = vpop.f32.mrf.mxu0
    %2718 = vdwg.mxu0
    %v2719 = vadd.f32 %v2634, %v2711
    %v2720 = vadd.f32 %v2635, %v2716
    %v2721 = vxor.u32 %v2719, 2147483648
    %v2722 = vxor.u32 %v2720, 2147483648
    %v2723 = vmul.f32 %v2721, 1.442695
    %v2724 = vpow.pop %v2723
    %v2725 = vmul.f32 %v2722, 1.442695
    %v2726 = vpow.pop %v2725
    %v2727 = vadd.f32 %v2724, 1.0
    %v2728 = vadd.f32 %v2726, 1.0
    %v2729 = vrcp.pop %v2727
    %v2730 = vmul.f32 1.0, %v2729
    %v2731 = vrcp.pop %v2728
    %v2732 = vmul.f32 1.0, %v2731
    %v2733 = vtanh.pop %v2719
    %v2734 = vtanh.pop %v2720
    %v2735 = vmul.f32 %v2730, %v2604
    %v2736 = vmul.f32 %v2732, %v2605
    %2739 = vrot.lane.b32.xlu0 %v2733, 64
    %v2740 = vpop.permute.xlu0 %2739
    %2741 = vrot.lane.b32.xlu0 %v2734, 64
    %v2742 = vpop.permute.xlu0 %2741
    %v2745 = vmul.f32 %v2730, %v2740
    %v2746 = vmul.f32 %v2732, %v2742
    %2749 = vrot.lane.b32.xlu0 %v2745, 32
    %v2750 = vpop.permute.xlu0 %2749
    %2751 = vrot.lane.b32.xlu0 %v2746, 32
    %v2752 = vpop.permute.xlu0 %2751
    %v2755 = vadd.f32 %v2735, %v2750
    %v2756 = vadd.f32 %v2736, %v2752
    %v2757 = vtanh.pop %v2755
    %v2758 = vtanh.pop %v2756
    %2761 = vrot.lane.b32.xlu0 %v2757, 64
    %v2762 = vpop.permute.xlu0 %2761
    %2763 = vrot.lane.b32.xlu0 %v2758, 64
    %v2764 = vpop.permute.xlu0 %2763
    %v2767 = vmul.f32 %v2730, %v2762
    %v2768 = vmul.f32 %v2732, %v2764
    %2771 = vrot.lane.b32.xlu0 %v2767, 32
    %v2772 = vpop.permute.xlu0 %2771
    %2773 = vrot.lane.b32.xlu0 %v2768, 32
    %v2774 = vpop.permute.xlu0 %2773
    %2777 = vst.msk [vmem:[#allocation3 + $0xd0] sm:$0xff] %vm814, %v2772
    %2778 = vst.msk [vmem:[#allocation3 + $0xd8] sm:$0xff] %vm814, %v2774
    %2779 = vst.msk [vmem:[#allocation3 + $0x10] sm:$0xff] %vm817, %v2772
    %2780 = vst.msk [vmem:[#allocation3 + $0x18] sm:$0xff] %vm817, %v2774
    %v2781 = vld [vmem:[#allocation2 + $0x1c0] sm:$0xff]
    %v2782 = vld [vmem:[#allocation2 + $0x1d0] sm:$0xff]
    %v2783 = vld [vmem:[#allocation2 + $0x8] sm:$0xff]
    %v2784 = vld [vmem:[#allocation2 + $0x18] sm:$0xff]
    %v2785 = vadd.f32 %v2781, %v2783
    %v2786 = vadd.f32 %v2782, %v2784
    %v2787 = vld [vmem:[#allocation4] sm:$0xff]
    %v2788 = vld [vmem:[#allocation4 + $0x8] sm:$0xff]
    %v2789 = vld [vmem:[#allocation4 + $0x10] sm:$0xff]
    %v2790 = vld [vmem:[#allocation4 + $0x18] sm:$0xff]
    %v2791 = vsel %vm677, %v2772, 0
    %v2793 = vsel %vm677, %v2774, 0
    %2795 = vmatprep.subr.mxu0 0.0
    %2796 = vmatpush1.msra.mxu0 0.0
    %2797 = vmatprep.subr.mxu0 0.0
    %2798 = vmatpush1.msra.mxu0 0.0
    %2799 = vmatprep.subr.mxu0 0.0
    %2800 = vmatpush1.msra.mxu0 0.0
    %2801 = vmatprep.subr.mxu0 0.0
    %2802 = vmatpush1.msra.mxu0 0.0
    %2803 = vmatprep.subr.mxu0 0.0
    %2804 = vmatpush1.msra.mxu0 0.0
    %2805 = vmatprep.subr.mxu0 0.0
    %2806 = vmatpush1.msra.mxu0 0.0
    %2807 = vmatprep.subr.mxu0 0.0
    %2808 = vmatpush1.msra.mxu0 0.0
    %2809 = vmatprep.subr.mxu0 0.0
    %2810 = vmatpush1.msra.mxu0 0.0
    %2811 = vmatprep.subr.mxu0 0.0
    %2812 = vmatpush1.msra.mxu0 0.0
    %2813 = vmatprep.subr.mxu0 0.0
    %2814 = vmatpush1.msra.mxu0 0.0
    %2815 = vmatprep.subr.mxu0 0.0
    %2816 = vmatpush1.msra.mxu0 0.0
    %2817 = vmatprep.subr.mxu0 0.0
    %2818 = vmatpush1.msra.mxu0 0.0
    %2819 = vmatprep.subr.mxu0 0.0
    %2820 = vmatpush1.msra.mxu0 %v2790
    %2821 = vmatprep.subr.mxu0 0.0
    %2822 = vmatpush1.msra.mxu0 %v2789
    %2823 = vmatprep.subr.mxu0 0.0
    %2824 = vmatpush1.msra.mxu0 %v2788
    %2825 = vmatprep.subr.mxu0 0.0
    %2826 = vmatpush1.msra.mxu0 %v2787
    %2827 = vmatprep.subr.mxu0 0.0
    %2828 = vmatpush2.msra.mxu0 0.0
    %2829 = vmatprep.subr.mxu0 0.0
    %2830 = vmatpush2.msra.mxu0 0.0
    %2831 = vmatprep.subr.mxu0 0.0
    %2832 = vmatpush2.msra.mxu0 0.0
    %2833 = vmatprep.subr.mxu0 0.0
    %2834 = vmatpush2.msra.mxu0 0.0
    %2835 = vmatprep.subr.mxu0 0.0
    %2836 = vmatpush2.msra.mxu0 0.0
    %2837 = vmatprep.subr.mxu0 0.0
    %2838 = vmatpush2.msra.mxu0 0.0
    %2839 = vmatprep.subr.mxu0 0.0
    %2840 = vmatpush2.msra.mxu0 0.0
    %2841 = vmatprep.subr.mxu0 0.0
    %2842 = vmatpush2.msra.mxu0 0.0
    %2843 = vmatprep.subr.mxu0 0.0
    %2844 = vmatpush2.msra.mxu0 0.0
    %2845 = vmatprep.subr.mxu0 0.0
    %2846 = vmatpush2.msra.mxu0 0.0
    %2847 = vmatprep.subr.mxu0 0.0
    %2848 = vmatpush2.msra.mxu0 0.0
    %2849 = vmatprep.subr.mxu0 0.0
    %2850 = vmatpush2.msra.mxu0 0.0
    %2851 = vmatprep.subr.mxu0 0.0
    %2852 = vmatpush2.msra.mxu0 0.0
    %2853 = vmatprep.subr.mxu0 0.0
    %2854 = vmatpush2.msra.mxu0 0.0
    %2855 = vmatprep.subr.mxu0 0.0
    %2856 = vmatpush2.msra.mxu0 0.0
    %2857 = vmatprep.subr.mxu0 0.0
    %2858 = vmatpush2.msra.mxu0 0.0
    %2859 = vmatprep.mubr.f32.mxu0 0.0
    %2860 = vmatmul.mubr.f32.gmra.mxu0 %v2791
    %v2861 = vpop.f32.mrf.mxu0
    %v2862 = vadd.f32 0.0, %v2861
    %v2863 = vpop.f32.mrf.mxu0
    %2864 = vmatprep.mubr.f32.mxu0 0.0
    %2865 = vmatmul.mubr.f32.gmra.mxu0 %v2793
    %v2866 = vpop.f32.mrf.mxu0
    %v2867 = vadd.f32 0.0, %v2866
    %v2868 = vpop.f32.mrf.mxu0
    %2869 = vdwg.mxu0
    %v2870 = vadd.f32 %v2785, %v2862
    %v2871 = vadd.f32 %v2786, %v2867
    %v2872 = vxor.u32 %v2870, 2147483648
    %v2873 = vxor.u32 %v2871, 2147483648
    %v2874 = vmul.f32 %v2872, 1.442695
    %v2875 = vpow.pop %v2874
    %v2876 = vmul.f32 %v2873, 1.442695
    %v2877 = vpow.pop %v2876
    %v2878 = vadd.f32 %v2875, 1.0
    %v2879 = vadd.f32 %v2877, 1.0
    %v2880 = vrcp.pop %v2878
    %v2881 = vmul.f32 1.0, %v2880
    %v2882 = vrcp.pop %v2879
    %v2883 = vmul.f32 1.0, %v2882
    %v2884 = vtanh.pop %v2870
    %v2885 = vtanh.pop %v2871
    %v2886 = vmul.f32 %v2881, %v2755
    %v2887 = vmul.f32 %v2883, %v2756
    %2890 = vrot.lane.b32.xlu0 %v2884, 64
    %v2891 = vpop.permute.xlu0 %2890
    %2892 = vrot.lane.b32.xlu0 %v2885, 64
    %v2893 = vpop.permute.xlu0 %2892
    %v2896 = vmul.f32 %v2881, %v2891
    %v2897 = vmul.f32 %v2883, %v2893
    %2900 = vrot.lane.b32.xlu0 %v2896, 32
    %v2901 = vpop.permute.xlu0 %2900
    %2902 = vrot.lane.b32.xlu0 %v2897, 32
    %v2903 = vpop.permute.xlu0 %2902
    %v2906 = vadd.f32 %v2886, %v2901
    %v2907 = vadd.f32 %v2887, %v2903
    %v2908 = vtanh.pop %v2906
    %v2909 = vtanh.pop %v2907
    %2912 = vrot.lane.b32.xlu0 %v2908, 64
    %v2913 = vpop.permute.xlu0 %2912
    %2914 = vrot.lane.b32.xlu0 %v2909, 64
    %v2915 = vpop.permute.xlu0 %2914
    %v2918 = vmul.f32 %v2881, %v2913
    %v2919 = vmul.f32 %v2883, %v2915
    %2922 = vrot.lane.b32.xlu0 %v2918, 32
    %v2923 = vpop.permute.xlu0 %2922
    %2924 = vrot.lane.b32.xlu0 %v2919, 32
    %v2925 = vpop.permute.xlu0 %2924
    %2928 = vst.msk [vmem:[#allocation3 + $0xe0] sm:$0xff] %vm814, %v2923
    %2929 = vst.msk [vmem:[#allocation3 + $0xe8] sm:$0xff] %vm814, %v2925
    %2930 = vst.msk [vmem:[#allocation3] sm:$0xff] %vm817, %v2923
    %2931 = vst.msk [vmem:[#allocation3 + $0x8] sm:$0xff] %vm817, %v2925
    %v2932 = vld [vmem:[#allocation3] sm:$0xff]
    %v2933 = vld [vmem:[#allocation3 + $0x8] sm:$0xff]
    %v2934 = vld [vmem:[#allocation3 + $0x10] sm:$0xff]
    %v2935 = vld [vmem:[#allocation3 + $0x18] sm:$0xff]
    %v2936 = vld [vmem:[#allocation3 + $0x20] sm:$0xff]
    %v2937 = vld [vmem:[#allocation3 + $0x28] sm:$0xff]
    %v2938 = vld [vmem:[#allocation3 + $0x30] sm:$0xff]
    %v2939 = vld [vmem:[#allocation3 + $0x38] sm:$0xff]
    %v2940 = vld [vmem:[#allocation3 + $0x40] sm:$0xff]
    %v2941 = vld [vmem:[#allocation3 + $0x48] sm:$0xff]
    %v2942 = vld [vmem:[#allocation3 + $0x50] sm:$0xff]
    %v2943 = vld [vmem:[#allocation3 + $0x58] sm:$0xff]
    %v2944 = vld [vmem:[#allocation3 + $0x60] sm:$0xff]
    %v2945 = vld [vmem:[#allocation3 + $0x68] sm:$0xff]
    %v2946 = vld [vmem:[#allocation3 + $0x70] sm:$0xff]
    %v2947 = vld [vmem:[#allocation3 + $0x78] sm:$0xff]
    %v2948 = vld [vmem:[#allocation3 + $0x80] sm:$0xff]
    %v2949 = vld [vmem:[#allocation3 + $0x88] sm:$0xff]
    %v2950 = vld [vmem:[#allocation3 + $0x90] sm:$0xff]
    %v2951 = vld [vmem:[#allocation3 + $0x98] sm:$0xff]
    %v2952 = vld [vmem:[#allocation3 + $0xa0] sm:$0xff]
    %v2953 = vld [vmem:[#allocation3 + $0xa8] sm:$0xff]
    %v2954 = vld [vmem:[#allocation3 + $0xb0] sm:$0xff]
    %v2955 = vld [vmem:[#allocation3 + $0xb8] sm:$0xff]
    %v2956 = vld [vmem:[#allocation3 + $0xc0] sm:$0xff]
    %v2957 = vld [vmem:[#allocation3 + $0xc8] sm:$0xff]
    %v2958 = vld [vmem:[#allocation3 + $0xd0] sm:$0xff]
    %v2959 = vld [vmem:[#allocation3 + $0xd8] sm:$0xff]
    %v2960 = vld [vmem:[#allocation3 + $0xe0] sm:$0xff]
    %v2961 = vld [vmem:[#allocation3 + $0xe8] sm:$0xff]
    %v2962 = vld [vmem:[%s2] sm:$0xff]
    %v2963 = vld [vmem:[%s2 + $0x8] sm:$0xff]
    %v2964 = vld [vmem:[%s2 + $0x10] sm:$0xff]
    %v2965 = vld [vmem:[%s2 + $0x18] sm:$0xff]
    %v2966 = vld [vmem:[%s2 + $0x20] sm:$0xff]
    %v2967 = vld [vmem:[%s2 + $0x28] sm:$0xff]
    %v2968 = vld [vmem:[%s2 + $0x30] sm:$0xff]
    %v2969 = vld [vmem:[%s2 + $0x38] sm:$0xff]
    %v2970 = vld [vmem:[%s4] sm:$0x3]
    %v2972 = vlaneseq
    %v2973 = vshrl.u32 %v2972, 7
    %v2974 = vsub.s32 0, %v2973
    %v2975 = vrot.slane %v2970, %v2974
    %v2976 = vlaneseq
    %v2977 = vshrl.u32 %v2976, 7
    %v2978 = vsub.s32 1, %v2977
    %v2979 = vrot.slane %v2970, %v2978
    %v2983 = vsel %vm677, %v2932, 0
    %v2986 = vsel %vm677, %v2933, 0
    %v2989 = vsel %vm677, %v2934, 0
    %v2992 = vsel %vm677, %v2935, 0
    %v2995 = vsel %vm677, %v2936, 0
    %v2998 = vsel %vm677, %v2937, 0
    %v3001 = vsel %vm677, %v2938, 0
    %v3004 = vsel %vm677, %v2939, 0
    %v3007 = vsel %vm677, %v2940, 0
    %v3010 = vsel %vm677, %v2941, 0
    %v3013 = vsel %vm677, %v2942, 0
    %v3016 = vsel %vm677, %v2943, 0
    %v3019 = vsel %vm677, %v2944, 0
    %v3022 = vsel %vm677, %v2945, 0
    %v3025 = vsel %vm677, %v2946, 0
    %v3028 = vsel %vm677, %v2947, 0
    %v3031 = vsel %vm677, %v2948, 0
    %v3034 = vsel %vm677, %v2949, 0
    %v3037 = vsel %vm677, %v2950, 0
    %v3040 = vsel %vm677, %v2951, 0
    %v3043 = vsel %vm677, %v2952, 0
    %v3046 = vsel %vm677, %v2953, 0
    %v3049 = vsel %vm677, %v2954, 0
    %v3052 = vsel %vm677, %v2955, 0
    %v3055 = vsel %vm677, %v2956, 0
    %v3058 = vsel %vm677, %v2957, 0
    %v3061 = vsel %vm677, %v2958, 0
    %v3064 = vsel %vm677, %v2959, 0
    %v3067 = vsel %vm677, %v2960, 0
    %v3070 = vsel %vm677, %v2961, 0
    %3072 = vmatprep.subr.mxu0 0.0
    %3073 = vmatpush1.msra.mxu0 0.0
    %3074 = vmatprep.subr.mxu0 0.0
    %3075 = vmatpush1.msra.mxu0 0.0
    %3076 = vmatprep.subr.mxu0 0.0
    %3077 = vmatpush1.msra.mxu0 0.0
    %3078 = vmatprep.subr.mxu0 0.0
    %3079 = vmatpush1.msra.mxu0 0.0
    %3080 = vmatprep.subr.mxu0 0.0
    %3081 = vmatpush1.msra.mxu0 0.0
    %3082 = vmatprep.subr.mxu0 0.0
    %3083 = vmatpush1.msra.mxu0 0.0
    %3084 = vmatprep.subr.mxu0 0.0
    %3085 = vmatpush1.msra.mxu0 0.0
    %3086 = vmatprep.subr.mxu0 0.0
    %3087 = vmatpush1.msra.mxu0 0.0
    %3088 = vmatprep.subr.mxu0 0.0
    %3089 = vmatpush1.msra.mxu0 0.0
    %3090 = vmatprep.subr.mxu0 0.0
    %3091 = vmatpush1.msra.mxu0 0.0
    %3092 = vmatprep.subr.mxu0 0.0
    %3093 = vmatpush1.msra.mxu0 0.0
    %3094 = vmatprep.subr.mxu0 0.0
    %3095 = vmatpush1.msra.mxu0 0.0
    %3096 = vmatprep.subr.mxu0 %v2969
    %3097 = vmatpush1.msra.mxu0 %v2968
    %3098 = vmatprep.subr.mxu0 %v2967
    %3099 = vmatpush1.msra.mxu0 %v2966
    %3100 = vmatprep.subr.mxu0 %v2965
    %3101 = vmatpush1.msra.mxu0 %v2964
    %3102 = vmatprep.subr.mxu0 %v2963
    %3103 = vmatpush1.msra.mxu0 %v2962
    %3104 = vmatprep.subr.mxu0 0.0
    %3105 = vmatpush2.msra.mxu0 0.0
    %3106 = vmatprep.subr.mxu0 0.0
    %3107 = vmatpush2.msra.mxu0 0.0
    %3108 = vmatprep.subr.mxu0 0.0
    %3109 = vmatpush2.msra.mxu0 0.0
    %3110 = vmatprep.subr.mxu0 0.0
    %3111 = vmatpush2.msra.mxu0 0.0
    %3112 = vmatprep.subr.mxu0 0.0
    %3113 = vmatpush2.msra.mxu0 0.0
    %3114 = vmatprep.subr.mxu0 0.0
    %3115 = vmatpush2.msra.mxu0 0.0
    %3116 = vmatprep.subr.mxu0 0.0
    %3117 = vmatpush2.msra.mxu0 0.0
    %3118 = vmatprep.subr.mxu0 0.0
    %3119 = vmatpush2.msra.mxu0 0.0
    %3120 = vmatprep.subr.mxu0 0.0
    %3121 = vmatpush2.msra.mxu0 0.0
    %3122 = vmatprep.subr.mxu0 0.0
    %3123 = vmatpush2.msra.mxu0 0.0
    %3124 = vmatprep.subr.mxu0 0.0
    %3125 = vmatpush2.msra.mxu0 0.0
    %3126 = vmatprep.subr.mxu0 0.0
    %3127 = vmatpush2.msra.mxu0 0.0
    %3128 = vmatprep.subr.mxu0 0.0
    %3129 = vmatpush2.msra.mxu0 0.0
    %3130 = vmatprep.subr.mxu0 0.0
    %3131 = vmatpush2.msra.mxu0 0.0
    %3132 = vmatprep.subr.mxu0 0.0
    %3133 = vmatpush2.msra.mxu0 0.0
    %3134 = vmatprep.subr.mxu0 0.0
    %3135 = vmatpush2.msra.mxu0 0.0
    %3136 = vmatprep.mubr.f32.mxu0 0.0
    %3137 = vmatmul.mubr.f32.gmra.mxu0 %v2983
    %v3138 = vpop.f32.mrf.mxu0
    %v3139 = vadd.f32 %v2975, %v3138
    %v3140 = vpop.f32.mrf.mxu0
    %v3141 = vadd.f32 %v2979, %v3140
    %3142 = vmatprep.mubr.f32.mxu0 0.0
    %3143 = vmatmul.mubr.f32.gmra.mxu0 %v2986
    %v3144 = vpop.f32.mrf.mxu0
    %v3145 = vadd.f32 %v2975, %v3144
    %v3146 = vpop.f32.mrf.mxu0
    %v3147 = vadd.f32 %v2979, %v3146
    %3148 = vmatprep.mubr.f32.mxu0 0.0
    %3149 = vmatmul.mubr.f32.gmra.mxu0 %v2989
    %v3150 = vpop.f32.mrf.mxu0
    %v3151 = vadd.f32 %v2975, %v3150
    %v3152 = vpop.f32.mrf.mxu0
    %v3153 = vadd.f32 %v2979, %v3152
    %3154 = vmatprep.mubr.f32.mxu0 0.0
    %3155 = vmatmul.mubr.f32.gmra.mxu0 %v2992
    %v3156 = vpop.f32.mrf.mxu0
    %v3157 = vadd.f32 %v2975, %v3156
    %v3158 = vpop.f32.mrf.mxu0
    %v3159 = vadd.f32 %v2979, %v3158
    %3160 = vmatprep.mubr.f32.mxu0 0.0
    %3161 = vmatmul.mubr.f32.gmra.mxu0 %v2995
    %v3162 = vpop.f32.mrf.mxu0
    %v3163 = vadd.f32 %v2975, %v3162
    %v3164 = vpop.f32.mrf.mxu0
    %v3165 = vadd.f32 %v2979, %v3164
    %3166 = vmatprep.mubr.f32.mxu0 0.0
    %3167 = vmatmul.mubr.f32.gmra.mxu0 %v2998
    %v3168 = vpop.f32.mrf.mxu0
    %v3169 = vadd.f32 %v2975, %v3168
    %v3170 = vpop.f32.mrf.mxu0
    %v3171 = vadd.f32 %v2979, %v3170
    %3172 = vmatprep.mubr.f32.mxu0 0.0
    %3173 = vmatmul.mubr.f32.gmra.mxu0 %v3001
    %v3174 = vpop.f32.mrf.mxu0
    %v3175 = vadd.f32 %v2975, %v3174
    %v3176 = vpop.f32.mrf.mxu0
    %v3177 = vadd.f32 %v2979, %v3176
    %3178 = vmatprep.mubr.f32.mxu0 0.0
    %3179 = vmatmul.mubr.f32.gmra.mxu0 %v3004
    %v3180 = vpop.f32.mrf.mxu0
    %v3181 = vadd.f32 %v2975, %v3180
    %v3182 = vpop.f32.mrf.mxu0
    %v3183 = vadd.f32 %v2979, %v3182
    %3184 = vmatprep.mubr.f32.mxu0 0.0
    %3185 = vmatmul.mubr.f32.gmra.mxu0 %v3007
    %v3186 = vpop.f32.mrf.mxu0
    %v3187 = vadd.f32 %v2975, %v3186
    %v3188 = vpop.f32.mrf.mxu0
    %v3189 = vadd.f32 %v2979, %v3188
    %3190 = vmatprep.mubr.f32.mxu0 0.0
    %3191 = vmatmul.mubr.f32.gmra.mxu0 %v3010
    %v3192 = vpop.f32.mrf.mxu0
    %v3193 = vadd.f32 %v2975, %v3192
    %v3194 = vpop.f32.mrf.mxu0
    %v3195 = vadd.f32 %v2979, %v3194
    %3196 = vmatprep.mubr.f32.mxu0 0.0
    %3197 = vmatmul.mubr.f32.gmra.mxu0 %v3013
    %v3198 = vpop.f32.mrf.mxu0
    %v3199 = vadd.f32 %v2975, %v3198
    %v3200 = vpop.f32.mrf.mxu0
    %v3201 = vadd.f32 %v2979, %v3200
    %3202 = vmatprep.mubr.f32.mxu0 0.0
    %3203 = vmatmul.mubr.f32.gmra.mxu0 %v3016
    %v3204 = vpop.f32.mrf.mxu0
    %v3205 = vadd.f32 %v2975, %v3204
    %v3206 = vpop.f32.mrf.mxu0
    %v3207 = vadd.f32 %v2979, %v3206
    %3208 = vmatprep.mubr.f32.mxu0 0.0
    %3209 = vmatmul.mubr.f32.gmra.mxu0 %v3019
    %v3210 = vpop.f32.mrf.mxu0
    %v3211 = vadd.f32 %v2975, %v3210
    %v3212 = vpop.f32.mrf.mxu0
    %v3213 = vadd.f32 %v2979, %v3212
    %3214 = vmatprep.mubr.f32.mxu0 0.0
    %3215 = vmatmul.mubr.f32.gmra.mxu0 %v3022
    %v3216 = vpop.f32.mrf.mxu0
    %v3217 = vadd.f32 %v2975, %v3216
    %v3218 = vpop.f32.mrf.mxu0
    %v3219 = vadd.f32 %v2979, %v3218
    %3220 = vmatprep.mubr.f32.mxu0 0.0
    %3221 = vmatmul.mubr.f32.gmra.mxu0 %v3025
    %v3222 = vpop.f32.mrf.mxu0
    %v3223 = vadd.f32 %v2975, %v3222
    %v3224 = vpop.f32.mrf.mxu0
    %v3225 = vadd.f32 %v2979, %v3224
    %3226 = vmatprep.mubr.f32.mxu0 0.0
    %3227 = vmatmul.mubr.f32.gmra.mxu0 %v3028
    %v3228 = vpop.f32.mrf.mxu0
    %v3229 = vadd.f32 %v2975, %v3228
    %v3230 = vpop.f32.mrf.mxu0
    %v3231 = vadd.f32 %v2979, %v3230
    %3232 = vmatprep.mubr.f32.mxu0 0.0
    %3233 = vmatmul.mubr.f32.gmra.mxu0 %v3031
    %v3234 = vpop.f32.mrf.mxu0
    %v3235 = vadd.f32 %v2975, %v3234
    %v3236 = vpop.f32.mrf.mxu0
    %v3237 = vadd.f32 %v2979, %v3236
    %3238 = vmatprep.mubr.f32.mxu0 0.0
    %3239 = vmatmul.mubr.f32.gmra.mxu0 %v3034
    %v3240 = vpop.f32.mrf.mxu0
    %v3241 = vadd.f32 %v2975, %v3240
    %v3242 = vpop.f32.mrf.mxu0
    %v3243 = vadd.f32 %v2979, %v3242
    %3244 = vmatprep.mubr.f32.mxu0 0.0
    %3245 = vmatmul.mubr.f32.gmra.mxu0 %v3037
    %v3246 = vpop.f32.mrf.mxu0
    %v3247 = vadd.f32 %v2975, %v3246
    %v3248 = vpop.f32.mrf.mxu0
    %v3249 = vadd.f32 %v2979, %v3248
    %3250 = vmatprep.mubr.f32.mxu0 0.0
    %3251 = vmatmul.mubr.f32.gmra.mxu0 %v3040
    %v3252 = vpop.f32.mrf.mxu0
    %v3253 = vadd.f32 %v2975, %v3252
    %v3254 = vpop.f32.mrf.mxu0
    %v3255 = vadd.f32 %v2979, %v3254
    %3256 = vmatprep.mubr.f32.mxu0 0.0
    %3257 = vmatmul.mubr.f32.gmra.mxu0 %v3043
    %v3258 = vpop.f32.mrf.mxu0
    %v3259 = vadd.f32 %v2975, %v3258
    %v3260 = vpop.f32.mrf.mxu0
    %v3261 = vadd.f32 %v2979, %v3260
    %3262 = vmatprep.mubr.f32.mxu0 0.0
    %3263 = vmatmul.mubr.f32.gmra.mxu0 %v3046
    %v3264 = vpop.f32.mrf.mxu0
    %v3265 = vadd.f32 %v2975, %v3264
    %v3266 = vpop.f32.mrf.mxu0
    %v3267 = vadd.f32 %v2979, %v3266
    %3268 = vmatprep.mubr.f32.mxu0 0.0
    %3269 = vmatmul.mubr.f32.gmra.mxu0 %v3049
    %v3270 = vpop.f32.mrf.mxu0
    %v3271 = vadd.f32 %v2975, %v3270
    %v3272 = vpop.f32.mrf.mxu0
    %v3273 = vadd.f32 %v2979, %v3272
    %3274 = vmatprep.mubr.f32.mxu0 0.0
    %3275 = vmatmul.mubr.f32.gmra.mxu0 %v3052
    %v3276 = vpop.f32.mrf.mxu0
    %v3277 = vadd.f32 %v2975, %v3276
    %v3278 = vpop.f32.mrf.mxu0
    %v3279 = vadd.f32 %v2979, %v3278
    %3280 = vmatprep.mubr.f32.mxu0 0.0
    %3281 = vmatmul.mubr.f32.gmra.mxu0 %v3055
    %v3282 = vpop.f32.mrf.mxu0
    %v3283 = vadd.f32 %v2975, %v3282
    %v3284 = vpop.f32.mrf.mxu0
    %v3285 = vadd.f32 %v2979, %v3284
    %3286 = vmatprep.mubr.f32.mxu0 0.0
    %3287 = vmatmul.mubr.f32.gmra.mxu0 %v3058
    %v3288 = vpop.f32.mrf.mxu0
    %v3289 = vadd.f32 %v2975, %v3288
    %v3290 = vpop.f32.mrf.mxu0
    %v3291 = vadd.f32 %v2979, %v3290
    %3292 = vmatprep.mubr.f32.mxu0 0.0
    %3293 = vmatmul.mubr.f32.gmra.mxu0 %v3061
    %v3294 = vpop.f32.mrf.mxu0
    %v3295 = vadd.f32 %v2975, %v3294
    %v3296 = vpop.f32.mrf.mxu0
    %v3297 = vadd.f32 %v2979, %v3296
    %3298 = vmatprep.mubr.f32.mxu0 0.0
    %3299 = vmatmul.mubr.f32.gmra.mxu0 %v3064
    %v3300 = vpop.f32.mrf.mxu0
    %v3301 = vadd.f32 %v2975, %v3300
    %v3302 = vpop.f32.mrf.mxu0
    %v3303 = vadd.f32 %v2979, %v3302
    %3304 = vmatprep.mubr.f32.mxu0 0.0
    %3305 = vmatmul.mubr.f32.gmra.mxu0 %v3067
    %v3306 = vpop.f32.mrf.mxu0
    %v3307 = vadd.f32 %v2975, %v3306
    %v3308 = vpop.f32.mrf.mxu0
    %v3309 = vadd.f32 %v2979, %v3308
    %3310 = vmatprep.mubr.f32.mxu0 0.0
    %3311 = vmatmul.mubr.f32.gmra.mxu0 %v3070
    %v3312 = vpop.f32.mrf.mxu0
    %v3313 = vadd.f32 %v2975, %v3312
    %v3314 = vpop.f32.mrf.mxu0
    %v3315 = vadd.f32 %v2979, %v3314
    %3316 = vdwg.mxu0
    %3317 = vst [vmem:[#allocation2] sm:$0xff] %v3139
    %3318 = vst [vmem:[#allocation2 + $0x8] sm:$0xff] %v3141
    %3319 = vst [vmem:[#allocation2 + $0x10] sm:$0xff] %v3145
    %3320 = vst [vmem:[#allocation2 + $0x18] sm:$0xff] %v3147
    %3321 = vst [vmem:[#allocation2 + $0x20] sm:$0xff] %v3151
    %3322 = vst [vmem:[#allocation2 + $0x28] sm:$0xff] %v3153
    %3323 = vst [vmem:[#allocation2 + $0x30] sm:$0xff] %v3157
    %3324 = vst [vmem:[#allocation2 + $0x38] sm:$0xff] %v3159
    %3325 = vst [vmem:[#allocation2 + $0x40] sm:$0xff] %v3163
    %3326 = vst [vmem:[#allocation2 + $0x48] sm:$0xff] %v3165
    %3327 = vst [vmem:[#allocation2 + $0x50] sm:$0xff] %v3169
    %3328 = vst [vmem:[#allocation2 + $0x58] sm:$0xff] %v3171
    %3329 = vst [vmem:[#allocation2 + $0x60] sm:$0xff] %v3175
    %3330 = vst [vmem:[#allocation2 + $0x68] sm:$0xff] %v3177
    %3331 = vst [vmem:[#allocation2 + $0x70] sm:$0xff] %v3181
    %3332 = vst [vmem:[#allocation2 + $0x78] sm:$0xff] %v3183
    %3333 = vst [vmem:[#allocation2 + $0x80] sm:$0xff] %v3187
    %3334 = vst [vmem:[#allocation2 + $0x88] sm:$0xff] %v3189
    %3335 = vst [vmem:[#allocation2 + $0x90] sm:$0xff] %v3193
    %3336 = vst [vmem:[#allocation2 + $0x98] sm:$0xff] %v3195
    %3337 = vst [vmem:[#allocation2 + $0xa0] sm:$0xff] %v3199
    %3338 = vst [vmem:[#allocation2 + $0xa8] sm:$0xff] %v3201
    %3339 = vst [vmem:[#allocation2 + $0xb0] sm:$0xff] %v3205
    %3340 = vst [vmem:[#allocation2 + $0xb8] sm:$0xff] %v3207
    %3341 = vst [vmem:[#allocation2 + $0xc0] sm:$0xff] %v3211
    %3342 = vst [vmem:[#allocation2 + $0xc8] sm:$0xff] %v3213
    %3343 = vst [vmem:[#allocation2 + $0xd0] sm:$0xff] %v3217
    %3344 = vst [vmem:[#allocation2 + $0xd8] sm:$0xff] %v3219
    %3345 = vst [vmem:[#allocation2 + $0xe0] sm:$0xff] %v3223
    %3346 = vst [vmem:[#allocation2 + $0xe8] sm:$0xff] %v3225
    %3347 = vst [vmem:[#allocation2 + $0xf0] sm:$0xff] %v3229
    %3348 = vst [vmem:[#allocation2 + $0xf8] sm:$0xff] %v3231
    %3349 = vst [vmem:[#allocation2 + $0x100] sm:$0xff] %v3235
    %3350 = vst [vmem:[#allocation2 + $0x108] sm:$0xff] %v3237
    %3351 = vst [vmem:[#allocation2 + $0x110] sm:$0xff] %v3241
    %3352 = vst [vmem:[#allocation2 + $0x118] sm:$0xff] %v3243
    %3353 = vst [vmem:[#allocation2 + $0x120] sm:$0xff] %v3247
    %3354 = vst [vmem:[#allocation2 + $0x128] sm:$0xff] %v3249
    %3355 = vst [vmem:[#allocation2 + $0x130] sm:$0xff] %v3253
    %3356 = vst [vmem:[#allocation2 + $0x138] sm:$0xff] %v3255
    %3357 = vst [vmem:[#allocation2 + $0x140] sm:$0xff] %v3259
    %3358 = vst [vmem:[#allocation2 + $0x148] sm:$0xff] %v3261
    %3359 = vst [vmem:[#allocation2 + $0x150] sm:$0xff] %v3265
    %3360 = vst [vmem:[#allocation2 + $0x158] sm:$0xff] %v3267
    %3361 = vst [vmem:[#allocation2 + $0x160] sm:$0xff] %v3271
    %3362 = vst [vmem:[#allocation2 + $0x168] sm:$0xff] %v3273
    %3363 = vst [vmem:[#allocation2 + $0x170] sm:$0xff] %v3277
    %3364 = vst [vmem:[#allocation2 + $0x178] sm:$0xff] %v3279
    %3365 = vst [vmem:[#allocation2 + $0x180] sm:$0xff] %v3283
    %3366 = vst [vmem:[#allocation2 + $0x188] sm:$0xff] %v3285
    %3367 = vst [vmem:[#allocation2 + $0x190] sm:$0xff] %v3289
    %3368 = vst [vmem:[#allocation2 + $0x198] sm:$0xff] %v3291
    %3369 = vst [vmem:[#allocation2 + $0x1a0] sm:$0xff] %v3295
    %3370 = vst [vmem:[#allocation2 + $0x1a8] sm:$0xff] %v3297
    %3371 = vst [vmem:[#allocation2 + $0x1b0] sm:$0xff] %v3301
    %3372 = vst [vmem:[#allocation2 + $0x1b8] sm:$0xff] %v3303
    %3373 = vst [vmem:[#allocation2 + $0x1c0] sm:$0xff] %v3307
    %3374 = vst [vmem:[#allocation2 + $0x1c8] sm:$0xff] %v3309
    %3375 = vst [vmem:[#allocation2 + $0x1d0] sm:$0xff] %v3313
    %3376 = vst [vmem:[#allocation2 + $0x1d8] sm:$0xff] %v3315
    %v3377 = vld [vmem:[#allocation2] sm:$0xff]
    %v3378 = vld [vmem:[#allocation2 + $0x10] sm:$0xff]
    %v3379 = vld [vmem:[#allocation2 + $0x1c8] sm:$0xff]
    %v3380 = vld [vmem:[#allocation2 + $0x1d8] sm:$0xff]
    %v3381 = vadd.f32 %v3377, %v3379
    %v3382 = vadd.f32 %v3378, %v3380
    %s3383 = scalar_lea.vmem [#allocation4], 32
    %v3384 = vld [vmem:[%s3383] sm:$0xff]
    %v3385 = vld [vmem:[%s3383 + $0x8] sm:$0xff]
    %v3386 = vld [vmem:[%s3383 + $0x10] sm:$0xff]
    %v3387 = vld [vmem:[%s3383 + $0x18] sm:$0xff]
    %3388 = vmatprep.subr.mxu0 0.0
    %3389 = vmatpush1.msra.mxu0 0.0
    %3390 = vmatprep.subr.mxu0 0.0
    %3391 = vmatpush1.msra.mxu0 0.0
    %3392 = vmatprep.subr.mxu0 0.0
    %3393 = vmatpush1.msra.mxu0 0.0
    %3394 = vmatprep.subr.mxu0 0.0
    %3395 = vmatpush1.msra.mxu0 0.0
    %3396 = vmatprep.subr.mxu0 0.0
    %3397 = vmatpush1.msra.mxu0 0.0
    %3398 = vmatprep.subr.mxu0 0.0
    %3399 = vmatpush1.msra.mxu0 0.0
    %3400 = vmatprep.subr.mxu0 0.0
    %3401 = vmatpush1.msra.mxu0 0.0
    %3402 = vmatprep.subr.mxu0 0.0
    %3403 = vmatpush1.msra.mxu0 0.0
    %3404 = vmatprep.subr.mxu0 0.0
    %3405 = vmatpush1.msra.mxu0 0.0
    %3406 = vmatprep.subr.mxu0 0.0
    %3407 = vmatpush1.msra.mxu0 0.0
    %3408 = vmatprep.subr.mxu0 0.0
    %3409 = vmatpush1.msra.mxu0 0.0
    %3410 = vmatprep.subr.mxu0 0.0
    %3411 = vmatpush1.msra.mxu0 0.0
    %3412 = vmatprep.subr.mxu0 0.0
    %3413 = vmatpush1.msra.mxu0 %v3387
    %3414 = vmatprep.subr.mxu0 0.0
    %3415 = vmatpush1.msra.mxu0 %v3386
    %3416 = vmatprep.subr.mxu0 0.0
    %3417 = vmatpush1.msra.mxu0 %v3385
    %3418 = vmatprep.subr.mxu0 0.0
    %3419 = vmatpush1.msra.mxu0 %v3384
    %3420 = vmatprep.subr.mxu0 0.0
    %3421 = vmatpush2.msra.mxu0 0.0
    %3422 = vmatprep.subr.mxu0 0.0
    %3423 = vmatpush2.msra.mxu0 0.0
    %3424 = vmatprep.subr.mxu0 0.0
    %3425 = vmatpush2.msra.mxu0 0.0
    %3426 = vmatprep.subr.mxu0 0.0
    %3427 = vmatpush2.msra.mxu0 0.0
    %3428 = vmatprep.subr.mxu0 0.0
    %3429 = vmatpush2.msra.mxu0 0.0
    %3430 = vmatprep.subr.mxu0 0.0
    %3431 = vmatpush2.msra.mxu0 0.0
    %3432 = vmatprep.subr.mxu0 0.0
    %3433 = vmatpush2.msra.mxu0 0.0
    %3434 = vmatprep.subr.mxu0 0.0
    %3435 = vmatpush2.msra.mxu0 0.0
    %3436 = vmatprep.subr.mxu0 0.0
    %3437 = vmatpush2.msra.mxu0 0.0
    %3438 = vmatprep.subr.mxu0 0.0
    %3439 = vmatpush2.msra.mxu0 0.0
    %3440 = vmatprep.subr.mxu0 0.0
    %3441 = vmatpush2.msra.mxu0 0.0
    %3442 = vmatprep.subr.mxu0 0.0
    %3443 = vmatpush2.msra.mxu0 0.0
    %3444 = vmatprep.subr.mxu0 0.0
    %3445 = vmatpush2.msra.mxu0 0.0
    %3446 = vmatprep.subr.mxu0 0.0
    %3447 = vmatpush2.msra.mxu0 0.0
    %3448 = vmatprep.subr.mxu0 0.0
    %3449 = vmatpush2.msra.mxu0 0.0
    %3450 = vmatprep.subr.mxu0 0.0
    %3451 = vmatpush2.msra.mxu0 0.0
    %3452 = vmatprep.mubr.f32.mxu0 0.0
    %3453 = vmatmul.mubr.f32.gmra.mxu0 %v679
    %v3454 = vpop.f32.mrf.mxu0
    %v3455 = vadd.f32 0.0, %v3454
    %v3456 = vpop.f32.mrf.mxu0
    %3457 = vmatprep.mubr.f32.mxu0 0.0
    %3458 = vmatmul.mubr.f32.gmra.mxu0 %v679
    %v3459 = vpop.f32.mrf.mxu0
    %v3460 = vadd.f32 0.0, %v3459
    %v3461 = vpop.f32.mrf.mxu0
    %3462 = vdwg.mxu0
    %v3463 = vadd.f32 %v3381, %v3455
    %v3464 = vadd.f32 %v3382, %v3460
    %v3465 = vxor.u32 %v3463, 2147483648
    %v3466 = vxor.u32 %v3464, 2147483648
    %v3467 = vmul.f32 %v3465, 1.442695
    %v3468 = vpow.pop %v3467
    %v3469 = vmul.f32 %v3466, 1.442695
    %v3470 = vpow.pop %v3469
    %v3471 = vadd.f32 %v3468, 1.0
    %v3472 = vadd.f32 %v3470, 1.0
    %v3473 = vrcp.pop %v3471
    %v3474 = vmul.f32 1.0, %v3473
    %v3475 = vrcp.pop %v3472
    %v3476 = vmul.f32 1.0, %v3475
    %v3477 = vtanh.pop %v3463
    %v3478 = vtanh.pop %v3464
    %v3479 = vmul.f32 %v3474, 0.0
    %v3480 = vmul.f32 %v3476, 0.0
    %3483 = vrot.lane.b32.xlu0 %v3477, 64
    %v3484 = vpop.permute.xlu0 %3483
    %3485 = vrot.lane.b32.xlu0 %v3478, 64
    %v3486 = vpop.permute.xlu0 %3485
    %v3489 = vmul.f32 %v3474, %v3484
    %v3490 = vmul.f32 %v3476, %v3486
    %3493 = vrot.lane.b32.xlu0 %v3489, 32
    %v3494 = vpop.permute.xlu0 %3493
    %3495 = vrot.lane.b32.xlu0 %v3490, 32
    %v3496 = vpop.permute.xlu0 %3495
    %v3499 = vadd.f32 %v3479, %v3494
    %v3500 = vadd.f32 %v3480, %v3496
    %v3501 = vtanh.pop %v3499
    %v3502 = vtanh.pop %v3500
    %3505 = vrot.lane.b32.xlu0 %v3501, 64
    %v3506 = vpop.permute.xlu0 %3505
    %3507 = vrot.lane.b32.xlu0 %v3502, 64
    %v3508 = vpop.permute.xlu0 %3507
    %v3511 = vmul.f32 %v3474, %v3506
    %v3512 = vmul.f32 %v3476, %v3508
    %3515 = vrot.lane.b32.xlu0 %v3511, 32
    %v3516 = vpop.permute.xlu0 %3515
    %3517 = vrot.lane.b32.xlu0 %v3512, 32
    %v3518 = vpop.permute.xlu0 %3517
    %3521 = vst.msk [vmem:[#allocation7] sm:$0xff] %vm814, %v3516
    %3522 = vst.msk [vmem:[#allocation7 + $0x20] sm:$0xff] %vm814, %v3518
    %3523 = vrot.lane.b32.xlu0 %v3511, 96
    %v3524 = vpop.permute.xlu0 %3523
    %3525 = vrot.lane.b32.xlu0 %v3512, 96
    %v3526 = vpop.permute.xlu0 %3525
    %vm3529 = vcmask 786048
    %3530 = vst.msk [vmem:[#allocation7 + $0x18] sm:$0xff] %vm3529, %v3524
    %3531 = vst.msk [vmem:[#allocation7 + $0x38] sm:$0xff] %vm3529, %v3526
    %v3532 = vld [vmem:[#allocation2 + $0x20] sm:$0xff]
    %v3533 = vld [vmem:[#allocation2 + $0x30] sm:$0xff]
    %v3534 = vld [vmem:[#allocation2 + $0x1a8] sm:$0xff]
    %v3535 = vld [vmem:[#allocation2 + $0x1b8] sm:$0xff]
    %v3536 = vadd.f32 %v3532, %v3534
    %v3537 = vadd.f32 %v3533, %v3535
    %v3538 = vld [vmem:[%s3383] sm:$0xff]
    %v3539 = vld [vmem:[%s3383 + $0x8] sm:$0xff]
    %v3540 = vld [vmem:[%s3383 + $0x10] sm:$0xff]
    %v3541 = vld [vmem:[%s3383 + $0x18] sm:$0xff]
    %v3542 = vsel %vm677, %v3516, 0
    %v3544 = vsel %vm677, %v3518, 0
    %3546 = vmatprep.subr.mxu0 0.0
    %3547 = vmatpush1.msra.mxu0 0.0
    %3548 = vmatprep.subr.mxu0 0.0
    %3549 = vmatpush1.msra.mxu0 0.0
    %3550 = vmatprep.subr.mxu0 0.0
    %3551 = vmatpush1.msra.mxu0 0.0
    %3552 = vmatprep.subr.mxu0 0.0
    %3553 = vmatpush1.msra.mxu0 0.0
    %3554 = vmatprep.subr.mxu0 0.0
    %3555 = vmatpush1.msra.mxu0 0.0
    %3556 = vmatprep.subr.mxu0 0.0
    %3557 = vmatpush1.msra.mxu0 0.0
    %3558 = vmatprep.subr.mxu0 0.0
    %3559 = vmatpush1.msra.mxu0 0.0
    %3560 = vmatprep.subr.mxu0 0.0
    %3561 = vmatpush1.msra.mxu0 0.0
    %3562 = vmatprep.subr.mxu0 0.0
    %3563 = vmatpush1.msra.mxu0 0.0
    %3564 = vmatprep.subr.mxu0 0.0
    %3565 = vmatpush1.msra.mxu0 0.0
    %3566 = vmatprep.subr.mxu0 0.0
    %3567 = vmatpush1.msra.mxu0 0.0
    %3568 = vmatprep.subr.mxu0 0.0
    %3569 = vmatpush1.msra.mxu0 0.0
    %3570 = vmatprep.subr.mxu0 0.0
    %3571 = vmatpush1.msra.mxu0 %v3541
    %3572 = vmatprep.subr.mxu0 0.0
    %3573 = vmatpush1.msra.mxu0 %v3540
    %3574 = vmatprep.subr.mxu0 0.0
    %3575 = vmatpush1.msra.mxu0 %v3539
    %3576 = vmatprep.subr.mxu0 0.0
    %3577 = vmatpush1.msra.mxu0 %v3538
    %3578 = vmatprep.subr.mxu0 0.0
    %3579 = vmatpush2.msra.mxu0 0.0
    %3580 = vmatprep.subr.mxu0 0.0
    %3581 = vmatpush2.msra.mxu0 0.0
    %3582 = vmatprep.subr.mxu0 0.0
    %3583 = vmatpush2.msra.mxu0 0.0
    %3584 = vmatprep.subr.mxu0 0.0
    %3585 = vmatpush2.msra.mxu0 0.0
    %3586 = vmatprep.subr.mxu0 0.0
    %3587 = vmatpush2.msra.mxu0 0.0
    %3588 = vmatprep.subr.mxu0 0.0
    %3589 = vmatpush2.msra.mxu0 0.0
    %3590 = vmatprep.subr.mxu0 0.0
    %3591 = vmatpush2.msra.mxu0 0.0
    %3592 = vmatprep.subr.mxu0 0.0
    %3593 = vmatpush2.msra.mxu0 0.0
    %3594 = vmatprep.subr.mxu0 0.0
    %3595 = vmatpush2.msra.mxu0 0.0
    %3596 = vmatprep.subr.mxu0 0.0
    %3597 = vmatpush2.msra.mxu0 0.0
    %3598 = vmatprep.subr.mxu0 0.0
    %3599 = vmatpush2.msra.mxu0 0.0
    %3600 = vmatprep.subr.mxu0 0.0
    %3601 = vmatpush2.msra.mxu0 0.0
    %3602 = vmatprep.subr.mxu0 0.0
    %3603 = vmatpush2.msra.mxu0 0.0
    %3604 = vmatprep.subr.mxu0 0.0
    %3605 = vmatpush2.msra.mxu0 0.0
    %3606 = vmatprep.subr.mxu0 0.0
    %3607 = vmatpush2.msra.mxu0 0.0
    %3608 = vmatprep.subr.mxu0 0.0
    %3609 = vmatpush2.msra.mxu0 0.0
    %3610 = vmatprep.mubr.f32.mxu0 0.0
    %3611 = vmatmul.mubr.f32.gmra.mxu0 %v3542
    %v3612 = vpop.f32.mrf.mxu0
    %v3613 = vadd.f32 0.0, %v3612
    %v3614 = vpop.f32.mrf.mxu0
    %3615 = vmatprep.mubr.f32.mxu0 0.0
    %3616 = vmatmul.mubr.f32.gmra.mxu0 %v3544
    %v3617 = vpop.f32.mrf.mxu0
    %v3618 = vadd.f32 0.0, %v3617
    %v3619 = vpop.f32.mrf.mxu0
    %3620 = vdwg.mxu0
    %v3621 = vadd.f32 %v3536, %v3613
    %v3622 = vadd.f32 %v3537, %v3618
    %v3623 = vxor.u32 %v3621, 2147483648
    %v3624 = vxor.u32 %v3622, 2147483648
    %v3625 = vmul.f32 %v3623, 1.442695
    %v3626 = vpow.pop %v3625
    %v3627 = vmul.f32 %v3624, 1.442695
    %v3628 = vpow.pop %v3627
    %v3629 = vadd.f32 %v3626, 1.0
    %v3630 = vadd.f32 %v3628, 1.0
    %v3631 = vrcp.pop %v3629
    %v3632 = vmul.f32 1.0, %v3631
    %v3633 = vrcp.pop %v3630
    %v3634 = vmul.f32 1.0, %v3633
    %v3635 = vtanh.pop %v3621
    %v3636 = vtanh.pop %v3622
    %v3637 = vmul.f32 %v3632, %v3499
    %v3638 = vmul.f32 %v3634, %v3500
    %3641 = vrot.lane.b32.xlu0 %v3635, 64
    %v3642 = vpop.permute.xlu0 %3641
    %3643 = vrot.lane.b32.xlu0 %v3636, 64
    %v3644 = vpop.permute.xlu0 %3643
    %v3647 = vmul.f32 %v3632, %v3642
    %v3648 = vmul.f32 %v3634, %v3644
    %3651 = vrot.lane.b32.xlu0 %v3647, 32
    %v3652 = vpop.permute.xlu0 %3651
    %3653 = vrot.lane.b32.xlu0 %v3648, 32
    %v3654 = vpop.permute.xlu0 %3653
    %v3657 = vadd.f32 %v3637, %v3652
    %v3658 = vadd.f32 %v3638, %v3654
    %v3659 = vtanh.pop %v3657
    %v3660 = vtanh.pop %v3658
    %3663 = vrot.lane.b32.xlu0 %v3659, 64
    %v3664 = vpop.permute.xlu0 %3663
    %3665 = vrot.lane.b32.xlu0 %v3660, 64
    %v3666 = vpop.permute.xlu0 %3665
    %v3669 = vmul.f32 %v3632, %v3664
    %v3670 = vmul.f32 %v3634, %v3666
    %3673 = vrot.lane.b32.xlu0 %v3669, 64
    %v3674 = vpop.permute.xlu0 %3673
    %3675 = vrot.lane.b32.xlu0 %v3670, 64
    %v3676 = vpop.permute.xlu0 %3675
    %vm3679 = vcmask 392448
    %3680 = vst.msk [vmem:[#allocation7] sm:$0xff] %vm3679, %v3674
    %3681 = vst.msk [vmem:[#allocation7 + $0x20] sm:$0xff] %vm3679, %v3676
    %vm3682 = vcmask 523648
    %3683 = vst.msk [vmem:[#allocation7 + $0x18] sm:$0xff] %vm3682, %v3674
    %3684 = vst.msk [vmem:[#allocation7 + $0x38] sm:$0xff] %vm3682, %v3676
    %v3685 = vld [vmem:[#allocation2 + $0x40] sm:$0xff]
    %v3686 = vld [vmem:[#allocation2 + $0x50] sm:$0xff]
    %v3687 = vld [vmem:[#allocation2 + $0x188] sm:$0xff]
    %v3688 = vld [vmem:[#allocation2 + $0x198] sm:$0xff]
    %v3689 = vadd.f32 %v3685, %v3687
    %v3690 = vadd.f32 %v3686, %v3688
    %v3691 = vld [vmem:[%s3383] sm:$0xff]
    %v3692 = vld [vmem:[%s3383 + $0x8] sm:$0xff]
    %v3693 = vld [vmem:[%s3383 + $0x10] sm:$0xff]
    %v3694 = vld [vmem:[%s3383 + $0x18] sm:$0xff]
    %3695 = vrot.lane.b32.xlu0 %v3669, 32
    %v3696 = vpop.permute.xlu0 %3695
    %3697 = vrot.lane.b32.xlu0 %v3670, 32
    %v3698 = vpop.permute.xlu0 %3697
    %v3699 = vsel %vm677, %v3696, 0
    %v3701 = vsel %vm677, %v3698, 0
    %3703 = vmatprep.subr.mxu0 0.0
    %3704 = vmatpush1.msra.mxu0 0.0
    %3705 = vmatprep.subr.mxu0 0.0
    %3706 = vmatpush1.msra.mxu0 0.0
    %3707 = vmatprep.subr.mxu0 0.0
    %3708 = vmatpush1.msra.mxu0 0.0
    %3709 = vmatprep.subr.mxu0 0.0
    %3710 = vmatpush1.msra.mxu0 0.0
    %3711 = vmatprep.subr.mxu0 0.0
    %3712 = vmatpush1.msra.mxu0 0.0
    %3713 = vmatprep.subr.mxu0 0.0
    %3714 = vmatpush1.msra.mxu0 0.0
    %3715 = vmatprep.subr.mxu0 0.0
    %3716 = vmatpush1.msra.mxu0 0.0
    %3717 = vmatprep.subr.mxu0 0.0
    %3718 = vmatpush1.msra.mxu0 0.0
    %3719 = vmatprep.subr.mxu0 0.0
    %3720 = vmatpush1.msra.mxu0 0.0
    %3721 = vmatprep.subr.mxu0 0.0
    %3722 = vmatpush1.msra.mxu0 0.0
    %3723 = vmatprep.subr.mxu0 0.0
    %3724 = vmatpush1.msra.mxu0 0.0
    %3725 = vmatprep.subr.mxu0 0.0
    %3726 = vmatpush1.msra.mxu0 0.0
    %3727 = vmatprep.subr.mxu0 0.0
    %3728 = vmatpush1.msra.mxu0 %v3694
    %3729 = vmatprep.subr.mxu0 0.0
    %3730 = vmatpush1.msra.mxu0 %v3693
    %3731 = vmatprep.subr.mxu0 0.0
    %3732 = vmatpush1.msra.mxu0 %v3692
    %3733 = vmatprep.subr.mxu0 0.0
    %3734 = vmatpush1.msra.mxu0 %v3691
    %3735 = vmatprep.subr.mxu0 0.0
    %3736 = vmatpush2.msra.mxu0 0.0
    %3737 = vmatprep.subr.mxu0 0.0
    %3738 = vmatpush2.msra.mxu0 0.0
    %3739 = vmatprep.subr.mxu0 0.0
    %3740 = vmatpush2.msra.mxu0 0.0
    %3741 = vmatprep.subr.mxu0 0.0
    %3742 = vmatpush2.msra.mxu0 0.0
    %3743 = vmatprep.subr.mxu0 0.0
    %3744 = vmatpush2.msra.mxu0 0.0
    %3745 = vmatprep.subr.mxu0 0.0
    %3746 = vmatpush2.msra.mxu0 0.0
    %3747 = vmatprep.subr.mxu0 0.0
    %3748 = vmatpush2.msra.mxu0 0.0
    %3749 = vmatprep.subr.mxu0 0.0
    %3750 = vmatpush2.msra.mxu0 0.0
    %3751 = vmatprep.subr.mxu0 0.0
    %3752 = vmatpush2.msra.mxu0 0.0
    %3753 = vmatprep.subr.mxu0 0.0
    %3754 = vmatpush2.msra.mxu0 0.0
    %3755 = vmatprep.subr.mxu0 0.0
    %3756 = vmatpush2.msra.mxu0 0.0
    %3757 = vmatprep.subr.mxu0 0.0
    %3758 = vmatpush2.msra.mxu0 0.0
    %3759 = vmatprep.subr.mxu0 0.0
    %3760 = vmatpush2.msra.mxu0 0.0
    %3761 = vmatprep.subr.mxu0 0.0
    %3762 = vmatpush2.msra.mxu0 0.0
    %3763 = vmatprep.subr.mxu0 0.0
    %3764 = vmatpush2.msra.mxu0 0.0
    %3765 = vmatprep.subr.mxu0 0.0
    %3766 = vmatpush2.msra.mxu0 0.0
    %3767 = vmatprep.mubr.f32.mxu0 0.0
    %3768 = vmatmul.mubr.f32.gmra.mxu0 %v3699
    %v3769 = vpop.f32.mrf.mxu0
    %v3770 = vadd.f32 0.0, %v3769
    %v3771 = vpop.f32.mrf.mxu0
    %3772 = vmatprep.mubr.f32.mxu0 0.0
    %3773 = vmatmul.mubr.f32.gmra.mxu0 %v3701
    %v3774 = vpop.f32.mrf.mxu0
    %v3775 = vadd.f32 0.0, %v3774
    %v3776 = vpop.f32.mrf.mxu0
    %3777 = vdwg.mxu0
    %v3778 = vadd.f32 %v3689, %v3770
    %v3779 = vadd.f32 %v3690, %v3775
    %v3780 = vxor.u32 %v3778, 2147483648
    %v3781 = vxor.u32 %v3779, 2147483648
    %v3782 = vmul.f32 %v3780, 1.442695
    %v3783 = vpow.pop %v3782
    %v3784 = vmul.f32 %v3781, 1.442695
    %v3785 = vpow.pop %v3784
    %v3786 = vadd.f32 %v3783, 1.0
    %v3787 = vadd.f32 %v3785, 1.0
    %v3788 = vrcp.pop %v3786
    %v3789 = vmul.f32 1.0, %v3788
    %v3790 = vrcp.pop %v3787
    %v3791 = vmul.f32 1.0, %v3790
    %v3792 = vtanh.pop %v3778
    %v3793 = vtanh.pop %v3779
    %v3794 = vmul.f32 %v3789, %v3657
    %v3795 = vmul.f32 %v3791, %v3658
    %3798 = vrot.lane.b32.xlu0 %v3792, 64
    %v3799 = vpop.permute.xlu0 %3798
    %3800 = vrot.lane.b32.xlu0 %v3793, 64
    %v3801 = vpop.permute.xlu0 %3800
    %v3804 = vmul.f32 %v3789, %v3799
    %v3805 = vmul.f32 %v3791, %v3801
    %3808 = vrot.lane.b32.xlu0 %v3804, 32
    %v3809 = vpop.permute.xlu0 %3808
    %3810 = vrot.lane.b32.xlu0 %v3805, 32
    %v3811 = vpop.permute.xlu0 %3810
    %v3814 = vadd.f32 %v3794, %v3809
    %v3815 = vadd.f32 %v3795, %v3811
    %v3816 = vtanh.pop %v3814
    %v3817 = vtanh.pop %v3815
    %3820 = vrot.lane.b32.xlu0 %v3816, 64
    %v3821 = vpop.permute.xlu0 %3820
    %3822 = vrot.lane.b32.xlu0 %v3817, 64
    %v3823 = vpop.permute.xlu0 %3822
    %v3826 = vmul.f32 %v3789, %v3821
    %v3827 = vmul.f32 %v3791, %v3823
    %3830 = vrot.lane.b32.xlu0 %v3826, 96
    %v3831 = vpop.permute.xlu0 %3830
    %3832 = vrot.lane.b32.xlu0 %v3827, 96
    %v3833 = vpop.permute.xlu0 %3832
    %vm3836 = vcmask 654848
    %3837 = vst.msk [vmem:[#allocation7] sm:$0xff] %vm3836, %v3831
    %3838 = vst.msk [vmem:[#allocation7 + $0x20] sm:$0xff] %vm3836, %v3833
    %3839 = vrot.lane.b32.xlu0 %v3826, 32
    %v3840 = vpop.permute.xlu0 %3839
    %3841 = vrot.lane.b32.xlu0 %v3827, 32
    %v3842 = vpop.permute.xlu0 %3841
    %3845 = vst.msk [vmem:[#allocation7 + $0x18] sm:$0xff] %vm817, %v3840
    %3846 = vst.msk [vmem:[#allocation7 + $0x38] sm:$0xff] %vm817, %v3842
    %v3847 = vld [vmem:[#allocation2 + $0x60] sm:$0xff]
    %v3848 = vld [vmem:[#allocation2 + $0x70] sm:$0xff]
    %v3849 = vld [vmem:[#allocation2 + $0x168] sm:$0xff]
    %v3850 = vld [vmem:[#allocation2 + $0x178] sm:$0xff]
    %v3851 = vadd.f32 %v3847, %v3849
    %v3852 = vadd.f32 %v3848, %v3850
    %v3853 = vld [vmem:[%s3383] sm:$0xff]
    %v3854 = vld [vmem:[%s3383 + $0x8] sm:$0xff]
    %v3855 = vld [vmem:[%s3383 + $0x10] sm:$0xff]
    %v3856 = vld [vmem:[%s3383 + $0x18] sm:$0xff]
    %v3857 = vsel %vm677, %v3840, 0
    %v3859 = vsel %vm677, %v3842, 0
    %3861 = vmatprep.subr.mxu0 0.0
    %3862 = vmatpush1.msra.mxu0 0.0
    %3863 = vmatprep.subr.mxu0 0.0
    %3864 = vmatpush1.msra.mxu0 0.0
    %3865 = vmatprep.subr.mxu0 0.0
    %3866 = vmatpush1.msra.mxu0 0.0
    %3867 = vmatprep.subr.mxu0 0.0
    %3868 = vmatpush1.msra.mxu0 0.0
    %3869 = vmatprep.subr.mxu0 0.0
    %3870 = vmatpush1.msra.mxu0 0.0
    %3871 = vmatprep.subr.mxu0 0.0
    %3872 = vmatpush1.msra.mxu0 0.0
    %3873 = vmatprep.subr.mxu0 0.0
    %3874 = vmatpush1.msra.mxu0 0.0
    %3875 = vmatprep.subr.mxu0 0.0
    %3876 = vmatpush1.msra.mxu0 0.0
    %3877 = vmatprep.subr.mxu0 0.0
    %3878 = vmatpush1.msra.mxu0 0.0
    %3879 = vmatprep.subr.mxu0 0.0
    %3880 = vmatpush1.msra.mxu0 0.0
    %3881 = vmatprep.subr.mxu0 0.0
    %3882 = vmatpush1.msra.mxu0 0.0
    %3883 = vmatprep.subr.mxu0 0.0
    %3884 = vmatpush1.msra.mxu0 0.0
    %3885 = vmatprep.subr.mxu0 0.0
    %3886 = vmatpush1.msra.mxu0 %v3856
    %3887 = vmatprep.subr.mxu0 0.0
    %3888 = vmatpush1.msra.mxu0 %v3855
    %3889 = vmatprep.subr.mxu0 0.0
    %3890 = vmatpush1.msra.mxu0 %v3854
    %3891 = vmatprep.subr.mxu0 0.0
    %3892 = vmatpush1.msra.mxu0 %v3853
    %3893 = vmatprep.subr.mxu0 0.0
    %3894 = vmatpush2.msra.mxu0 0.0
    %3895 = vmatprep.subr.mxu0 0.0
    %3896 = vmatpush2.msra.mxu0 0.0
    %3897 = vmatprep.subr.mxu0 0.0
    %3898 = vmatpush2.msra.mxu0 0.0
    %3899 = vmatprep.subr.mxu0 0.0
    %3900 = vmatpush2.msra.mxu0 0.0
    %3901 = vmatprep.subr.mxu0 0.0
    %3902 = vmatpush2.msra.mxu0 0.0
    %3903 = vmatprep.subr.mxu0 0.0
    %3904 = vmatpush2.msra.mxu0 0.0
    %3905 = vmatprep.subr.mxu0 0.0
    %3906 = vmatpush2.msra.mxu0 0.0
    %3907 = vmatprep.subr.mxu0 0.0
    %3908 = vmatpush2.msra.mxu0 0.0
    %3909 = vmatprep.subr.mxu0 0.0
    %3910 = vmatpush2.msra.mxu0 0.0
    %3911 = vmatprep.subr.mxu0 0.0
    %3912 = vmatpush2.msra.mxu0 0.0
    %3913 = vmatprep.subr.mxu0 0.0
    %3914 = vmatpush2.msra.mxu0 0.0
    %3915 = vmatprep.subr.mxu0 0.0
    %3916 = vmatpush2.msra.mxu0 0.0
    %3917 = vmatprep.subr.mxu0 0.0
    %3918 = vmatpush2.msra.mxu0 0.0
    %3919 = vmatprep.subr.mxu0 0.0
    %3920 = vmatpush2.msra.mxu0 0.0
    %3921 = vmatprep.subr.mxu0 0.0
    %3922 = vmatpush2.msra.mxu0 0.0
    %3923 = vmatprep.subr.mxu0 0.0
    %3924 = vmatpush2.msra.mxu0 0.0
    %3925 = vmatprep.mubr.f32.mxu0 0.0
    %3926 = vmatmul.mubr.f32.gmra.mxu0 %v3857
    %v3927 = vpop.f32.mrf.mxu0
    %v3928 = vadd.f32 0.0, %v3927
    %v3929 = vpop.f32.mrf.mxu0
    %3930 = vmatprep.mubr.f32.mxu0 0.0
    %3931 = vmatmul.mubr.f32.gmra.mxu0 %v3859
    %v3932 = vpop.f32.mrf.mxu0
    %v3933 = vadd.f32 0.0, %v3932
    %v3934 = vpop.f32.mrf.mxu0
    %3935 = vdwg.mxu0
    %v3936 = vadd.f32 %v3851, %v3928
    %v3937 = vadd.f32 %v3852, %v3933
    %v3938 = vxor.u32 %v3936, 2147483648
    %v3939 = vxor.u32 %v3937, 2147483648
    %v3940 = vmul.f32 %v3938, 1.442695
    %v3941 = vpow.pop %v3940
    %v3942 = vmul.f32 %v3939, 1.442695
    %v3943 = vpow.pop %v3942
    %v3944 = vadd.f32 %v3941, 1.0
    %v3945 = vadd.f32 %v3943, 1.0
    %v3946 = vrcp.pop %v3944
    %v3947 = vmul.f32 1.0, %v3946
    %v3948 = vrcp.pop %v3945
    %v3949 = vmul.f32 1.0, %v3948
    %v3950 = vtanh.pop %v3936
    %v3951 = vtanh.pop %v3937
    %v3952 = vmul.f32 %v3947, %v3814
    %v3953 = vmul.f32 %v3949, %v3815
    %3956 = vrot.lane.b32.xlu0 %v3950, 64
    %v3957 = vpop.permute.xlu0 %3956
    %3958 = vrot.lane.b32.xlu0 %v3951, 64
    %v3959 = vpop.permute.xlu0 %3958
    %v3962 = vmul.f32 %v3947, %v3957
    %v3963 = vmul.f32 %v3949, %v3959
    %3966 = vrot.lane.b32.xlu0 %v3962, 32
    %v3967 = vpop.permute.xlu0 %3966
    %3968 = vrot.lane.b32.xlu0 %v3963, 32
    %v3969 = vpop.permute.xlu0 %3968
    %v3972 = vadd.f32 %v3952, %v3967
    %v3973 = vadd.f32 %v3953, %v3969
    %v3974 = vtanh.pop %v3972
    %v3975 = vtanh.pop %v3973
    %3978 = vrot.lane.b32.xlu0 %v3974, 64
    %v3979 = vpop.permute.xlu0 %3978
    %3980 = vrot.lane.b32.xlu0 %v3975, 64
    %v3981 = vpop.permute.xlu0 %3980
    %v3984 = vmul.f32 %v3947, %v3979
    %v3985 = vmul.f32 %v3949, %v3981
    %vm3986 = vcmask 917248
    %3987 = vst.msk [vmem:[#allocation7] sm:$0xff] %vm3986, %v3984
    %3988 = vst.msk [vmem:[#allocation7 + $0x20] sm:$0xff] %vm3986, %v3985
    %vm3989 = vcmask 1048448
    %3990 = vst.msk [vmem:[#allocation7 + $0x10] sm:$0xff] %vm3989, %v3984
    %3991 = vst.msk [vmem:[#allocation7 + $0x30] sm:$0xff] %vm3989, %v3985
    %v3992 = vld [vmem:[#allocation2 + $0x80] sm:$0xff]
    %v3993 = vld [vmem:[#allocation2 + $0x90] sm:$0xff]
    %v3994 = vld [vmem:[#allocation2 + $0x148] sm:$0xff]
    %v3995 = vld [vmem:[#allocation2 + $0x158] sm:$0xff]
    %v3996 = vadd.f32 %v3992, %v3994
    %v3997 = vadd.f32 %v3993, %v3995
    %v3998 = vld [vmem:[%s3383] sm:$0xff]
    %v3999 = vld [vmem:[%s3383 + $0x8] sm:$0xff]
    %v4000 = vld [vmem:[%s3383 + $0x10] sm:$0xff]
    %v4001 = vld [vmem:[%s3383 + $0x18] sm:$0xff]
    %4004 = vrot.lane.b32.xlu0 %v3984, 32
    %v4005 = vpop.permute.xlu0 %4004
    %4006 = vrot.lane.b32.xlu0 %v3985, 32
    %v4007 = vpop.permute.xlu0 %4006
    %v4008 = vsel %vm677, %v4005, 0
    %v4010 = vsel %vm677, %v4007, 0
    %4012 = vmatprep.subr.mxu0 0.0
    %4013 = vmatpush1.msra.mxu0 0.0
    %4014 = vmatprep.subr.mxu0 0.0
    %4015 = vmatpush1.msra.mxu0 0.0
    %4016 = vmatprep.subr.mxu0 0.0
    %4017 = vmatpush1.msra.mxu0 0.0
    %4018 = vmatprep.subr.mxu0 0.0
    %4019 = vmatpush1.msra.mxu0 0.0
    %4020 = vmatprep.subr.mxu0 0.0
    %4021 = vmatpush1.msra.mxu0 0.0
    %4022 = vmatprep.subr.mxu0 0.0
    %4023 = vmatpush1.msra.mxu0 0.0
    %4024 = vmatprep.subr.mxu0 0.0
    %4025 = vmatpush1.msra.mxu0 0.0
    %4026 = vmatprep.subr.mxu0 0.0
    %4027 = vmatpush1.msra.mxu0 0.0
    %4028 = vmatprep.subr.mxu0 0.0
    %4029 = vmatpush1.msra.mxu0 0.0
    %4030 = vmatprep.subr.mxu0 0.0
    %4031 = vmatpush1.msra.mxu0 0.0
    %4032 = vmatprep.subr.mxu0 0.0
    %4033 = vmatpush1.msra.mxu0 0.0
    %4034 = vmatprep.subr.mxu0 0.0
    %4035 = vmatpush1.msra.mxu0 0.0
    %4036 = vmatprep.subr.mxu0 0.0
    %4037 = vmatpush1.msra.mxu0 %v4001
    %4038 = vmatprep.subr.mxu0 0.0
    %4039 = vmatpush1.msra.mxu0 %v4000
    %4040 = vmatprep.subr.mxu0 0.0
    %4041 = vmatpush1.msra.mxu0 %v3999
    %4042 = vmatprep.subr.mxu0 0.0
    %4043 = vmatpush1.msra.mxu0 %v3998
    %4044 = vmatprep.subr.mxu0 0.0
    %4045 = vmatpush2.msra.mxu0 0.0
    %4046 = vmatprep.subr.mxu0 0.0
    %4047 = vmatpush2.msra.mxu0 0.0
    %4048 = vmatprep.subr.mxu0 0.0
    %4049 = vmatpush2.msra.mxu0 0.0
    %4050 = vmatprep.subr.mxu0 0.0
    %4051 = vmatpush2.msra.mxu0 0.0
    %4052 = vmatprep.subr.mxu0 0.0
    %4053 = vmatpush2.msra.mxu0 0.0
    %4054 = vmatprep.subr.mxu0 0.0
    %4055 = vmatpush2.msra.mxu0 0.0
    %4056 = vmatprep.subr.mxu0 0.0
    %4057 = vmatpush2.msra.mxu0 0.0
    %4058 = vmatprep.subr.mxu0 0.0
    %4059 = vmatpush2.msra.mxu0 0.0
    %4060 = vmatprep.subr.mxu0 0.0
    %4061 = vmatpush2.msra.mxu0 0.0
    %4062 = vmatprep.subr.mxu0 0.0
    %4063 = vmatpush2.msra.mxu0 0.0
    %4064 = vmatprep.subr.mxu0 0.0
    %4065 = vmatpush2.msra.mxu0 0.0
    %4066 = vmatprep.subr.mxu0 0.0
    %4067 = vmatpush2.msra.mxu0 0.0
    %4068 = vmatprep.subr.mxu0 0.0
    %4069 = vmatpush2.msra.mxu0 0.0
    %4070 = vmatprep.subr.mxu0 0.0
    %4071 = vmatpush2.msra.mxu0 0.0
    %4072 = vmatprep.subr.mxu0 0.0
    %4073 = vmatpush2.msra.mxu0 0.0
    %4074 = vmatprep.subr.mxu0 0.0
    %4075 = vmatpush2.msra.mxu0 0.0
    %4076 = vmatprep.mubr.f32.mxu0 0.0
    %4077 = vmatmul.mubr.f32.gmra.mxu0 %v4008
    %v4078 = vpop.f32.mrf.mxu0
    %v4079 = vadd.f32 0.0, %v4078
    %v4080 = vpop.f32.mrf.mxu0
    %4081 = vmatprep.mubr.f32.mxu0 0.0
    %4082 = vmatmul.mubr.f32.gmra.mxu0 %v4010
    %v4083 = vpop.f32.mrf.mxu0
    %v4084 = vadd.f32 0.0, %v4083
    %v4085 = vpop.f32.mrf.mxu0
    %4086 = vdwg.mxu0
    %v4087 = vadd.f32 %v3996, %v4079
    %v4088 = vadd.f32 %v3997, %v4084
    %v4089 = vxor.u32 %v4087, 2147483648
    %v4090 = vxor.u32 %v4088, 2147483648
    %v4091 = vmul.f32 %v4089, 1.442695
    %v4092 = vpow.pop %v4091
    %v4093 = vmul.f32 %v4090, 1.442695
    %v4094 = vpow.pop %v4093
    %v4095 = vadd.f32 %v4092, 1.0
    %v4096 = vadd.f32 %v4094, 1.0
    %v4097 = vrcp.pop %v4095
    %v4098 = vmul.f32 1.0, %v4097
    %v4099 = vrcp.pop %v4096
    %v4100 = vmul.f32 1.0, %v4099
    %v4101 = vtanh.pop %v4087
    %v4102 = vtanh.pop %v4088
    %v4103 = vmul.f32 %v4098, %v3972
    %v4104 = vmul.f32 %v4100, %v3973
    %4107 = vrot.lane.b32.xlu0 %v4101, 64
    %v4108 = vpop.permute.xlu0 %4107
    %4109 = vrot.lane.b32.xlu0 %v4102, 64
    %v4110 = vpop.permute.xlu0 %4109
    %v4113 = vmul.f32 %v4098, %v4108
    %v4114 = vmul.f32 %v4100, %v4110
    %4117 = vrot.lane.b32.xlu0 %v4113, 32
    %v4118 = vpop.permute.xlu0 %4117
    %4119 = vrot.lane.b32.xlu0 %v4114, 32
    %v4120 = vpop.permute.xlu0 %4119
    %v4123 = vadd.f32 %v4103, %v4118
    %v4124 = vadd.f32 %v4104, %v4120
    %v4125 = vtanh.pop %v4123
    %v4126 = vtanh.pop %v4124
    %4129 = vrot.lane.b32.xlu0 %v4125, 64
    %v4130 = vpop.permute.xlu0 %4129
    %4131 = vrot.lane.b32.xlu0 %v4126, 64
    %v4132 = vpop.permute.xlu0 %4131
    %v4135 = vmul.f32 %v4098, %v4130
    %v4136 = vmul.f32 %v4100, %v4132
    %4139 = vrot.lane.b32.xlu0 %v4135, 32
    %v4140 = vpop.permute.xlu0 %4139
    %4141 = vrot.lane.b32.xlu0 %v4136, 32
    %v4142 = vpop.permute.xlu0 %4141
    %4145 = vst.msk [vmem:[#allocation7 + $0x8] sm:$0xff] %vm814, %v4140
    %4146 = vst.msk [vmem:[#allocation7 + $0x28] sm:$0xff] %vm814, %v4142
    %4147 = vrot.lane.b32.xlu0 %v4135, 96
    %v4148 = vpop.permute.xlu0 %4147
    %4149 = vrot.lane.b32.xlu0 %v4136, 96
    %v4150 = vpop.permute.xlu0 %4149
    %4153 = vst.msk [vmem:[#allocation7 + $0x10] sm:$0xff] %vm3529, %v4148
    %4154 = vst.msk [vmem:[#allocation7 + $0x30] sm:$0xff] %vm3529, %v4150
    %v4155 = vld [vmem:[#allocation2 + $0xa0] sm:$0xff]
    %v4156 = vld [vmem:[#allocation2 + $0xb0] sm:$0xff]
    %v4157 = vld [vmem:[#allocation2 + $0x128] sm:$0xff]
    %v4158 = vld [vmem:[#allocation2 + $0x138] sm:$0xff]
    %v4159 = vadd.f32 %v4155, %v4157
    %v4160 = vadd.f32 %v4156, %v4158
    %v4161 = vld [vmem:[%s3383] sm:$0xff]
    %v4162 = vld [vmem:[%s3383 + $0x8] sm:$0xff]
    %v4163 = vld [vmem:[%s3383 + $0x10] sm:$0xff]
    %v4164 = vld [vmem:[%s3383 + $0x18] sm:$0xff]
    %v4165 = vsel %vm677, %v4140, 0
    %v4167 = vsel %vm677, %v4142, 0
    %4169 = vmatprep.subr.mxu0 0.0
    %4170 = vmatpush1.msra.mxu0 0.0
    %4171 = vmatprep.subr.mxu0 0.0
    %4172 = vmatpush1.msra.mxu0 0.0
    %4173 = vmatprep.subr.mxu0 0.0
    %4174 = vmatpush1.msra.mxu0 0.0
    %4175 = vmatprep.subr.mxu0 0.0
    %4176 = vmatpush1.msra.mxu0 0.0
    %4177 = vmatprep.subr.mxu0 0.0
    %4178 = vmatpush1.msra.mxu0 0.0
    %4179 = vmatprep.subr.mxu0 0.0
    %4180 = vmatpush1.msra.mxu0 0.0
    %4181 = vmatprep.subr.mxu0 0.0
    %4182 = vmatpush1.msra.mxu0 0.0
    %4183 = vmatprep.subr.mxu0 0.0
    %4184 = vmatpush1.msra.mxu0 0.0
    %4185 = vmatprep.subr.mxu0 0.0
    %4186 = vmatpush1.msra.mxu0 0.0
    %4187 = vmatprep.subr.mxu0 0.0
    %4188 = vmatpush1.msra.mxu0 0.0
    %4189 = vmatprep.subr.mxu0 0.0
    %4190 = vmatpush1.msra.mxu0 0.0
    %4191 = vmatprep.subr.mxu0 0.0
    %4192 = vmatpush1.msra.mxu0 0.0
    %4193 = vmatprep.subr.mxu0 0.0
    %4194 = vmatpush1.msra.mxu0 %v4164
    %4195 = vmatprep.subr.mxu0 0.0
    %4196 = vmatpush1.msra.mxu0 %v4163
    %4197 = vmatprep.subr.mxu0 0.0
    %4198 = vmatpush1.msra.mxu0 %v4162
    %4199 = vmatprep.subr.mxu0 0.0
    %4200 = vmatpush1.msra.mxu0 %v4161
    %4201 = vmatprep.subr.mxu0 0.0
    %4202 = vmatpush2.msra.mxu0 0.0
    %4203 = vmatprep.subr.mxu0 0.0
    %4204 = vmatpush2.msra.mxu0 0.0
    %4205 = vmatprep.subr.mxu0 0.0
    %4206 = vmatpush2.msra.mxu0 0.0
    %4207 = vmatprep.subr.mxu0 0.0
    %4208 = vmatpush2.msra.mxu0 0.0
    %4209 = vmatprep.subr.mxu0 0.0
    %4210 = vmatpush2.msra.mxu0 0.0
    %4211 = vmatprep.subr.mxu0 0.0
    %4212 = vmatpush2.msra.mxu0 0.0
    %4213 = vmatprep.subr.mxu0 0.0
    %4214 = vmatpush2.msra.mxu0 0.0
    %4215 = vmatprep.subr.mxu0 0.0
    %4216 = vmatpush2.msra.mxu0 0.0
    %4217 = vmatprep.subr.mxu0 0.0
    %4218 = vmatpush2.msra.mxu0 0.0
    %4219 = vmatprep.subr.mxu0 0.0
    %4220 = vmatpush2.msra.mxu0 0.0
    %4221 = vmatprep.subr.mxu0 0.0
    %4222 = vmatpush2.msra.mxu0 0.0
    %4223 = vmatprep.subr.mxu0 0.0
    %4224 = vmatpush2.msra.mxu0 0.0
    %4225 = vmatprep.subr.mxu0 0.0
    %4226 = vmatpush2.msra.mxu0 0.0
    %4227 = vmatprep.subr.mxu0 0.0
    %4228 = vmatpush2.msra.mxu0 0.0
    %4229 = vmatprep.subr.mxu0 0.0
    %4230 = vmatpush2.msra.mxu0 0.0
    %4231 = vmatprep.subr.mxu0 0.0
    %4232 = vmatpush2.msra.mxu0 0.0
    %4233 = vmatprep.mubr.f32.mxu0 0.0
    %4234 = vmatmul.mubr.f32.gmra.mxu0 %v4165
    %v4235 = vpop.f32.mrf.mxu0
    %v4236 = vadd.f32 0.0, %v4235
    %v4237 = vpop.f32.mrf.mxu0
    %4238 = vmatprep.mubr.f32.mxu0 0.0
    %4239 = vmatmul.mubr.f32.gmra.mxu0 %v4167
    %v4240 = vpop.f32.mrf.mxu0
    %v4241 = vadd.f32 0.0, %v4240
    %v4242 = vpop.f32.mrf.mxu0
    %4243 = vdwg.mxu0
    %v4244 = vadd.f32 %v4159, %v4236
    %v4245 = vadd.f32 %v4160, %v4241
    %v4246 = vxor.u32 %v4244, 2147483648
    %v4247 = vxor.u32 %v4245, 2147483648
    %v4248 = vmul.f32 %v4246, 1.442695
    %v4249 = vpow.pop %v4248
    %v4250 = vmul.f32 %v4247, 1.442695
    %v4251 = vpow.pop %v4250
    %v4252 = vadd.f32 %v4249, 1.0
    %v4253 = vadd.f32 %v4251, 1.0
    %v4254 = vrcp.pop %v4252
    %v4255 = vmul.f32 1.0, %v4254
    %v4256 = vrcp.pop %v4253
    %v4257 = vmul.f32 1.0, %v4256
    %v4258 = vtanh.pop %v4244
    %v4259 = vtanh.pop %v4245
    %v4260 = vmul.f32 %v4255, %v4123
    %v4261 = vmul.f32 %v4257, %v4124
    %4264 = vrot.lane.b32.xlu0 %v4258, 64
    %v4265 = vpop.permute.xlu0 %4264
    %4266 = vrot.lane.b32.xlu0 %v4259, 64
    %v4267 = vpop.permute.xlu0 %4266
    %v4270 = vmul.f32 %v4255, %v4265
    %v4271 = vmul.f32 %v4257, %v4267
    %4274 = vrot.lane.b32.xlu0 %v4270, 32
    %v4275 = vpop.permute.xlu0 %4274
    %4276 = vrot.lane.b32.xlu0 %v4271, 32
    %v4277 = vpop.permute.xlu0 %4276
    %v4280 = vadd.f32 %v4260, %v4275
    %v4281 = vadd.f32 %v4261, %v4277
    %v4282 = vtanh.pop %v4280
    %v4283 = vtanh.pop %v4281
    %4286 = vrot.lane.b32.xlu0 %v4282, 64
    %v4287 = vpop.permute.xlu0 %4286
    %4288 = vrot.lane.b32.xlu0 %v4283, 64
    %v4289 = vpop.permute.xlu0 %4288
    %v4292 = vmul.f32 %v4255, %v4287
    %v4293 = vmul.f32 %v4257, %v4289
    %4296 = vrot.lane.b32.xlu0 %v4292, 64
    %v4297 = vpop.permute.xlu0 %4296
    %4298 = vrot.lane.b32.xlu0 %v4293, 64
    %v4299 = vpop.permute.xlu0 %4298
    %4302 = vst.msk [vmem:[#allocation7 + $0x8] sm:$0xff] %vm3679, %v4297
    %4303 = vst.msk [vmem:[#allocation7 + $0x28] sm:$0xff] %vm3679, %v4299
    %4304 = vst.msk [vmem:[#allocation7 + $0x10] sm:$0xff] %vm3682, %v4297
    %4305 = vst.msk [vmem:[#allocation7 + $0x30] sm:$0xff] %vm3682, %v4299
    %v4306 = vld [vmem:[#allocation2 + $0xc0] sm:$0xff]
    %v4307 = vld [vmem:[#allocation2 + $0xd0] sm:$0xff]
    %v4308 = vld [vmem:[#allocation2 + $0x108] sm:$0xff]
    %v4309 = vld [vmem:[#allocation2 + $0x118] sm:$0xff]
    %v4310 = vadd.f32 %v4306, %v4308
    %v4311 = vadd.f32 %v4307, %v4309
    %v4312 = vld [vmem:[%s3383] sm:$0xff]
    %v4313 = vld [vmem:[%s3383 + $0x8] sm:$0xff]
    %v4314 = vld [vmem:[%s3383 + $0x10] sm:$0xff]
    %v4315 = vld [vmem:[%s3383 + $0x18] sm:$0xff]
    %4316 = vrot.lane.b32.xlu0 %v4292, 32
    %v4317 = vpop.permute.xlu0 %4316
    %4318 = vrot.lane.b32.xlu0 %v4293, 32
    %v4319 = vpop.permute.xlu0 %4318
    %v4320 = vsel %vm677, %v4317, 0
    %v4322 = vsel %vm677, %v4319, 0
    %4324 = vmatprep.subr.mxu0 0.0
    %4325 = vmatpush1.msra.mxu0 0.0
    %4326 = vmatprep.subr.mxu0 0.0
    %4327 = vmatpush1.msra.mxu0 0.0
    %4328 = vmatprep.subr.mxu0 0.0
    %4329 = vmatpush1.msra.mxu0 0.0
    %4330 = vmatprep.subr.mxu0 0.0
    %4331 = vmatpush1.msra.mxu0 0.0
    %4332 = vmatprep.subr.mxu0 0.0
    %4333 = vmatpush1.msra.mxu0 0.0
    %4334 = vmatprep.subr.mxu0 0.0
    %4335 = vmatpush1.msra.mxu0 0.0
    %4336 = vmatprep.subr.mxu0 0.0
    %4337 = vmatpush1.msra.mxu0 0.0
    %4338 = vmatprep.subr.mxu0 0.0
    %4339 = vmatpush1.msra.mxu0 0.0
    %4340 = vmatprep.subr.mxu0 0.0
    %4341 = vmatpush1.msra.mxu0 0.0
    %4342 = vmatprep.subr.mxu0 0.0
    %4343 = vmatpush1.msra.mxu0 0.0
    %4344 = vmatprep.subr.mxu0 0.0
    %4345 = vmatpush1.msra.mxu0 0.0
    %4346 = vmatprep.subr.mxu0 0.0
    %4347 = vmatpush1.msra.mxu0 0.0
    %4348 = vmatprep.subr.mxu0 0.0
    %4349 = vmatpush1.msra.mxu0 %v4315
    %4350 = vmatprep.subr.mxu0 0.0
    %4351 = vmatpush1.msra.mxu0 %v4314
    %4352 = vmatprep.subr.mxu0 0.0
    %4353 = vmatpush1.msra.mxu0 %v4313
    %4354 = vmatprep.subr.mxu0 0.0
    %4355 = vmatpush1.msra.mxu0 %v4312
    %4356 = vmatprep.subr.mxu0 0.0
    %4357 = vmatpush2.msra.mxu0 0.0
    %4358 = vmatprep.subr.mxu0 0.0
    %4359 = vmatpush2.msra.mxu0 0.0
    %4360 = vmatprep.subr.mxu0 0.0
    %4361 = vmatpush2.msra.mxu0 0.0
    %4362 = vmatprep.subr.mxu0 0.0
    %4363 = vmatpush2.msra.mxu0 0.0
    %4364 = vmatprep.subr.mxu0 0.0
    %4365 = vmatpush2.msra.mxu0 0.0
    %4366 = vmatprep.subr.mxu0 0.0
    %4367 = vmatpush2.msra.mxu0 0.0
    %4368 = vmatprep.subr.mxu0 0.0
    %4369 = vmatpush2.msra.mxu0 0.0
    %4370 = vmatprep.subr.mxu0 0.0
    %4371 = vmatpush2.msra.mxu0 0.0
    %4372 = vmatprep.subr.mxu0 0.0
    %4373 = vmatpush2.msra.mxu0 0.0
    %4374 = vmatprep.subr.mxu0 0.0
    %4375 = vmatpush2.msra.mxu0 0.0
    %4376 = vmatprep.subr.mxu0 0.0
    %4377 = vmatpush2.msra.mxu0 0.0
    %4378 = vmatprep.subr.mxu0 0.0
    %4379 = vmatpush2.msra.mxu0 0.0
    %4380 = vmatprep.subr.mxu0 0.0
    %4381 = vmatpush2.msra.mxu0 0.0
    %4382 = vmatprep.subr.mxu0 0.0
    %4383 = vmatpush2.msra.mxu0 0.0
    %4384 = vmatprep.subr.mxu0 0.0
    %4385 = vmatpush2.msra.mxu0 0.0
    %4386 = vmatprep.subr.mxu0 0.0
    %4387 = vmatpush2.msra.mxu0 0.0
    %4388 = vmatprep.mubr.f32.mxu0 0.0
    %4389 = vmatmul.mubr.f32.gmra.mxu0 %v4320
    %v4390 = vpop.f32.mrf.mxu0
    %v4391 = vadd.f32 0.0, %v4390
    %v4392 = vpop.f32.mrf.mxu0
    %4393 = vmatprep.mubr.f32.mxu0 0.0
    %4394 = vmatmul.mubr.f32.gmra.mxu0 %v4322
    %v4395 = vpop.f32.mrf.mxu0
    %v4396 = vadd.f32 0.0, %v4395
    %v4397 = vpop.f32.mrf.mxu0
    %4398 = vdwg.mxu0
    %v4399 = vadd.f32 %v4310, %v4391
    %v4400 = vadd.f32 %v4311, %v4396
    %v4401 = vxor.u32 %v4399, 2147483648
    %v4402 = vxor.u32 %v4400, 2147483648
    %v4403 = vmul.f32 %v4401, 1.442695
    %v4404 = vpow.pop %v4403
    %v4405 = vmul.f32 %v4402, 1.442695
    %v4406 = vpow.pop %v4405
    %v4407 = vadd.f32 %v4404, 1.0
    %v4408 = vadd.f32 %v4406, 1.0
    %v4409 = vrcp.pop %v4407
    %v4410 = vmul.f32 1.0, %v4409
    %v4411 = vrcp.pop %v4408
    %v4412 = vmul.f32 1.0, %v4411
    %v4413 = vtanh.pop %v4399
    %v4414 = vtanh.pop %v4400
    %v4415 = vmul.f32 %v4410, %v4280
    %v4416 = vmul.f32 %v4412, %v4281
    %4419 = vrot.lane.b32.xlu0 %v4413, 64
    %v4420 = vpop.permute.xlu0 %4419
    %4421 = vrot.lane.b32.xlu0 %v4414, 64
    %v4422 = vpop.permute.xlu0 %4421
    %v4425 = vmul.f32 %v4410, %v4420
    %v4426 = vmul.f32 %v4412, %v4422
    %4429 = vrot.lane.b32.xlu0 %v4425, 32
    %v4430 = vpop.permute.xlu0 %4429
    %4431 = vrot.lane.b32.xlu0 %v4426, 32
    %v4432 = vpop.permute.xlu0 %4431
    %v4435 = vadd.f32 %v4415, %v4430
    %v4436 = vadd.f32 %v4416, %v4432
    %v4437 = vtanh.pop %v4435
    %v4438 = vtanh.pop %v4436
    %4441 = vrot.lane.b32.xlu0 %v4437, 64
    %v4442 = vpop.permute.xlu0 %4441
    %4443 = vrot.lane.b32.xlu0 %v4438, 64
    %v4444 = vpop.permute.xlu0 %4443
    %v4447 = vmul.f32 %v4410, %v4442
    %v4448 = vmul.f32 %v4412, %v4444
    %4451 = vrot.lane.b32.xlu0 %v4447, 96
    %v4452 = vpop.permute.xlu0 %4451
    %4453 = vrot.lane.b32.xlu0 %v4448, 96
    %v4454 = vpop.permute.xlu0 %4453
    %4457 = vst.msk [vmem:[#allocation7 + $0x8] sm:$0xff] %vm3836, %v4452
    %4458 = vst.msk [vmem:[#allocation7 + $0x28] sm:$0xff] %vm3836, %v4454
    %4459 = vrot.lane.b32.xlu0 %v4447, 32
    %v4460 = vpop.permute.xlu0 %4459
    %4461 = vrot.lane.b32.xlu0 %v4448, 32
    %v4462 = vpop.permute.xlu0 %4461
    %4465 = vst.msk [vmem:[#allocation7 + $0x10] sm:$0xff] %vm817, %v4460
    %4466 = vst.msk [vmem:[#allocation7 + $0x30] sm:$0xff] %vm817, %v4462
    %v4467 = vld [vmem:[#allocation2 + $0xe0] sm:$0xff]
    %v4468 = vld [vmem:[#allocation2 + $0xf0] sm:$0xff]
    %v4469 = vld [vmem:[#allocation2 + $0xe8] sm:$0xff]
    %v4470 = vld [vmem:[#allocation2 + $0xf8] sm:$0xff]
    %v4471 = vadd.f32 %v4467, %v4469
    %v4472 = vadd.f32 %v4468, %v4470
    %v4473 = vld [vmem:[%s3383] sm:$0xff]
    %v4474 = vld [vmem:[%s3383 + $0x8] sm:$0xff]
    %v4475 = vld [vmem:[%s3383 + $0x10] sm:$0xff]
    %v4476 = vld [vmem:[%s3383 + $0x18] sm:$0xff]
    %v4477 = vsel %vm677, %v4460, 0
    %v4479 = vsel %vm677, %v4462, 0
    %4481 = vmatprep.subr.mxu0 0.0
    %4482 = vmatpush1.msra.mxu0 0.0
    %4483 = vmatprep.subr.mxu0 0.0
    %4484 = vmatpush1.msra.mxu0 0.0
    %4485 = vmatprep.subr.mxu0 0.0
    %4486 = vmatpush1.msra.mxu0 0.0
    %4487 = vmatprep.subr.mxu0 0.0
    %4488 = vmatpush1.msra.mxu0 0.0
    %4489 = vmatprep.subr.mxu0 0.0
    %4490 = vmatpush1.msra.mxu0 0.0
    %4491 = vmatprep.subr.mxu0 0.0
    %4492 = vmatpush1.msra.mxu0 0.0
    %4493 = vmatprep.subr.mxu0 0.0
    %4494 = vmatpush1.msra.mxu0 0.0
    %4495 = vmatprep.subr.mxu0 0.0
    %4496 = vmatpush1.msra.mxu0 0.0
    %4497 = vmatprep.subr.mxu0 0.0
    %4498 = vmatpush1.msra.mxu0 0.0
    %4499 = vmatprep.subr.mxu0 0.0
    %4500 = vmatpush1.msra.mxu0 0.0
    %4501 = vmatprep.subr.mxu0 0.0
    %4502 = vmatpush1.msra.mxu0 0.0
    %4503 = vmatprep.subr.mxu0 0.0
    %4504 = vmatpush1.msra.mxu0 0.0
    %4505 = vmatprep.subr.mxu0 0.0
    %4506 = vmatpush1.msra.mxu0 %v4476
    %4507 = vmatprep.subr.mxu0 0.0
    %4508 = vmatpush1.msra.mxu0 %v4475
    %4509 = vmatprep.subr.mxu0 0.0
    %4510 = vmatpush1.msra.mxu0 %v4474
    %4511 = vmatprep.subr.mxu0 0.0
    %4512 = vmatpush1.msra.mxu0 %v4473
    %4513 = vmatprep.subr.mxu0 0.0
    %4514 = vmatpush2.msra.mxu0 0.0
    %4515 = vmatprep.subr.mxu0 0.0
    %4516 = vmatpush2.msra.mxu0 0.0
    %4517 = vmatprep.subr.mxu0 0.0
    %4518 = vmatpush2.msra.mxu0 0.0
    %4519 = vmatprep.subr.mxu0 0.0
    %4520 = vmatpush2.msra.mxu0 0.0
    %4521 = vmatprep.subr.mxu0 0.0
    %4522 = vmatpush2.msra.mxu0 0.0
    %4523 = vmatprep.subr.mxu0 0.0
    %4524 = vmatpush2.msra.mxu0 0.0
    %4525 = vmatprep.subr.mxu0 0.0
    %4526 = vmatpush2.msra.mxu0 0.0
    %4527 = vmatprep.subr.mxu0 0.0
    %4528 = vmatpush2.msra.mxu0 0.0
    %4529 = vmatprep.subr.mxu0 0.0
    %4530 = vmatpush2.msra.mxu0 0.0
    %4531 = vmatprep.subr.mxu0 0.0
    %4532 = vmatpush2.msra.mxu0 0.0
    %4533 = vmatprep.subr.mxu0 0.0
    %4534 = vmatpush2.msra.mxu0 0.0
    %4535 = vmatprep.subr.mxu0 0.0
    %4536 = vmatpush2.msra.mxu0 0.0
    %4537 = vmatprep.subr.mxu0 0.0
    %4538 = vmatpush2.msra.mxu0 0.0
    %4539 = vmatprep.subr.mxu0 0.0
    %4540 = vmatpush2.msra.mxu0 0.0
    %4541 = vmatprep.subr.mxu0 0.0
    %4542 = vmatpush2.msra.mxu0 0.0
    %4543 = vmatprep.subr.mxu0 0.0
    %4544 = vmatpush2.msra.mxu0 0.0
    %4545 = vmatprep.mubr.f32.mxu0 0.0
    %4546 = vmatmul.mubr.f32.gmra.mxu0 %v4477
    %v4547 = vpop.f32.mrf.mxu0
    %v4548 = vadd.f32 0.0, %v4547
    %v4549 = vpop.f32.mrf.mxu0
    %4550 = vmatprep.mubr.f32.mxu0 0.0
    %4551 = vmatmul.mubr.f32.gmra.mxu0 %v4479
    %v4552 = vpop.f32.mrf.mxu0
    %v4553 = vadd.f32 0.0, %v4552
    %v4554 = vpop.f32.mrf.mxu0
    %4555 = vdwg.mxu0
    %v4556 = vadd.f32 %v4471, %v4548
    %v4557 = vadd.f32 %v4472, %v4553
    %v4558 = vxor.u32 %v4556, 2147483648
    %v4559 = vxor.u32 %v4557, 2147483648
    %v4560 = vmul.f32 %v4558, 1.442695
    %v4561 = vpow.pop %v4560
    %v4562 = vmul.f32 %v4559, 1.442695
    %v4563 = vpow.pop %v4562
    %v4564 = vadd.f32 %v4561, 1.0
    %v4565 = vadd.f32 %v4563, 1.0
    %v4566 = vrcp.pop %v4564
    %v4567 = vmul.f32 1.0, %v4566
    %v4568 = vrcp.pop %v4565
    %v4569 = vmul.f32 1.0, %v4568
    %v4570 = vtanh.pop %v4556
    %v4571 = vtanh.pop %v4557
    %v4572 = vmul.f32 %v4567, %v4435
    %v4573 = vmul.f32 %v4569, %v4436
    %4576 = vrot.lane.b32.xlu0 %v4570, 64
    %v4577 = vpop.permute.xlu0 %4576
    %4578 = vrot.lane.b32.xlu0 %v4571, 64
    %v4579 = vpop.permute.xlu0 %4578
    %v4582 = vmul.f32 %v4567, %v4577
    %v4583 = vmul.f32 %v4569, %v4579
    %4586 = vrot.lane.b32.xlu0 %v4582, 32
    %v4587 = vpop.permute.xlu0 %4586
    %4588 = vrot.lane.b32.xlu0 %v4583, 32
    %v4589 = vpop.permute.xlu0 %4588
    %v4592 = vadd.f32 %v4572, %v4587
    %v4593 = vadd.f32 %v4573, %v4589
    %v4594 = vtanh.pop %v4592
    %v4595 = vtanh.pop %v4593
    %4598 = vrot.lane.b32.xlu0 %v4594, 64
    %v4599 = vpop.permute.xlu0 %4598
    %4600 = vrot.lane.b32.xlu0 %v4595, 64
    %v4601 = vpop.permute.xlu0 %4600
    %v4604 = vmul.f32 %v4567, %v4599
    %v4605 = vmul.f32 %v4569, %v4601
    %vm4606 = vcmask 1048320
    %4607 = vst.msk [vmem:[#allocation7 + $0x8] sm:$0xff] %vm4606, %v4604
    %4608 = vst.msk [vmem:[#allocation7 + $0x28] sm:$0xff] %vm4606, %v4605
    %v4609 = vld [vmem:[#allocation2 + $0x100] sm:$0xff]
    %v4610 = vld [vmem:[#allocation2 + $0x110] sm:$0xff]
    %v4611 = vld [vmem:[#allocation2 + $0xc8] sm:$0xff]
    %v4612 = vld [vmem:[#allocation2 + $0xd8] sm:$0xff]
    %v4613 = vadd.f32 %v4609, %v4611
    %v4614 = vadd.f32 %v4610, %v4612
    %v4615 = vld [vmem:[%s3383] sm:$0xff]
    %v4616 = vld [vmem:[%s3383 + $0x8] sm:$0xff]
    %v4617 = vld [vmem:[%s3383 + $0x10] sm:$0xff]
    %v4618 = vld [vmem:[%s3383 + $0x18] sm:$0xff]
    %4621 = vrot.lane.b32.xlu0 %v4604, 32
    %v4622 = vpop.permute.xlu0 %4621
    %4623 = vrot.lane.b32.xlu0 %v4605, 32
    %v4624 = vpop.permute.xlu0 %4623
    %v4625 = vsel %vm677, %v4622, 0
    %v4627 = vsel %vm677, %v4624, 0
    %4629 = vmatprep.subr.mxu0 0.0
    %4630 = vmatpush1.msra.mxu0 0.0
    %4631 = vmatprep.subr.mxu0 0.0
    %4632 = vmatpush1.msra.mxu0 0.0
    %4633 = vmatprep.subr.mxu0 0.0
    %4634 = vmatpush1.msra.mxu0 0.0
    %4635 = vmatprep.subr.mxu0 0.0
    %4636 = vmatpush1.msra.mxu0 0.0
    %4637 = vmatprep.subr.mxu0 0.0
    %4638 = vmatpush1.msra.mxu0 0.0
    %4639 = vmatprep.subr.mxu0 0.0
    %4640 = vmatpush1.msra.mxu0 0.0
    %4641 = vmatprep.subr.mxu0 0.0
    %4642 = vmatpush1.msra.mxu0 0.0
    %4643 = vmatprep.subr.mxu0 0.0
    %4644 = vmatpush1.msra.mxu0 0.0
    %4645 = vmatprep.subr.mxu0 0.0
    %4646 = vmatpush1.msra.mxu0 0.0
    %4647 = vmatprep.subr.mxu0 0.0
    %4648 = vmatpush1.msra.mxu0 0.0
    %4649 = vmatprep.subr.mxu0 0.0
    %4650 = vmatpush1.msra.mxu0 0.0
    %4651 = vmatprep.subr.mxu0 0.0
    %4652 = vmatpush1.msra.mxu0 0.0
    %4653 = vmatprep.subr.mxu0 0.0
    %4654 = vmatpush1.msra.mxu0 %v4618
    %4655 = vmatprep.subr.mxu0 0.0
    %4656 = vmatpush1.msra.mxu0 %v4617
    %4657 = vmatprep.subr.mxu0 0.0
    %4658 = vmatpush1.msra.mxu0 %v4616
    %4659 = vmatprep.subr.mxu0 0.0
    %4660 = vmatpush1.msra.mxu0 %v4615
    %4661 = vmatprep.subr.mxu0 0.0
    %4662 = vmatpush2.msra.mxu0 0.0
    %4663 = vmatprep.subr.mxu0 0.0
    %4664 = vmatpush2.msra.mxu0 0.0
    %4665 = vmatprep.subr.mxu0 0.0
    %4666 = vmatpush2.msra.mxu0 0.0
    %4667 = vmatprep.subr.mxu0 0.0
    %4668 = vmatpush2.msra.mxu0 0.0
    %4669 = vmatprep.subr.mxu0 0.0
    %4670 = vmatpush2.msra.mxu0 0.0
    %4671 = vmatprep.subr.mxu0 0.0
    %4672 = vmatpush2.msra.mxu0 0.0
    %4673 = vmatprep.subr.mxu0 0.0
    %4674 = vmatpush2.msra.mxu0 0.0
    %4675 = vmatprep.subr.mxu0 0.0
    %4676 = vmatpush2.msra.mxu0 0.0
    %4677 = vmatprep.subr.mxu0 0.0
    %4678 = vmatpush2.msra.mxu0 0.0
    %4679 = vmatprep.subr.mxu0 0.0
    %4680 = vmatpush2.msra.mxu0 0.0
    %4681 = vmatprep.subr.mxu0 0.0
    %4682 = vmatpush2.msra.mxu0 0.0
    %4683 = vmatprep.subr.mxu0 0.0
    %4684 = vmatpush2.msra.mxu0 0.0
    %4685 = vmatprep.subr.mxu0 0.0
    %4686 = vmatpush2.msra.mxu0 0.0
    %4687 = vmatprep.subr.mxu0 0.0
    %4688 = vmatpush2.msra.mxu0 0.0
    %4689 = vmatprep.subr.mxu0 0.0
    %4690 = vmatpush2.msra.mxu0 0.0
    %4691 = vmatprep.subr.mxu0 0.0
    %4692 = vmatpush2.msra.mxu0 0.0
    %4693 = vmatprep.mubr.f32.mxu0 0.0
    %4694 = vmatmul.mubr.f32.gmra.mxu0 %v4625
    %v4695 = vpop.f32.mrf.mxu0
    %v4696 = vadd.f32 0.0, %v4695
    %v4697 = vpop.f32.mrf.mxu0
    %4698 = vmatprep.mubr.f32.mxu0 0.0
    %4699 = vmatmul.mubr.f32.gmra.mxu0 %v4627
    %v4700 = vpop.f32.mrf.mxu0
    %v4701 = vadd.f32 0.0, %v4700
    %v4702 = vpop.f32.mrf.mxu0
    %4703 = vdwg.mxu0
    %v4704 = vadd.f32 %v4613, %v4696
    %v4705 = vadd.f32 %v4614, %v4701
    %v4706 = vxor.u32 %v4704, 2147483648
    %v4707 = vxor.u32 %v4705, 2147483648
    %v4708 = vmul.f32 %v4706, 1.442695
    %v4709 = vpow.pop %v4708
    %v4710 = vmul.f32 %v4707, 1.442695
    %v4711 = vpow.pop %v4710
    %v4712 = vadd.f32 %v4709, 1.0
    %v4713 = vadd.f32 %v4711, 1.0
    %v4714 = vrcp.pop %v4712
    %v4715 = vmul.f32 1.0, %v4714
    %v4716 = vrcp.pop %v4713
    %v4717 = vmul.f32 1.0, %v4716
    %v4718 = vtanh.pop %v4704
    %v4719 = vtanh.pop %v4705
    %v4720 = vmul.f32 %v4715, %v4592
    %v4721 = vmul.f32 %v4717, %v4593
    %4724 = vrot.lane.b32.xlu0 %v4718, 64
    %v4725 = vpop.permute.xlu0 %4724
    %4726 = vrot.lane.b32.xlu0 %v4719, 64
    %v4727 = vpop.permute.xlu0 %4726
    %v4730 = vmul.f32 %v4715, %v4725
    %v4731 = vmul.f32 %v4717, %v4727
    %4734 = vrot.lane.b32.xlu0 %v4730, 32
    %v4735 = vpop.permute.xlu0 %4734
    %4736 = vrot.lane.b32.xlu0 %v4731, 32
    %v4737 = vpop.permute.xlu0 %4736
    %v4740 = vadd.f32 %v4720, %v4735
    %v4741 = vadd.f32 %v4721, %v4737
    %v4742 = vtanh.pop %v4740
    %v4743 = vtanh.pop %v4741
    %4746 = vrot.lane.b32.xlu0 %v4742, 64
    %v4747 = vpop.permute.xlu0 %4746
    %4748 = vrot.lane.b32.xlu0 %v4743, 64
    %v4749 = vpop.permute.xlu0 %4748
    %v4752 = vmul.f32 %v4715, %v4747
    %v4753 = vmul.f32 %v4717, %v4749
    %4756 = vrot.lane.b32.xlu0 %v4752, 32
    %v4757 = vpop.permute.xlu0 %4756
    %4758 = vrot.lane.b32.xlu0 %v4753, 32
    %v4759 = vpop.permute.xlu0 %4758
    %4762 = vst.msk [vmem:[#allocation7 + $0x10] sm:$0xff] %vm814, %v4757
    %4763 = vst.msk [vmem:[#allocation7 + $0x30] sm:$0xff] %vm814, %v4759
    %4764 = vrot.lane.b32.xlu0 %v4752, 96
    %v4765 = vpop.permute.xlu0 %4764
    %4766 = vrot.lane.b32.xlu0 %v4753, 96
    %v4767 = vpop.permute.xlu0 %4766
    %4770 = vst.msk [vmem:[#allocation7 + $0x8] sm:$0xff] %vm3529, %v4765
    %4771 = vst.msk [vmem:[#allocation7 + $0x28] sm:$0xff] %vm3529, %v4767
    %v4772 = vld [vmem:[#allocation2 + $0x120] sm:$0xff]
    %v4773 = vld [vmem:[#allocation2 + $0x130] sm:$0xff]
    %v4774 = vld [vmem:[#allocation2 + $0xa8] sm:$0xff]
    %v4775 = vld [vmem:[#allocation2 + $0xb8] sm:$0xff]
    %v4776 = vadd.f32 %v4772, %v4774
    %v4777 = vadd.f32 %v4773, %v4775
    %v4778 = vld [vmem:[%s3383] sm:$0xff]
    %v4779 = vld [vmem:[%s3383 + $0x8] sm:$0xff]
    %v4780 = vld [vmem:[%s3383 + $0x10] sm:$0xff]
    %v4781 = vld [vmem:[%s3383 + $0x18] sm:$0xff]
    %v4782 = vsel %vm677, %v4757, 0
    %v4784 = vsel %vm677, %v4759, 0
    %4786 = vmatprep.subr.mxu0 0.0
    %4787 = vmatpush1.msra.mxu0 0.0
    %4788 = vmatprep.subr.mxu0 0.0
    %4789 = vmatpush1.msra.mxu0 0.0
    %4790 = vmatprep.subr.mxu0 0.0
    %4791 = vmatpush1.msra.mxu0 0.0
    %4792 = vmatprep.subr.mxu0 0.0
    %4793 = vmatpush1.msra.mxu0 0.0
    %4794 = vmatprep.subr.mxu0 0.0
    %4795 = vmatpush1.msra.mxu0 0.0
    %4796 = vmatprep.subr.mxu0 0.0
    %4797 = vmatpush1.msra.mxu0 0.0
    %4798 = vmatprep.subr.mxu0 0.0
    %4799 = vmatpush1.msra.mxu0 0.0
    %4800 = vmatprep.subr.mxu0 0.0
    %4801 = vmatpush1.msra.mxu0 0.0
    %4802 = vmatprep.subr.mxu0 0.0
    %4803 = vmatpush1.msra.mxu0 0.0
    %4804 = vmatprep.subr.mxu0 0.0
    %4805 = vmatpush1.msra.mxu0 0.0
    %4806 = vmatprep.subr.mxu0 0.0
    %4807 = vmatpush1.msra.mxu0 0.0
    %4808 = vmatprep.subr.mxu0 0.0
    %4809 = vmatpush1.msra.mxu0 0.0
    %4810 = vmatprep.subr.mxu0 0.0
    %4811 = vmatpush1.msra.mxu0 %v4781
    %4812 = vmatprep.subr.mxu0 0.0
    %4813 = vmatpush1.msra.mxu0 %v4780
    %4814 = vmatprep.subr.mxu0 0.0
    %4815 = vmatpush1.msra.mxu0 %v4779
    %4816 = vmatprep.subr.mxu0 0.0
    %4817 = vmatpush1.msra.mxu0 %v4778
    %4818 = vmatprep.subr.mxu0 0.0
    %4819 = vmatpush2.msra.mxu0 0.0
    %4820 = vmatprep.subr.mxu0 0.0
    %4821 = vmatpush2.msra.mxu0 0.0
    %4822 = vmatprep.subr.mxu0 0.0
    %4823 = vmatpush2.msra.mxu0 0.0
    %4824 = vmatprep.subr.mxu0 0.0
    %4825 = vmatpush2.msra.mxu0 0.0
    %4826 = vmatprep.subr.mxu0 0.0
    %4827 = vmatpush2.msra.mxu0 0.0
    %4828 = vmatprep.subr.mxu0 0.0
    %4829 = vmatpush2.msra.mxu0 0.0
    %4830 = vmatprep.subr.mxu0 0.0
    %4831 = vmatpush2.msra.mxu0 0.0
    %4832 = vmatprep.subr.mxu0 0.0
    %4833 = vmatpush2.msra.mxu0 0.0
    %4834 = vmatprep.subr.mxu0 0.0
    %4835 = vmatpush2.msra.mxu0 0.0
    %4836 = vmatprep.subr.mxu0 0.0
    %4837 = vmatpush2.msra.mxu0 0.0
    %4838 = vmatprep.subr.mxu0 0.0
    %4839 = vmatpush2.msra.mxu0 0.0
    %4840 = vmatprep.subr.mxu0 0.0
    %4841 = vmatpush2.msra.mxu0 0.0
    %4842 = vmatprep.subr.mxu0 0.0
    %4843 = vmatpush2.msra.mxu0 0.0
    %4844 = vmatprep.subr.mxu0 0.0
    %4845 = vmatpush2.msra.mxu0 0.0
    %4846 = vmatprep.subr.mxu0 0.0
    %4847 = vmatpush2.msra.mxu0 0.0
    %4848 = vmatprep.subr.mxu0 0.0
    %4849 = vmatpush2.msra.mxu0 0.0
    %4850 = vmatprep.mubr.f32.mxu0 0.0
    %4851 = vmatmul.mubr.f32.gmra.mxu0 %v4782
    %v4852 = vpop.f32.mrf.mxu0
    %v4853 = vadd.f32 0.0, %v4852
    %v4854 = vpop.f32.mrf.mxu0
    %4855 = vmatprep.mubr.f32.mxu0 0.0
    %4856 = vmatmul.mubr.f32.gmra.mxu0 %v4784
    %v4857 = vpop.f32.mrf.mxu0
    %v4858 = vadd.f32 0.0, %v4857
    %v4859 = vpop.f32.mrf.mxu0
    %4860 = vdwg.mxu0
    %v4861 = vadd.f32 %v4776, %v4853
    %v4862 = vadd.f32 %v4777, %v4858
    %v4863 = vxor.u32 %v4861, 2147483648
    %v4864 = vxor.u32 %v4862, 2147483648
    %v4865 = vmul.f32 %v4863, 1.442695
    %v4866 = vpow.pop %v4865
    %v4867 = vmul.f32 %v4864, 1.442695
    %v4868 = vpow.pop %v4867
    %v4869 = vadd.f32 %v4866, 1.0
    %v4870 = vadd.f32 %v4868, 1.0
    %v4871 = vrcp.pop %v4869
    %v4872 = vmul.f32 1.0, %v4871
    %v4873 = vrcp.pop %v4870
    %v4874 = vmul.f32 1.0, %v4873
    %v4875 = vtanh.pop %v4861
    %v4876 = vtanh.pop %v4862
    %v4877 = vmul.f32 %v4872, %v4740
    %v4878 = vmul.f32 %v4874, %v4741
    %4881 = vrot.lane.b32.xlu0 %v4875, 64
    %v4882 = vpop.permute.xlu0 %4881
    %4883 = vrot.lane.b32.xlu0 %v4876, 64
    %v4884 = vpop.permute.xlu0 %4883
    %v4887 = vmul.f32 %v4872, %v4882
    %v4888 = vmul.f32 %v4874, %v4884
    %4891 = vrot.lane.b32.xlu0 %v4887, 32
    %v4892 = vpop.permute.xlu0 %4891
    %4893 = vrot.lane.b32.xlu0 %v4888, 32
    %v4894 = vpop.permute.xlu0 %4893
    %v4897 = vadd.f32 %v4877, %v4892
    %v4898 = vadd.f32 %v4878, %v4894
    %v4899 = vtanh.pop %v4897
    %v4900 = vtanh.pop %v4898
    %4903 = vrot.lane.b32.xlu0 %v4899, 64
    %v4904 = vpop.permute.xlu0 %4903
    %4905 = vrot.lane.b32.xlu0 %v4900, 64
    %v4906 = vpop.permute.xlu0 %4905
    %v4909 = vmul.f32 %v4872, %v4904
    %v4910 = vmul.f32 %v4874, %v4906
    %4913 = vrot.lane.b32.xlu0 %v4909, 64
    %v4914 = vpop.permute.xlu0 %4913
    %4915 = vrot.lane.b32.xlu0 %v4910, 64
    %v4916 = vpop.permute.xlu0 %4915
    %4919 = vst.msk [vmem:[#allocation7 + $0x10] sm:$0xff] %vm3679, %v4914
    %4920 = vst.msk [vmem:[#allocation7 + $0x30] sm:$0xff] %vm3679, %v4916
    %4921 = vst.msk [vmem:[#allocation7 + $0x8] sm:$0xff] %vm3682, %v4914
    %4922 = vst.msk [vmem:[#allocation7 + $0x28] sm:$0xff] %vm3682, %v4916
    %v4923 = vld [vmem:[#allocation2 + $0x140] sm:$0xff]
    %v4924 = vld [vmem:[#allocation2 + $0x150] sm:$0xff]
    %v4925 = vld [vmem:[#allocation2 + $0x88] sm:$0xff]
    %v4926 = vld [vmem:[#allocation2 + $0x98] sm:$0xff]
    %v4927 = vadd.f32 %v4923, %v4925
    %v4928 = vadd.f32 %v4924, %v4926
    %v4929 = vld [vmem:[%s3383] sm:$0xff]
    %v4930 = vld [vmem:[%s3383 + $0x8] sm:$0xff]
    %v4931 = vld [vmem:[%s3383 + $0x10] sm:$0xff]
    %v4932 = vld [vmem:[%s3383 + $0x18] sm:$0xff]
    %4933 = vrot.lane.b32.xlu0 %v4909, 32
    %v4934 = vpop.permute.xlu0 %4933
    %4935 = vrot.lane.b32.xlu0 %v4910, 32
    %v4936 = vpop.permute.xlu0 %4935
    %v4937 = vsel %vm677, %v4934, 0
    %v4939 = vsel %vm677, %v4936, 0
    %4941 = vmatprep.subr.mxu0 0.0
    %4942 = vmatpush1.msra.mxu0 0.0
    %4943 = vmatprep.subr.mxu0 0.0
    %4944 = vmatpush1.msra.mxu0 0.0
    %4945 = vmatprep.subr.mxu0 0.0
    %4946 = vmatpush1.msra.mxu0 0.0
    %4947 = vmatprep.subr.mxu0 0.0
    %4948 = vmatpush1.msra.mxu0 0.0
    %4949 = vmatprep.subr.mxu0 0.0
    %4950 = vmatpush1.msra.mxu0 0.0
    %4951 = vmatprep.subr.mxu0 0.0
    %4952 = vmatpush1.msra.mxu0 0.0
    %4953 = vmatprep.subr.mxu0 0.0
    %4954 = vmatpush1.msra.mxu0 0.0
    %4955 = vmatprep.subr.mxu0 0.0
    %4956 = vmatpush1.msra.mxu0 0.0
    %4957 = vmatprep.subr.mxu0 0.0
    %4958 = vmatpush1.msra.mxu0 0.0
    %4959 = vmatprep.subr.mxu0 0.0
    %4960 = vmatpush1.msra.mxu0 0.0
    %4961 = vmatprep.subr.mxu0 0.0
    %4962 = vmatpush1.msra.mxu0 0.0
    %4963 = vmatprep.subr.mxu0 0.0
    %4964 = vmatpush1.msra.mxu0 0.0
    %4965 = vmatprep.subr.mxu0 0.0
    %4966 = vmatpush1.msra.mxu0 %v4932
    %4967 = vmatprep.subr.mxu0 0.0
    %4968 = vmatpush1.msra.mxu0 %v4931
    %4969 = vmatprep.subr.mxu0 0.0
    %4970 = vmatpush1.msra.mxu0 %v4930
    %4971 = vmatprep.subr.mxu0 0.0
    %4972 = vmatpush1.msra.mxu0 %v4929
    %4973 = vmatprep.subr.mxu0 0.0
    %4974 = vmatpush2.msra.mxu0 0.0
    %4975 = vmatprep.subr.mxu0 0.0
    %4976 = vmatpush2.msra.mxu0 0.0
    %4977 = vmatprep.subr.mxu0 0.0
    %4978 = vmatpush2.msra.mxu0 0.0
    %4979 = vmatprep.subr.mxu0 0.0
    %4980 = vmatpush2.msra.mxu0 0.0
    %4981 = vmatprep.subr.mxu0 0.0
    %4982 = vmatpush2.msra.mxu0 0.0
    %4983 = vmatprep.subr.mxu0 0.0
    %4984 = vmatpush2.msra.mxu0 0.0
    %4985 = vmatprep.subr.mxu0 0.0
    %4986 = vmatpush2.msra.mxu0 0.0
    %4987 = vmatprep.subr.mxu0 0.0
    %4988 = vmatpush2.msra.mxu0 0.0
    %4989 = vmatprep.subr.mxu0 0.0
    %4990 = vmatpush2.msra.mxu0 0.0
    %4991 = vmatprep.subr.mxu0 0.0
    %4992 = vmatpush2.msra.mxu0 0.0
    %4993 = vmatprep.subr.mxu0 0.0
    %4994 = vmatpush2.msra.mxu0 0.0
    %4995 = vmatprep.subr.mxu0 0.0
    %4996 = vmatpush2.msra.mxu0 0.0
    %4997 = vmatprep.subr.mxu0 0.0
    %4998 = vmatpush2.msra.mxu0 0.0
    %4999 = vmatprep.subr.mxu0 0.0
    %5000 = vmatpush2.msra.mxu0 0.0
    %5001 = vmatprep.subr.mxu0 0.0
    %5002 = vmatpush2.msra.mxu0 0.0
    %5003 = vmatprep.subr.mxu0 0.0
    %5004 = vmatpush2.msra.mxu0 0.0
    %5005 = vmatprep.mubr.f32.mxu0 0.0
    %5006 = vmatmul.mubr.f32.gmra.mxu0 %v4937
    %v5007 = vpop.f32.mrf.mxu0
    %v5008 = vadd.f32 0.0, %v5007
    %v5009 = vpop.f32.mrf.mxu0
    %5010 = vmatprep.mubr.f32.mxu0 0.0
    %5011 = vmatmul.mubr.f32.gmra.mxu0 %v4939
    %v5012 = vpop.f32.mrf.mxu0
    %v5013 = vadd.f32 0.0, %v5012
    %v5014 = vpop.f32.mrf.mxu0
    %5015 = vdwg.mxu0
    %v5016 = vadd.f32 %v4927, %v5008
    %v5017 = vadd.f32 %v4928, %v5013
    %v5018 = vxor.u32 %v5016, 2147483648
    %v5019 = vxor.u32 %v5017, 2147483648
    %v5020 = vmul.f32 %v5018, 1.442695
    %v5021 = vpow.pop %v5020
    %v5022 = vmul.f32 %v5019, 1.442695
    %v5023 = vpow.pop %v5022
    %v5024 = vadd.f32 %v5021, 1.0
    %v5025 = vadd.f32 %v5023, 1.0
    %v5026 = vrcp.pop %v5024
    %v5027 = vmul.f32 1.0, %v5026
    %v5028 = vrcp.pop %v5025
    %v5029 = vmul.f32 1.0, %v5028
    %v5030 = vtanh.pop %v5016
    %v5031 = vtanh.pop %v5017
    %v5032 = vmul.f32 %v5027, %v4897
    %v5033 = vmul.f32 %v5029, %v4898
    %5036 = vrot.lane.b32.xlu0 %v5030, 64
    %v5037 = vpop.permute.xlu0 %5036
    %5038 = vrot.lane.b32.xlu0 %v5031, 64
    %v5039 = vpop.permute.xlu0 %5038
    %v5042 = vmul.f32 %v5027, %v5037
    %v5043 = vmul.f32 %v5029, %v5039
    %5046 = vrot.lane.b32.xlu0 %v5042, 32
    %v5047 = vpop.permute.xlu0 %5046
    %5048 = vrot.lane.b32.xlu0 %v5043, 32
    %v5049 = vpop.permute.xlu0 %5048
    %v5052 = vadd.f32 %v5032, %v5047
    %v5053 = vadd.f32 %v5033, %v5049
    %v5054 = vtanh.pop %v5052
    %v5055 = vtanh.pop %v5053
    %5058 = vrot.lane.b32.xlu0 %v5054, 64
    %v5059 = vpop.permute.xlu0 %5058
    %5060 = vrot.lane.b32.xlu0 %v5055, 64
    %v5061 = vpop.permute.xlu0 %5060
    %v5064 = vmul.f32 %v5027, %v5059
    %v5065 = vmul.f32 %v5029, %v5061
    %5068 = vrot.lane.b32.xlu0 %v5064, 96
    %v5069 = vpop.permute.xlu0 %5068
    %5070 = vrot.lane.b32.xlu0 %v5065, 96
    %v5071 = vpop.permute.xlu0 %5070
    %5074 = vst.msk [vmem:[#allocation7 + $0x10] sm:$0xff] %vm3836, %v5069
    %5075 = vst.msk [vmem:[#allocation7 + $0x30] sm:$0xff] %vm3836, %v5071
    %5076 = vrot.lane.b32.xlu0 %v5064, 32
    %v5077 = vpop.permute.xlu0 %5076
    %5078 = vrot.lane.b32.xlu0 %v5065, 32
    %v5079 = vpop.permute.xlu0 %5078
    %5082 = vst.msk [vmem:[#allocation7 + $0x8] sm:$0xff] %vm817, %v5077
    %5083 = vst.msk [vmem:[#allocation7 + $0x28] sm:$0xff] %vm817, %v5079
    %v5084 = vld [vmem:[#allocation2 + $0x160] sm:$0xff]
    %v5085 = vld [vmem:[#allocation2 + $0x170] sm:$0xff]
    %v5086 = vld [vmem:[#allocation2 + $0x68] sm:$0xff]
    %v5087 = vld [vmem:[#allocation2 + $0x78] sm:$0xff]
    %v5088 = vadd.f32 %v5084, %v5086
    %v5089 = vadd.f32 %v5085, %v5087
    %v5090 = vld [vmem:[%s3383] sm:$0xff]
    %v5091 = vld [vmem:[%s3383 + $0x8] sm:$0xff]
    %v5092 = vld [vmem:[%s3383 + $0x10] sm:$0xff]
    %v5093 = vld [vmem:[%s3383 + $0x18] sm:$0xff]
    %v5094 = vsel %vm677, %v5077, 0
    %v5096 = vsel %vm677, %v5079, 0
    %5098 = vmatprep.subr.mxu0 0.0
    %5099 = vmatpush1.msra.mxu0 0.0
    %5100 = vmatprep.subr.mxu0 0.0
    %5101 = vmatpush1.msra.mxu0 0.0
    %5102 = vmatprep.subr.mxu0 0.0
    %5103 = vmatpush1.msra.mxu0 0.0
    %5104 = vmatprep.subr.mxu0 0.0
    %5105 = vmatpush1.msra.mxu0 0.0
    %5106 = vmatprep.subr.mxu0 0.0
    %5107 = vmatpush1.msra.mxu0 0.0
    %5108 = vmatprep.subr.mxu0 0.0
    %5109 = vmatpush1.msra.mxu0 0.0
    %5110 = vmatprep.subr.mxu0 0.0
    %5111 = vmatpush1.msra.mxu0 0.0
    %5112 = vmatprep.subr.mxu0 0.0
    %5113 = vmatpush1.msra.mxu0 0.0
    %5114 = vmatprep.subr.mxu0 0.0
    %5115 = vmatpush1.msra.mxu0 0.0
    %5116 = vmatprep.subr.mxu0 0.0
    %5117 = vmatpush1.msra.mxu0 0.0
    %5118 = vmatprep.subr.mxu0 0.0
    %5119 = vmatpush1.msra.mxu0 0.0
    %5120 = vmatprep.subr.mxu0 0.0
    %5121 = vmatpush1.msra.mxu0 0.0
    %5122 = vmatprep.subr.mxu0 0.0
    %5123 = vmatpush1.msra.mxu0 %v5093
    %5124 = vmatprep.subr.mxu0 0.0
    %5125 = vmatpush1.msra.mxu0 %v5092
    %5126 = vmatprep.subr.mxu0 0.0
    %5127 = vmatpush1.msra.mxu0 %v5091
    %5128 = vmatprep.subr.mxu0 0.0
    %5129 = vmatpush1.msra.mxu0 %v5090
    %5130 = vmatprep.subr.mxu0 0.0
    %5131 = vmatpush2.msra.mxu0 0.0
    %5132 = vmatprep.subr.mxu0 0.0
    %5133 = vmatpush2.msra.mxu0 0.0
    %5134 = vmatprep.subr.mxu0 0.0
    %5135 = vmatpush2.msra.mxu0 0.0
    %5136 = vmatprep.subr.mxu0 0.0
    %5137 = vmatpush2.msra.mxu0 0.0
    %5138 = vmatprep.subr.mxu0 0.0
    %5139 = vmatpush2.msra.mxu0 0.0
    %5140 = vmatprep.subr.mxu0 0.0
    %5141 = vmatpush2.msra.mxu0 0.0
    %5142 = vmatprep.subr.mxu0 0.0
    %5143 = vmatpush2.msra.mxu0 0.0
    %5144 = vmatprep.subr.mxu0 0.0
    %5145 = vmatpush2.msra.mxu0 0.0
    %5146 = vmatprep.subr.mxu0 0.0
    %5147 = vmatpush2.msra.mxu0 0.0
    %5148 = vmatprep.subr.mxu0 0.0
    %5149 = vmatpush2.msra.mxu0 0.0
    %5150 = vmatprep.subr.mxu0 0.0
    %5151 = vmatpush2.msra.mxu0 0.0
    %5152 = vmatprep.subr.mxu0 0.0
    %5153 = vmatpush2.msra.mxu0 0.0
    %5154 = vmatprep.subr.mxu0 0.0
    %5155 = vmatpush2.msra.mxu0 0.0
    %5156 = vmatprep.subr.mxu0 0.0
    %5157 = vmatpush2.msra.mxu0 0.0
    %5158 = vmatprep.subr.mxu0 0.0
    %5159 = vmatpush2.msra.mxu0 0.0
    %5160 = vmatprep.subr.mxu0 0.0
    %5161 = vmatpush2.msra.mxu0 0.0
    %5162 = vmatprep.mubr.f32.mxu0 0.0
    %5163 = vmatmul.mubr.f32.gmra.mxu0 %v5094
    %v5164 = vpop.f32.mrf.mxu0
    %v5165 = vadd.f32 0.0, %v5164
    %v5166 = vpop.f32.mrf.mxu0
    %5167 = vmatprep.mubr.f32.mxu0 0.0
    %5168 = vmatmul.mubr.f32.gmra.mxu0 %v5096
    %v5169 = vpop.f32.mrf.mxu0
    %v5170 = vadd.f32 0.0, %v5169
    %v5171 = vpop.f32.mrf.mxu0
    %5172 = vdwg.mxu0
    %v5173 = vadd.f32 %v5088, %v5165
    %v5174 = vadd.f32 %v5089, %v5170
    %v5175 = vxor.u32 %v5173, 2147483648
    %v5176 = vxor.u32 %v5174, 2147483648
    %v5177 = vmul.f32 %v5175, 1.442695
    %v5178 = vpow.pop %v5177
    %v5179 = vmul.f32 %v5176, 1.442695
    %v5180 = vpow.pop %v5179
    %v5181 = vadd.f32 %v5178, 1.0
    %v5182 = vadd.f32 %v5180, 1.0
    %v5183 = vrcp.pop %v5181
    %v5184 = vmul.f32 1.0, %v5183
    %v5185 = vrcp.pop %v5182
    %v5186 = vmul.f32 1.0, %v5185
    %v5187 = vtanh.pop %v5173
    %v5188 = vtanh.pop %v5174
    %v5189 = vmul.f32 %v5184, %v5052
    %v5190 = vmul.f32 %v5186, %v5053
    %5193 = vrot.lane.b32.xlu0 %v5187, 64
    %v5194 = vpop.permute.xlu0 %5193
    %5195 = vrot.lane.b32.xlu0 %v5188, 64
    %v5196 = vpop.permute.xlu0 %5195
    %v5199 = vmul.f32 %v5184, %v5194
    %v5200 = vmul.f32 %v5186, %v5196
    %5203 = vrot.lane.b32.xlu0 %v5199, 32
    %v5204 = vpop.permute.xlu0 %5203
    %5205 = vrot.lane.b32.xlu0 %v5200, 32
    %v5206 = vpop.permute.xlu0 %5205
    %v5209 = vadd.f32 %v5189, %v5204
    %v5210 = vadd.f32 %v5190, %v5206
    %v5211 = vtanh.pop %v5209
    %v5212 = vtanh.pop %v5210
    %5215 = vrot.lane.b32.xlu0 %v5211, 64
    %v5216 = vpop.permute.xlu0 %5215
    %5217 = vrot.lane.b32.xlu0 %v5212, 64
    %v5218 = vpop.permute.xlu0 %5217
    %v5221 = vmul.f32 %v5184, %v5216
    %v5222 = vmul.f32 %v5186, %v5218
    %5223 = vst.msk [vmem:[#allocation7 + $0x10] sm:$0xff] %vm3986, %v5221
    %5224 = vst.msk [vmem:[#allocation7 + $0x30] sm:$0xff] %vm3986, %v5222
    %5225 = vst.msk [vmem:[#allocation7] sm:$0xff] %vm3989, %v5221
    %5226 = vst.msk [vmem:[#allocation7 + $0x20] sm:$0xff] %vm3989, %v5222
    %v5227 = vld [vmem:[#allocation2 + $0x180] sm:$0xff]
    %v5228 = vld [vmem:[#allocation2 + $0x190] sm:$0xff]
    %v5229 = vld [vmem:[#allocation2 + $0x48] sm:$0xff]
    %v5230 = vld [vmem:[#allocation2 + $0x58] sm:$0xff]
    %v5231 = vadd.f32 %v5227, %v5229
    %v5232 = vadd.f32 %v5228, %v5230
    %v5233 = vld [vmem:[%s3383] sm:$0xff]
    %v5234 = vld [vmem:[%s3383 + $0x8] sm:$0xff]
    %v5235 = vld [vmem:[%s3383 + $0x10] sm:$0xff]
    %v5236 = vld [vmem:[%s3383 + $0x18] sm:$0xff]
    %5239 = vrot.lane.b32.xlu0 %v5221, 32
    %v5240 = vpop.permute.xlu0 %5239
    %5241 = vrot.lane.b32.xlu0 %v5222, 32
    %v5242 = vpop.permute.xlu0 %5241
    %v5243 = vsel %vm677, %v5240, 0
    %v5245 = vsel %vm677, %v5242, 0
    %5247 = vmatprep.subr.mxu0 0.0
    %5248 = vmatpush1.msra.mxu0 0.0
    %5249 = vmatprep.subr.mxu0 0.0
    %5250 = vmatpush1.msra.mxu0 0.0
    %5251 = vmatprep.subr.mxu0 0.0
    %5252 = vmatpush1.msra.mxu0 0.0
    %5253 = vmatprep.subr.mxu0 0.0
    %5254 = vmatpush1.msra.mxu0 0.0
    %5255 = vmatprep.subr.mxu0 0.0
    %5256 = vmatpush1.msra.mxu0 0.0
    %5257 = vmatprep.subr.mxu0 0.0
    %5258 = vmatpush1.msra.mxu0 0.0
    %5259 = vmatprep.subr.mxu0 0.0
    %5260 = vmatpush1.msra.mxu0 0.0
    %5261 = vmatprep.subr.mxu0 0.0
    %5262 = vmatpush1.msra.mxu0 0.0
    %5263 = vmatprep.subr.mxu0 0.0
    %5264 = vmatpush1.msra.mxu0 0.0
    %5265 = vmatprep.subr.mxu0 0.0
    %5266 = vmatpush1.msra.mxu0 0.0
    %5267 = vmatprep.subr.mxu0 0.0
    %5268 = vmatpush1.msra.mxu0 0.0
    %5269 = vmatprep.subr.mxu0 0.0
    %5270 = vmatpush1.msra.mxu0 0.0
    %5271 = vmatprep.subr.mxu0 0.0
    %5272 = vmatpush1.msra.mxu0 %v5236
    %5273 = vmatprep.subr.mxu0 0.0
    %5274 = vmatpush1.msra.mxu0 %v5235
    %5275 = vmatprep.subr.mxu0 0.0
    %5276 = vmatpush1.msra.mxu0 %v5234
    %5277 = vmatprep.subr.mxu0 0.0
    %5278 = vmatpush1.msra.mxu0 %v5233
    %5279 = vmatprep.subr.mxu0 0.0
    %5280 = vmatpush2.msra.mxu0 0.0
    %5281 = vmatprep.subr.mxu0 0.0
    %5282 = vmatpush2.msra.mxu0 0.0
    %5283 = vmatprep.subr.mxu0 0.0
    %5284 = vmatpush2.msra.mxu0 0.0
    %5285 = vmatprep.subr.mxu0 0.0
    %5286 = vmatpush2.msra.mxu0 0.0
    %5287 = vmatprep.subr.mxu0 0.0
    %5288 = vmatpush2.msra.mxu0 0.0
    %5289 = vmatprep.subr.mxu0 0.0
    %5290 = vmatpush2.msra.mxu0 0.0
    %5291 = vmatprep.subr.mxu0 0.0
    %5292 = vmatpush2.msra.mxu0 0.0
    %5293 = vmatprep.subr.mxu0 0.0
    %5294 = vmatpush2.msra.mxu0 0.0
    %5295 = vmatprep.subr.mxu0 0.0
    %5296 = vmatpush2.msra.mxu0 0.0
    %5297 = vmatprep.subr.mxu0 0.0
    %5298 = vmatpush2.msra.mxu0 0.0
    %5299 = vmatprep.subr.mxu0 0.0
    %5300 = vmatpush2.msra.mxu0 0.0
    %5301 = vmatprep.subr.mxu0 0.0
    %5302 = vmatpush2.msra.mxu0 0.0
    %5303 = vmatprep.subr.mxu0 0.0
    %5304 = vmatpush2.msra.mxu0 0.0
    %5305 = vmatprep.subr.mxu0 0.0
    %5306 = vmatpush2.msra.mxu0 0.0
    %5307 = vmatprep.subr.mxu0 0.0
    %5308 = vmatpush2.msra.mxu0 0.0
    %5309 = vmatprep.subr.mxu0 0.0
    %5310 = vmatpush2.msra.mxu0 0.0
    %5311 = vmatprep.mubr.f32.mxu0 0.0
    %5312 = vmatmul.mubr.f32.gmra.mxu0 %v5243
    %v5313 = vpop.f32.mrf.mxu0
    %v5314 = vadd.f32 0.0, %v5313
    %v5315 = vpop.f32.mrf.mxu0
    %5316 = vmatprep.mubr.f32.mxu0 0.0
    %5317 = vmatmul.mubr.f32.gmra.mxu0 %v5245
    %v5318 = vpop.f32.mrf.mxu0
    %v5319 = vadd.f32 0.0, %v5318
    %v5320 = vpop.f32.mrf.mxu0
    %5321 = vdwg.mxu0
    %v5322 = vadd.f32 %v5231, %v5314
    %v5323 = vadd.f32 %v5232, %v5319
    %v5324 = vxor.u32 %v5322, 2147483648
    %v5325 = vxor.u32 %v5323, 2147483648
    %v5326 = vmul.f32 %v5324, 1.442695
    %v5327 = vpow.pop %v5326
    %v5328 = vmul.f32 %v5325, 1.442695
    %v5329 = vpow.pop %v5328
    %v5330 = vadd.f32 %v5327, 1.0
    %v5331 = vadd.f32 %v5329, 1.0
    %v5332 = vrcp.pop %v5330
    %v5333 = vmul.f32 1.0, %v5332
    %v5334 = vrcp.pop %v5331
    %v5335 = vmul.f32 1.0, %v5334
    %v5336 = vtanh.pop %v5322
    %v5337 = vtanh.pop %v5323
    %v5338 = vmul.f32 %v5333, %v5209
    %v5339 = vmul.f32 %v5335, %v5210
    %5342 = vrot.lane.b32.xlu0 %v5336, 64
    %v5343 = vpop.permute.xlu0 %5342
    %5344 = vrot.lane.b32.xlu0 %v5337, 64
    %v5345 = vpop.permute.xlu0 %5344
    %v5348 = vmul.f32 %v5333, %v5343
    %v5349 = vmul.f32 %v5335, %v5345
    %5352 = vrot.lane.b32.xlu0 %v5348, 32
    %v5353 = vpop.permute.xlu0 %5352
    %5354 = vrot.lane.b32.xlu0 %v5349, 32
    %v5355 = vpop.permute.xlu0 %5354
    %v5358 = vadd.f32 %v5338, %v5353
    %v5359 = vadd.f32 %v5339, %v5355
    %v5360 = vtanh.pop %v5358
    %v5361 = vtanh.pop %v5359
    %5364 = vrot.lane.b32.xlu0 %v5360, 64
    %v5365 = vpop.permute.xlu0 %5364
    %5366 = vrot.lane.b32.xlu0 %v5361, 64
    %v5367 = vpop.permute.xlu0 %5366
    %v5370 = vmul.f32 %v5333, %v5365
    %v5371 = vmul.f32 %v5335, %v5367
    %5374 = vrot.lane.b32.xlu0 %v5370, 32
    %v5375 = vpop.permute.xlu0 %5374
    %5376 = vrot.lane.b32.xlu0 %v5371, 32
    %v5377 = vpop.permute.xlu0 %5376
    %5380 = vst.msk [vmem:[#allocation7 + $0x18] sm:$0xff] %vm814, %v5375
    %5381 = vst.msk [vmem:[#allocation7 + $0x38] sm:$0xff] %vm814, %v5377
    %5382 = vrot.lane.b32.xlu0 %v5370, 96
    %v5383 = vpop.permute.xlu0 %5382
    %5384 = vrot.lane.b32.xlu0 %v5371, 96
    %v5385 = vpop.permute.xlu0 %5384
    %5388 = vst.msk [vmem:[#allocation7] sm:$0xff] %vm3529, %v5383
    %5389 = vst.msk [vmem:[#allocation7 + $0x20] sm:$0xff] %vm3529, %v5385
    %v5390 = vld [vmem:[#allocation2 + $0x1a0] sm:$0xff]
    %v5391 = vld [vmem:[#allocation2 + $0x1b0] sm:$0xff]
    %v5392 = vld [vmem:[#allocation2 + $0x28] sm:$0xff]
    %v5393 = vld [vmem:[#allocation2 + $0x38] sm:$0xff]
    %v5394 = vadd.f32 %v5390, %v5392
    %v5395 = vadd.f32 %v5391, %v5393
    %v5396 = vld [vmem:[%s3383] sm:$0xff]
    %v5397 = vld [vmem:[%s3383 + $0x8] sm:$0xff]
    %v5398 = vld [vmem:[%s3383 + $0x10] sm:$0xff]
    %v5399 = vld [vmem:[%s3383 + $0x18] sm:$0xff]
    %v5400 = vsel %vm677, %v5375, 0
    %v5402 = vsel %vm677, %v5377, 0
    %5404 = vmatprep.subr.mxu0 0.0
    %5405 = vmatpush1.msra.mxu0 0.0
    %5406 = vmatprep.subr.mxu0 0.0
    %5407 = vmatpush1.msra.mxu0 0.0
    %5408 = vmatprep.subr.mxu0 0.0
    %5409 = vmatpush1.msra.mxu0 0.0
    %5410 = vmatprep.subr.mxu0 0.0
    %5411 = vmatpush1.msra.mxu0 0.0
    %5412 = vmatprep.subr.mxu0 0.0
    %5413 = vmatpush1.msra.mxu0 0.0
    %5414 = vmatprep.subr.mxu0 0.0
    %5415 = vmatpush1.msra.mxu0 0.0
    %5416 = vmatprep.subr.mxu0 0.0
    %5417 = vmatpush1.msra.mxu0 0.0
    %5418 = vmatprep.subr.mxu0 0.0
    %5419 = vmatpush1.msra.mxu0 0.0
    %5420 = vmatprep.subr.mxu0 0.0
    %5421 = vmatpush1.msra.mxu0 0.0
    %5422 = vmatprep.subr.mxu0 0.0
    %5423 = vmatpush1.msra.mxu0 0.0
    %5424 = vmatprep.subr.mxu0 0.0
    %5425 = vmatpush1.msra.mxu0 0.0
    %5426 = vmatprep.subr.mxu0 0.0
    %5427 = vmatpush1.msra.mxu0 0.0
    %5428 = vmatprep.subr.mxu0 0.0
    %5429 = vmatpush1.msra.mxu0 %v5399
    %5430 = vmatprep.subr.mxu0 0.0
    %5431 = vmatpush1.msra.mxu0 %v5398
    %5432 = vmatprep.subr.mxu0 0.0
    %5433 = vmatpush1.msra.mxu0 %v5397
    %5434 = vmatprep.subr.mxu0 0.0
    %5435 = vmatpush1.msra.mxu0 %v5396
    %5436 = vmatprep.subr.mxu0 0.0
    %5437 = vmatpush2.msra.mxu0 0.0
    %5438 = vmatprep.subr.mxu0 0.0
    %5439 = vmatpush2.msra.mxu0 0.0
    %5440 = vmatprep.subr.mxu0 0.0
    %5441 = vmatpush2.msra.mxu0 0.0
    %5442 = vmatprep.subr.mxu0 0.0
    %5443 = vmatpush2.msra.mxu0 0.0
    %5444 = vmatprep.subr.mxu0 0.0
    %5445 = vmatpush2.msra.mxu0 0.0
    %5446 = vmatprep.subr.mxu0 0.0
    %5447 = vmatpush2.msra.mxu0 0.0
    %5448 = vmatprep.subr.mxu0 0.0
    %5449 = vmatpush2.msra.mxu0 0.0
    %5450 = vmatprep.subr.mxu0 0.0
    %5451 = vmatpush2.msra.mxu0 0.0
    %5452 = vmatprep.subr.mxu0 0.0
    %5453 = vmatpush2.msra.mxu0 0.0
    %5454 = vmatprep.subr.mxu0 0.0
    %5455 = vmatpush2.msra.mxu0 0.0
    %5456 = vmatprep.subr.mxu0 0.0
    %5457 = vmatpush2.msra.mxu0 0.0
    %5458 = vmatprep.subr.mxu0 0.0
    %5459 = vmatpush2.msra.mxu0 0.0
    %5460 = vmatprep.subr.mxu0 0.0
    %5461 = vmatpush2.msra.mxu0 0.0
    %5462 = vmatprep.subr.mxu0 0.0
    %5463 = vmatpush2.msra.mxu0 0.0
    %5464 = vmatprep.subr.mxu0 0.0
    %5465 = vmatpush2.msra.mxu0 0.0
    %5466 = vmatprep.subr.mxu0 0.0
    %5467 = vmatpush2.msra.mxu0 0.0
    %5468 = vmatprep.mubr.f32.mxu0 0.0
    %5469 = vmatmul.mubr.f32.gmra.mxu0 %v5400
    %v5470 = vpop.f32.mrf.mxu0
    %v5471 = vadd.f32 0.0, %v5470
    %v5472 = vpop.f32.mrf.mxu0
    %5473 = vmatprep.mubr.f32.mxu0 0.0
    %5474 = vmatmul.mubr.f32.gmra.mxu0 %v5402
    %v5475 = vpop.f32.mrf.mxu0
    %v5476 = vadd.f32 0.0, %v5475
    %v5477 = vpop.f32.mrf.mxu0
    %5478 = vdwg.mxu0
    %v5479 = vadd.f32 %v5394, %v5471
    %v5480 = vadd.f32 %v5395, %v5476
    %v5481 = vxor.u32 %v5479, 2147483648
    %v5482 = vxor.u32 %v5480, 2147483648
    %v5483 = vmul.f32 %v5481, 1.442695
    %v5484 = vpow.pop %v5483
    %v5485 = vmul.f32 %v5482, 1.442695
    %v5486 = vpow.pop %v5485
    %v5487 = vadd.f32 %v5484, 1.0
    %v5488 = vadd.f32 %v5486, 1.0
    %v5489 = vrcp.pop %v5487
    %v5490 = vmul.f32 1.0, %v5489
    %v5491 = vrcp.pop %v5488
    %v5492 = vmul.f32 1.0, %v5491
    %v5493 = vtanh.pop %v5479
    %v5494 = vtanh.pop %v5480
    %v5495 = vmul.f32 %v5490, %v5358
    %v5496 = vmul.f32 %v5492, %v5359
    %5499 = vrot.lane.b32.xlu0 %v5493, 64
    %v5500 = vpop.permute.xlu0 %5499
    %5501 = vrot.lane.b32.xlu0 %v5494, 64
    %v5502 = vpop.permute.xlu0 %5501
    %v5505 = vmul.f32 %v5490, %v5500
    %v5506 = vmul.f32 %v5492, %v5502
    %5509 = vrot.lane.b32.xlu0 %v5505, 32
    %v5510 = vpop.permute.xlu0 %5509
    %5511 = vrot.lane.b32.xlu0 %v5506, 32
    %v5512 = vpop.permute.xlu0 %5511
    %v5515 = vadd.f32 %v5495, %v5510
    %v5516 = vadd.f32 %v5496, %v5512
    %v5517 = vtanh.pop %v5515
    %v5518 = vtanh.pop %v5516
    %5521 = vrot.lane.b32.xlu0 %v5517, 64
    %v5522 = vpop.permute.xlu0 %5521
    %5523 = vrot.lane.b32.xlu0 %v5518, 64
    %v5524 = vpop.permute.xlu0 %5523
    %v5527 = vmul.f32 %v5490, %v5522
    %v5528 = vmul.f32 %v5492, %v5524
    %5531 = vrot.lane.b32.xlu0 %v5527, 64
    %v5532 = vpop.permute.xlu0 %5531
    %5533 = vrot.lane.b32.xlu0 %v5528, 64
    %v5534 = vpop.permute.xlu0 %5533
    %5537 = vst.msk [vmem:[#allocation7 + $0x18] sm:$0xff] %vm3679, %v5532
    %5538 = vst.msk [vmem:[#allocation7 + $0x38] sm:$0xff] %vm3679, %v5534
    %5539 = vst.msk [vmem:[#allocation7] sm:$0xff] %vm3682, %v5532
    %5540 = vst.msk [vmem:[#allocation7 + $0x20] sm:$0xff] %vm3682, %v5534
    %v5541 = vld [vmem:[#allocation2 + $0x1c0] sm:$0xff]
    %v5542 = vld [vmem:[#allocation2 + $0x1d0] sm:$0xff]
    %v5543 = vld [vmem:[#allocation2 + $0x8] sm:$0xff]
    %v5544 = vld [vmem:[#allocation2 + $0x18] sm:$0xff]
    %v5545 = vadd.f32 %v5541, %v5543
    %v5546 = vadd.f32 %v5542, %v5544
    %v5547 = vld [vmem:[%s3383] sm:$0xff]
    %v5548 = vld [vmem:[%s3383 + $0x8] sm:$0xff]
    %v5549 = vld [vmem:[%s3383 + $0x10] sm:$0xff]
    %v5550 = vld [vmem:[%s3383 + $0x18] sm:$0xff]
    %5551 = vrot.lane.b32.xlu0 %v5527, 32
    %v5552 = vpop.permute.xlu0 %5551
    %5553 = vrot.lane.b32.xlu0 %v5528, 32
    %v5554 = vpop.permute.xlu0 %5553
    %v5555 = vsel %vm677, %v5552, 0
    %v5557 = vsel %vm677, %v5554, 0
    %5559 = vmatprep.subr.mxu0 0.0
    %5560 = vmatpush1.msra.mxu0 0.0
    %5561 = vmatprep.subr.mxu0 0.0
    %5562 = vmatpush1.msra.mxu0 0.0
    %5563 = vmatprep.subr.mxu0 0.0
    %5564 = vmatpush1.msra.mxu0 0.0
    %5565 = vmatprep.subr.mxu0 0.0
    %5566 = vmatpush1.msra.mxu0 0.0
    %5567 = vmatprep.subr.mxu0 0.0
    %5568 = vmatpush1.msra.mxu0 0.0
    %5569 = vmatprep.subr.mxu0 0.0
    %5570 = vmatpush1.msra.mxu0 0.0
    %5571 = vmatprep.subr.mxu0 0.0
    %5572 = vmatpush1.msra.mxu0 0.0
    %5573 = vmatprep.subr.mxu0 0.0
    %5574 = vmatpush1.msra.mxu0 0.0
    %5575 = vmatprep.subr.mxu0 0.0
    %5576 = vmatpush1.msra.mxu0 0.0
    %5577 = vmatprep.subr.mxu0 0.0
    %5578 = vmatpush1.msra.mxu0 0.0
    %5579 = vmatprep.subr.mxu0 0.0
    %5580 = vmatpush1.msra.mxu0 0.0
    %5581 = vmatprep.subr.mxu0 0.0
    %5582 = vmatpush1.msra.mxu0 0.0
    %5583 = vmatprep.subr.mxu0 0.0
    %5584 = vmatpush1.msra.mxu0 %v5550
    %5585 = vmatprep.subr.mxu0 0.0
    %5586 = vmatpush1.msra.mxu0 %v5549
    %5587 = vmatprep.subr.mxu0 0.0
    %5588 = vmatpush1.msra.mxu0 %v5548
    %5589 = vmatprep.subr.mxu0 0.0
    %5590 = vmatpush1.msra.mxu0 %v5547
    %5591 = vmatprep.subr.mxu0 0.0
    %5592 = vmatpush2.msra.mxu0 0.0
    %5593 = vmatprep.subr.mxu0 0.0
    %5594 = vmatpush2.msra.mxu0 0.0
    %5595 = vmatprep.subr.mxu0 0.0
    %5596 = vmatpush2.msra.mxu0 0.0
    %5597 = vmatprep.subr.mxu0 0.0
    %5598 = vmatpush2.msra.mxu0 0.0
    %5599 = vmatprep.subr.mxu0 0.0
    %5600 = vmatpush2.msra.mxu0 0.0
    %5601 = vmatprep.subr.mxu0 0.0
    %5602 = vmatpush2.msra.mxu0 0.0
    %5603 = vmatprep.subr.mxu0 0.0
    %5604 = vmatpush2.msra.mxu0 0.0
    %5605 = vmatprep.subr.mxu0 0.0
    %5606 = vmatpush2.msra.mxu0 0.0
    %5607 = vmatprep.subr.mxu0 0.0
    %5608 = vmatpush2.msra.mxu0 0.0
    %5609 = vmatprep.subr.mxu0 0.0
    %5610 = vmatpush2.msra.mxu0 0.0
    %5611 = vmatprep.subr.mxu0 0.0
    %5612 = vmatpush2.msra.mxu0 0.0
    %5613 = vmatprep.subr.mxu0 0.0
    %5614 = vmatpush2.msra.mxu0 0.0
    %5615 = vmatprep.subr.mxu0 0.0
    %5616 = vmatpush2.msra.mxu0 0.0
    %5617 = vmatprep.subr.mxu0 0.0
    %5618 = vmatpush2.msra.mxu0 0.0
    %5619 = vmatprep.subr.mxu0 0.0
    %5620 = vmatpush2.msra.mxu0 0.0
    %5621 = vmatprep.subr.mxu0 0.0
    %5622 = vmatpush2.msra.mxu0 0.0
    %5623 = vmatprep.mubr.f32.mxu0 0.0
    %5624 = vmatmul.mubr.f32.gmra.mxu0 %v5555
    %v5625 = vpop.f32.mrf.mxu0
    %v5626 = vadd.f32 0.0, %v5625
    %v5627 = vpop.f32.mrf.mxu0
    %5628 = vmatprep.mubr.f32.mxu0 0.0
    %5629 = vmatmul.mubr.f32.gmra.mxu0 %v5557
    %v5630 = vpop.f32.mrf.mxu0
    %v5631 = vadd.f32 0.0, %v5630
    %v5632 = vpop.f32.mrf.mxu0
    %5633 = vdwg.mxu0
    %v5634 = vadd.f32 %v5545, %v5626
    %v5635 = vadd.f32 %v5546, %v5631
    %v5636 = vxor.u32 %v5634, 2147483648
    %v5637 = vxor.u32 %v5635, 2147483648
    %v5638 = vmul.f32 %v5636, 1.442695
    %v5639 = vpow.pop %v5638
    %v5640 = vmul.f32 %v5637, 1.442695
    %v5641 = vpow.pop %v5640
    %v5642 = vadd.f32 %v5639, 1.0
    %v5643 = vadd.f32 %v5641, 1.0
    %v5644 = vrcp.pop %v5642
    %v5645 = vmul.f32 1.0, %v5644
    %v5646 = vrcp.pop %v5643
    %v5647 = vmul.f32 1.0, %v5646
    %v5648 = vtanh.pop %v5634
    %v5649 = vtanh.pop %v5635
    %v5650 = vmul.f32 %v5645, %v5515
    %v5651 = vmul.f32 %v5647, %v5516
    %5654 = vrot.lane.b32.xlu0 %v5648, 64
    %v5655 = vpop.permute.xlu0 %5654
    %5656 = vrot.lane.b32.xlu0 %v5649, 64
    %v5657 = vpop.permute.xlu0 %5656
    %v5660 = vmul.f32 %v5645, %v5655
    %v5661 = vmul.f32 %v5647, %v5657
    %5664 = vrot.lane.b32.xlu0 %v5660, 32
    %v5665 = vpop.permute.xlu0 %5664
    %5666 = vrot.lane.b32.xlu0 %v5661, 32
    %v5667 = vpop.permute.xlu0 %5666
    %v5670 = vadd.f32 %v5650, %v5665
    %v5671 = vadd.f32 %v5651, %v5667
    %v5672 = vtanh.pop %v5670
    %v5673 = vtanh.pop %v5671
    %5676 = vrot.lane.b32.xlu0 %v5672, 64
    %v5677 = vpop.permute.xlu0 %5676
    %5678 = vrot.lane.b32.xlu0 %v5673, 64
    %v5679 = vpop.permute.xlu0 %5678
    %v5682 = vmul.f32 %v5645, %v5677
    %v5683 = vmul.f32 %v5647, %v5679
    %5686 = vrot.lane.b32.xlu0 %v5682, 96
    %v5687 = vpop.permute.xlu0 %5686
    %5688 = vrot.lane.b32.xlu0 %v5683, 96
    %v5689 = vpop.permute.xlu0 %5688
    %5692 = vst.msk [vmem:[#allocation7 + $0x18] sm:$0xff] %vm3836, %v5687
    %5693 = vst.msk [vmem:[#allocation7 + $0x38] sm:$0xff] %vm3836, %v5689
    %5694 = vrot.lane.b32.xlu0 %v5682, 32
    %v5695 = vpop.permute.xlu0 %5694
    %5696 = vrot.lane.b32.xlu0 %v5683, 32
    %v5697 = vpop.permute.xlu0 %5696
    %5700 = vst.msk [vmem:[#allocation7] sm:$0xff] %vm817, %v5695
    %5701 = vst.msk [vmem:[#allocation7 + $0x20] sm:$0xff] %vm817, %v5697
    // Predicated region
    $region26: #{character_model_forward.1} parent=1 // pred_check
      _
    $region27: #{character_model_forward.1} parent=1 // pred_check_branch
      %5703 = sbr.rel (0) target = $region29
    $region28: #{character_model_forward.1} parent=1 // pred_region
      %s5705 = ssub.s32 1024, 1024
      %5706 = vsyncadd [#allocation6], %s5705
      %s5707 = sshll.u32 [#allocation7], 4
      %s5708 = int_to_ptr.vmem [resolvable:$true] %s5707
      %5713 = dma.vmem_to_hbm [thread:$0]  %s5708, 1024, %s5, [#allocation6], 512, 512, 32
    $region29: #{character_model_forward.1} parent=1 // pred_fallthru
      _
    // Predicated region
    $region30: #{character_model_forward.1} parent=1 // pred_check
      _
    $region31: #{character_model_forward.1} parent=1 // pred_check_branch
      %5715 = sbr.rel (0) target = $region33
    $region32: #{character_model_forward.1} parent=1 // pred_region
      %5716 = dma.done [#allocation6], 1024
    $region33: #{character_model_forward.1} parent=1 // pred_fallthru
      _
    %5717 = vsyncpa [#allocation5], 1
    %5718 = vsyncpa [#allocation6], 1

</llo_original>
